<compile_context>
chip_gen: v6e
topology: v6e:2x2x1
jax: 0.10.0
libtpu: 0.0.40
codegen_flags: <defaults>
</compile_context>

<pallas_src>
import functools

import jax
import jax.numpy as jnp
from jax.experimental import pallas as pl
from jax.experimental.pallas import tpu as pltpu

# ---- configuration implied by the module ----
BATCH = 2
D_DIM = 1                      # required so fc2 output can be viewed (1,B,x,y)
X_DIM = Y_DIM = 64
HIDDEN = 32
CONV_DIM = 4
KSIZE = 4
STRIDE = 2
PAD = 1
EPS = 1e-5
CHANNEL_SIZE = CONV_DIM * 32   # 128 = GRU input size

CHANS = [D_DIM, CONV_DIM, CONV_DIM * 2, CONV_DIM * 4,
         CONV_DIM * 8, CONV_DIM * 16, CONV_DIM * 32]       # 1,4,8,16,32,64,128
SPATIAL = [X_DIM // (2 ** l) for l in range(7)]             # 64,32,16,8,4,2,1
MIN_ROWS = 8                                                # sublane granularity
ROWS = [max(BATCH * s, MIN_ROWS) for s in SPATIAL]          # padded row counts


def full_spec(shape):
    """BlockSpec covering the whole (small) array in one block."""
    n = len(shape)
    return pl.BlockSpec(shape, lambda i: (0,) * n)


# ---------------------------------------------------------------------------
# The single fused kernel
# ---------------------------------------------------------------------------
def _conv_layer(a, ww_ref, rb_ref, shift):
    """One stride-2 4x4 conv (+ folded BN affine) on the (B*H, W*C) layout."""
    a16 = a.astype(jnp.bfloat16)
    acc = None
    for ki in range(KSIZE):
        # width + channel contraction (weights pre-folded on host)
        t = jnp.dot(a16, ww_ref[ki], preferred_element_type=jnp.float32)
        # row gather (stride-2 / pad-1 selection) as a 0/1 matmul
        u = jnp.dot(rb_ref[ki], t.astype(jnp.bfloat16),
                    preferred_element_type=jnp.float32)
        acc = u if acc is None else acc + u
    return acc + shift          # (rows_out, 128) f32


def encoder_kernel(x_ref, h_ref,
                   ww1, rb1, ww2, rb2, ww3, rb3, ww4, rb4, ww5, rb5, ww6, rb6,
                   shift_ref, wih_ref, whh_ref, bih_ref, bhh_ref,
                   wfc_ref, bfc_ref,
                   y_ref, hout_ref):
    # ---- CNN encoder (all activations stay in VMEM / vregs) ----
    a = x_ref[...]                                   # (B*64, 64) f32
    conv = ((ww1, rb1), (ww2, rb2), (ww3, rb3),
            (ww4, rb4), (ww5, rb5), (ww6, rb6))
    for l, (ww, rb) in enumerate(conv):
        a = _conv_layer(a, ww, rb, shift_ref[l])     # (ROWS[l+1], 128) f32

    feat = a[0:BATCH, :]                             # (B, 128) == x.view(B,-1)
    h_prev = h_ref[...]                              # (B, HIDDEN) f32

    # ---- GRU cell (PyTorch gate order r,z,n), 2 dots with 128-aligned gates
    gi = jnp.dot(feat, wih_ref[...],
                 preferred_element_type=jnp.float32) + bih_ref[...]   # (B,384)
    gh = jnp.dot(h_prev, whh_ref[...],
                 preferred_element_type=jnp.float32) + bhh_ref[...]   # (B,384)
    H = HIDDEN
    r = jax.nn.sigmoid(gi[:, 0:H] + gh[:, 0:H])
    z = jax.nn.sigmoid(gi[:, 128:128 + H] + gh[:, 128:128 + H])
    n = jnp.tanh(gi[:, 256:256 + H] + r * gh[:, 256:256 + H])
    h_new = (1.0 - z) * n + z * h_prev               # (B, HIDDEN) f32
    hout_ref[...] = h_new

    # ---- fc2 fused on the VMEM-resident hidden state (lane-dense output) ----
    y = jnp.dot(h_new.astype(jnp.bfloat16), wfc_ref[...],
                preferred_element_type=jnp.float32) + bfc_ref[...]    # (B,4096)
    y_ref[...] = y


# ---------------------------------------------------------------------------
# Host-side parameter packing (done once at init)
# ---------------------------------------------------------------------------
def _make_row_gather(b, s_in, s_out, rows_out, cols_in, dtype):
    """RB[ki, b*T+t1, b*S+h] = 1 iff h == 2*t1 + ki - 1 (zero-padded)."""
    ki = jnp.arange(KSIZE)[:, None, None]
    t1 = jnp.arange(s_out)[None, :, None]
    h = jnp.arange(s_in)[None, None, :]
    sel = (h == STRIDE * t1 + ki - PAD).astype(jnp.float32)        # (4, T, S)
    eye = jnp.eye(b, dtype=jnp.float32)
    rb = jnp.einsum('kts,bc->kbtcs', sel, eye).reshape(KSIZE, b * s_out, b * s_in)
    rb = jnp.pad(rb, ((0, 0), (0, rows_out - b * s_out), (0, cols_in - b * s_in)))
    return rb.astype(dtype)


def _make_col_weight(w_conv, s_in, s_out, dtype):
    """WW[ki, w*Cin+cin, t2*Cout+cout] = W[cout,cin,ki, w-2*t2+1] (0 outside)."""
    w4 = jnp.transpose(w_conv, (2, 3, 1, 0))                       # (ki,kj,cin,cout)
    kj = jnp.arange(KSIZE)[:, None, None]
    w = jnp.arange(s_in)[None, :, None]
    t2 = jnp.arange(s_out)[None, None, :]
    sel = (w == STRIDE * t2 + kj - PAD).astype(jnp.float32)        # (4, S, T)
    ww = jnp.einsum('jwt,kjio->kwito', sel, w4)                    # (ki,w,cin,t2,cout)
    cin, cout = w_conv.shape[1], w_conv.shape[0]
    return ww.reshape(KSIZE, s_in * cin, s_out * cout).astype(dtype)


def init_params(key):
    keys = iter(jax.random.split(key, 64))
    ww_list, rb_list, shift_rows = [], [], []
    for l in range(6):
        cin, cout = CHANS[l], CHANS[l + 1]
        s_in, s_out = SPATIAL[l], SPATIAL[l + 1]
        fan_in = cin * KSIZE * KSIZE
        bound = 1.0 / (fan_in ** 0.5)
        w = jax.random.uniform(next(keys), (cout, cin, KSIZE, KSIZE),
                               jnp.float32, -bound, bound)
        b = jax.random.uniform(next(keys), (cout,), jnp.float32, -bound, bound)
        if l < 5:   # conv followed by BatchNorm2d (eval mode, folded affine)
            gamma = 1.0 + 0.05 * jax.random.normal(next(keys), (cout,), jnp.float32)
            beta = 0.05 * jax.random.normal(next(keys), (cout,), jnp.float32)
            rmean = 0.05 * jax.random.normal(next(keys), (cout,), jnp.float32)
            rvar = jnp.abs(1.0 + 0.05 * jax.random.normal(next(keys), (cout,),
                                                          jnp.float32))
            scale = gamma / jnp.sqrt(rvar + EPS)
            shift = beta + (b - rmean) * scale
        else:       # last conv: no BN
            scale = jnp.ones((cout,), jnp.float32)
            shift = b
        w_fold = w * scale[:, None, None, None]        # BN scale folded into W
        ww_list.append(_make_col_weight(w_fold, s_in, s_out, jnp.bfloat16))
        rb_list.append(_make_row_gather(BATCH, s_in, s_out,
                                        ROWS[l + 1], ROWS[l], jnp.bfloat16))
        shift_rows.append(jnp.tile(shift, s_out))       # (s_out*cout,) == (128,)
    shifts = jnp.stack(shift_rows, 0).reshape(6, 1, 128).astype(jnp.float32)

    # GRU (input 128, hidden 32); gates r|z|n packed into 128-aligned blocks.
    H = HIDDEN
    gb = 1.0 / (H ** 0.5)
    w_ih = jax.random.uniform(next(keys), (3 * H, CHANNEL_SIZE), jnp.float32, -gb, gb)
    w_hh = jax.random.uniform(next(keys), (3 * H, H), jnp.float32, -gb, gb)
    b_ih = jax.random.uniform(next(keys), (3 * H,), jnp.float32, -gb, gb)
    b_hh = jax.random.uniform(next(keys), (3 * H,), jnp.float32, -gb, gb)
    wih_p = jnp.zeros((CHANNEL_SIZE, 3 * 128), jnp.float32)
    whh_p = jnp.zeros((H, 3 * 128), jnp.float32)
    bih_p = jnp.zeros((1, 3 * 128), jnp.float32)
    bhh_p = jnp.zeros((1, 3 * 128), jnp.float32)
    for g in range(3):
        wih_p = wih_p.at[:, g * 128:g * 128 + H].set(w_ih[g * H:(g + 1) * H, :].T)
        whh_p = whh_p.at[:, g * 128:g * 128 + H].set(w_hh[g * H:(g + 1) * H, :].T)
        bih_p = bih_p.at[0, g * 128:g * 128 + H].set(b_ih[g * H:(g + 1) * H])
        bhh_p = bhh_p.at[0, g * 128:g * 128 + H].set(b_hh[g * H:(g + 1) * H])

    out_features = X_DIM * Y_DIM * D_DIM
    fb = 1.0 / (H ** 0.5)
    w_fc = jax.random.uniform(next(keys), (out_features, H), jnp.float32, -fb, fb)
    b_fc = jax.random.uniform(next(keys), (out_features,), jnp.float32, -fb, fb)

    return {
        "ww": ww_list, "rb": rb_list, "shift": shifts,
        "wih": wih_p, "whh": whh_p, "bih": bih_p, "bhh": bhh_p,
        "wfc": w_fc.T.astype(jnp.bfloat16),            # (HIDDEN, 4096)
        "bfc": b_fc.reshape(1, out_features),
    }


# ---------------------------------------------------------------------------
# Forward wrapper: one pallas_call for the whole module
# ---------------------------------------------------------------------------
def encoder_crnn_forward(params, x, h):
    """x: (B, d_dim, 64, 64) NCHW, h: (n_layers=1, B, hidden) -> (y, h')."""
    B = x.shape[0]
    # (B,C,H,W) -> lane-dense (B*H, W*C) layout consumed by the kernel.
    a0 = jnp.transpose(x, (0, 2, 3, 1)).reshape(B * X_DIM, Y_DIM * D_DIM)
    a0 = a0.astype(jnp.float32)
    h0 = h[0].astype(jnp.float32)                       # (B, HIDDEN)

    flat = [a0, h0]
    for l in range(6):
        flat.append(params["ww"][l])
        flat.append(params["rb"][l])
    flat += [params["shift"], params["wih"], params["whh"], params["bih"],
             params["bhh"], params["wfc"], params["bfc"]]

    out_features = X_DIM * Y_DIM * D_DIM
    y2d, h_new = pl.pallas_call(
        encoder_kernel,
        grid=(1,),
        in_specs=[full_spec(t.shape) for t in flat],
        out_specs=(full_spec((B, out_features)), full_spec((B, HIDDEN))),
        out_shape=(jax.ShapeDtypeStruct((B, out_features), jnp.float32),
                   jax.ShapeDtypeStruct((B, HIDDEN), jnp.float32)),
        compiler_params=pltpu.CompilerParams(dimension_semantics=("arbitrary",)),
    )(*flat)

    y = y2d.reshape(1, B, X_DIM, Y_DIM)
    return y, h_new[None]                               # h': (1, B, hidden)


if __name__ == "__main__":
    key = jax.random.PRNGKey(0)
    pkey, xkey = jax.random.split(key)
    params = init_params(pkey)

    x = jax.random.normal(xkey, (BATCH, D_DIM, X_DIM, Y_DIM), jnp.float32)
    h0 = jnp.zeros((1, BATCH, HIDDEN), jnp.float32)     # initHidden()

    fwd = jax.jit(functools.partial(encoder_crnn_forward, params))
    y, h = fwd(x, h0)
    jax.block_until_ready((y, h))

    assert y.shape == (1, BATCH, X_DIM, Y_DIM), y.shape
    assert h.shape == (1, BATCH, HIDDEN), h.shape
    assert bool(jnp.all(jnp.isfinite(y))) and bool(jnp.all(jnp.isfinite(h)))
    print("KERNEL_OK")
</pallas_src>

<mosaic_0001>
module attributes {stable_mosaic.version = 11 : i64} {
  func.func @encoder_kernel(%arg0: i32, %arg1: memref<128x64xf32, #tpu.memory_space<vmem>>, %arg2: memref<2x32xf32, #tpu.memory_space<vmem>>, %arg3: memref<4x64x128xbf16, #tpu.memory_space<vmem>>, %arg4: memref<4x64x128xbf16, #tpu.memory_space<vmem>>, %arg5: memref<4x128x128xbf16, #tpu.memory_space<vmem>>, %arg6: memref<4x32x64xbf16, #tpu.memory_space<vmem>>, %arg7: memref<4x128x128xbf16, #tpu.memory_space<vmem>>, %arg8: memref<4x16x32xbf16, #tpu.memory_space<vmem>>, %arg9: memref<4x128x128xbf16, #tpu.memory_space<vmem>>, %arg10: memref<4x8x16xbf16, #tpu.memory_space<vmem>>, %arg11: memref<4x128x128xbf16, #tpu.memory_space<vmem>>, %arg12: memref<4x8x8xbf16, #tpu.memory_space<vmem>>, %arg13: memref<4x128x128xbf16, #tpu.memory_space<vmem>>, %arg14: memref<4x8x8xbf16, #tpu.memory_space<vmem>>, %arg15: memref<6x1x128xf32, #tpu.memory_space<vmem>>, %arg16: memref<128x384xf32, #tpu.memory_space<vmem>>, %arg17: memref<32x384xf32, #tpu.memory_space<vmem>>, %arg18: memref<1x384xf32, #tpu.memory_space<vmem>>, %arg19: memref<1x384xf32, #tpu.memory_space<vmem>>, %arg20: memref<32x4096xbf16, #tpu.memory_space<vmem>>, %arg21: memref<1x4096xf32, #tpu.memory_space<vmem>>, %arg22: memref<2x4096xf32, #tpu.memory_space<vmem>>, %arg23: memref<2x32xf32, #tpu.memory_space<vmem>>) attributes {dimension_semantics = [#tpu.dimension_semantics<arbitrary>], iteration_bounds = array<i64: 1>, scalar_prefetch = 0 : i64, scratch_operands = 0 : i64, tpu.core_type = #tpu.core_type<tc>, window_params = [{pipeline_mode = #tpu.pipeline_mode<synchronous>, transform_indices = @transform_0, window_bounds = array<i64: 128, 64>}, {pipeline_mode = #tpu.pipeline_mode<synchronous>, transform_indices = @transform_1, window_bounds = array<i64: 2, 32>}, {pipeline_mode = #tpu.pipeline_mode<synchronous>, transform_indices = @transform_2, window_bounds = array<i64: 4, 64, 128>}, {pipeline_mode = #tpu.pipeline_mode<synchronous>, transform_indices = @transform_3, window_bounds = array<i64: 4, 64, 128>}, {pipeline_mode = #tpu.pipeline_mode<synchronous>, transform_indices = @transform_4, window_bounds = array<i64: 4, 128, 128>}, {pipeline_mode = #tpu.pipeline_mode<synchronous>, transform_indices = @transform_5, window_bounds = array<i64: 4, 32, 64>}, {pipeline_mode = #tpu.pipeline_mode<synchronous>, transform_indices = @transform_6, window_bounds = array<i64: 4, 128, 128>}, {pipeline_mode = #tpu.pipeline_mode<synchronous>, transform_indices = @transform_7, window_bounds = array<i64: 4, 16, 32>}, {pipeline_mode = #tpu.pipeline_mode<synchronous>, transform_indices = @transform_8, window_bounds = array<i64: 4, 128, 128>}, {pipeline_mode = #tpu.pipeline_mode<synchronous>, transform_indices = @transform_9, window_bounds = array<i64: 4, 8, 16>}, {pipeline_mode = #tpu.pipeline_mode<synchronous>, transform_indices = @transform_10, window_bounds = array<i64: 4, 128, 128>}, {pipeline_mode = #tpu.pipeline_mode<synchronous>, transform_indices = @transform_11, window_bounds = array<i64: 4, 8, 8>}, {pipeline_mode = #tpu.pipeline_mode<synchronous>, transform_indices = @transform_12, window_bounds = array<i64: 4, 128, 128>}, {pipeline_mode = #tpu.pipeline_mode<synchronous>, transform_indices = @transform_13, window_bounds = array<i64: 4, 8, 8>}, {pipeline_mode = #tpu.pipeline_mode<synchronous>, transform_indices = @transform_14, window_bounds = array<i64: 6, 1, 128>}, {pipeline_mode = #tpu.pipeline_mode<synchronous>, transform_indices = @transform_15, window_bounds = array<i64: 128, 384>}, {pipeline_mode = #tpu.pipeline_mode<synchronous>, transform_indices = @transform_16, window_bounds = array<i64: 32, 384>}, {pipeline_mode = #tpu.pipeline_mode<synchronous>, transform_indices = @transform_17, window_bounds = array<i64: 1, 384>}, {pipeline_mode = #tpu.pipeline_mode<synchronous>, transform_indices = @transform_18, window_bounds = array<i64: 1, 384>}, {pipeline_mode = #tpu.pipeline_mode<synchronous>, transform_indices = @transform_19, window_bounds = array<i64: 32, 4096>}, {pipeline_mode = #tpu.pipeline_mode<synchronous>, transform_indices = @transform_20, window_bounds = array<i64: 1, 4096>}, {pipeline_mode = #tpu.pipeline_mode<synchronous>, transform_indices = @transform_21, window_bounds = array<i64: 2, 4096>}, {pipeline_mode = #tpu.pipeline_mode<synchronous>, transform_indices = @transform_22, window_bounds = array<i64: 2, 32>}]} {
    %c0 = arith.constant 0 : index
    %c0_0 = arith.constant 0 : index
    %0 = vector.load %arg1[%c0, %c0_0] : memref<128x64xf32, #tpu.memory_space<vmem>>, vector<128x64xf32>
    %c0_1 = arith.constant 0 : index
    %c0_2 = arith.constant 0 : index
    %c0_3 = arith.constant 0 : index
    %1 = vector.load %arg15[%c0_1, %c0_2, %c0_3] : memref<6x1x128xf32, #tpu.memory_space<vmem>>, vector<1x1x128xf32>
    %2 = vector.shape_cast %1 : vector<1x1x128xf32> to vector<1x128xf32>
    %3 = arith.truncf %0 : vector<128x64xf32> to vector<128x64xbf16>
    %c0_4 = arith.constant 0 : index
    %c0_5 = arith.constant 0 : index
    %c0_6 = arith.constant 0 : index
    %4 = vector.load %arg3[%c0_4, %c0_5, %c0_6] : memref<4x64x128xbf16, #tpu.memory_space<vmem>>, vector<1x64x128xbf16>
    %5 = vector.shape_cast %4 : vector<1x64x128xbf16> to vector<64x128xbf16>
    %cst = arith.constant dense<0.000000e+00> : vector<128x128xf32>
    %6 = tpu.matmul %3, %5, %cst {dimension_numbers = #tpu.dot_dimension_numbers<[1], [0], [0], [1], [0, 0, 1, 1], [], []>} : vector<128x64xbf16>, vector<64x128xbf16>, vector<128x128xf32> -> vector<128x128xf32>
    %c0_7 = arith.constant 0 : index
    %c0_8 = arith.constant 0 : index
    %c0_9 = arith.constant 0 : index
    %7 = vector.load %arg4[%c0_7, %c0_8, %c0_9] : memref<4x64x128xbf16, #tpu.memory_space<vmem>>, vector<1x64x128xbf16>
    %8 = vector.shape_cast %7 : vector<1x64x128xbf16> to vector<64x128xbf16>
    %9 = arith.truncf %6 : vector<128x128xf32> to vector<128x128xbf16>
    %cst_10 = arith.constant dense<0.000000e+00> : vector<64x128xf32>
    %10 = tpu.matmul %8, %9, %cst_10 {dimension_numbers = #tpu.dot_dimension_numbers<[1], [0], [0], [1], [0, 0, 1, 1], [], []>} : vector<64x128xbf16>, vector<128x128xbf16>, vector<64x128xf32> -> vector<64x128xf32>
    %c1 = arith.constant 1 : index
    %c0_11 = arith.constant 0 : index
    %c0_12 = arith.constant 0 : index
    %11 = vector.load %arg3[%c1, %c0_11, %c0_12] : memref<4x64x128xbf16, #tpu.memory_space<vmem>>, vector<1x64x128xbf16>
    %12 = vector.shape_cast %11 : vector<1x64x128xbf16> to vector<64x128xbf16>
    %cst_13 = arith.constant dense<0.000000e+00> : vector<128x128xf32>
    %13 = tpu.matmul %3, %12, %cst_13 {dimension_numbers = #tpu.dot_dimension_numbers<[1], [0], [0], [1], [0, 0, 1, 1], [], []>} : vector<128x64xbf16>, vector<64x128xbf16>, vector<128x128xf32> -> vector<128x128xf32>
    %c1_14 = arith.constant 1 : index
    %c0_15 = arith.constant 0 : index
    %c0_16 = arith.constant 0 : index
    %14 = vector.load %arg4[%c1_14, %c0_15, %c0_16] : memref<4x64x128xbf16, #tpu.memory_space<vmem>>, vector<1x64x128xbf16>
    %15 = vector.shape_cast %14 : vector<1x64x128xbf16> to vector<64x128xbf16>
    %16 = arith.truncf %13 : vector<128x128xf32> to vector<128x128xbf16>
    %cst_17 = arith.constant dense<0.000000e+00> : vector<64x128xf32>
    %17 = tpu.matmul %15, %16, %cst_17 {dimension_numbers = #tpu.dot_dimension_numbers<[1], [0], [0], [1], [0, 0, 1, 1], [], []>} : vector<64x128xbf16>, vector<128x128xbf16>, vector<64x128xf32> -> vector<64x128xf32>
    %18 = arith.addf %10, %17 : vector<64x128xf32>
    %c2 = arith.constant 2 : index
    %c0_18 = arith.constant 0 : index
    %c0_19 = arith.constant 0 : index
    %19 = vector.load %arg3[%c2, %c0_18, %c0_19] : memref<4x64x128xbf16, #tpu.memory_space<vmem>>, vector<1x64x128xbf16>
    %20 = vector.shape_cast %19 : vector<1x64x128xbf16> to vector<64x128xbf16>
    %cst_20 = arith.constant dense<0.000000e+00> : vector<128x128xf32>
    %21 = tpu.matmul %3, %20, %cst_20 {dimension_numbers = #tpu.dot_dimension_numbers<[1], [0], [0], [1], [0, 0, 1, 1], [], []>} : vector<128x64xbf16>, vector<64x128xbf16>, vector<128x128xf32> -> vector<128x128xf32>
    %c2_21 = arith.constant 2 : index
    %c0_22 = arith.constant 0 : index
    %c0_23 = arith.constant 0 : index
    %22 = vector.load %arg4[%c2_21, %c0_22, %c0_23] : memref<4x64x128xbf16, #tpu.memory_space<vmem>>, vector<1x64x128xbf16>
    %23 = vector.shape_cast %22 : vector<1x64x128xbf16> to vector<64x128xbf16>
    %24 = arith.truncf %21 : vector<128x128xf32> to vector<128x128xbf16>
    %cst_24 = arith.constant dense<0.000000e+00> : vector<64x128xf32>
    %25 = tpu.matmul %23, %24, %cst_24 {dimension_numbers = #tpu.dot_dimension_numbers<[1], [0], [0], [1], [0, 0, 1, 1], [], []>} : vector<64x128xbf16>, vector<128x128xbf16>, vector<64x128xf32> -> vector<64x128xf32>
    %26 = arith.addf %18, %25 : vector<64x128xf32>
    %c3 = arith.constant 3 : index
    %c0_25 = arith.constant 0 : index
    %c0_26 = arith.constant 0 : index
    %27 = vector.load %arg3[%c3, %c0_25, %c0_26] : memref<4x64x128xbf16, #tpu.memory_space<vmem>>, vector<1x64x128xbf16>
    %28 = vector.shape_cast %27 : vector<1x64x128xbf16> to vector<64x128xbf16>
    %cst_27 = arith.constant dense<0.000000e+00> : vector<128x128xf32>
    %29 = tpu.matmul %3, %28, %cst_27 {dimension_numbers = #tpu.dot_dimension_numbers<[1], [0], [0], [1], [0, 0, 1, 1], [], []>} : vector<128x64xbf16>, vector<64x128xbf16>, vector<128x128xf32> -> vector<128x128xf32>
    %c3_28 = arith.constant 3 : index
    %c0_29 = arith.constant 0 : index
    %c0_30 = arith.constant 0 : index
    %30 = vector.load %arg4[%c3_28, %c0_29, %c0_30] : memref<4x64x128xbf16, #tpu.memory_space<vmem>>, vector<1x64x128xbf16>
    %31 = vector.shape_cast %30 : vector<1x64x128xbf16> to vector<64x128xbf16>
    %32 = arith.truncf %29 : vector<128x128xf32> to vector<128x128xbf16>
    %cst_31 = arith.constant dense<0.000000e+00> : vector<64x128xf32>
    %33 = tpu.matmul %31, %32, %cst_31 {dimension_numbers = #tpu.dot_dimension_numbers<[1], [0], [0], [1], [0, 0, 1, 1], [], []>} : vector<64x128xbf16>, vector<128x128xbf16>, vector<64x128xf32> -> vector<64x128xf32>
    %34 = arith.addf %26, %33 : vector<64x128xf32>
    %35 = vector.broadcast %2 : vector<1x128xf32> to vector<64x128xf32>
    %36 = arith.addf %34, %35 : vector<64x128xf32>
    %c1_32 = arith.constant 1 : index
    %c0_33 = arith.constant 0 : index
    %c0_34 = arith.constant 0 : index
    %37 = vector.load %arg15[%c1_32, %c0_33, %c0_34] : memref<6x1x128xf32, #tpu.memory_space<vmem>>, vector<1x1x128xf32>
    %38 = vector.shape_cast %37 : vector<1x1x128xf32> to vector<1x128xf32>
    %39 = arith.truncf %36 : vector<64x128xf32> to vector<64x128xbf16>
    %c0_35 = arith.constant 0 : index
    %c0_36 = arith.constant 0 : index
    %c0_37 = arith.constant 0 : index
    %40 = vector.load %arg5[%c0_35, %c0_36, %c0_37] : memref<4x128x128xbf16, #tpu.memory_space<vmem>>, vector<1x128x128xbf16>
    %41 = vector.shape_cast %40 : vector<1x128x128xbf16> to vector<128x128xbf16>
    %cst_38 = arith.constant dense<0.000000e+00> : vector<64x128xf32>
    %42 = tpu.matmul %39, %41, %cst_38 {dimension_numbers = #tpu.dot_dimension_numbers<[1], [0], [0], [1], [0, 0, 1, 1], [], []>} : vector<64x128xbf16>, vector<128x128xbf16>, vector<64x128xf32> -> vector<64x128xf32>
    %c0_39 = arith.constant 0 : index
    %c0_40 = arith.constant 0 : index
    %c0_41 = arith.constant 0 : index
    %43 = vector.load %arg6[%c0_39, %c0_40, %c0_41] : memref<4x32x64xbf16, #tpu.memory_space<vmem>>, vector<1x32x64xbf16>
    %44 = vector.shape_cast %43 : vector<1x32x64xbf16> to vector<32x64xbf16>
    %45 = arith.truncf %42 : vector<64x128xf32> to vector<64x128xbf16>
    %cst_42 = arith.constant dense<0.000000e+00> : vector<32x128xf32>
    %46 = tpu.matmul %44, %45, %cst_42 {dimension_numbers = #tpu.dot_dimension_numbers<[1], [0], [0], [1], [0, 0, 1, 1], [], []>} : vector<32x64xbf16>, vector<64x128xbf16>, vector<32x128xf32> -> vector<32x128xf32>
    %c1_43 = arith.constant 1 : index
    %c0_44 = arith.constant 0 : index
    %c0_45 = arith.constant 0 : index
    %47 = vector.load %arg5[%c1_43, %c0_44, %c0_45] : memref<4x128x128xbf16, #tpu.memory_space<vmem>>, vector<1x128x128xbf16>
    %48 = vector.shape_cast %47 : vector<1x128x128xbf16> to vector<128x128xbf16>
    %cst_46 = arith.constant dense<0.000000e+00> : vector<64x128xf32>
    %49 = tpu.matmul %39, %48, %cst_46 {dimension_numbers = #tpu.dot_dimension_numbers<[1], [0], [0], [1], [0, 0, 1, 1], [], []>} : vector<64x128xbf16>, vector<128x128xbf16>, vector<64x128xf32> -> vector<64x128xf32>
    %c1_47 = arith.constant 1 : index
    %c0_48 = arith.constant 0 : index
    %c0_49 = arith.constant 0 : index
    %50 = vector.load %arg6[%c1_47, %c0_48, %c0_49] : memref<4x32x64xbf16, #tpu.memory_space<vmem>>, vector<1x32x64xbf16>
    %51 = vector.shape_cast %50 : vector<1x32x64xbf16> to vector<32x64xbf16>
    %52 = arith.truncf %49 : vector<64x128xf32> to vector<64x128xbf16>
    %cst_50 = arith.constant dense<0.000000e+00> : vector<32x128xf32>
    %53 = tpu.matmul %51, %52, %cst_50 {dimension_numbers = #tpu.dot_dimension_numbers<[1], [0], [0], [1], [0, 0, 1, 1], [], []>} : vector<32x64xbf16>, vector<64x128xbf16>, vector<32x128xf32> -> vector<32x128xf32>
    %54 = arith.addf %46, %53 : vector<32x128xf32>
    %c2_51 = arith.constant 2 : index
    %c0_52 = arith.constant 0 : index
    %c0_53 = arith.constant 0 : index
    %55 = vector.load %arg5[%c2_51, %c0_52, %c0_53] : memref<4x128x128xbf16, #tpu.memory_space<vmem>>, vector<1x128x128xbf16>
    %56 = vector.shape_cast %55 : vector<1x128x128xbf16> to vector<128x128xbf16>
    %cst_54 = arith.constant dense<0.000000e+00> : vector<64x128xf32>
    %57 = tpu.matmul %39, %56, %cst_54 {dimension_numbers = #tpu.dot_dimension_numbers<[1], [0], [0], [1], [0, 0, 1, 1], [], []>} : vector<64x128xbf16>, vector<128x128xbf16>, vector<64x128xf32> -> vector<64x128xf32>
    %c2_55 = arith.constant 2 : index
    %c0_56 = arith.constant 0 : index
    %c0_57 = arith.constant 0 : index
    %58 = vector.load %arg6[%c2_55, %c0_56, %c0_57] : memref<4x32x64xbf16, #tpu.memory_space<vmem>>, vector<1x32x64xbf16>
    %59 = vector.shape_cast %58 : vector<1x32x64xbf16> to vector<32x64xbf16>
    %60 = arith.truncf %57 : vector<64x128xf32> to vector<64x128xbf16>
    %cst_58 = arith.constant dense<0.000000e+00> : vector<32x128xf32>
    %61 = tpu.matmul %59, %60, %cst_58 {dimension_numbers = #tpu.dot_dimension_numbers<[1], [0], [0], [1], [0, 0, 1, 1], [], []>} : vector<32x64xbf16>, vector<64x128xbf16>, vector<32x128xf32> -> vector<32x128xf32>
    %62 = arith.addf %54, %61 : vector<32x128xf32>
    %c3_59 = arith.constant 3 : index
    %c0_60 = arith.constant 0 : index
    %c0_61 = arith.constant 0 : index
    %63 = vector.load %arg5[%c3_59, %c0_60, %c0_61] : memref<4x128x128xbf16, #tpu.memory_space<vmem>>, vector<1x128x128xbf16>
    %64 = vector.shape_cast %63 : vector<1x128x128xbf16> to vector<128x128xbf16>
    %cst_62 = arith.constant dense<0.000000e+00> : vector<64x128xf32>
    %65 = tpu.matmul %39, %64, %cst_62 {dimension_numbers = #tpu.dot_dimension_numbers<[1], [0], [0], [1], [0, 0, 1, 1], [], []>} : vector<64x128xbf16>, vector<128x128xbf16>, vector<64x128xf32> -> vector<64x128xf32>
    %c3_63 = arith.constant 3 : index
    %c0_64 = arith.constant 0 : index
    %c0_65 = arith.constant 0 : index
    %66 = vector.load %arg6[%c3_63, %c0_64, %c0_65] : memref<4x32x64xbf16, #tpu.memory_space<vmem>>, vector<1x32x64xbf16>
    %67 = vector.shape_cast %66 : vector<1x32x64xbf16> to vector<32x64xbf16>
    %68 = arith.truncf %65 : vector<64x128xf32> to vector<64x128xbf16>
    %cst_66 = arith.constant dense<0.000000e+00> : vector<32x128xf32>
    %69 = tpu.matmul %67, %68, %cst_66 {dimension_numbers = #tpu.dot_dimension_numbers<[1], [0], [0], [1], [0, 0, 1, 1], [], []>} : vector<32x64xbf16>, vector<64x128xbf16>, vector<32x128xf32> -> vector<32x128xf32>
    %70 = arith.addf %62, %69 : vector<32x128xf32>
    %71 = vector.broadcast %38 : vector<1x128xf32> to vector<32x128xf32>
    %72 = arith.addf %70, %71 : vector<32x128xf32>
    %c2_67 = arith.constant 2 : index
    %c0_68 = arith.constant 0 : index
    %c0_69 = arith.constant 0 : index
    %73 = vector.load %arg15[%c2_67, %c0_68, %c0_69] : memref<6x1x128xf32, #tpu.memory_space<vmem>>, vector<1x1x128xf32>
    %74 = vector.shape_cast %73 : vector<1x1x128xf32> to vector<1x128xf32>
    %75 = arith.truncf %72 : vector<32x128xf32> to vector<32x128xbf16>
    %c0_70 = arith.constant 0 : index
    %c0_71 = arith.constant 0 : index
    %c0_72 = arith.constant 0 : index
    %76 = vector.load %arg7[%c0_70, %c0_71, %c0_72] : memref<4x128x128xbf16, #tpu.memory_space<vmem>>, vector<1x128x128xbf16>
    %77 = vector.shape_cast %76 : vector<1x128x128xbf16> to vector<128x128xbf16>
    %cst_73 = arith.constant dense<0.000000e+00> : vector<32x128xf32>
    %78 = tpu.matmul %75, %77, %cst_73 {dimension_numbers = #tpu.dot_dimension_numbers<[1], [0], [0], [1], [0, 0, 1, 1], [], []>} : vector<32x128xbf16>, vector<128x128xbf16>, vector<32x128xf32> -> vector<32x128xf32>
    %c0_74 = arith.constant 0 : index
    %c0_75 = arith.constant 0 : index
    %c0_76 = arith.constant 0 : index
    %79 = vector.load %arg8[%c0_74, %c0_75, %c0_76] : memref<4x16x32xbf16, #tpu.memory_space<vmem>>, vector<1x16x32xbf16>
    %80 = vector.shape_cast %79 : vector<1x16x32xbf16> to vector<16x32xbf16>
    %81 = arith.truncf %78 : vector<32x128xf32> to vector<32x128xbf16>
    %cst_77 = arith.constant dense<0.000000e+00> : vector<16x128xf32>
    %82 = tpu.matmul %80, %81, %cst_77 {dimension_numbers = #tpu.dot_dimension_numbers<[1], [0], [0], [1], [0, 0, 1, 1], [], []>} : vector<16x32xbf16>, vector<32x128xbf16>, vector<16x128xf32> -> vector<16x128xf32>
    %c1_78 = arith.constant 1 : index
    %c0_79 = arith.constant 0 : index
    %c0_80 = arith.constant 0 : index
    %83 = vector.load %arg7[%c1_78, %c0_79, %c0_80] : memref<4x128x128xbf16, #tpu.memory_space<vmem>>, vector<1x128x128xbf16>
    %84 = vector.shape_cast %83 : vector<1x128x128xbf16> to vector<128x128xbf16>
    %cst_81 = arith.constant dense<0.000000e+00> : vector<32x128xf32>
    %85 = tpu.matmul %75, %84, %cst_81 {dimension_numbers = #tpu.dot_dimension_numbers<[1], [0], [0], [1], [0, 0, 1, 1], [], []>} : vector<32x128xbf16>, vector<128x128xbf16>, vector<32x128xf32> -> vector<32x128xf32>
    %c1_82 = arith.constant 1 : index
    %c0_83 = arith.constant 0 : index
    %c0_84 = arith.constant 0 : index
    %86 = vector.load %arg8[%c1_82, %c0_83, %c0_84] : memref<4x16x32xbf16, #tpu.memory_space<vmem>>, vector<1x16x32xbf16>
    %87 = vector.shape_cast %86 : vector<1x16x32xbf16> to vector<16x32xbf16>
    %88 = arith.truncf %85 : vector<32x128xf32> to vector<32x128xbf16>
    %cst_85 = arith.constant dense<0.000000e+00> : vector<16x128xf32>
    %89 = tpu.matmul %87, %88, %cst_85 {dimension_numbers = #tpu.dot_dimension_numbers<[1], [0], [0], [1], [0, 0, 1, 1], [], []>} : vector<16x32xbf16>, vector<32x128xbf16>, vector<16x128xf32> -> vector<16x128xf32>
    %90 = arith.addf %82, %89 : vector<16x128xf32>
    %c2_86 = arith.constant 2 : index
    %c0_87 = arith.constant 0 : index
    %c0_88 = arith.constant 0 : index
    %91 = vector.load %arg7[%c2_86, %c0_87, %c0_88] : memref<4x128x128xbf16, #tpu.memory_space<vmem>>, vector<1x128x128xbf16>
    %92 = vector.shape_cast %91 : vector<1x128x128xbf16> to vector<128x128xbf16>
    %cst_89 = arith.constant dense<0.000000e+00> : vector<32x128xf32>
    %93 = tpu.matmul %75, %92, %cst_89 {dimension_numbers = #tpu.dot_dimension_numbers<[1], [0], [0], [1], [0, 0, 1, 1], [], []>} : vector<32x128xbf16>, vector<128x128xbf16>, vector<32x128xf32> -> vector<32x128xf32>
    %c2_90 = arith.constant 2 : index
    %c0_91 = arith.constant 0 : index
    %c0_92 = arith.constant 0 : index
    %94 = vector.load %arg8[%c2_90, %c0_91, %c0_92] : memref<4x16x32xbf16, #tpu.memory_space<vmem>>, vector<1x16x32xbf16>
    %95 = vector.shape_cast %94 : vector<1x16x32xbf16> to vector<16x32xbf16>
    %96 = arith.truncf %93 : vector<32x128xf32> to vector<32x128xbf16>
    %cst_93 = arith.constant dense<0.000000e+00> : vector<16x128xf32>
    %97 = tpu.matmul %95, %96, %cst_93 {dimension_numbers = #tpu.dot_dimension_numbers<[1], [0], [0], [1], [0, 0, 1, 1], [], []>} : vector<16x32xbf16>, vector<32x128xbf16>, vector<16x128xf32> -> vector<16x128xf32>
    %98 = arith.addf %90, %97 : vector<16x128xf32>
    %c3_94 = arith.constant 3 : index
    %c0_95 = arith.constant 0 : index
    %c0_96 = arith.constant 0 : index
    %99 = vector.load %arg7[%c3_94, %c0_95, %c0_96] : memref<4x128x128xbf16, #tpu.memory_space<vmem>>, vector<1x128x128xbf16>
    %100 = vector.shape_cast %99 : vector<1x128x128xbf16> to vector<128x128xbf16>
    %cst_97 = arith.constant dense<0.000000e+00> : vector<32x128xf32>
    %101 = tpu.matmul %75, %100, %cst_97 {dimension_numbers = #tpu.dot_dimension_numbers<[1], [0], [0], [1], [0, 0, 1, 1], [], []>} : vector<32x128xbf16>, vector<128x128xbf16>, vector<32x128xf32> -> vector<32x128xf32>
    %c3_98 = arith.constant 3 : index
    %c0_99 = arith.constant 0 : index
    %c0_100 = arith.constant 0 : index
    %102 = vector.load %arg8[%c3_98, %c0_99, %c0_100] : memref<4x16x32xbf16, #tpu.memory_space<vmem>>, vector<1x16x32xbf16>
    %103 = vector.shape_cast %102 : vector<1x16x32xbf16> to vector<16x32xbf16>
    %104 = arith.truncf %101 : vector<32x128xf32> to vector<32x128xbf16>
    %cst_101 = arith.constant dense<0.000000e+00> : vector<16x128xf32>
    %105 = tpu.matmul %103, %104, %cst_101 {dimension_numbers = #tpu.dot_dimension_numbers<[1], [0], [0], [1], [0, 0, 1, 1], [], []>} : vector<16x32xbf16>, vector<32x128xbf16>, vector<16x128xf32> -> vector<16x128xf32>
    %106 = arith.addf %98, %105 : vector<16x128xf32>
    %107 = vector.broadcast %74 : vector<1x128xf32> to vector<16x128xf32>
    %108 = arith.addf %106, %107 : vector<16x128xf32>
    %c3_102 = arith.constant 3 : index
    %c0_103 = arith.constant 0 : index
    %c0_104 = arith.constant 0 : index
    %109 = vector.load %arg15[%c3_102, %c0_103, %c0_104] : memref<6x1x128xf32, #tpu.memory_space<vmem>>, vector<1x1x128xf32>
    %110 = vector.shape_cast %109 : vector<1x1x128xf32> to vector<1x128xf32>
    %111 = arith.truncf %108 : vector<16x128xf32> to vector<16x128xbf16>
    %c0_105 = arith.constant 0 : index
    %c0_106 = arith.constant 0 : index
    %c0_107 = arith.constant 0 : index
    %112 = vector.load %arg9[%c0_105, %c0_106, %c0_107] : memref<4x128x128xbf16, #tpu.memory_space<vmem>>, vector<1x128x128xbf16>
    %113 = vector.shape_cast %112 : vector<1x128x128xbf16> to vector<128x128xbf16>
    %cst_108 = arith.constant dense<0.000000e+00> : vector<16x128xf32>
    %114 = tpu.matmul %111, %113, %cst_108 {dimension_numbers = #tpu.dot_dimension_numbers<[1], [0], [0], [1], [0, 0, 1, 1], [], []>} : vector<16x128xbf16>, vector<128x128xbf16>, vector<16x128xf32> -> vector<16x128xf32>
    %c0_109 = arith.constant 0 : index
    %c0_110 = arith.constant 0 : index
    %c0_111 = arith.constant 0 : index
    %115 = vector.load %arg10[%c0_109, %c0_110, %c0_111] : memref<4x8x16xbf16, #tpu.memory_space<vmem>>, vector<1x8x16xbf16>
    %116 = vector.shape_cast %115 : vector<1x8x16xbf16> to vector<8x16xbf16>
    %117 = arith.truncf %114 : vector<16x128xf32> to vector<16x128xbf16>
    %cst_112 = arith.constant dense<0.000000e+00> : vector<8x128xf32>
    %118 = tpu.matmul %116, %117, %cst_112 {dimension_numbers = #tpu.dot_dimension_numbers<[1], [0], [0], [1], [0, 0, 1, 1], [], []>} : vector<8x16xbf16>, vector<16x128xbf16>, vector<8x128xf32> -> vector<8x128xf32>
    %c1_113 = arith.constant 1 : index
    %c0_114 = arith.constant 0 : index
    %c0_115 = arith.constant 0 : index
    %119 = vector.load %arg9[%c1_113, %c0_114, %c0_115] : memref<4x128x128xbf16, #tpu.memory_space<vmem>>, vector<1x128x128xbf16>
    %120 = vector.shape_cast %119 : vector<1x128x128xbf16> to vector<128x128xbf16>
    %cst_116 = arith.constant dense<0.000000e+00> : vector<16x128xf32>
    %121 = tpu.matmul %111, %120, %cst_116 {dimension_numbers = #tpu.dot_dimension_numbers<[1], [0], [0], [1], [0, 0, 1, 1], [], []>} : vector<16x128xbf16>, vector<128x128xbf16>, vector<16x128xf32> -> vector<16x128xf32>
    %c1_117 = arith.constant 1 : index
    %c0_118 = arith.constant 0 : index
    %c0_119 = arith.constant 0 : index
    %122 = vector.load %arg10[%c1_117, %c0_118, %c0_119] : memref<4x8x16xbf16, #tpu.memory_space<vmem>>, vector<1x8x16xbf16>
    %123 = vector.shape_cast %122 : vector<1x8x16xbf16> to vector<8x16xbf16>
    %124 = arith.truncf %121 : vector<16x128xf32> to vector<16x128xbf16>
    %cst_120 = arith.constant dense<0.000000e+00> : vector<8x128xf32>
    %125 = tpu.matmul %123, %124, %cst_120 {dimension_numbers = #tpu.dot_dimension_numbers<[1], [0], [0], [1], [0, 0, 1, 1], [], []>} : vector<8x16xbf16>, vector<16x128xbf16>, vector<8x128xf32> -> vector<8x128xf32>
    %126 = arith.addf %118, %125 : vector<8x128xf32>
    %c2_121 = arith.constant 2 : index
    %c0_122 = arith.constant 0 : index
    %c0_123 = arith.constant 0 : index
    %127 = vector.load %arg9[%c2_121, %c0_122, %c0_123] : memref<4x128x128xbf16, #tpu.memory_space<vmem>>, vector<1x128x128xbf16>
    %128 = vector.shape_cast %127 : vector<1x128x128xbf16> to vector<128x128xbf16>
    %cst_124 = arith.constant dense<0.000000e+00> : vector<16x128xf32>
    %129 = tpu.matmul %111, %128, %cst_124 {dimension_numbers = #tpu.dot_dimension_numbers<[1], [0], [0], [1], [0, 0, 1, 1], [], []>} : vector<16x128xbf16>, vector<128x128xbf16>, vector<16x128xf32> -> vector<16x128xf32>
    %c2_125 = arith.constant 2 : index
    %c0_126 = arith.constant 0 : index
    %c0_127 = arith.constant 0 : index
    %130 = vector.load %arg10[%c2_125, %c0_126, %c0_127] : memref<4x8x16xbf16, #tpu.memory_space<vmem>>, vector<1x8x16xbf16>
    %131 = vector.shape_cast %130 : vector<1x8x16xbf16> to vector<8x16xbf16>
    %132 = arith.truncf %129 : vector<16x128xf32> to vector<16x128xbf16>
    %cst_128 = arith.constant dense<0.000000e+00> : vector<8x128xf32>
    %133 = tpu.matmul %131, %132, %cst_128 {dimension_numbers = #tpu.dot_dimension_numbers<[1], [0], [0], [1], [0, 0, 1, 1], [], []>} : vector<8x16xbf16>, vector<16x128xbf16>, vector<8x128xf32> -> vector<8x128xf32>
    %134 = arith.addf %126, %133 : vector<8x128xf32>
    %c3_129 = arith.constant 3 : index
    %c0_130 = arith.constant 0 : index
    %c0_131 = arith.constant 0 : index
    %135 = vector.load %arg9[%c3_129, %c0_130, %c0_131] : memref<4x128x128xbf16, #tpu.memory_space<vmem>>, vector<1x128x128xbf16>
    %136 = vector.shape_cast %135 : vector<1x128x128xbf16> to vector<128x128xbf16>
    %cst_132 = arith.constant dense<0.000000e+00> : vector<16x128xf32>
    %137 = tpu.matmul %111, %136, %cst_132 {dimension_numbers = #tpu.dot_dimension_numbers<[1], [0], [0], [1], [0, 0, 1, 1], [], []>} : vector<16x128xbf16>, vector<128x128xbf16>, vector<16x128xf32> -> vector<16x128xf32>
    %c3_133 = arith.constant 3 : index
    %c0_134 = arith.constant 0 : index
    %c0_135 = arith.constant 0 : index
    %138 = vector.load %arg10[%c3_133, %c0_134, %c0_135] : memref<4x8x16xbf16, #tpu.memory_space<vmem>>, vector<1x8x16xbf16>
    %139 = vector.shape_cast %138 : vector<1x8x16xbf16> to vector<8x16xbf16>
    %140 = arith.truncf %137 : vector<16x128xf32> to vector<16x128xbf16>
    %cst_136 = arith.constant dense<0.000000e+00> : vector<8x128xf32>
    %141 = tpu.matmul %139, %140, %cst_136 {dimension_numbers = #tpu.dot_dimension_numbers<[1], [0], [0], [1], [0, 0, 1, 1], [], []>} : vector<8x16xbf16>, vector<16x128xbf16>, vector<8x128xf32> -> vector<8x128xf32>
    %142 = arith.addf %134, %141 : vector<8x128xf32>
    %143 = vector.broadcast %110 : vector<1x128xf32> to vector<8x128xf32>
    %144 = arith.addf %142, %143 : vector<8x128xf32>
    %c4 = arith.constant 4 : index
    %c0_137 = arith.constant 0 : index
    %c0_138 = arith.constant 0 : index
    %145 = vector.load %arg15[%c4, %c0_137, %c0_138] : memref<6x1x128xf32, #tpu.memory_space<vmem>>, vector<1x1x128xf32>
    %146 = vector.shape_cast %145 : vector<1x1x128xf32> to vector<1x128xf32>
    %147 = arith.truncf %144 : vector<8x128xf32> to vector<8x128xbf16>
    %c0_139 = arith.constant 0 : index
    %c0_140 = arith.constant 0 : index
    %c0_141 = arith.constant 0 : index
    %148 = vector.load %arg11[%c0_139, %c0_140, %c0_141] : memref<4x128x128xbf16, #tpu.memory_space<vmem>>, vector<1x128x128xbf16>
    %149 = vector.shape_cast %148 : vector<1x128x128xbf16> to vector<128x128xbf16>
    %cst_142 = arith.constant dense<0.000000e+00> : vector<8x128xf32>
    %150 = tpu.matmul %147, %149, %cst_142 {dimension_numbers = #tpu.dot_dimension_numbers<[1], [0], [0], [1], [0, 0, 1, 1], [], []>} : vector<8x128xbf16>, vector<128x128xbf16>, vector<8x128xf32> -> vector<8x128xf32>
    %c0_143 = arith.constant 0 : index
    %c0_144 = arith.constant 0 : index
    %c0_145 = arith.constant 0 : index
    %151 = vector.load %arg12[%c0_143, %c0_144, %c0_145] : memref<4x8x8xbf16, #tpu.memory_space<vmem>>, vector<1x8x8xbf16>
    %152 = vector.shape_cast %151 : vector<1x8x8xbf16> to vector<8x8xbf16>
    %153 = arith.truncf %150 : vector<8x128xf32> to vector<8x128xbf16>
    %cst_146 = arith.constant dense<0.000000e+00> : vector<8x128xf32>
    %154 = tpu.matmul %152, %153, %cst_146 {dimension_numbers = #tpu.dot_dimension_numbers<[1], [0], [0], [1], [0, 0, 1, 1], [], []>} : vector<8x8xbf16>, vector<8x128xbf16>, vector<8x128xf32> -> vector<8x128xf32>
    %c1_147 = arith.constant 1 : index
    %c0_148 = arith.constant 0 : index
    %c0_149 = arith.constant 0 : index
    %155 = vector.load %arg11[%c1_147, %c0_148, %c0_149] : memref<4x128x128xbf16, #tpu.memory_space<vmem>>, vector<1x128x128xbf16>
    %156 = vector.shape_cast %155 : vector<1x128x128xbf16> to vector<128x128xbf16>
    %cst_150 = arith.constant dense<0.000000e+00> : vector<8x128xf32>
    %157 = tpu.matmul %147, %156, %cst_150 {dimension_numbers = #tpu.dot_dimension_numbers<[1], [0], [0], [1], [0, 0, 1, 1], [], []>} : vector<8x128xbf16>, vector<128x128xbf16>, vector<8x128xf32> -> vector<8x128xf32>
    %c1_151 = arith.constant 1 : index
    %c0_152 = arith.constant 0 : index
    %c0_153 = arith.constant 0 : index
    %158 = vector.load %arg12[%c1_151, %c0_152, %c0_153] : memref<4x8x8xbf16, #tpu.memory_space<vmem>>, vector<1x8x8xbf16>
    %159 = vector.shape_cast %158 : vector<1x8x8xbf16> to vector<8x8xbf16>
    %160 = arith.truncf %157 : vector<8x128xf32> to vector<8x128xbf16>
    %cst_154 = arith.constant dense<0.000000e+00> : vector<8x128xf32>
    %161 = tpu.matmul %159, %160, %cst_154 {dimension_numbers = #tpu.dot_dimension_numbers<[1], [0], [0], [1], [0, 0, 1, 1], [], []>} : vector<8x8xbf16>, vector<8x128xbf16>, vector<8x128xf32> -> vector<8x128xf32>
    %162 = arith.addf %154, %161 : vector<8x128xf32>
    %c2_155 = arith.constant 2 : index
    %c0_156 = arith.constant 0 : index
    %c0_157 = arith.constant 0 : index
    %163 = vector.load %arg11[%c2_155, %c0_156, %c0_157] : memref<4x128x128xbf16, #tpu.memory_space<vmem>>, vector<1x128x128xbf16>
    %164 = vector.shape_cast %163 : vector<1x128x128xbf16> to vector<128x128xbf16>
    %cst_158 = arith.constant dense<0.000000e+00> : vector<8x128xf32>
    %165 = tpu.matmul %147, %164, %cst_158 {dimension_numbers = #tpu.dot_dimension_numbers<[1], [0], [0], [1], [0, 0, 1, 1], [], []>} : vector<8x128xbf16>, vector<128x128xbf16>, vector<8x128xf32> -> vector<8x128xf32>
    %c2_159 = arith.constant 2 : index
    %c0_160 = arith.constant 0 : index
    %c0_161 = arith.constant 0 : index
    %166 = vector.load %arg12[%c2_159, %c0_160, %c0_161] : memref<4x8x8xbf16, #tpu.memory_space<vmem>>, vector<1x8x8xbf16>
    %167 = vector.shape_cast %166 : vector<1x8x8xbf16> to vector<8x8xbf16>
    %168 = arith.truncf %165 : vector<8x128xf32> to vector<8x128xbf16>
    %cst_162 = arith.constant dense<0.000000e+00> : vector<8x128xf32>
    %169 = tpu.matmul %167, %168, %cst_162 {dimension_numbers = #tpu.dot_dimension_numbers<[1], [0], [0], [1], [0, 0, 1, 1], [], []>} : vector<8x8xbf16>, vector<8x128xbf16>, vector<8x128xf32> -> vector<8x128xf32>
    %170 = arith.addf %162, %169 : vector<8x128xf32>
    %c3_163 = arith.constant 3 : index
    %c0_164 = arith.constant 0 : index
    %c0_165 = arith.constant 0 : index
    %171 = vector.load %arg11[%c3_163, %c0_164, %c0_165] : memref<4x128x128xbf16, #tpu.memory_space<vmem>>, vector<1x128x128xbf16>
    %172 = vector.shape_cast %171 : vector<1x128x128xbf16> to vector<128x128xbf16>
    %cst_166 = arith.constant dense<0.000000e+00> : vector<8x128xf32>
    %173 = tpu.matmul %147, %172, %cst_166 {dimension_numbers = #tpu.dot_dimension_numbers<[1], [0], [0], [1], [0, 0, 1, 1], [], []>} : vector<8x128xbf16>, vector<128x128xbf16>, vector<8x128xf32> -> vector<8x128xf32>
    %c3_167 = arith.constant 3 : index
    %c0_168 = arith.constant 0 : index
    %c0_169 = arith.constant 0 : index
    %174 = vector.load %arg12[%c3_167, %c0_168, %c0_169] : memref<4x8x8xbf16, #tpu.memory_space<vmem>>, vector<1x8x8xbf16>
    %175 = vector.shape_cast %174 : vector<1x8x8xbf16> to vector<8x8xbf16>
    %176 = arith.truncf %173 : vector<8x128xf32> to vector<8x128xbf16>
    %cst_170 = arith.constant dense<0.000000e+00> : vector<8x128xf32>
    %177 = tpu.matmul %175, %176, %cst_170 {dimension_numbers = #tpu.dot_dimension_numbers<[1], [0], [0], [1], [0, 0, 1, 1], [], []>} : vector<8x8xbf16>, vector<8x128xbf16>, vector<8x128xf32> -> vector<8x128xf32>
    %178 = arith.addf %170, %177 : vector<8x128xf32>
    %179 = vector.broadcast %146 : vector<1x128xf32> to vector<8x128xf32>
    %180 = arith.addf %178, %179 : vector<8x128xf32>
    %c5 = arith.constant 5 : index
    %c0_171 = arith.constant 0 : index
    %c0_172 = arith.constant 0 : index
    %181 = vector.load %arg15[%c5, %c0_171, %c0_172] : memref<6x1x128xf32, #tpu.memory_space<vmem>>, vector<1x1x128xf32>
    %182 = vector.shape_cast %181 : vector<1x1x128xf32> to vector<1x128xf32>
    %183 = arith.truncf %180 : vector<8x128xf32> to vector<8x128xbf16>
    %c0_173 = arith.constant 0 : index
    %c0_174 = arith.constant 0 : index
    %c0_175 = arith.constant 0 : index
    %184 = vector.load %arg13[%c0_173, %c0_174, %c0_175] : memref<4x128x128xbf16, #tpu.memory_space<vmem>>, vector<1x128x128xbf16>
    %185 = vector.shape_cast %184 : vector<1x128x128xbf16> to vector<128x128xbf16>
    %cst_176 = arith.constant dense<0.000000e+00> : vector<8x128xf32>
    %186 = tpu.matmul %183, %185, %cst_176 {dimension_numbers = #tpu.dot_dimension_numbers<[1], [0], [0], [1], [0, 0, 1, 1], [], []>} : vector<8x128xbf16>, vector<128x128xbf16>, vector<8x128xf32> -> vector<8x128xf32>
    %c0_177 = arith.constant 0 : index
    %c0_178 = arith.constant 0 : index
    %c0_179 = arith.constant 0 : index
    %187 = vector.load %arg14[%c0_177, %c0_178, %c0_179] : memref<4x8x8xbf16, #tpu.memory_space<vmem>>, vector<1x8x8xbf16>
    %188 = vector.shape_cast %187 : vector<1x8x8xbf16> to vector<8x8xbf16>
    %189 = arith.truncf %186 : vector<8x128xf32> to vector<8x128xbf16>
    %cst_180 = arith.constant dense<0.000000e+00> : vector<8x128xf32>
    %190 = tpu.matmul %188, %189, %cst_180 {dimension_numbers = #tpu.dot_dimension_numbers<[1], [0], [0], [1], [0, 0, 1, 1], [], []>} : vector<8x8xbf16>, vector<8x128xbf16>, vector<8x128xf32> -> vector<8x128xf32>
    %c1_181 = arith.constant 1 : index
    %c0_182 = arith.constant 0 : index
    %c0_183 = arith.constant 0 : index
    %191 = vector.load %arg13[%c1_181, %c0_182, %c0_183] : memref<4x128x128xbf16, #tpu.memory_space<vmem>>, vector<1x128x128xbf16>
    %192 = vector.shape_cast %191 : vector<1x128x128xbf16> to vector<128x128xbf16>
    %cst_184 = arith.constant dense<0.000000e+00> : vector<8x128xf32>
    %193 = tpu.matmul %183, %192, %cst_184 {dimension_numbers = #tpu.dot_dimension_numbers<[1], [0], [0], [1], [0, 0, 1, 1], [], []>} : vector<8x128xbf16>, vector<128x128xbf16>, vector<8x128xf32> -> vector<8x128xf32>
    %c1_185 = arith.constant 1 : index
    %c0_186 = arith.constant 0 : index
    %c0_187 = arith.constant 0 : index
    %194 = vector.load %arg14[%c1_185, %c0_186, %c0_187] : memref<4x8x8xbf16, #tpu.memory_space<vmem>>, vector<1x8x8xbf16>
    %195 = vector.shape_cast %194 : vector<1x8x8xbf16> to vector<8x8xbf16>
    %196 = arith.truncf %193 : vector<8x128xf32> to vector<8x128xbf16>
    %cst_188 = arith.constant dense<0.000000e+00> : vector<8x128xf32>
    %197 = tpu.matmul %195, %196, %cst_188 {dimension_numbers = #tpu.dot_dimension_numbers<[1], [0], [0], [1], [0, 0, 1, 1], [], []>} : vector<8x8xbf16>, vector<8x128xbf16>, vector<8x128xf32> -> vector<8x128xf32>
    %198 = arith.addf %190, %197 : vector<8x128xf32>
    %c2_189 = arith.constant 2 : index
    %c0_190 = arith.constant 0 : index
    %c0_191 = arith.constant 0 : index
    %199 = vector.load %arg13[%c2_189, %c0_190, %c0_191] : memref<4x128x128xbf16, #tpu.memory_space<vmem>>, vector<1x128x128xbf16>
    %200 = vector.shape_cast %199 : vector<1x128x128xbf16> to vector<128x128xbf16>
    %cst_192 = arith.constant dense<0.000000e+00> : vector<8x128xf32>
    %201 = tpu.matmul %183, %200, %cst_192 {dimension_numbers = #tpu.dot_dimension_numbers<[1], [0], [0], [1], [0, 0, 1, 1], [], []>} : vector<8x128xbf16>, vector<128x128xbf16>, vector<8x128xf32> -> vector<8x128xf32>
    %c2_193 = arith.constant 2 : index
    %c0_194 = arith.constant 0 : index
    %c0_195 = arith.constant 0 : index
    %202 = vector.load %arg14[%c2_193, %c0_194, %c0_195] : memref<4x8x8xbf16, #tpu.memory_space<vmem>>, vector<1x8x8xbf16>
    %203 = vector.shape_cast %202 : vector<1x8x8xbf16> to vector<8x8xbf16>
    %204 = arith.truncf %201 : vector<8x128xf32> to vector<8x128xbf16>
    %cst_196 = arith.constant dense<0.000000e+00> : vector<8x128xf32>
    %205 = tpu.matmul %203, %204, %cst_196 {dimension_numbers = #tpu.dot_dimension_numbers<[1], [0], [0], [1], [0, 0, 1, 1], [], []>} : vector<8x8xbf16>, vector<8x128xbf16>, vector<8x128xf32> -> vector<8x128xf32>
    %206 = arith.addf %198, %205 : vector<8x128xf32>
    %c3_197 = arith.constant 3 : index
    %c0_198 = arith.constant 0 : index
    %c0_199 = arith.constant 0 : index
    %207 = vector.load %arg13[%c3_197, %c0_198, %c0_199] : memref<4x128x128xbf16, #tpu.memory_space<vmem>>, vector<1x128x128xbf16>
    %208 = vector.shape_cast %207 : vector<1x128x128xbf16> to vector<128x128xbf16>
    %cst_200 = arith.constant dense<0.000000e+00> : vector<8x128xf32>
    %209 = tpu.matmul %183, %208, %cst_200 {dimension_numbers = #tpu.dot_dimension_numbers<[1], [0], [0], [1], [0, 0, 1, 1], [], []>} : vector<8x128xbf16>, vector<128x128xbf16>, vector<8x128xf32> -> vector<8x128xf32>
    %c3_201 = arith.constant 3 : index
    %c0_202 = arith.constant 0 : index
    %c0_203 = arith.constant 0 : index
    %210 = vector.load %arg14[%c3_201, %c0_202, %c0_203] : memref<4x8x8xbf16, #tpu.memory_space<vmem>>, vector<1x8x8xbf16>
    %211 = vector.shape_cast %210 : vector<1x8x8xbf16> to vector<8x8xbf16>
    %212 = arith.truncf %209 : vector<8x128xf32> to vector<8x128xbf16>
    %cst_204 = arith.constant dense<0.000000e+00> : vector<8x128xf32>
    %213 = tpu.matmul %211, %212, %cst_204 {dimension_numbers = #tpu.dot_dimension_numbers<[1], [0], [0], [1], [0, 0, 1, 1], [], []>} : vector<8x8xbf16>, vector<8x128xbf16>, vector<8x128xf32> -> vector<8x128xf32>
    %214 = arith.addf %206, %213 : vector<8x128xf32>
    %215 = vector.broadcast %182 : vector<1x128xf32> to vector<8x128xf32>
    %216 = arith.addf %214, %215 : vector<8x128xf32>
    %217 = vector.extract_strided_slice %216 {offsets = [0, 0], sizes = [2, 128], strides = [1, 1]} : vector<8x128xf32> to vector<2x128xf32>
    %c0_205 = arith.constant 0 : index
    %c0_206 = arith.constant 0 : index
    %218 = vector.load %arg2[%c0_205, %c0_206] : memref<2x32xf32, #tpu.memory_space<vmem>>, vector<2x32xf32>
    %c0_207 = arith.constant 0 : index
    %c0_208 = arith.constant 0 : index
    %219 = vector.load %arg16[%c0_207, %c0_208] : memref<128x384xf32, #tpu.memory_space<vmem>>, vector<128x384xf32>
    %cst_209 = arith.constant dense<0.000000e+00> : vector<2x384xf32>
    %220 = tpu.matmul %217, %219, %cst_209 {dimension_numbers = #tpu.dot_dimension_numbers<[1], [0], [0], [1], [0, 0, 1, 1], [], []>} : vector<2x128xf32>, vector<128x384xf32>, vector<2x384xf32> -> vector<2x384xf32>
    %c0_210 = arith.constant 0 : index
    %c0_211 = arith.constant 0 : index
    %221 = vector.load %arg18[%c0_210, %c0_211] : memref<1x384xf32, #tpu.memory_space<vmem>>, vector<1x384xf32>
    %222 = vector.broadcast %221 : vector<1x384xf32> to vector<2x384xf32>
    %223 = arith.addf %220, %222 : vector<2x384xf32>
    %c0_212 = arith.constant 0 : index
    %c0_213 = arith.constant 0 : index
    %224 = vector.load %arg17[%c0_212, %c0_213] : memref<32x384xf32, #tpu.memory_space<vmem>>, vector<32x384xf32>
    %cst_214 = arith.constant dense<0.000000e+00> : vector<2x384xf32>
    %225 = tpu.matmul %218, %224, %cst_214 {dimension_numbers = #tpu.dot_dimension_numbers<[1], [0], [0], [1], [0, 0, 1, 1], [], []>} : vector<2x32xf32>, vector<32x384xf32>, vector<2x384xf32> -> vector<2x384xf32>
    %c0_215 = arith.constant 0 : index
    %c0_216 = arith.constant 0 : index
    %226 = vector.load %arg19[%c0_215, %c0_216] : memref<1x384xf32, #tpu.memory_space<vmem>>, vector<1x384xf32>
    %227 = vector.broadcast %226 : vector<1x384xf32> to vector<2x384xf32>
    %228 = arith.addf %225, %227 : vector<2x384xf32>
    %229 = vector.extract_strided_slice %223 {offsets = [0, 0], sizes = [2, 32], strides = [1, 1]} : vector<2x384xf32> to vector<2x32xf32>
    %230 = vector.extract_strided_slice %228 {offsets = [0, 0], sizes = [2, 32], strides = [1, 1]} : vector<2x384xf32> to vector<2x32xf32>
    %231 = arith.addf %229, %230 : vector<2x32xf32>
    %232 = arith.negf %231 : vector<2x32xf32>
    %233 = math.exp %232 : vector<2x32xf32>
    %cst_217 = arith.constant 1.000000e+00 : f32
    %234 = vector.broadcast %cst_217 : f32 to vector<2x32xf32>
    %235 = arith.addf %234, %233 : vector<2x32xf32>
    %236 = arith.divf %234, %235 : vector<2x32xf32>
    %237 = vector.extract_strided_slice %223 {offsets = [0, 128], sizes = [2, 32], strides = [1, 1]} : vector<2x384xf32> to vector<2x32xf32>
    %238 = vector.extract_strided_slice %228 {offsets = [0, 128], sizes = [2, 32], strides = [1, 1]} : vector<2x384xf32> to vector<2x32xf32>
    %239 = arith.addf %237, %238 : vector<2x32xf32>
    %240 = arith.negf %239 : vector<2x32xf32>
    %241 = math.exp %240 : vector<2x32xf32>
    %cst_218 = arith.constant 1.000000e+00 : f32
    %242 = vector.broadcast %cst_218 : f32 to vector<2x32xf32>
    %243 = arith.addf %242, %241 : vector<2x32xf32>
    %244 = arith.divf %242, %243 : vector<2x32xf32>
    %245 = vector.extract_strided_slice %223 {offsets = [0, 256], sizes = [2, 32], strides = [1, 1]} : vector<2x384xf32> to vector<2x32xf32>
    %246 = vector.extract_strided_slice %228 {offsets = [0, 256], sizes = [2, 32], strides = [1, 1]} : vector<2x384xf32> to vector<2x32xf32>
    %247 = arith.mulf %236, %246 : vector<2x32xf32>
    %248 = arith.addf %245, %247 : vector<2x32xf32>
    %249 = math.tanh %248 : vector<2x32xf32>
    %cst_219 = arith.constant 1.000000e+00 : f32
    %250 = vector.broadcast %cst_219 : f32 to vector<2x32xf32>
    %251 = arith.subf %250, %244 : vector<2x32xf32>
    %252 = arith.mulf %251, %249 : vector<2x32xf32>
    %253 = arith.mulf %244, %218 : vector<2x32xf32>
    %254 = arith.addf %252, %253 : vector<2x32xf32>
    %c0_220 = arith.constant 0 : index
    %c0_221 = arith.constant 0 : index
    %255 = vector.load %arg23[%c0_220, %c0_221] : memref<2x32xf32, #tpu.memory_space<vmem>>, vector<2x32xf32>
    tpu.vector_store %arg23[%c0_220, %c0_221], %254 {strides = array<i32>} : memref<2x32xf32, #tpu.memory_space<vmem>>, vector<2x32xf32>,
    %256 = arith.truncf %254 : vector<2x32xf32> to vector<2x32xbf16>
    %c0_222 = arith.constant 0 : index
    %c0_223 = arith.constant 0 : index
    %257 = vector.load %arg20[%c0_222, %c0_223] : memref<32x4096xbf16, #tpu.memory_space<vmem>>, vector<32x4096xbf16>
    %cst_224 = arith.constant dense<0.000000e+00> : vector<2x4096xf32>
    %258 = tpu.matmul %256, %257, %cst_224 {dimension_numbers = #tpu.dot_dimension_numbers<[1], [0], [0], [1], [0, 0, 1, 1], [], []>} : vector<2x32xbf16>, vector<32x4096xbf16>, vector<2x4096xf32> -> vector<2x4096xf32>
    %c0_225 = arith.constant 0 : index
    %c0_226 = arith.constant 0 : index
    %259 = vector.load %arg21[%c0_225, %c0_226] : memref<1x4096xf32, #tpu.memory_space<vmem>>, vector<1x4096xf32>
    %260 = vector.broadcast %259 : vector<1x4096xf32> to vector<2x4096xf32>
    %261 = arith.addf %258, %260 : vector<2x4096xf32>
    %c0_227 = arith.constant 0 : index
    %c0_228 = arith.constant 0 : index
    %262 = vector.load %arg22[%c0_227, %c0_228] : memref<2x4096xf32, #tpu.memory_space<vmem>>, vector<2x4096xf32>
    tpu.vector_store %arg22[%c0_227, %c0_228], %261 {strides = array<i32>} : memref<2x4096xf32, #tpu.memory_space<vmem>>, vector<2x4096xf32>,
    return
  }
  func.func @transform_0(%arg0: i32) -> (i32, i32) {
    %c0_i32 = arith.constant 0 : i32
    %c0_i32_0 = arith.constant 0 : i32
    %c0_i32_1 = arith.constant 0 : i32
    return %c0_i32, %c0_i32_0 : i32, i32
  }
  func.func @transform_1(%arg0: i32) -> (i32, i32) {
    %c0_i32 = arith.constant 0 : i32
    %c0_i32_0 = arith.constant 0 : i32
    %c0_i32_1 = arith.constant 0 : i32
    return %c0_i32, %c0_i32_0 : i32, i32
  }
  func.func @transform_2(%arg0: i32) -> (i32, i32, i32) {
    %c0_i32 = arith.constant 0 : i32
    %c0_i32_0 = arith.constant 0 : i32
    %c0_i32_1 = arith.constant 0 : i32
    %c0_i32_2 = arith.constant 0 : i32
    return %c0_i32, %c0_i32_0, %c0_i32_1 : i32, i32, i32
  }
  func.func @transform_3(%arg0: i32) -> (i32, i32, i32) {
    %c0_i32 = arith.constant 0 : i32
    %c0_i32_0 = arith.constant 0 : i32
    %c0_i32_1 = arith.constant 0 : i32
    %c0_i32_2 = arith.constant 0 : i32
    return %c0_i32, %c0_i32_0, %c0_i32_1 : i32, i32, i32
  }
  func.func @transform_4(%arg0: i32) -> (i32, i32, i32) {
    %c0_i32 = arith.constant 0 : i32
    %c0_i32_0 = arith.constant 0 : i32
    %c0_i32_1 = arith.constant 0 : i32
    %c0_i32_2 = arith.constant 0 : i32
    return %c0_i32, %c0_i32_0, %c0_i32_1 : i32, i32, i32
  }
  func.func @transform_5(%arg0: i32) -> (i32, i32, i32) {
    %c0_i32 = arith.constant 0 : i32
    %c0_i32_0 = arith.constant 0 : i32
    %c0_i32_1 = arith.constant 0 : i32
    %c0_i32_2 = arith.constant 0 : i32
    return %c0_i32, %c0_i32_0, %c0_i32_1 : i32, i32, i32
  }
  func.func @transform_6(%arg0: i32) -> (i32, i32, i32) {
    %c0_i32 = arith.constant 0 : i32
    %c0_i32_0 = arith.constant 0 : i32
    %c0_i32_1 = arith.constant 0 : i32
    %c0_i32_2 = arith.constant 0 : i32
    return %c0_i32, %c0_i32_0, %c0_i32_1 : i32, i32, i32
  }
  func.func @transform_7(%arg0: i32) -> (i32, i32, i32) {
    %c0_i32 = arith.constant 0 : i32
    %c0_i32_0 = arith.constant 0 : i32
    %c0_i32_1 = arith.constant 0 : i32
    %c0_i32_2 = arith.constant 0 : i32
    return %c0_i32, %c0_i32_0, %c0_i32_1 : i32, i32, i32
  }
  func.func @transform_8(%arg0: i32) -> (i32, i32, i32) {
    %c0_i32 = arith.constant 0 : i32
    %c0_i32_0 = arith.constant 0 : i32
    %c0_i32_1 = arith.constant 0 : i32
    %c0_i32_2 = arith.constant 0 : i32
    return %c0_i32, %c0_i32_0, %c0_i32_1 : i32, i32, i32
  }
  func.func @transform_9(%arg0: i32) -> (i32, i32, i32) {
    %c0_i32 = arith.constant 0 : i32
    %c0_i32_0 = arith.constant 0 : i32
    %c0_i32_1 = arith.constant 0 : i32
    %c0_i32_2 = arith.constant 0 : i32
    return %c0_i32, %c0_i32_0, %c0_i32_1 : i32, i32, i32
  }
  func.func @transform_10(%arg0: i32) -> (i32, i32, i32) {
    %c0_i32 = arith.constant 0 : i32
    %c0_i32_0 = arith.constant 0 : i32
    %c0_i32_1 = arith.constant 0 : i32
    %c0_i32_2 = arith.constant 0 : i32
    return %c0_i32, %c0_i32_0, %c0_i32_1 : i32, i32, i32
  }
  func.func @transform_11(%arg0: i32) -> (i32, i32, i32) {
    %c0_i32 = arith.constant 0 : i32
    %c0_i32_0 = arith.constant 0 : i32
    %c0_i32_1 = arith.constant 0 : i32
    %c0_i32_2 = arith.constant 0 : i32
    return %c0_i32, %c0_i32_0, %c0_i32_1 : i32, i32, i32
  }
  func.func @transform_12(%arg0: i32) -> (i32, i32, i32) {
    %c0_i32 = arith.constant 0 : i32
    %c0_i32_0 = arith.constant 0 : i32
    %c0_i32_1 = arith.constant 0 : i32
    %c0_i32_2 = arith.constant 0 : i32
    return %c0_i32, %c0_i32_0, %c0_i32_1 : i32, i32, i32
  }
  func.func @transform_13(%arg0: i32) -> (i32, i32, i32) {
    %c0_i32 = arith.constant 0 : i32
    %c0_i32_0 = arith.constant 0 : i32
    %c0_i32_1 = arith.constant 0 : i32
    %c0_i32_2 = arith.constant 0 : i32
    return %c0_i32, %c0_i32_0, %c0_i32_1 : i32, i32, i32
  }
  func.func @transform_14(%arg0: i32) -> (i32, i32, i32) {
    %c0_i32 = arith.constant 0 : i32
    %c0_i32_0 = arith.constant 0 : i32
    %c0_i32_1 = arith.constant 0 : i32
    %c0_i32_2 = arith.constant 0 : i32
    return %c0_i32, %c0_i32_0, %c0_i32_1 : i32, i32, i32
  }
  func.func @transform_15(%arg0: i32) -> (i32, i32) {
    %c0_i32 = arith.constant 0 : i32
    %c0_i32_0 = arith.constant 0 : i32
    %c0_i32_1 = arith.constant 0 : i32
    return %c0_i32, %c0_i32_0 : i32, i32
  }
  func.func @transform_16(%arg0: i32) -> (i32, i32) {
    %c0_i32 = arith.constant 0 : i32
    %c0_i32_0 = arith.constant 0 : i32
    %c0_i32_1 = arith.constant 0 : i32
    return %c0_i32, %c0_i32_0 : i32, i32
  }
  func.func @transform_17(%arg0: i32) -> (i32, i32) {
    %c0_i32 = arith.constant 0 : i32
    %c0_i32_0 = arith.constant 0 : i32
    %c0_i32_1 = arith.constant 0 : i32
    return %c0_i32, %c0_i32_0 : i32, i32
  }
  func.func @transform_18(%arg0: i32) -> (i32, i32) {
    %c0_i32 = arith.constant 0 : i32
    %c0_i32_0 = arith.constant 0 : i32
    %c0_i32_1 = arith.constant 0 : i32
    return %c0_i32, %c0_i32_0 : i32, i32
  }
  func.func @transform_19(%arg0: i32) -> (i32, i32) {
    %c0_i32 = arith.constant 0 : i32
    %c0_i32_0 = arith.constant 0 : i32
    %c0_i32_1 = arith.constant 0 : i32
    return %c0_i32, %c0_i32_0 : i32, i32
  }
  func.func @transform_20(%arg0: i32) -> (i32, i32) {
    %c0_i32 = arith.constant 0 : i32
    %c0_i32_0 = arith.constant 0 : i32
    %c0_i32_1 = arith.constant 0 : i32
    return %c0_i32, %c0_i32_0 : i32, i32
  }
  func.func @transform_21(%arg0: i32) -> (i32, i32) {
    %c0_i32 = arith.constant 0 : i32
    %c0_i32_0 = arith.constant 0 : i32
    %c0_i32_1 = arith.constant 0 : i32
    return %c0_i32, %c0_i32_0 : i32, i32
  }
  func.func @transform_22(%arg0: i32) -> (i32, i32) {
    %c0_i32 = arith.constant 0 : i32
    %c0_i32_0 = arith.constant 0 : i32
    %c0_i32_1 = arith.constant 0 : i32
    return %c0_i32, %c0_i32_0 : i32, i32
  }
}

</mosaic_0001>

<llo_original>
// kernel: encoder_crnn_forward.1
$region0: #{encoder_crnn_forward.1}
  #allocation0 [shape = 'u32[]', space=smem, size = 0x4, offset = 0x4, fixed_abs, tag = 'smem constant byte address 0x4 - core index']
  #allocation1 [shape = 'u32[144,128]{1,0:T(1,128)}', space=vmem, size = 0x12000, scoped, tag = 'internal scratch']
  %s0 = inlined_call_operand.hbm [shape: f32[128,64], index: 0, kind: input, shape index: {}]
  %s1 = inlined_call_operand.vmem [shape: f32[2,32], index: 1, kind: input, shape index: {}]
  %s2 = inlined_call_operand.hbm [shape: bf16[4,64,128], index: 2, kind: input, shape index: {}]
  %s3 = inlined_call_operand.hbm [shape: bf16[4,64,128], index: 3, kind: input, shape index: {}]
  %s4 = inlined_call_operand.hbm [shape: bf16[4,128,128], index: 4, kind: input, shape index: {}]
  %s5 = inlined_call_operand.hbm [shape: bf16[4,32,64], index: 5, kind: input, shape index: {}]
  %s6 = inlined_call_operand.hbm [shape: bf16[4,128,128], index: 6, kind: input, shape index: {}]
  %s7 = inlined_call_operand.hbm [shape: bf16[4,16,32], index: 7, kind: input, shape index: {}]
  %s8 = inlined_call_operand.hbm [shape: bf16[4,128,128], index: 8, kind: input, shape index: {}]
  %s9 = inlined_call_operand.hbm [shape: bf16[4,8,16], index: 9, kind: input, shape index: {}]
  %s10 = inlined_call_operand.hbm [shape: bf16[4,128,128], index: 10, kind: input, shape index: {}]
  %s11 = inlined_call_operand.hbm [shape: bf16[4,8,8], index: 11, kind: input, shape index: {}]
  %s12 = inlined_call_operand.hbm [shape: bf16[4,128,128], index: 12, kind: input, shape index: {}]
  %s13 = inlined_call_operand.hbm [shape: bf16[4,8,8], index: 13, kind: input, shape index: {}]
  %s14 = inlined_call_operand.vmem [shape: f32[6,1,128], index: 14, kind: input, shape index: {}]
  %s15 = inlined_call_operand.hbm [shape: f32[128,384], index: 15, kind: input, shape index: {}]
  %s16 = inlined_call_operand.hbm [shape: f32[32,384], index: 16, kind: input, shape index: {}]
  %s17 = inlined_call_operand.hbm [shape: f32[1,384], index: 17, kind: input, shape index: {}]
  %s18 = inlined_call_operand.hbm [shape: f32[1,384], index: 18, kind: input, shape index: {}]
  %s19 = inlined_call_operand.hbm [shape: bf16[32,4096], index: 19, kind: input, shape index: {}]
  %s20 = inlined_call_operand.vmem [shape: f32[1,4096], index: 20, kind: input, shape index: {}]
  %s21 = inlined_call_operand.vmem [shape: f32[2,4096], index: 21, kind: output, shape index: {0}]
  %s22 = inlined_call_operand.hbm [shape: f32[2,32], index: 22, kind: output, shape index: {1}]
  %23 = xla_tuple %s21, %s22
  %s24 = sld [smem:[#allocation0]]
  $region174: #{encoder_crnn_forward.1} parent=0
    _
  %s26 = ssub.s32 1, %s24
  %s27 = scalar_select 0, %s26, %s24
  $region1: #{encoder_crnn_forward.1} parent=0
    #allocation2 [shape = 'u8[65536]{0}', space=vmem, size = 0x10000, scoped, tag = 'input window, operand 0, single buffered']
    #allocation3 [shape = 's32[1]{0}', space=sflag, size = 0x4, scoped, tag = 'scoped memory for encoder_crnn_forward.1']
    #allocation4 [shape = 's32[1]{0}', space=sflag, size = 0x4, scoped, tag = 'scoped memory for encoder_crnn_forward.1']
    #allocation5 [shape = 'u8[65536]{0}', space=vmem, size = 0x10000, scoped, tag = 'input window, operand 2, single buffered']
    #allocation6 [shape = 's32[1]{0}', space=sflag, size = 0x4, scoped, tag = 'scoped memory for encoder_crnn_forward.1']
    #allocation7 [shape = 'u8[65536]{0}', space=vmem, size = 0x10000, scoped, tag = 'input window, operand 3, single buffered']
    #allocation8 [shape = 'u8[131072]{0}', space=vmem, size = 0x20000, scoped, tag = 'input window, operand 4, single buffered']
    #allocation9 [shape = 's32[1]{0}', space=sflag, size = 0x4, scoped, tag = 'scoped memory for encoder_crnn_forward.1']
    #allocation10 [shape = 'u8[32768]{0}', space=vmem, size = 0x8000, scoped, tag = 'input window, operand 5, single buffered']
    #allocation11 [shape = 'u8[131072]{0}', space=vmem, size = 0x20000, scoped, tag = 'input window, operand 6, single buffered']
    #allocation12 [shape = 's32[1]{0}', space=sflag, size = 0x4, scoped, tag = 'scoped memory for encoder_crnn_forward.1']
    #allocation13 [shape = 'u8[16384]{0}', space=vmem, size = 0x4000, scoped, tag = 'input window, operand 7, single buffered']
    #allocation14 [shape = 'u8[131072]{0}', space=vmem, size = 0x20000, scoped, tag = 'input window, operand 8, single buffered']
    #allocation15 [shape = 's32[1]{0}', space=sflag, size = 0x4, scoped, tag = 'scoped memory for encoder_crnn_forward.1']
    #allocation16 [shape = 'u8[8192]{0}', space=vmem, size = 0x2000, scoped, tag = 'input window, operand 9, single buffered']
    #allocation17 [shape = 'u8[131072]{0}', space=vmem, size = 0x20000, scoped, tag = 'input window, operand 10, single buffered']
    #allocation18 [shape = 's32[1]{0}', space=sflag, size = 0x4, scoped, tag = 'scoped memory for encoder_crnn_forward.1']
    #allocation19 [shape = 'u8[8192]{0}', space=vmem, size = 0x2000, scoped, tag = 'input window, operand 11, single buffered']
    #allocation20 [shape = 'u8[131072]{0}', space=vmem, size = 0x20000, scoped, tag = 'input window, operand 12, single buffered']
    #allocation21 [shape = 's32[1]{0}', space=sflag, size = 0x4, scoped, tag = 'scoped memory for encoder_crnn_forward.1']
    #allocation22 [shape = 'u8[8192]{0}', space=vmem, size = 0x2000, scoped, tag = 'input window, operand 13, single buffered']
    #allocation23 [shape = 'u8[196608]{0}', space=vmem, size = 0x30000, scoped, tag = 'input window, operand 15, single buffered']
    #allocation24 [shape = 's32[1]{0}', space=sflag, size = 0x4, scoped, tag = 'scoped memory for encoder_crnn_forward.1']
    #allocation25 [shape = 'u8[49152]{0}', space=vmem, size = 0xc000, scoped, tag = 'input window, operand 16, single buffered']
    #allocation26 [shape = 'u8[1536]{0}', space=vmem, size = 0x800, scoped, tag = 'input window, operand 17, single buffered']
    #allocation27 [shape = 's32[1]{0}', space=sflag, size = 0x4, scoped, tag = 'scoped memory for encoder_crnn_forward.1']
    #allocation28 [shape = 'u8[1536]{0}', space=vmem, size = 0x800, scoped, tag = 'input window, operand 18, single buffered']
    #allocation29 [shape = 'u8[262144]{0}', space=vmem, size = 0x40000, scoped, tag = 'input window, operand 19, single buffered']
    #allocation30 [shape = 's32[1]{0}', space=sflag, size = 0x4, scoped, tag = 'scoped memory for encoder_crnn_forward.1']
    #allocation31 [shape = 'u8[1024]{0}', space=vmem, size = 0x400, scoped, tag = 'output window, operand 1, single buffered']
    %28 = vsyncpa [#allocation3], 0
    %29 = vsyncpa [#allocation6], 0
    %30 = vsyncpa [#allocation9], 0
    %31 = vsyncpa [#allocation12], 0
    %32 = vsyncpa [#allocation15], 0
    %33 = vsyncpa [#allocation18], 0
    %34 = vsyncpa [#allocation21], 0
    %35 = vsyncpa [#allocation24], 0
    %36 = vsyncpa [#allocation27], 0
    %37 = vsyncpa [#allocation30], 0
    %38 = vsyncpa [#allocation4], 0
    // Predicated region
    $region2: #{encoder_crnn_forward.1} parent=1 // pred_check
      _
    $region3: #{encoder_crnn_forward.1} parent=1 // pred_check_branch
      %40 = sbr.rel (0) target = $region5
    $region4: #{encoder_crnn_forward.1} parent=1 // pred_region
      %s42 = ssub.s32 2048, 2048
      %43 = vsyncadd [#allocation3], %s42
      %s44 = sshll.u32 [#allocation2], 4
      %s45 = int_to_ptr.vmem [resolvable:$true] %s44
      %50 = dma.hbm_to_vmem [thread:$0]  %s0, 2048, %s45, [#allocation3], 128, 128, 8
    $region5: #{encoder_crnn_forward.1} parent=1 // pred_fallthru
      _
    // Predicated region
    $region6: #{encoder_crnn_forward.1} parent=1 // pred_check
      _
    $region7: #{encoder_crnn_forward.1} parent=1 // pred_check_branch
      %52 = sbr.rel (0) target = $region9
    $region8: #{encoder_crnn_forward.1} parent=1 // pred_region
      _
    $region9: #{encoder_crnn_forward.1} parent=1 // pred_fallthru
      _
    // Predicated region
    $region10: #{encoder_crnn_forward.1} parent=1 // pred_check
      _
    $region11: #{encoder_crnn_forward.1} parent=1 // pred_check_branch
      %54 = sbr.rel (0) target = $region13
    $region12: #{encoder_crnn_forward.1} parent=1 // pred_region
      %s56 = ssub.s32 2048, 2048
      %57 = vsyncadd [#allocation6], %s56
      %s58 = sshll.u32 [#allocation5], 4
      %s59 = int_to_ptr.vmem [resolvable:$true] %s58
      %64 = dma.hbm_to_vmem [thread:$0]  %s2, 2048, %s59, [#allocation6], 64, 64, 4
    $region13: #{encoder_crnn_forward.1} parent=1 // pred_fallthru
      _
    // Predicated region
    $region14: #{encoder_crnn_forward.1} parent=1 // pred_check
      _
    $region15: #{encoder_crnn_forward.1} parent=1 // pred_check_branch
      %66 = sbr.rel (0) target = $region17
    $region16: #{encoder_crnn_forward.1} parent=1 // pred_region
      %s68 = ssub.s32 2048, 2048
      %69 = vsyncadd [#allocation6], %s68
      %s70 = sshll.u32 [#allocation7], 4
      %s71 = int_to_ptr.vmem [resolvable:$true] %s70
      %76 = dma.hbm_to_vmem [thread:$0]  %s3, 2048, %s71, [#allocation6], 64, 64, 4
    $region17: #{encoder_crnn_forward.1} parent=1 // pred_fallthru
      _
    // Predicated region
    $region18: #{encoder_crnn_forward.1} parent=1 // pred_check
      _
    $region19: #{encoder_crnn_forward.1} parent=1 // pred_check_branch
      %78 = sbr.rel (0) target = $region21
    $region20: #{encoder_crnn_forward.1} parent=1 // pred_region
      %s80 = ssub.s32 4096, 4096
      %81 = vsyncadd [#allocation9], %s80
      %s82 = sshll.u32 [#allocation8], 4
      %s83 = int_to_ptr.vmem [resolvable:$true] %s82
      %88 = dma.hbm_to_vmem [thread:$0]  %s4, 4096, %s83, [#allocation9], 64, 64, 4
    $region21: #{encoder_crnn_forward.1} parent=1 // pred_fallthru
      _
    // Predicated region
    $region22: #{encoder_crnn_forward.1} parent=1 // pred_check
      _
    $region23: #{encoder_crnn_forward.1} parent=1 // pred_check_branch
      %90 = sbr.rel (0) target = $region25
    $region24: #{encoder_crnn_forward.1} parent=1 // pred_region
      %s92 = ssub.s32 1024, 1024
      %93 = vsyncadd [#allocation9], %s92
      %s94 = sshll.u32 [#allocation10], 4
      %s95 = int_to_ptr.vmem [resolvable:$true] %s94
      %100 = dma.hbm_to_vmem [thread:$0]  %s5, 1024, %s95, [#allocation9], 64, 64, 4
    $region25: #{encoder_crnn_forward.1} parent=1 // pred_fallthru
      _
    // Predicated region
    $region26: #{encoder_crnn_forward.1} parent=1 // pred_check
      _
    $region27: #{encoder_crnn_forward.1} parent=1 // pred_check_branch
      %102 = sbr.rel (0) target = $region29
    $region28: #{encoder_crnn_forward.1} parent=1 // pred_region
      %s104 = ssub.s32 4096, 4096
      %105 = vsyncadd [#allocation12], %s104
      %s106 = sshll.u32 [#allocation11], 4
      %s107 = int_to_ptr.vmem [resolvable:$true] %s106
      %112 = dma.hbm_to_vmem [thread:$0]  %s6, 4096, %s107, [#allocation12], 64, 64, 4
    $region29: #{encoder_crnn_forward.1} parent=1 // pred_fallthru
      _
    // Predicated region
    $region30: #{encoder_crnn_forward.1} parent=1 // pred_check
      _
    $region31: #{encoder_crnn_forward.1} parent=1 // pred_check_branch
      %114 = sbr.rel (0) target = $region33
    $region32: #{encoder_crnn_forward.1} parent=1 // pred_region
      %s116 = ssub.s32 512, 512
      %117 = vsyncadd [#allocation12], %s116
      %s118 = sshll.u32 [#allocation13], 4
      %s119 = int_to_ptr.vmem [resolvable:$true] %s118
      %124 = dma.hbm_to_vmem [thread:$0]  %s7, 512, %s119, [#allocation12], 64, 64, 4
    $region33: #{encoder_crnn_forward.1} parent=1 // pred_fallthru
      _
    // Predicated region
    $region34: #{encoder_crnn_forward.1} parent=1 // pred_check
      _
    $region35: #{encoder_crnn_forward.1} parent=1 // pred_check_branch
      %126 = sbr.rel (0) target = $region37
    $region36: #{encoder_crnn_forward.1} parent=1 // pred_region
      %s128 = ssub.s32 4096, 4096
      %129 = vsyncadd [#allocation15], %s128
      %s130 = sshll.u32 [#allocation14], 4
      %s131 = int_to_ptr.vmem [resolvable:$true] %s130
      %136 = dma.hbm_to_vmem [thread:$0]  %s8, 4096, %s131, [#allocation15], 64, 64, 4
    $region37: #{encoder_crnn_forward.1} parent=1 // pred_fallthru
      _
    // Predicated region
    $region38: #{encoder_crnn_forward.1} parent=1 // pred_check
      _
    $region39: #{encoder_crnn_forward.1} parent=1 // pred_check_branch
      %138 = sbr.rel (0) target = $region41
    $region40: #{encoder_crnn_forward.1} parent=1 // pred_region
      %s140 = ssub.s32 256, 256
      %141 = vsyncadd [#allocation15], %s140
      %s142 = sshll.u32 [#allocation16], 4
      %s143 = int_to_ptr.vmem [resolvable:$true] %s142
      %148 = dma.hbm_to_vmem [thread:$0]  %s9, 256, %s143, [#allocation15], 64, 64, 4
    $region41: #{encoder_crnn_forward.1} parent=1 // pred_fallthru
      _
    // Predicated region
    $region42: #{encoder_crnn_forward.1} parent=1 // pred_check
      _
    $region43: #{encoder_crnn_forward.1} parent=1 // pred_check_branch
      %150 = sbr.rel (0) target = $region45
    $region44: #{encoder_crnn_forward.1} parent=1 // pred_region
      %s152 = ssub.s32 4096, 4096
      %153 = vsyncadd [#allocation18], %s152
      %s154 = sshll.u32 [#allocation17], 4
      %s155 = int_to_ptr.vmem [resolvable:$true] %s154
      %160 = dma.hbm_to_vmem [thread:$0]  %s10, 4096, %s155, [#allocation18], 64, 64, 4
    $region45: #{encoder_crnn_forward.1} parent=1 // pred_fallthru
      _
    // Predicated region
    $region46: #{encoder_crnn_forward.1} parent=1 // pred_check
      _
    $region47: #{encoder_crnn_forward.1} parent=1 // pred_check_branch
      %162 = sbr.rel (0) target = $region49
    $region48: #{encoder_crnn_forward.1} parent=1 // pred_region
      %s164 = ssub.s32 256, 256
      %165 = vsyncadd [#allocation18], %s164
      %s166 = sshll.u32 [#allocation19], 4
      %s167 = int_to_ptr.vmem [resolvable:$true] %s166
      %172 = dma.hbm_to_vmem [thread:$0]  %s11, 256, %s167, [#allocation18], 64, 64, 4
    $region49: #{encoder_crnn_forward.1} parent=1 // pred_fallthru
      _
    // Predicated region
    $region50: #{encoder_crnn_forward.1} parent=1 // pred_check
      _
    $region51: #{encoder_crnn_forward.1} parent=1 // pred_check_branch
      %174 = sbr.rel (0) target = $region53
    $region52: #{encoder_crnn_forward.1} parent=1 // pred_region
      %s176 = ssub.s32 4096, 4096
      %177 = vsyncadd [#allocation21], %s176
      %s178 = sshll.u32 [#allocation20], 4
      %s179 = int_to_ptr.vmem [resolvable:$true] %s178
      %184 = dma.hbm_to_vmem [thread:$0]  %s12, 4096, %s179, [#allocation21], 64, 64, 4
    $region53: #{encoder_crnn_forward.1} parent=1 // pred_fallthru
      _
    // Predicated region
    $region54: #{encoder_crnn_forward.1} parent=1 // pred_check
      _
    $region55: #{encoder_crnn_forward.1} parent=1 // pred_check_branch
      %186 = sbr.rel (0) target = $region57
    $region56: #{encoder_crnn_forward.1} parent=1 // pred_region
      %s188 = ssub.s32 256, 256
      %189 = vsyncadd [#allocation21], %s188
      %s190 = sshll.u32 [#allocation22], 4
      %s191 = int_to_ptr.vmem [resolvable:$true] %s190
      %196 = dma.hbm_to_vmem [thread:$0]  %s13, 256, %s191, [#allocation21], 64, 64, 4
    $region57: #{encoder_crnn_forward.1} parent=1 // pred_fallthru
      _
    // Predicated region
    $region58: #{encoder_crnn_forward.1} parent=1 // pred_check
      _
    $region59: #{encoder_crnn_forward.1} parent=1 // pred_check_branch
      %198 = sbr.rel (0) target = $region61
    $region60: #{encoder_crnn_forward.1} parent=1 // pred_region
      _
    $region61: #{encoder_crnn_forward.1} parent=1 // pred_fallthru
      _
    // Predicated region
    $region62: #{encoder_crnn_forward.1} parent=1 // pred_check
      _
    $region63: #{encoder_crnn_forward.1} parent=1 // pred_check_branch
      %200 = sbr.rel (0) target = $region65
    $region64: #{encoder_crnn_forward.1} parent=1 // pred_region
      %s202 = ssub.s32 6144, 6144
      %203 = vsyncadd [#allocation24], %s202
      %s204 = sshll.u32 [#allocation23], 4
      %s205 = int_to_ptr.vmem [resolvable:$true] %s204
      %210 = dma.hbm_to_vmem [thread:$0]  %s15, 6144, %s205, [#allocation24], 384, 384, 24
    $region65: #{encoder_crnn_forward.1} parent=1 // pred_fallthru
      _
    // Predicated region
    $region66: #{encoder_crnn_forward.1} parent=1 // pred_check
      _
    $region67: #{encoder_crnn_forward.1} parent=1 // pred_check_branch
      %212 = sbr.rel (0) target = $region69
    $region68: #{encoder_crnn_forward.1} parent=1 // pred_region
      %s214 = ssub.s32 1536, 1536
      %215 = vsyncadd [#allocation24], %s214
      %s216 = sshll.u32 [#allocation25], 4
      %s217 = int_to_ptr.vmem [resolvable:$true] %s216
      %222 = dma.hbm_to_vmem [thread:$0]  %s16, 1536, %s217, [#allocation24], 384, 384, 24
    $region69: #{encoder_crnn_forward.1} parent=1 // pred_fallthru
      _
    // Predicated region
    $region70: #{encoder_crnn_forward.1} parent=1 // pred_check
      _
    $region71: #{encoder_crnn_forward.1} parent=1 // pred_check_branch
      %224 = sbr.rel (0) target = $region73
    $region72: #{encoder_crnn_forward.1} parent=1 // pred_region
      %s226 = ssub.s32 48, 48
      %227 = vsyncadd [#allocation27], %s226
      %s229 = sshll.u32 [#allocation26], 4
      %s230 = int_to_ptr.vmem [resolvable:$true] %s229
      %232 = dma.hbm_to_vmem [thread:$0]  %s17, 48, %s230, [#allocation27]
    $region73: #{encoder_crnn_forward.1} parent=1 // pred_fallthru
      _
    // Predicated region
    $region74: #{encoder_crnn_forward.1} parent=1 // pred_check
      _
    $region75: #{encoder_crnn_forward.1} parent=1 // pred_check_branch
      %234 = sbr.rel (0) target = $region77
    $region76: #{encoder_crnn_forward.1} parent=1 // pred_region
      %s236 = ssub.s32 48, 48
      %237 = vsyncadd [#allocation27], %s236
      %s239 = sshll.u32 [#allocation28], 4
      %s240 = int_to_ptr.vmem [resolvable:$true] %s239
      %242 = dma.hbm_to_vmem [thread:$0]  %s18, 48, %s240, [#allocation27]
    $region77: #{encoder_crnn_forward.1} parent=1 // pred_fallthru
      _
    // Predicated region
    $region78: #{encoder_crnn_forward.1} parent=1 // pred_check
      _
    $region79: #{encoder_crnn_forward.1} parent=1 // pred_check_branch
      %244 = sbr.rel (0) target = $region81
    $region80: #{encoder_crnn_forward.1} parent=1 // pred_region
      %s246 = ssub.s32 8192, 8192
      %247 = vsyncadd [#allocation30], %s246
      %s248 = sshll.u32 [#allocation29], 4
      %s249 = int_to_ptr.vmem [resolvable:$true] %s248
      %254 = dma.hbm_to_vmem [thread:$0]  %s19, 8192, %s249, [#allocation30], 2048, 2048, 128
    $region81: #{encoder_crnn_forward.1} parent=1 // pred_fallthru
      _
    // Predicated region
    $region82: #{encoder_crnn_forward.1} parent=1 // pred_check
      _
    $region83: #{encoder_crnn_forward.1} parent=1 // pred_check_branch
      %256 = sbr.rel (0) target = $region85
    $region84: #{encoder_crnn_forward.1} parent=1 // pred_region
      _
    $region85: #{encoder_crnn_forward.1} parent=1 // pred_fallthru
      _
    // Predicated region
    $region86: #{encoder_crnn_forward.1} parent=1 // pred_check
      _
    $region87: #{encoder_crnn_forward.1} parent=1 // pred_check_branch
      %258 = sbr.rel (0) target = $region89
    $region88: #{encoder_crnn_forward.1} parent=1 // pred_region
      %259 = dma.done [#allocation3], 2048
    $region89: #{encoder_crnn_forward.1} parent=1 // pred_fallthru
      _
    // Predicated region
    $region90: #{encoder_crnn_forward.1} parent=1 // pred_check
      _
    $region91: #{encoder_crnn_forward.1} parent=1 // pred_check_branch
      %261 = sbr.rel (0) target = $region93
    $region92: #{encoder_crnn_forward.1} parent=1 // pred_region
      %262 = dma.done [#allocation6], 2048
    $region93: #{encoder_crnn_forward.1} parent=1 // pred_fallthru
      _
    // Predicated region
    $region94: #{encoder_crnn_forward.1} parent=1 // pred_check
      _
    $region95: #{encoder_crnn_forward.1} parent=1 // pred_check_branch
      %264 = sbr.rel (0) target = $region97
    $region96: #{encoder_crnn_forward.1} parent=1 // pred_region
      %265 = dma.done [#allocation6], 2048
    $region97: #{encoder_crnn_forward.1} parent=1 // pred_fallthru
      _
    // Predicated region
    $region98: #{encoder_crnn_forward.1} parent=1 // pred_check
      _
    $region99: #{encoder_crnn_forward.1} parent=1 // pred_check_branch
      %267 = sbr.rel (0) target = $region101
    $region100: #{encoder_crnn_forward.1} parent=1 // pred_region
      %268 = dma.done [#allocation9], 4096
    $region101: #{encoder_crnn_forward.1} parent=1 // pred_fallthru
      _
    // Predicated region
    $region102: #{encoder_crnn_forward.1} parent=1 // pred_check
      _
    $region103: #{encoder_crnn_forward.1} parent=1 // pred_check_branch
      %270 = sbr.rel (0) target = $region105
    $region104: #{encoder_crnn_forward.1} parent=1 // pred_region
      %271 = dma.done [#allocation9], 1024
    $region105: #{encoder_crnn_forward.1} parent=1 // pred_fallthru
      _
    // Predicated region
    $region106: #{encoder_crnn_forward.1} parent=1 // pred_check
      _
    $region107: #{encoder_crnn_forward.1} parent=1 // pred_check_branch
      %273 = sbr.rel (0) target = $region109
    $region108: #{encoder_crnn_forward.1} parent=1 // pred_region
      %274 = dma.done [#allocation12], 4096
    $region109: #{encoder_crnn_forward.1} parent=1 // pred_fallthru
      _
    // Predicated region
    $region110: #{encoder_crnn_forward.1} parent=1 // pred_check
      _
    $region111: #{encoder_crnn_forward.1} parent=1 // pred_check_branch
      %276 = sbr.rel (0) target = $region113
    $region112: #{encoder_crnn_forward.1} parent=1 // pred_region
      %277 = dma.done [#allocation12], 512
    $region113: #{encoder_crnn_forward.1} parent=1 // pred_fallthru
      _
    // Predicated region
    $region114: #{encoder_crnn_forward.1} parent=1 // pred_check
      _
    $region115: #{encoder_crnn_forward.1} parent=1 // pred_check_branch
      %279 = sbr.rel (0) target = $region117
    $region116: #{encoder_crnn_forward.1} parent=1 // pred_region
      %280 = dma.done [#allocation15], 4096
    $region117: #{encoder_crnn_forward.1} parent=1 // pred_fallthru
      _
    // Predicated region
    $region118: #{encoder_crnn_forward.1} parent=1 // pred_check
      _
    $region119: #{encoder_crnn_forward.1} parent=1 // pred_check_branch
      %282 = sbr.rel (0) target = $region121
    $region120: #{encoder_crnn_forward.1} parent=1 // pred_region
      %283 = dma.done [#allocation15], 256
    $region121: #{encoder_crnn_forward.1} parent=1 // pred_fallthru
      _
    // Predicated region
    $region122: #{encoder_crnn_forward.1} parent=1 // pred_check
      _
    $region123: #{encoder_crnn_forward.1} parent=1 // pred_check_branch
      %285 = sbr.rel (0) target = $region125
    $region124: #{encoder_crnn_forward.1} parent=1 // pred_region
      %286 = dma.done [#allocation18], 4096
    $region125: #{encoder_crnn_forward.1} parent=1 // pred_fallthru
      _
    // Predicated region
    $region126: #{encoder_crnn_forward.1} parent=1 // pred_check
      _
    $region127: #{encoder_crnn_forward.1} parent=1 // pred_check_branch
      %288 = sbr.rel (0) target = $region129
    $region128: #{encoder_crnn_forward.1} parent=1 // pred_region
      %289 = dma.done [#allocation18], 256
    $region129: #{encoder_crnn_forward.1} parent=1 // pred_fallthru
      _
    // Predicated region
    $region130: #{encoder_crnn_forward.1} parent=1 // pred_check
      _
    $region131: #{encoder_crnn_forward.1} parent=1 // pred_check_branch
      %291 = sbr.rel (0) target = $region133
    $region132: #{encoder_crnn_forward.1} parent=1 // pred_region
      %292 = dma.done [#allocation21], 4096
    $region133: #{encoder_crnn_forward.1} parent=1 // pred_fallthru
      _
    // Predicated region
    $region134: #{encoder_crnn_forward.1} parent=1 // pred_check
      _
    $region135: #{encoder_crnn_forward.1} parent=1 // pred_check_branch
      %294 = sbr.rel (0) target = $region137
    $region136: #{encoder_crnn_forward.1} parent=1 // pred_region
      %295 = dma.done [#allocation21], 256
    $region137: #{encoder_crnn_forward.1} parent=1 // pred_fallthru
      _
    // Predicated region
    $region138: #{encoder_crnn_forward.1} parent=1 // pred_check
      _
    $region139: #{encoder_crnn_forward.1} parent=1 // pred_check_branch
      %297 = sbr.rel (0) target = $region141
    $region140: #{encoder_crnn_forward.1} parent=1 // pred_region
      %298 = dma.done [#allocation24], 6144
    $region141: #{encoder_crnn_forward.1} parent=1 // pred_fallthru
      _
    // Predicated region
    $region142: #{encoder_crnn_forward.1} parent=1 // pred_check
      _
    $region143: #{encoder_crnn_forward.1} parent=1 // pred_check_branch
      %300 = sbr.rel (0) target = $region145
    $region144: #{encoder_crnn_forward.1} parent=1 // pred_region
      %301 = dma.done [#allocation24], 1536
    $region145: #{encoder_crnn_forward.1} parent=1 // pred_fallthru
      _
    // Predicated region
    $region146: #{encoder_crnn_forward.1} parent=1 // pred_check
      _
    $region147: #{encoder_crnn_forward.1} parent=1 // pred_check_branch
      %303 = sbr.rel (0) target = $region149
    $region148: #{encoder_crnn_forward.1} parent=1 // pred_region
      %304 = dma.done [#allocation27], 48
    $region149: #{encoder_crnn_forward.1} parent=1 // pred_fallthru
      _
    // Predicated region
    $region150: #{encoder_crnn_forward.1} parent=1 // pred_check
      _
    $region151: #{encoder_crnn_forward.1} parent=1 // pred_check_branch
      %306 = sbr.rel (0) target = $region153
    $region152: #{encoder_crnn_forward.1} parent=1 // pred_region
      %307 = dma.done [#allocation27], 48
    $region153: #{encoder_crnn_forward.1} parent=1 // pred_fallthru
      _
    // Predicated region
    $region154: #{encoder_crnn_forward.1} parent=1 // pred_check
      _
    $region155: #{encoder_crnn_forward.1} parent=1 // pred_check_branch
      %309 = sbr.rel (0) target = $region157
    $region156: #{encoder_crnn_forward.1} parent=1 // pred_region
      %310 = dma.done [#allocation30], 8192
    $region157: #{encoder_crnn_forward.1} parent=1 // pred_fallthru
      _
    %v312 = vld [vmem:[#allocation2] sm:$0xff]
    %v313 = vld [vmem:[#allocation2 + $0x8] sm:$0xff]
    %v314 = vld [vmem:[#allocation2 + $0x10] sm:$0xff]
    %v315 = vld [vmem:[#allocation2 + $0x18] sm:$0xff]
    %v316 = vld [vmem:[#allocation2 + $0x20] sm:$0xff]
    %v317 = vld [vmem:[#allocation2 + $0x28] sm:$0xff]
    %v318 = vld [vmem:[#allocation2 + $0x30] sm:$0xff]
    %v319 = vld [vmem:[#allocation2 + $0x38] sm:$0xff]
    %v320 = vld [vmem:[#allocation2 + $0x40] sm:$0xff]
    %v321 = vld [vmem:[#allocation2 + $0x48] sm:$0xff]
    %v322 = vld [vmem:[#allocation2 + $0x50] sm:$0xff]
    %v323 = vld [vmem:[#allocation2 + $0x58] sm:$0xff]
    %v324 = vld [vmem:[#allocation2 + $0x60] sm:$0xff]
    %v325 = vld [vmem:[#allocation2 + $0x68] sm:$0xff]
    %v326 = vld [vmem:[#allocation2 + $0x70] sm:$0xff]
    %v327 = vld [vmem:[#allocation2 + $0x78] sm:$0xff]
    %v328 = vld [vmem:[%s14] sm:$0x1]
    %v329 = vpack.c.bf16 %v313, %v312
    %v330 = vpack.c.bf16 %v315, %v314
    %v331 = vpack.c.bf16 %v317, %v316
    %v332 = vpack.c.bf16 %v319, %v318
    %v333 = vpack.c.bf16 %v321, %v320
    %v334 = vpack.c.bf16 %v323, %v322
    %v335 = vpack.c.bf16 %v325, %v324
    %v336 = vpack.c.bf16 %v327, %v326
    %v337 = vld [vmem:[#allocation5] sm:$0xf]
    %v338 = vld [vmem:[#allocation5 + $0x4] sm:$0xf]
    %v339 = vld [vmem:[#allocation5 + $0x8] sm:$0xf]
    %v340 = vld [vmem:[#allocation5 + $0xc] sm:$0xf]
    %v341 = vld [vmem:[#allocation5 + $0x10] sm:$0xf]
    %v342 = vld [vmem:[#allocation5 + $0x14] sm:$0xf]
    %v343 = vld [vmem:[#allocation5 + $0x18] sm:$0xf]
    %v344 = vld [vmem:[#allocation5 + $0x1c] sm:$0xf]
    %v353 = vunpack.c.l.b16 %v337
    %v354 = vunpack.c.l.b16 %v338
    %v355 = vunpack.c.l.b16 %v339
    %v356 = vunpack.c.l.b16 %v340
    %v357 = vunpack.c.l.b16 %v341
    %v358 = vunpack.c.l.b16 %v342
    %v359 = vunpack.c.l.b16 %v343
    %v360 = vunpack.c.l.b16 %v344
    %v361 = vpack.c.b16 %v354, %v353
    %v362 = vpack.c.b16 %v356, %v355
    %v363 = vpack.c.b16 %v358, %v357
    %v364 = vpack.c.b16 %v360, %v359
    %vm369 = vcmask 523264
    %v371 = vsel %vm369, %v329, 0
    %v374 = vsel %vm369, %v330, 0
    %v377 = vsel %vm369, %v331, 0
    %v380 = vsel %vm369, %v332, 0
    %v383 = vsel %vm369, %v333, 0
    %v386 = vsel %vm369, %v334, 0
    %v389 = vsel %vm369, %v335, 0
    %v392 = vsel %vm369, %v336, 0
    %394 = vmatprep.subr.bf16.mxu0 0
    %395 = vmatpush1.bf16.msra.mxu0 0
    %396 = vmatprep.subr.bf16.mxu0 0
    %397 = vmatpush1.bf16.msra.mxu0 0
    %398 = vmatprep.subr.bf16.mxu0 0
    %399 = vmatpush1.bf16.msra.mxu0 0
    %400 = vmatprep.subr.bf16.mxu0 0
    %401 = vmatpush1.bf16.msra.mxu0 0
    %402 = vmatprep.subr.bf16.mxu0 0
    %403 = vmatpush1.bf16.msra.mxu0 %v364
    %404 = vmatprep.subr.bf16.mxu0 0
    %405 = vmatpush1.bf16.msra.mxu0 %v363
    %406 = vmatprep.subr.bf16.mxu0 0
    %407 = vmatpush1.bf16.msra.mxu0 %v362
    %408 = vmatprep.subr.bf16.mxu0 0
    %409 = vmatpush1.bf16.msra.mxu0 %v361
    %410 = vmatprep.subr.bf16.mxu0 0
    %411 = vmatpush2.bf16.msra.mxu0 0
    %412 = vmatprep.subr.bf16.mxu0 0
    %413 = vmatpush2.bf16.msra.mxu0 0
    %414 = vmatprep.subr.bf16.mxu0 0
    %415 = vmatpush2.bf16.msra.mxu0 0
    %416 = vmatprep.subr.bf16.mxu0 0
    %417 = vmatpush2.bf16.msra.mxu0 0
    %418 = vmatprep.subr.bf16.mxu0 0
    %419 = vmatpush2.bf16.msra.mxu0 0
    %420 = vmatprep.subr.bf16.mxu0 0
    %421 = vmatpush2.bf16.msra.mxu0 0
    %422 = vmatprep.subr.bf16.mxu0 0
    %423 = vmatpush2.bf16.msra.mxu0 0
    %424 = vmatprep.subr.bf16.mxu0 0
    %425 = vmatpush2.bf16.msra.mxu0 0
    %426 = vmatprep.mubr.bf16.mxu0 0
    %427 = vmatmul.mubr.bf16.gmra.mxu0 %v371
    %v428 = vpop.f32.mrf.mxu0
    %v429 = vadd.f32 0.0, %v428
    %v430 = vpop.f32.mrf.mxu0
    %v431 = vpop.f32.mrf.mxu0
    %v432 = vadd.f32 0.0, %v431
    %v433 = vpop.f32.mrf.mxu0
    %434 = vmatprep.mubr.bf16.mxu0 0
    %435 = vmatmul.mubr.bf16.gmra.mxu0 %v374
    %v436 = vpop.f32.mrf.mxu0
    %v437 = vadd.f32 0.0, %v436
    %v438 = vpop.f32.mrf.mxu0
    %v439 = vpop.f32.mrf.mxu0
    %v440 = vadd.f32 0.0, %v439
    %v441 = vpop.f32.mrf.mxu0
    %442 = vmatprep.mubr.bf16.mxu0 0
    %443 = vmatmul.mubr.bf16.gmra.mxu0 %v377
    %v444 = vpop.f32.mrf.mxu0
    %v445 = vadd.f32 0.0, %v444
    %v446 = vpop.f32.mrf.mxu0
    %v447 = vpop.f32.mrf.mxu0
    %v448 = vadd.f32 0.0, %v447
    %v449 = vpop.f32.mrf.mxu0
    %450 = vmatprep.mubr.bf16.mxu0 0
    %451 = vmatmul.mubr.bf16.gmra.mxu0 %v380
    %v452 = vpop.f32.mrf.mxu0
    %v453 = vadd.f32 0.0, %v452
    %v454 = vpop.f32.mrf.mxu0
    %v455 = vpop.f32.mrf.mxu0
    %v456 = vadd.f32 0.0, %v455
    %v457 = vpop.f32.mrf.mxu0
    %458 = vmatprep.mubr.bf16.mxu0 0
    %459 = vmatmul.mubr.bf16.gmra.mxu0 %v383
    %v460 = vpop.f32.mrf.mxu0
    %v461 = vadd.f32 0.0, %v460
    %v462 = vpop.f32.mrf.mxu0
    %v463 = vpop.f32.mrf.mxu0
    %v464 = vadd.f32 0.0, %v463
    %v465 = vpop.f32.mrf.mxu0
    %466 = vmatprep.mubr.bf16.mxu0 0
    %467 = vmatmul.mubr.bf16.gmra.mxu0 %v386
    %v468 = vpop.f32.mrf.mxu0
    %v469 = vadd.f32 0.0, %v468
    %v470 = vpop.f32.mrf.mxu0
    %v471 = vpop.f32.mrf.mxu0
    %v472 = vadd.f32 0.0, %v471
    %v473 = vpop.f32.mrf.mxu0
    %474 = vmatprep.mubr.bf16.mxu0 0
    %475 = vmatmul.mubr.bf16.gmra.mxu0 %v389
    %v476 = vpop.f32.mrf.mxu0
    %v477 = vadd.f32 0.0, %v476
    %v478 = vpop.f32.mrf.mxu0
    %v479 = vpop.f32.mrf.mxu0
    %v480 = vadd.f32 0.0, %v479
    %v481 = vpop.f32.mrf.mxu0
    %482 = vmatprep.mubr.bf16.mxu0 0
    %483 = vmatmul.mubr.bf16.gmra.mxu0 %v392
    %v484 = vpop.f32.mrf.mxu0
    %v485 = vadd.f32 0.0, %v484
    %v486 = vpop.f32.mrf.mxu0
    %v487 = vpop.f32.mrf.mxu0
    %v488 = vadd.f32 0.0, %v487
    %v489 = vpop.f32.mrf.mxu0
    %490 = vdwg.mxu0
    %v491 = vld [vmem:[#allocation7] sm:$0xf]
    %v492 = vld [vmem:[#allocation7 + $0x4] sm:$0xf]
    %v493 = vld [vmem:[#allocation7 + $0x8] sm:$0xf]
    %v494 = vld [vmem:[#allocation7 + $0xc] sm:$0xf]
    %v495 = vld [vmem:[#allocation7 + $0x10] sm:$0xf]
    %v496 = vld [vmem:[#allocation7 + $0x14] sm:$0xf]
    %v497 = vld [vmem:[#allocation7 + $0x18] sm:$0xf]
    %v498 = vld [vmem:[#allocation7 + $0x1c] sm:$0xf]
    %v499 = vpack.c.bf16 %v432, %v429
    %v500 = vpack.c.bf16 %v440, %v437
    %v501 = vpack.c.bf16 %v448, %v445
    %v502 = vpack.c.bf16 %v456, %v453
    %v503 = vpack.c.bf16 %v464, %v461
    %v504 = vpack.c.bf16 %v472, %v469
    %v505 = vpack.c.bf16 %v480, %v477
    %v506 = vpack.c.bf16 %v488, %v485
    %s507 = scalar_lea.vmem [#allocation5], 32
    %v508 = vld [vmem:[%s507] sm:$0xf]
    %v509 = vld [vmem:[%s507 + $0x4] sm:$0xf]
    %v510 = vld [vmem:[%s507 + $0x8] sm:$0xf]
    %v511 = vld [vmem:[%s507 + $0xc] sm:$0xf]
    %v512 = vld [vmem:[%s507 + $0x10] sm:$0xf]
    %v513 = vld [vmem:[%s507 + $0x14] sm:$0xf]
    %v514 = vld [vmem:[%s507 + $0x18] sm:$0xf]
    %v515 = vld [vmem:[%s507 + $0x1c] sm:$0xf]
    %v524 = vunpack.c.l.b16 %v508
    %v525 = vunpack.c.l.b16 %v509
    %v526 = vunpack.c.l.b16 %v510
    %v527 = vunpack.c.l.b16 %v511
    %v528 = vunpack.c.l.b16 %v512
    %v529 = vunpack.c.l.b16 %v513
    %v530 = vunpack.c.l.b16 %v514
    %v531 = vunpack.c.l.b16 %v515
    %v532 = vpack.c.b16 %v525, %v524
    %v533 = vpack.c.b16 %v527, %v526
    %v534 = vpack.c.b16 %v529, %v528
    %v535 = vpack.c.b16 %v531, %v530
    %540 = vmatprep.subr.bf16.mxu0 0
    %541 = vmatpush1.bf16.msra.mxu0 0
    %542 = vmatprep.subr.bf16.mxu0 0
    %543 = vmatpush1.bf16.msra.mxu0 0
    %544 = vmatprep.subr.bf16.mxu0 0
    %545 = vmatpush1.bf16.msra.mxu0 0
    %546 = vmatprep.subr.bf16.mxu0 0
    %547 = vmatpush1.bf16.msra.mxu0 0
    %548 = vmatprep.subr.bf16.mxu0 0
    %549 = vmatpush1.bf16.msra.mxu0 %v535
    %550 = vmatprep.subr.bf16.mxu0 0
    %551 = vmatpush1.bf16.msra.mxu0 %v534
    %552 = vmatprep.subr.bf16.mxu0 0
    %553 = vmatpush1.bf16.msra.mxu0 %v533
    %554 = vmatprep.subr.bf16.mxu0 0
    %555 = vmatpush1.bf16.msra.mxu0 %v532
    %556 = vmatprep.subr.bf16.mxu0 0
    %557 = vmatpush2.bf16.msra.mxu0 0
    %558 = vmatprep.subr.bf16.mxu0 0
    %559 = vmatpush2.bf16.msra.mxu0 0
    %560 = vmatprep.subr.bf16.mxu0 0
    %561 = vmatpush2.bf16.msra.mxu0 0
    %562 = vmatprep.subr.bf16.mxu0 0
    %563 = vmatpush2.bf16.msra.mxu0 0
    %564 = vmatprep.subr.bf16.mxu0 0
    %565 = vmatpush2.bf16.msra.mxu0 0
    %566 = vmatprep.subr.bf16.mxu0 0
    %567 = vmatpush2.bf16.msra.mxu0 0
    %568 = vmatprep.subr.bf16.mxu0 0
    %569 = vmatpush2.bf16.msra.mxu0 0
    %570 = vmatprep.subr.bf16.mxu0 0
    %571 = vmatpush2.bf16.msra.mxu0 0
    %572 = vmatprep.mubr.bf16.mxu0 0
    %573 = vmatmul.mubr.bf16.gmra.mxu0 %v371
    %v574 = vpop.f32.mrf.mxu0
    %v575 = vadd.f32 0.0, %v574
    %v576 = vpop.f32.mrf.mxu0
    %v577 = vpop.f32.mrf.mxu0
    %v578 = vadd.f32 0.0, %v577
    %v579 = vpop.f32.mrf.mxu0
    %580 = vmatprep.mubr.bf16.mxu0 0
    %581 = vmatmul.mubr.bf16.gmra.mxu0 %v374
    %v582 = vpop.f32.mrf.mxu0
    %v583 = vadd.f32 0.0, %v582
    %v584 = vpop.f32.mrf.mxu0
    %v585 = vpop.f32.mrf.mxu0
    %v586 = vadd.f32 0.0, %v585
    %v587 = vpop.f32.mrf.mxu0
    %588 = vmatprep.mubr.bf16.mxu0 0
    %589 = vmatmul.mubr.bf16.gmra.mxu0 %v377
    %v590 = vpop.f32.mrf.mxu0
    %v591 = vadd.f32 0.0, %v590
    %v592 = vpop.f32.mrf.mxu0
    %v593 = vpop.f32.mrf.mxu0
    %v594 = vadd.f32 0.0, %v593
    %v595 = vpop.f32.mrf.mxu0
    %596 = vmatprep.mubr.bf16.mxu0 0
    %597 = vmatmul.mubr.bf16.gmra.mxu0 %v380
    %v598 = vpop.f32.mrf.mxu0
    %v599 = vadd.f32 0.0, %v598
    %v600 = vpop.f32.mrf.mxu0
    %v601 = vpop.f32.mrf.mxu0
    %v602 = vadd.f32 0.0, %v601
    %v603 = vpop.f32.mrf.mxu0
    %604 = vmatprep.mubr.bf16.mxu0 0
    %605 = vmatmul.mubr.bf16.gmra.mxu0 %v383
    %v606 = vpop.f32.mrf.mxu0
    %v607 = vadd.f32 0.0, %v606
    %v608 = vpop.f32.mrf.mxu0
    %v609 = vpop.f32.mrf.mxu0
    %v610 = vadd.f32 0.0, %v609
    %v611 = vpop.f32.mrf.mxu0
    %612 = vmatprep.mubr.bf16.mxu0 0
    %613 = vmatmul.mubr.bf16.gmra.mxu0 %v386
    %v614 = vpop.f32.mrf.mxu0
    %v615 = vadd.f32 0.0, %v614
    %v616 = vpop.f32.mrf.mxu0
    %v617 = vpop.f32.mrf.mxu0
    %v618 = vadd.f32 0.0, %v617
    %v619 = vpop.f32.mrf.mxu0
    %620 = vmatprep.mubr.bf16.mxu0 0
    %621 = vmatmul.mubr.bf16.gmra.mxu0 %v389
    %v622 = vpop.f32.mrf.mxu0
    %v623 = vadd.f32 0.0, %v622
    %v624 = vpop.f32.mrf.mxu0
    %v625 = vpop.f32.mrf.mxu0
    %v626 = vadd.f32 0.0, %v625
    %v627 = vpop.f32.mrf.mxu0
    %628 = vmatprep.mubr.bf16.mxu0 0
    %629 = vmatmul.mubr.bf16.gmra.mxu0 %v392
    %v630 = vpop.f32.mrf.mxu0
    %v631 = vadd.f32 0.0, %v630
    %v632 = vpop.f32.mrf.mxu0
    %v633 = vpop.f32.mrf.mxu0
    %v634 = vadd.f32 0.0, %v633
    %v635 = vpop.f32.mrf.mxu0
    %636 = vdwg.mxu0
    %s637 = scalar_lea.vmem [#allocation7], 32
    %v638 = vld [vmem:[%s637] sm:$0xf]
    %v639 = vld [vmem:[%s637 + $0x4] sm:$0xf]
    %v640 = vld [vmem:[%s637 + $0x8] sm:$0xf]
    %v641 = vld [vmem:[%s637 + $0xc] sm:$0xf]
    %v642 = vld [vmem:[%s637 + $0x10] sm:$0xf]
    %v643 = vld [vmem:[%s637 + $0x14] sm:$0xf]
    %v644 = vld [vmem:[%s637 + $0x18] sm:$0xf]
    %v645 = vld [vmem:[%s637 + $0x1c] sm:$0xf]
    %v646 = vpack.c.bf16 %v578, %v575
    %v647 = vpack.c.bf16 %v586, %v583
    %v648 = vpack.c.bf16 %v594, %v591
    %v649 = vpack.c.bf16 %v602, %v599
    %v650 = vpack.c.bf16 %v610, %v607
    %v651 = vpack.c.bf16 %v618, %v615
    %v652 = vpack.c.bf16 %v626, %v623
    %v653 = vpack.c.bf16 %v634, %v631
    %v662 = vunpack.c.l.b16 %v638
    %v663 = vunpack.c.l.b16 %v639
    %v664 = vunpack.c.l.b16 %v640
    %v665 = vunpack.c.l.b16 %v641
    %v666 = vunpack.c.l.b16 %v642
    %v667 = vunpack.c.l.b16 %v643
    %v668 = vunpack.c.l.b16 %v644
    %v669 = vunpack.c.l.b16 %v645
    %v670 = vpack.c.b16 %v663, %v662
    %v671 = vpack.c.b16 %v665, %v664
    %v672 = vpack.c.b16 %v667, %v666
    %v673 = vpack.c.b16 %v669, %v668
    %678 = vmatprep.subr.bf16.mxu0 0
    %679 = vmatpush1.bf16.msra.mxu0 %v653
    %680 = vmatprep.subr.bf16.mxu0 0
    %681 = vmatpush1.bf16.msra.mxu0 %v652
    %682 = vmatprep.subr.bf16.mxu0 0
    %683 = vmatpush1.bf16.msra.mxu0 %v651
    %684 = vmatprep.subr.bf16.mxu0 0
    %685 = vmatpush1.bf16.msra.mxu0 %v650
    %686 = vmatprep.subr.bf16.mxu0 0
    %687 = vmatpush1.bf16.msra.mxu0 %v649
    %688 = vmatprep.subr.bf16.mxu0 0
    %689 = vmatpush1.bf16.msra.mxu0 %v648
    %690 = vmatprep.subr.bf16.mxu0 0
    %691 = vmatpush1.bf16.msra.mxu0 %v647
    %692 = vmatprep.subr.bf16.mxu0 0
    %693 = vmatpush1.bf16.msra.mxu0 %v646
    %694 = vmatprep.subr.bf16.mxu0 0
    %695 = vmatpush2.bf16.msra.mxu0 0
    %696 = vmatprep.subr.bf16.mxu0 0
    %697 = vmatpush2.bf16.msra.mxu0 0
    %698 = vmatprep.subr.bf16.mxu0 0
    %699 = vmatpush2.bf16.msra.mxu0 0
    %700 = vmatprep.subr.bf16.mxu0 0
    %701 = vmatpush2.bf16.msra.mxu0 0
    %702 = vmatprep.subr.bf16.mxu0 0
    %703 = vmatpush2.bf16.msra.mxu0 0
    %704 = vmatprep.subr.bf16.mxu0 0
    %705 = vmatpush2.bf16.msra.mxu0 0
    %706 = vmatprep.subr.bf16.mxu0 0
    %707 = vmatpush2.bf16.msra.mxu0 0
    %708 = vmatprep.subr.bf16.mxu0 0
    %709 = vmatpush2.bf16.msra.mxu0 0
    %710 = vmatprep.mubr.bf16.mxu0 0
    %711 = vmatmul.mubr.bf16.gmra.mxu0 %v670
    %v712 = vpop.f32.mrf.mxu0
    %v713 = vadd.f32 0.0, %v712
    %v714 = vpop.f32.mrf.mxu0
    %v715 = vpop.f32.mrf.mxu0
    %v716 = vadd.f32 0.0, %v715
    %v717 = vpop.f32.mrf.mxu0
    %718 = vmatprep.mubr.bf16.mxu0 0
    %719 = vmatmul.mubr.bf16.gmra.mxu0 %v671
    %v720 = vpop.f32.mrf.mxu0
    %v721 = vadd.f32 0.0, %v720
    %v722 = vpop.f32.mrf.mxu0
    %v723 = vpop.f32.mrf.mxu0
    %v724 = vadd.f32 0.0, %v723
    %v725 = vpop.f32.mrf.mxu0
    %726 = vmatprep.mubr.bf16.mxu0 0
    %727 = vmatmul.mubr.bf16.gmra.mxu0 %v672
    %v728 = vpop.f32.mrf.mxu0
    %v729 = vadd.f32 0.0, %v728
    %v730 = vpop.f32.mrf.mxu0
    %v731 = vpop.f32.mrf.mxu0
    %v732 = vadd.f32 0.0, %v731
    %v733 = vpop.f32.mrf.mxu0
    %734 = vmatprep.mubr.bf16.mxu0 0
    %735 = vmatmul.mubr.bf16.gmra.mxu0 %v673
    %v736 = vpop.f32.mrf.mxu0
    %v737 = vadd.f32 0.0, %v736
    %v738 = vpop.f32.mrf.mxu0
    %v739 = vpop.f32.mrf.mxu0
    %v740 = vadd.f32 0.0, %v739
    %v741 = vpop.f32.mrf.mxu0
    %742 = vdwg.mxu0
    %v751 = vunpack.c.l.b16 %v491
    %v752 = vunpack.c.l.b16 %v492
    %v753 = vunpack.c.l.b16 %v493
    %v754 = vunpack.c.l.b16 %v494
    %v755 = vunpack.c.l.b16 %v495
    %v756 = vunpack.c.l.b16 %v496
    %v757 = vunpack.c.l.b16 %v497
    %v758 = vunpack.c.l.b16 %v498
    %v759 = vpack.c.b16 %v752, %v751
    %v760 = vpack.c.b16 %v754, %v753
    %v761 = vpack.c.b16 %v756, %v755
    %v762 = vpack.c.b16 %v758, %v757
    %767 = vmatprep.subr.bf16.mxu0 0
    %768 = vmatpush1.bf16.msra.mxu0 %v506
    %769 = vmatprep.subr.bf16.mxu0 0
    %770 = vmatpush1.bf16.msra.mxu0 %v505
    %771 = vmatprep.subr.bf16.mxu0 0
    %772 = vmatpush1.bf16.msra.mxu0 %v504
    %773 = vmatprep.subr.bf16.mxu0 0
    %774 = vmatpush1.bf16.msra.mxu0 %v503
    %775 = vmatprep.subr.bf16.mxu0 0
    %776 = vmatpush1.bf16.msra.mxu0 %v502
    %777 = vmatprep.subr.bf16.mxu0 0
    %778 = vmatpush1.bf16.msra.mxu0 %v501
    %779 = vmatprep.subr.bf16.mxu0 0
    %780 = vmatpush1.bf16.msra.mxu0 %v500
    %781 = vmatprep.subr.bf16.mxu0 0
    %782 = vmatpush1.bf16.msra.mxu0 %v499
    %783 = vmatprep.subr.bf16.mxu0 0
    %784 = vmatpush2.bf16.msra.mxu0 0
    %785 = vmatprep.subr.bf16.mxu0 0
    %786 = vmatpush2.bf16.msra.mxu0 0
    %787 = vmatprep.subr.bf16.mxu0 0
    %788 = vmatpush2.bf16.msra.mxu0 0
    %789 = vmatprep.subr.bf16.mxu0 0
    %790 = vmatpush2.bf16.msra.mxu0 0
    %791 = vmatprep.subr.bf16.mxu0 0
    %792 = vmatpush2.bf16.msra.mxu0 0
    %793 = vmatprep.subr.bf16.mxu0 0
    %794 = vmatpush2.bf16.msra.mxu0 0
    %795 = vmatprep.subr.bf16.mxu0 0
    %796 = vmatpush2.bf16.msra.mxu0 0
    %797 = vmatprep.subr.bf16.mxu0 0
    %798 = vmatpush2.bf16.msra.mxu0 0
    %799 = vmatprep.mubr.bf16.mxu0 0
    %800 = vmatmul.mubr.bf16.gmra.mxu0 %v759
    %v801 = vpop.f32.mrf.mxu0
    %v802 = vadd.f32 %v713, %v801
    %v803 = vpop.f32.mrf.mxu0
    %v804 = vpop.f32.mrf.mxu0
    %v805 = vadd.f32 %v716, %v804
    %v806 = vpop.f32.mrf.mxu0
    %807 = vmatprep.mubr.bf16.mxu0 0
    %808 = vmatmul.mubr.bf16.gmra.mxu0 %v760
    %v809 = vpop.f32.mrf.mxu0
    %v810 = vadd.f32 %v721, %v809
    %v811 = vpop.f32.mrf.mxu0
    %v812 = vpop.f32.mrf.mxu0
    %v813 = vadd.f32 %v724, %v812
    %v814 = vpop.f32.mrf.mxu0
    %815 = vmatprep.mubr.bf16.mxu0 0
    %816 = vmatmul.mubr.bf16.gmra.mxu0 %v761
    %v817 = vpop.f32.mrf.mxu0
    %v818 = vadd.f32 %v729, %v817
    %v819 = vpop.f32.mrf.mxu0
    %v820 = vpop.f32.mrf.mxu0
    %v821 = vadd.f32 %v732, %v820
    %v822 = vpop.f32.mrf.mxu0
    %823 = vmatprep.mubr.bf16.mxu0 0
    %824 = vmatmul.mubr.bf16.gmra.mxu0 %v762
    %v825 = vpop.f32.mrf.mxu0
    %v826 = vadd.f32 %v737, %v825
    %v827 = vpop.f32.mrf.mxu0
    %v828 = vpop.f32.mrf.mxu0
    %v829 = vadd.f32 %v740, %v828
    %v830 = vpop.f32.mrf.mxu0
    %831 = vdwg.mxu0
    %s832 = scalar_lea.vmem [#allocation5], 64
    %v833 = vld [vmem:[%s832] sm:$0xf]
    %v834 = vld [vmem:[%s832 + $0x4] sm:$0xf]
    %v835 = vld [vmem:[%s832 + $0x8] sm:$0xf]
    %v836 = vld [vmem:[%s832 + $0xc] sm:$0xf]
    %v837 = vld [vmem:[%s832 + $0x10] sm:$0xf]
    %v838 = vld [vmem:[%s832 + $0x14] sm:$0xf]
    %v839 = vld [vmem:[%s832 + $0x18] sm:$0xf]
    %v840 = vld [vmem:[%s832 + $0x1c] sm:$0xf]
    %v849 = vunpack.c.l.b16 %v833
    %v850 = vunpack.c.l.b16 %v834
    %v851 = vunpack.c.l.b16 %v835
    %v852 = vunpack.c.l.b16 %v836
    %v853 = vunpack.c.l.b16 %v837
    %v854 = vunpack.c.l.b16 %v838
    %v855 = vunpack.c.l.b16 %v839
    %v856 = vunpack.c.l.b16 %v840
    %v857 = vpack.c.b16 %v850, %v849
    %v858 = vpack.c.b16 %v852, %v851
    %v859 = vpack.c.b16 %v854, %v853
    %v860 = vpack.c.b16 %v856, %v855
    %865 = vmatprep.subr.bf16.mxu0 0
    %866 = vmatpush1.bf16.msra.mxu0 0
    %867 = vmatprep.subr.bf16.mxu0 0
    %868 = vmatpush1.bf16.msra.mxu0 0
    %869 = vmatprep.subr.bf16.mxu0 0
    %870 = vmatpush1.bf16.msra.mxu0 0
    %871 = vmatprep.subr.bf16.mxu0 0
    %872 = vmatpush1.bf16.msra.mxu0 0
    %873 = vmatprep.subr.bf16.mxu0 0
    %874 = vmatpush1.bf16.msra.mxu0 %v860
    %875 = vmatprep.subr.bf16.mxu0 0
    %876 = vmatpush1.bf16.msra.mxu0 %v859
    %877 = vmatprep.subr.bf16.mxu0 0
    %878 = vmatpush1.bf16.msra.mxu0 %v858
    %879 = vmatprep.subr.bf16.mxu0 0
    %880 = vmatpush1.bf16.msra.mxu0 %v857
    %881 = vmatprep.subr.bf16.mxu0 0
    %882 = vmatpush2.bf16.msra.mxu0 0
    %883 = vmatprep.subr.bf16.mxu0 0
    %884 = vmatpush2.bf16.msra.mxu0 0
    %885 = vmatprep.subr.bf16.mxu0 0
    %886 = vmatpush2.bf16.msra.mxu0 0
    %887 = vmatprep.subr.bf16.mxu0 0
    %888 = vmatpush2.bf16.msra.mxu0 0
    %889 = vmatprep.subr.bf16.mxu0 0
    %890 = vmatpush2.bf16.msra.mxu0 0
    %891 = vmatprep.subr.bf16.mxu0 0
    %892 = vmatpush2.bf16.msra.mxu0 0
    %893 = vmatprep.subr.bf16.mxu0 0
    %894 = vmatpush2.bf16.msra.mxu0 0
    %895 = vmatprep.subr.bf16.mxu0 0
    %896 = vmatpush2.bf16.msra.mxu0 0
    %897 = vmatprep.mubr.bf16.mxu0 0
    %898 = vmatmul.mubr.bf16.gmra.mxu0 %v371
    %v899 = vpop.f32.mrf.mxu0
    %v900 = vadd.f32 0.0, %v899
    %v901 = vpop.f32.mrf.mxu0
    %v902 = vpop.f32.mrf.mxu0
    %v903 = vadd.f32 0.0, %v902
    %v904 = vpop.f32.mrf.mxu0
    %905 = vmatprep.mubr.bf16.mxu0 0
    %906 = vmatmul.mubr.bf16.gmra.mxu0 %v374
    %v907 = vpop.f32.mrf.mxu0
    %v908 = vadd.f32 0.0, %v907
    %v909 = vpop.f32.mrf.mxu0
    %v910 = vpop.f32.mrf.mxu0
    %v911 = vadd.f32 0.0, %v910
    %v912 = vpop.f32.mrf.mxu0
    %913 = vmatprep.mubr.bf16.mxu0 0
    %914 = vmatmul.mubr.bf16.gmra.mxu0 %v377
    %v915 = vpop.f32.mrf.mxu0
    %v916 = vadd.f32 0.0, %v915
    %v917 = vpop.f32.mrf.mxu0
    %v918 = vpop.f32.mrf.mxu0
    %v919 = vadd.f32 0.0, %v918
    %v920 = vpop.f32.mrf.mxu0
    %921 = vmatprep.mubr.bf16.mxu0 0
    %922 = vmatmul.mubr.bf16.gmra.mxu0 %v380
    %v923 = vpop.f32.mrf.mxu0
    %v924 = vadd.f32 0.0, %v923
    %v925 = vpop.f32.mrf.mxu0
    %v926 = vpop.f32.mrf.mxu0
    %v927 = vadd.f32 0.0, %v926
    %v928 = vpop.f32.mrf.mxu0
    %929 = vmatprep.mubr.bf16.mxu0 0
    %930 = vmatmul.mubr.bf16.gmra.mxu0 %v383
    %v931 = vpop.f32.mrf.mxu0
    %v932 = vadd.f32 0.0, %v931
    %v933 = vpop.f32.mrf.mxu0
    %v934 = vpop.f32.mrf.mxu0
    %v935 = vadd.f32 0.0, %v934
    %v936 = vpop.f32.mrf.mxu0
    %937 = vmatprep.mubr.bf16.mxu0 0
    %938 = vmatmul.mubr.bf16.gmra.mxu0 %v386
    %v939 = vpop.f32.mrf.mxu0
    %v940 = vadd.f32 0.0, %v939
    %v941 = vpop.f32.mrf.mxu0
    %v942 = vpop.f32.mrf.mxu0
    %v943 = vadd.f32 0.0, %v942
    %v944 = vpop.f32.mrf.mxu0
    %945 = vmatprep.mubr.bf16.mxu0 0
    %946 = vmatmul.mubr.bf16.gmra.mxu0 %v389
    %v947 = vpop.f32.mrf.mxu0
    %v948 = vadd.f32 0.0, %v947
    %v949 = vpop.f32.mrf.mxu0
    %v950 = vpop.f32.mrf.mxu0
    %v951 = vadd.f32 0.0, %v950
    %v952 = vpop.f32.mrf.mxu0
    %953 = vmatprep.mubr.bf16.mxu0 0
    %954 = vmatmul.mubr.bf16.gmra.mxu0 %v392
    %v955 = vpop.f32.mrf.mxu0
    %v956 = vadd.f32 0.0, %v955
    %v957 = vpop.f32.mrf.mxu0
    %v958 = vpop.f32.mrf.mxu0
    %v959 = vadd.f32 0.0, %v958
    %v960 = vpop.f32.mrf.mxu0
    %961 = vdwg.mxu0
    %s962 = scalar_lea.vmem [#allocation7], 64
    %v963 = vld [vmem:[%s962] sm:$0xf]
    %v964 = vld [vmem:[%s962 + $0x4] sm:$0xf]
    %v965 = vld [vmem:[%s962 + $0x8] sm:$0xf]
    %v966 = vld [vmem:[%s962 + $0xc] sm:$0xf]
    %v967 = vld [vmem:[%s962 + $0x10] sm:$0xf]
    %v968 = vld [vmem:[%s962 + $0x14] sm:$0xf]
    %v969 = vld [vmem:[%s962 + $0x18] sm:$0xf]
    %v970 = vld [vmem:[%s962 + $0x1c] sm:$0xf]
    %v971 = vpack.c.bf16 %v903, %v900
    %v972 = vpack.c.bf16 %v911, %v908
    %v973 = vpack.c.bf16 %v919, %v916
    %v974 = vpack.c.bf16 %v927, %v924
    %v975 = vpack.c.bf16 %v935, %v932
    %v976 = vpack.c.bf16 %v943, %v940
    %v977 = vpack.c.bf16 %v951, %v948
    %v978 = vpack.c.bf16 %v959, %v956
    %v987 = vunpack.c.l.b16 %v963
    %v988 = vunpack.c.l.b16 %v964
    %v989 = vunpack.c.l.b16 %v965
    %v990 = vunpack.c.l.b16 %v966
    %v991 = vunpack.c.l.b16 %v967
    %v992 = vunpack.c.l.b16 %v968
    %v993 = vunpack.c.l.b16 %v969
    %v994 = vunpack.c.l.b16 %v970
    %v995 = vpack.c.b16 %v988, %v987
    %v996 = vpack.c.b16 %v990, %v989
    %v997 = vpack.c.b16 %v992, %v991
    %v998 = vpack.c.b16 %v994, %v993
    %1003 = vmatprep.subr.bf16.mxu0 0
    %1004 = vmatpush1.bf16.msra.mxu0 %v978
    %1005 = vmatprep.subr.bf16.mxu0 0
    %1006 = vmatpush1.bf16.msra.mxu0 %v977
    %1007 = vmatprep.subr.bf16.mxu0 0
    %1008 = vmatpush1.bf16.msra.mxu0 %v976
    %1009 = vmatprep.subr.bf16.mxu0 0
    %1010 = vmatpush1.bf16.msra.mxu0 %v975
    %1011 = vmatprep.subr.bf16.mxu0 0
    %1012 = vmatpush1.bf16.msra.mxu0 %v974
    %1013 = vmatprep.subr.bf16.mxu0 0
    %1014 = vmatpush1.bf16.msra.mxu0 %v973
    %1015 = vmatprep.subr.bf16.mxu0 0
    %1016 = vmatpush1.bf16.msra.mxu0 %v972
    %1017 = vmatprep.subr.bf16.mxu0 0
    %1018 = vmatpush1.bf16.msra.mxu0 %v971
    %1019 = vmatprep.subr.bf16.mxu0 0
    %1020 = vmatpush2.bf16.msra.mxu0 0
    %1021 = vmatprep.subr.bf16.mxu0 0
    %1022 = vmatpush2.bf16.msra.mxu0 0
    %1023 = vmatprep.subr.bf16.mxu0 0
    %1024 = vmatpush2.bf16.msra.mxu0 0
    %1025 = vmatprep.subr.bf16.mxu0 0
    %1026 = vmatpush2.bf16.msra.mxu0 0
    %1027 = vmatprep.subr.bf16.mxu0 0
    %1028 = vmatpush2.bf16.msra.mxu0 0
    %1029 = vmatprep.subr.bf16.mxu0 0
    %1030 = vmatpush2.bf16.msra.mxu0 0
    %1031 = vmatprep.subr.bf16.mxu0 0
    %1032 = vmatpush2.bf16.msra.mxu0 0
    %1033 = vmatprep.subr.bf16.mxu0 0
    %1034 = vmatpush2.bf16.msra.mxu0 0
    %1035 = vmatprep.mubr.bf16.mxu0 0
    %1036 = vmatmul.mubr.bf16.gmra.mxu0 %v995
    %v1037 = vpop.f32.mrf.mxu0
    %v1038 = vadd.f32 0.0, %v1037
    %v1039 = vpop.f32.mrf.mxu0
    %v1040 = vpop.f32.mrf.mxu0
    %v1041 = vadd.f32 0.0, %v1040
    %v1042 = vpop.f32.mrf.mxu0
    %1043 = vmatprep.mubr.bf16.mxu0 0
    %1044 = vmatmul.mubr.bf16.gmra.mxu0 %v996
    %v1045 = vpop.f32.mrf.mxu0
    %v1046 = vadd.f32 0.0, %v1045
    %v1047 = vpop.f32.mrf.mxu0
    %v1048 = vpop.f32.mrf.mxu0
    %v1049 = vadd.f32 0.0, %v1048
    %v1050 = vpop.f32.mrf.mxu0
    %1051 = vmatprep.mubr.bf16.mxu0 0
    %1052 = vmatmul.mubr.bf16.gmra.mxu0 %v997
    %v1053 = vpop.f32.mrf.mxu0
    %v1054 = vadd.f32 0.0, %v1053
    %v1055 = vpop.f32.mrf.mxu0
    %v1056 = vpop.f32.mrf.mxu0
    %v1057 = vadd.f32 0.0, %v1056
    %v1058 = vpop.f32.mrf.mxu0
    %1059 = vmatprep.mubr.bf16.mxu0 0
    %1060 = vmatmul.mubr.bf16.gmra.mxu0 %v998
    %v1061 = vpop.f32.mrf.mxu0
    %v1062 = vadd.f32 0.0, %v1061
    %v1063 = vpop.f32.mrf.mxu0
    %v1064 = vpop.f32.mrf.mxu0
    %v1065 = vadd.f32 0.0, %v1064
    %v1066 = vpop.f32.mrf.mxu0
    %1067 = vdwg.mxu0
    %v1068 = vadd.f32 %v802, %v1038
    %v1069 = vadd.f32 %v805, %v1041
    %v1070 = vadd.f32 %v810, %v1046
    %v1071 = vadd.f32 %v813, %v1049
    %v1072 = vadd.f32 %v818, %v1054
    %v1073 = vadd.f32 %v821, %v1057
    %v1074 = vadd.f32 %v826, %v1062
    %v1075 = vadd.f32 %v829, %v1065
    %s1076 = scalar_lea.vmem [#allocation5], 96
    %v1077 = vld [vmem:[%s1076] sm:$0xf]
    %v1078 = vld [vmem:[%s1076 + $0x4] sm:$0xf]
    %v1079 = vld [vmem:[%s1076 + $0x8] sm:$0xf]
    %v1080 = vld [vmem:[%s1076 + $0xc] sm:$0xf]
    %v1081 = vld [vmem:[%s1076 + $0x10] sm:$0xf]
    %v1082 = vld [vmem:[%s1076 + $0x14] sm:$0xf]
    %v1083 = vld [vmem:[%s1076 + $0x18] sm:$0xf]
    %v1084 = vld [vmem:[%s1076 + $0x1c] sm:$0xf]
    %v1093 = vunpack.c.l.b16 %v1077
    %v1094 = vunpack.c.l.b16 %v1078
    %v1095 = vunpack.c.l.b16 %v1079
    %v1096 = vunpack.c.l.b16 %v1080
    %v1097 = vunpack.c.l.b16 %v1081
    %v1098 = vunpack.c.l.b16 %v1082
    %v1099 = vunpack.c.l.b16 %v1083
    %v1100 = vunpack.c.l.b16 %v1084
    %v1101 = vpack.c.b16 %v1094, %v1093
    %v1102 = vpack.c.b16 %v1096, %v1095
    %v1103 = vpack.c.b16 %v1098, %v1097
    %v1104 = vpack.c.b16 %v1100, %v1099
    %1109 = vmatprep.subr.bf16.mxu0 0
    %1110 = vmatpush1.bf16.msra.mxu0 0
    %1111 = vmatprep.subr.bf16.mxu0 0
    %1112 = vmatpush1.bf16.msra.mxu0 0
    %1113 = vmatprep.subr.bf16.mxu0 0
    %1114 = vmatpush1.bf16.msra.mxu0 0
    %1115 = vmatprep.subr.bf16.mxu0 0
    %1116 = vmatpush1.bf16.msra.mxu0 0
    %1117 = vmatprep.subr.bf16.mxu0 0
    %1118 = vmatpush1.bf16.msra.mxu0 %v1104
    %1119 = vmatprep.subr.bf16.mxu0 0
    %1120 = vmatpush1.bf16.msra.mxu0 %v1103
    %1121 = vmatprep.subr.bf16.mxu0 0
    %1122 = vmatpush1.bf16.msra.mxu0 %v1102
    %1123 = vmatprep.subr.bf16.mxu0 0
    %1124 = vmatpush1.bf16.msra.mxu0 %v1101
    %1125 = vmatprep.subr.bf16.mxu0 0
    %1126 = vmatpush2.bf16.msra.mxu0 0
    %1127 = vmatprep.subr.bf16.mxu0 0
    %1128 = vmatpush2.bf16.msra.mxu0 0
    %1129 = vmatprep.subr.bf16.mxu0 0
    %1130 = vmatpush2.bf16.msra.mxu0 0
    %1131 = vmatprep.subr.bf16.mxu0 0
    %1132 = vmatpush2.bf16.msra.mxu0 0
    %1133 = vmatprep.subr.bf16.mxu0 0
    %1134 = vmatpush2.bf16.msra.mxu0 0
    %1135 = vmatprep.subr.bf16.mxu0 0
    %1136 = vmatpush2.bf16.msra.mxu0 0
    %1137 = vmatprep.subr.bf16.mxu0 0
    %1138 = vmatpush2.bf16.msra.mxu0 0
    %1139 = vmatprep.subr.bf16.mxu0 0
    %1140 = vmatpush2.bf16.msra.mxu0 0
    %1141 = vmatprep.mubr.bf16.mxu0 0
    %1142 = vmatmul.mubr.bf16.gmra.mxu0 %v371
    %v1143 = vpop.f32.mrf.mxu0
    %v1144 = vadd.f32 0.0, %v1143
    %v1145 = vpop.f32.mrf.mxu0
    %v1146 = vpop.f32.mrf.mxu0
    %v1147 = vadd.f32 0.0, %v1146
    %v1148 = vpop.f32.mrf.mxu0
    %1149 = vmatprep.mubr.bf16.mxu0 0
    %1150 = vmatmul.mubr.bf16.gmra.mxu0 %v374
    %v1151 = vpop.f32.mrf.mxu0
    %v1152 = vadd.f32 0.0, %v1151
    %v1153 = vpop.f32.mrf.mxu0
    %v1154 = vpop.f32.mrf.mxu0
    %v1155 = vadd.f32 0.0, %v1154
    %v1156 = vpop.f32.mrf.mxu0
    %1157 = vmatprep.mubr.bf16.mxu0 0
    %1158 = vmatmul.mubr.bf16.gmra.mxu0 %v377
    %v1159 = vpop.f32.mrf.mxu0
    %v1160 = vadd.f32 0.0, %v1159
    %v1161 = vpop.f32.mrf.mxu0
    %v1162 = vpop.f32.mrf.mxu0
    %v1163 = vadd.f32 0.0, %v1162
    %v1164 = vpop.f32.mrf.mxu0
    %1165 = vmatprep.mubr.bf16.mxu0 0
    %1166 = vmatmul.mubr.bf16.gmra.mxu0 %v380
    %v1167 = vpop.f32.mrf.mxu0
    %v1168 = vadd.f32 0.0, %v1167
    %v1169 = vpop.f32.mrf.mxu0
    %v1170 = vpop.f32.mrf.mxu0
    %v1171 = vadd.f32 0.0, %v1170
    %v1172 = vpop.f32.mrf.mxu0
    %1173 = vmatprep.mubr.bf16.mxu0 0
    %1174 = vmatmul.mubr.bf16.gmra.mxu0 %v383
    %v1175 = vpop.f32.mrf.mxu0
    %v1176 = vadd.f32 0.0, %v1175
    %v1177 = vpop.f32.mrf.mxu0
    %v1178 = vpop.f32.mrf.mxu0
    %v1179 = vadd.f32 0.0, %v1178
    %v1180 = vpop.f32.mrf.mxu0
    %1181 = vmatprep.mubr.bf16.mxu0 0
    %1182 = vmatmul.mubr.bf16.gmra.mxu0 %v386
    %v1183 = vpop.f32.mrf.mxu0
    %v1184 = vadd.f32 0.0, %v1183
    %v1185 = vpop.f32.mrf.mxu0
    %v1186 = vpop.f32.mrf.mxu0
    %v1187 = vadd.f32 0.0, %v1186
    %v1188 = vpop.f32.mrf.mxu0
    %1189 = vmatprep.mubr.bf16.mxu0 0
    %1190 = vmatmul.mubr.bf16.gmra.mxu0 %v389
    %v1191 = vpop.f32.mrf.mxu0
    %v1192 = vadd.f32 0.0, %v1191
    %v1193 = vpop.f32.mrf.mxu0
    %v1194 = vpop.f32.mrf.mxu0
    %v1195 = vadd.f32 0.0, %v1194
    %v1196 = vpop.f32.mrf.mxu0
    %1197 = vmatprep.mubr.bf16.mxu0 0
    %1198 = vmatmul.mubr.bf16.gmra.mxu0 %v392
    %v1199 = vpop.f32.mrf.mxu0
    %v1200 = vadd.f32 0.0, %v1199
    %v1201 = vpop.f32.mrf.mxu0
    %v1202 = vpop.f32.mrf.mxu0
    %v1203 = vadd.f32 0.0, %v1202
    %v1204 = vpop.f32.mrf.mxu0
    %1205 = vdwg.mxu0
    %s1206 = scalar_lea.vmem [#allocation7], 96
    %v1207 = vld [vmem:[%s1206] sm:$0xf]
    %v1208 = vld [vmem:[%s1206 + $0x4] sm:$0xf]
    %v1209 = vld [vmem:[%s1206 + $0x8] sm:$0xf]
    %v1210 = vld [vmem:[%s1206 + $0xc] sm:$0xf]
    %v1211 = vld [vmem:[%s1206 + $0x10] sm:$0xf]
    %v1212 = vld [vmem:[%s1206 + $0x14] sm:$0xf]
    %v1213 = vld [vmem:[%s1206 + $0x18] sm:$0xf]
    %v1214 = vld [vmem:[%s1206 + $0x1c] sm:$0xf]
    %v1215 = vpack.c.bf16 %v1147, %v1144
    %v1216 = vpack.c.bf16 %v1155, %v1152
    %v1217 = vpack.c.bf16 %v1163, %v1160
    %v1218 = vpack.c.bf16 %v1171, %v1168
    %v1219 = vpack.c.bf16 %v1179, %v1176
    %v1220 = vpack.c.bf16 %v1187, %v1184
    %v1221 = vpack.c.bf16 %v1195, %v1192
    %v1222 = vpack.c.bf16 %v1203, %v1200
    %v1231 = vunpack.c.l.b16 %v1207
    %v1232 = vunpack.c.l.b16 %v1208
    %v1233 = vunpack.c.l.b16 %v1209
    %v1234 = vunpack.c.l.b16 %v1210
    %v1235 = vunpack.c.l.b16 %v1211
    %v1236 = vunpack.c.l.b16 %v1212
    %v1237 = vunpack.c.l.b16 %v1213
    %v1238 = vunpack.c.l.b16 %v1214
    %v1239 = vpack.c.b16 %v1232, %v1231
    %v1240 = vpack.c.b16 %v1234, %v1233
    %v1241 = vpack.c.b16 %v1236, %v1235
    %v1242 = vpack.c.b16 %v1238, %v1237
    %1247 = vmatprep.subr.bf16.mxu0 0
    %1248 = vmatpush1.bf16.msra.mxu0 %v1222
    %1249 = vmatprep.subr.bf16.mxu0 0
    %1250 = vmatpush1.bf16.msra.mxu0 %v1221
    %1251 = vmatprep.subr.bf16.mxu0 0
    %1252 = vmatpush1.bf16.msra.mxu0 %v1220
    %1253 = vmatprep.subr.bf16.mxu0 0
    %1254 = vmatpush1.bf16.msra.mxu0 %v1219
    %1255 = vmatprep.subr.bf16.mxu0 0
    %1256 = vmatpush1.bf16.msra.mxu0 %v1218
    %1257 = vmatprep.subr.bf16.mxu0 0
    %1258 = vmatpush1.bf16.msra.mxu0 %v1217
    %1259 = vmatprep.subr.bf16.mxu0 0
    %1260 = vmatpush1.bf16.msra.mxu0 %v1216
    %1261 = vmatprep.subr.bf16.mxu0 0
    %1262 = vmatpush1.bf16.msra.mxu0 %v1215
    %1263 = vmatprep.subr.bf16.mxu0 0
    %1264 = vmatpush2.bf16.msra.mxu0 0
    %1265 = vmatprep.subr.bf16.mxu0 0
    %1266 = vmatpush2.bf16.msra.mxu0 0
    %1267 = vmatprep.subr.bf16.mxu0 0
    %1268 = vmatpush2.bf16.msra.mxu0 0
    %1269 = vmatprep.subr.bf16.mxu0 0
    %1270 = vmatpush2.bf16.msra.mxu0 0
    %1271 = vmatprep.subr.bf16.mxu0 0
    %1272 = vmatpush2.bf16.msra.mxu0 0
    %1273 = vmatprep.subr.bf16.mxu0 0
    %1274 = vmatpush2.bf16.msra.mxu0 0
    %1275 = vmatprep.subr.bf16.mxu0 0
    %1276 = vmatpush2.bf16.msra.mxu0 0
    %1277 = vmatprep.subr.bf16.mxu0 0
    %1278 = vmatpush2.bf16.msra.mxu0 0
    %1279 = vmatprep.mubr.bf16.mxu0 0
    %1280 = vmatmul.mubr.bf16.gmra.mxu0 %v1239
    %v1281 = vpop.f32.mrf.mxu0
    %v1282 = vadd.f32 0.0, %v1281
    %v1283 = vpop.f32.mrf.mxu0
    %v1284 = vpop.f32.mrf.mxu0
    %v1285 = vadd.f32 0.0, %v1284
    %v1286 = vpop.f32.mrf.mxu0
    %1287 = vmatprep.mubr.bf16.mxu0 0
    %1288 = vmatmul.mubr.bf16.gmra.mxu0 %v1240
    %v1289 = vpop.f32.mrf.mxu0
    %v1290 = vadd.f32 0.0, %v1289
    %v1291 = vpop.f32.mrf.mxu0
    %v1292 = vpop.f32.mrf.mxu0
    %v1293 = vadd.f32 0.0, %v1292
    %v1294 = vpop.f32.mrf.mxu0
    %1295 = vmatprep.mubr.bf16.mxu0 0
    %1296 = vmatmul.mubr.bf16.gmra.mxu0 %v1241
    %v1297 = vpop.f32.mrf.mxu0
    %v1298 = vadd.f32 0.0, %v1297
    %v1299 = vpop.f32.mrf.mxu0
    %v1300 = vpop.f32.mrf.mxu0
    %v1301 = vadd.f32 0.0, %v1300
    %v1302 = vpop.f32.mrf.mxu0
    %1303 = vmatprep.mubr.bf16.mxu0 0
    %1304 = vmatmul.mubr.bf16.gmra.mxu0 %v1242
    %v1305 = vpop.f32.mrf.mxu0
    %v1306 = vadd.f32 0.0, %v1305
    %v1307 = vpop.f32.mrf.mxu0
    %v1308 = vpop.f32.mrf.mxu0
    %v1309 = vadd.f32 0.0, %v1308
    %v1310 = vpop.f32.mrf.mxu0
    %1311 = vdwg.mxu0
    %v1312 = vadd.f32 %v1068, %v1282
    %v1313 = vadd.f32 %v1069, %v1285
    %v1314 = vadd.f32 %v1070, %v1290
    %v1315 = vadd.f32 %v1071, %v1293
    %v1316 = vadd.f32 %v1072, %v1298
    %v1317 = vadd.f32 %v1073, %v1301
    %v1318 = vadd.f32 %v1074, %v1306
    %v1319 = vadd.f32 %v1075, %v1309
    %v1321 = vlaneseq
    %v1322 = vshrl.u32 %v1321, 7
    %v1323 = vsub.s32 0, %v1322
    %v1324 = vrot.slane %v328, %v1323
    %v1326 = vadd.f32 %v1312, %v1324
    %v1327 = vadd.f32 %v1313, %v1324
    %v1328 = vadd.f32 %v1314, %v1324
    %v1329 = vadd.f32 %v1315, %v1324
    %v1330 = vadd.f32 %v1316, %v1324
    %v1331 = vadd.f32 %v1317, %v1324
    %v1332 = vadd.f32 %v1318, %v1324
    %v1333 = vadd.f32 %v1319, %v1324
    %s1334 = scalar_lea.vmem %s14, 1
    %v1335 = vld [vmem:[%s1334] sm:$0x1]
    %v1336 = vpack.c.bf16 %v1327, %v1326
    %v1337 = vpack.c.bf16 %v1329, %v1328
    %v1338 = vpack.c.bf16 %v1331, %v1330
    %v1339 = vpack.c.bf16 %v1333, %v1332
    %v1340 = vld [vmem:[#allocation8] sm:$0xf]
    %v1341 = vld [vmem:[#allocation8 + $0x4] sm:$0xf]
    %v1342 = vld [vmem:[#allocation8 + $0x8] sm:$0xf]
    %v1343 = vld [vmem:[#allocation8 + $0xc] sm:$0xf]
    %v1344 = vld [vmem:[#allocation8 + $0x10] sm:$0xf]
    %v1345 = vld [vmem:[#allocation8 + $0x14] sm:$0xf]
    %v1346 = vld [vmem:[#allocation8 + $0x18] sm:$0xf]
    %v1347 = vld [vmem:[#allocation8 + $0x1c] sm:$0xf]
    %v1348 = vld [vmem:[#allocation8 + $0x20] sm:$0xf]
    %v1349 = vld [vmem:[#allocation8 + $0x24] sm:$0xf]
    %v1350 = vld [vmem:[#allocation8 + $0x28] sm:$0xf]
    %v1351 = vld [vmem:[#allocation8 + $0x2c] sm:$0xf]
    %v1352 = vld [vmem:[#allocation8 + $0x30] sm:$0xf]
    %v1353 = vld [vmem:[#allocation8 + $0x34] sm:$0xf]
    %v1354 = vld [vmem:[#allocation8 + $0x38] sm:$0xf]
    %v1355 = vld [vmem:[#allocation8 + $0x3c] sm:$0xf]
    %v1372 = vunpack.c.l.b16 %v1340
    %v1373 = vunpack.c.l.b16 %v1341
    %v1374 = vunpack.c.l.b16 %v1342
    %v1375 = vunpack.c.l.b16 %v1343
    %v1376 = vunpack.c.l.b16 %v1344
    %v1377 = vunpack.c.l.b16 %v1345
    %v1378 = vunpack.c.l.b16 %v1346
    %v1379 = vunpack.c.l.b16 %v1347
    %v1380 = vunpack.c.l.b16 %v1348
    %v1381 = vunpack.c.l.b16 %v1349
    %v1382 = vunpack.c.l.b16 %v1350
    %v1383 = vunpack.c.l.b16 %v1351
    %v1384 = vunpack.c.l.b16 %v1352
    %v1385 = vunpack.c.l.b16 %v1353
    %v1386 = vunpack.c.l.b16 %v1354
    %v1387 = vunpack.c.l.b16 %v1355
    %v1388 = vpack.c.b16 %v1373, %v1372
    %v1389 = vpack.c.b16 %v1375, %v1374
    %v1390 = vpack.c.b16 %v1377, %v1376
    %v1391 = vpack.c.b16 %v1379, %v1378
    %v1392 = vpack.c.b16 %v1381, %v1380
    %v1393 = vpack.c.b16 %v1383, %v1382
    %v1394 = vpack.c.b16 %v1385, %v1384
    %v1395 = vpack.c.b16 %v1387, %v1386
    %1404 = vmatprep.subr.bf16.mxu0 0
    %1405 = vmatpush1.bf16.msra.mxu0 %v1395
    %1406 = vmatprep.subr.bf16.mxu0 0
    %1407 = vmatpush1.bf16.msra.mxu0 %v1394
    %1408 = vmatprep.subr.bf16.mxu0 0
    %1409 = vmatpush1.bf16.msra.mxu0 %v1393
    %1410 = vmatprep.subr.bf16.mxu0 0
    %1411 = vmatpush1.bf16.msra.mxu0 %v1392
    %1412 = vmatprep.subr.bf16.mxu0 0
    %1413 = vmatpush1.bf16.msra.mxu0 %v1391
    %1414 = vmatprep.subr.bf16.mxu0 0
    %1415 = vmatpush1.bf16.msra.mxu0 %v1390
    %1416 = vmatprep.subr.bf16.mxu0 0
    %1417 = vmatpush1.bf16.msra.mxu0 %v1389
    %1418 = vmatprep.subr.bf16.mxu0 0
    %1419 = vmatpush1.bf16.msra.mxu0 %v1388
    %1420 = vmatprep.subr.bf16.mxu0 0
    %1421 = vmatpush2.bf16.msra.mxu0 0
    %1422 = vmatprep.subr.bf16.mxu0 0
    %1423 = vmatpush2.bf16.msra.mxu0 0
    %1424 = vmatprep.subr.bf16.mxu0 0
    %1425 = vmatpush2.bf16.msra.mxu0 0
    %1426 = vmatprep.subr.bf16.mxu0 0
    %1427 = vmatpush2.bf16.msra.mxu0 0
    %1428 = vmatprep.subr.bf16.mxu0 0
    %1429 = vmatpush2.bf16.msra.mxu0 0
    %1430 = vmatprep.subr.bf16.mxu0 0
    %1431 = vmatpush2.bf16.msra.mxu0 0
    %1432 = vmatprep.subr.bf16.mxu0 0
    %1433 = vmatpush2.bf16.msra.mxu0 0
    %1434 = vmatprep.subr.bf16.mxu0 0
    %1435 = vmatpush2.bf16.msra.mxu0 0
    %1436 = vmatprep.mubr.bf16.mxu0 0
    %1437 = vmatmul.mubr.bf16.gmra.mxu0 %v1336
    %v1438 = vpop.f32.mrf.mxu0
    %v1439 = vadd.f32 0.0, %v1438
    %v1440 = vpop.f32.mrf.mxu0
    %v1441 = vpop.f32.mrf.mxu0
    %v1442 = vadd.f32 0.0, %v1441
    %v1443 = vpop.f32.mrf.mxu0
    %1444 = vmatprep.mubr.bf16.mxu0 0
    %1445 = vmatmul.mubr.bf16.gmra.mxu0 %v1337
    %v1446 = vpop.f32.mrf.mxu0
    %v1447 = vadd.f32 0.0, %v1446
    %v1448 = vpop.f32.mrf.mxu0
    %v1449 = vpop.f32.mrf.mxu0
    %v1450 = vadd.f32 0.0, %v1449
    %v1451 = vpop.f32.mrf.mxu0
    %1452 = vmatprep.mubr.bf16.mxu0 0
    %1453 = vmatmul.mubr.bf16.gmra.mxu0 %v1338
    %v1454 = vpop.f32.mrf.mxu0
    %v1455 = vadd.f32 0.0, %v1454
    %v1456 = vpop.f32.mrf.mxu0
    %v1457 = vpop.f32.mrf.mxu0
    %v1458 = vadd.f32 0.0, %v1457
    %v1459 = vpop.f32.mrf.mxu0
    %1460 = vmatprep.mubr.bf16.mxu0 0
    %1461 = vmatmul.mubr.bf16.gmra.mxu0 %v1339
    %v1462 = vpop.f32.mrf.mxu0
    %v1463 = vadd.f32 0.0, %v1462
    %v1464 = vpop.f32.mrf.mxu0
    %v1465 = vpop.f32.mrf.mxu0
    %v1466 = vadd.f32 0.0, %v1465
    %v1467 = vpop.f32.mrf.mxu0
    %1468 = vdwg.mxu0
    %v1469 = vld [vmem:[#allocation10] sm:$0xf]
    %v1470 = vld [vmem:[#allocation10 + $0x4] sm:$0xf]
    %v1471 = vld [vmem:[#allocation10 + $0x8] sm:$0xf]
    %v1472 = vld [vmem:[#allocation10 + $0xc] sm:$0xf]
    %v1473 = vpack.c.bf16 %v1442, %v1439
    %v1474 = vpack.c.bf16 %v1450, %v1447
    %v1475 = vpack.c.bf16 %v1458, %v1455
    %v1476 = vpack.c.bf16 %v1466, %v1463
    %s1477 = scalar_lea.vmem [#allocation8], 64
    %v1478 = vld [vmem:[%s1477] sm:$0xf]
    %v1479 = vld [vmem:[%s1477 + $0x4] sm:$0xf]
    %v1480 = vld [vmem:[%s1477 + $0x8] sm:$0xf]
    %v1481 = vld [vmem:[%s1477 + $0xc] sm:$0xf]
    %v1482 = vld [vmem:[%s1477 + $0x10] sm:$0xf]
    %v1483 = vld [vmem:[%s1477 + $0x14] sm:$0xf]
    %v1484 = vld [vmem:[%s1477 + $0x18] sm:$0xf]
    %v1485 = vld [vmem:[%s1477 + $0x1c] sm:$0xf]
    %v1486 = vld [vmem:[%s1477 + $0x20] sm:$0xf]
    %v1487 = vld [vmem:[%s1477 + $0x24] sm:$0xf]
    %v1488 = vld [vmem:[%s1477 + $0x28] sm:$0xf]
    %v1489 = vld [vmem:[%s1477 + $0x2c] sm:$0xf]
    %v1490 = vld [vmem:[%s1477 + $0x30] sm:$0xf]
    %v1491 = vld [vmem:[%s1477 + $0x34] sm:$0xf]
    %v1492 = vld [vmem:[%s1477 + $0x38] sm:$0xf]
    %v1493 = vld [vmem:[%s1477 + $0x3c] sm:$0xf]
    %v1510 = vunpack.c.l.b16 %v1478
    %v1511 = vunpack.c.l.b16 %v1479
    %v1512 = vunpack.c.l.b16 %v1480
    %v1513 = vunpack.c.l.b16 %v1481
    %v1514 = vunpack.c.l.b16 %v1482
    %v1515 = vunpack.c.l.b16 %v1483
    %v1516 = vunpack.c.l.b16 %v1484
    %v1517 = vunpack.c.l.b16 %v1485
    %v1518 = vunpack.c.l.b16 %v1486
    %v1519 = vunpack.c.l.b16 %v1487
    %v1520 = vunpack.c.l.b16 %v1488
    %v1521 = vunpack.c.l.b16 %v1489
    %v1522 = vunpack.c.l.b16 %v1490
    %v1523 = vunpack.c.l.b16 %v1491
    %v1524 = vunpack.c.l.b16 %v1492
    %v1525 = vunpack.c.l.b16 %v1493
    %v1526 = vpack.c.b16 %v1511, %v1510
    %v1527 = vpack.c.b16 %v1513, %v1512
    %v1528 = vpack.c.b16 %v1515, %v1514
    %v1529 = vpack.c.b16 %v1517, %v1516
    %v1530 = vpack.c.b16 %v1519, %v1518
    %v1531 = vpack.c.b16 %v1521, %v1520
    %v1532 = vpack.c.b16 %v1523, %v1522
    %v1533 = vpack.c.b16 %v1525, %v1524
    %1542 = vmatprep.subr.bf16.mxu0 0
    %1543 = vmatpush1.bf16.msra.mxu0 %v1533
    %1544 = vmatprep.subr.bf16.mxu0 0
    %1545 = vmatpush1.bf16.msra.mxu0 %v1532
    %1546 = vmatprep.subr.bf16.mxu0 0
    %1547 = vmatpush1.bf16.msra.mxu0 %v1531
    %1548 = vmatprep.subr.bf16.mxu0 0
    %1549 = vmatpush1.bf16.msra.mxu0 %v1530
    %1550 = vmatprep.subr.bf16.mxu0 0
    %1551 = vmatpush1.bf16.msra.mxu0 %v1529
    %1552 = vmatprep.subr.bf16.mxu0 0
    %1553 = vmatpush1.bf16.msra.mxu0 %v1528
    %1554 = vmatprep.subr.bf16.mxu0 0
    %1555 = vmatpush1.bf16.msra.mxu0 %v1527
    %1556 = vmatprep.subr.bf16.mxu0 0
    %1557 = vmatpush1.bf16.msra.mxu0 %v1526
    %1558 = vmatprep.subr.bf16.mxu0 0
    %1559 = vmatpush2.bf16.msra.mxu0 0
    %1560 = vmatprep.subr.bf16.mxu0 0
    %1561 = vmatpush2.bf16.msra.mxu0 0
    %1562 = vmatprep.subr.bf16.mxu0 0
    %1563 = vmatpush2.bf16.msra.mxu0 0
    %1564 = vmatprep.subr.bf16.mxu0 0
    %1565 = vmatpush2.bf16.msra.mxu0 0
    %1566 = vmatprep.subr.bf16.mxu0 0
    %1567 = vmatpush2.bf16.msra.mxu0 0
    %1568 = vmatprep.subr.bf16.mxu0 0
    %1569 = vmatpush2.bf16.msra.mxu0 0
    %1570 = vmatprep.subr.bf16.mxu0 0
    %1571 = vmatpush2.bf16.msra.mxu0 0
    %1572 = vmatprep.subr.bf16.mxu0 0
    %1573 = vmatpush2.bf16.msra.mxu0 0
    %1574 = vmatprep.mubr.bf16.mxu0 0
    %1575 = vmatmul.mubr.bf16.gmra.mxu0 %v1336
    %v1576 = vpop.f32.mrf.mxu0
    %v1577 = vadd.f32 0.0, %v1576
    %v1578 = vpop.f32.mrf.mxu0
    %v1579 = vpop.f32.mrf.mxu0
    %v1580 = vadd.f32 0.0, %v1579
    %v1581 = vpop.f32.mrf.mxu0
    %1582 = vmatprep.mubr.bf16.mxu0 0
    %1583 = vmatmul.mubr.bf16.gmra.mxu0 %v1337
    %v1584 = vpop.f32.mrf.mxu0
    %v1585 = vadd.f32 0.0, %v1584
    %v1586 = vpop.f32.mrf.mxu0
    %v1587 = vpop.f32.mrf.mxu0
    %v1588 = vadd.f32 0.0, %v1587
    %v1589 = vpop.f32.mrf.mxu0
    %1590 = vmatprep.mubr.bf16.mxu0 0
    %1591 = vmatmul.mubr.bf16.gmra.mxu0 %v1338
    %v1592 = vpop.f32.mrf.mxu0
    %v1593 = vadd.f32 0.0, %v1592
    %v1594 = vpop.f32.mrf.mxu0
    %v1595 = vpop.f32.mrf.mxu0
    %v1596 = vadd.f32 0.0, %v1595
    %v1597 = vpop.f32.mrf.mxu0
    %1598 = vmatprep.mubr.bf16.mxu0 0
    %1599 = vmatmul.mubr.bf16.gmra.mxu0 %v1339
    %v1600 = vpop.f32.mrf.mxu0
    %v1601 = vadd.f32 0.0, %v1600
    %v1602 = vpop.f32.mrf.mxu0
    %v1603 = vpop.f32.mrf.mxu0
    %v1604 = vadd.f32 0.0, %v1603
    %v1605 = vpop.f32.mrf.mxu0
    %1606 = vdwg.mxu0
    %s1607 = scalar_lea.vmem [#allocation10], 16
    %v1608 = vld [vmem:[%s1607] sm:$0xf]
    %v1609 = vld [vmem:[%s1607 + $0x4] sm:$0xf]
    %v1610 = vld [vmem:[%s1607 + $0x8] sm:$0xf]
    %v1611 = vld [vmem:[%s1607 + $0xc] sm:$0xf]
    %v1612 = vpack.c.bf16 %v1580, %v1577
    %v1613 = vpack.c.bf16 %v1588, %v1585
    %v1614 = vpack.c.bf16 %v1596, %v1593
    %v1615 = vpack.c.bf16 %v1604, %v1601
    %v1620 = vunpack.c.l.b16 %v1608
    %v1621 = vunpack.c.l.b16 %v1609
    %v1622 = vunpack.c.l.b16 %v1610
    %v1623 = vunpack.c.l.b16 %v1611
    %v1624 = vpack.c.b16 %v1621, %v1620
    %v1625 = vpack.c.b16 %v1623, %v1622
    %v1627 = vsel %vm369, %v1624, 0
    %v1630 = vsel %vm369, %v1625, 0
    %1632 = vmatprep.subr.bf16.mxu0 0
    %1633 = vmatpush1.bf16.msra.mxu0 0
    %1634 = vmatprep.subr.bf16.mxu0 0
    %1635 = vmatpush1.bf16.msra.mxu0 0
    %1636 = vmatprep.subr.bf16.mxu0 0
    %1637 = vmatpush1.bf16.msra.mxu0 0
    %1638 = vmatprep.subr.bf16.mxu0 0
    %1639 = vmatpush1.bf16.msra.mxu0 0
    %1640 = vmatprep.subr.bf16.mxu0 0
    %1641 = vmatpush1.bf16.msra.mxu0 %v1615
    %1642 = vmatprep.subr.bf16.mxu0 0
    %1643 = vmatpush1.bf16.msra.mxu0 %v1614
    %1644 = vmatprep.subr.bf16.mxu0 0
    %1645 = vmatpush1.bf16.msra.mxu0 %v1613
    %1646 = vmatprep.subr.bf16.mxu0 0
    %1647 = vmatpush1.bf16.msra.mxu0 %v1612
    %1648 = vmatprep.subr.bf16.mxu0 0
    %1649 = vmatpush2.bf16.msra.mxu0 0
    %1650 = vmatprep.subr.bf16.mxu0 0
    %1651 = vmatpush2.bf16.msra.mxu0 0
    %1652 = vmatprep.subr.bf16.mxu0 0
    %1653 = vmatpush2.bf16.msra.mxu0 0
    %1654 = vmatprep.subr.bf16.mxu0 0
    %1655 = vmatpush2.bf16.msra.mxu0 0
    %1656 = vmatprep.subr.bf16.mxu0 0
    %1657 = vmatpush2.bf16.msra.mxu0 0
    %1658 = vmatprep.subr.bf16.mxu0 0
    %1659 = vmatpush2.bf16.msra.mxu0 0
    %1660 = vmatprep.subr.bf16.mxu0 0
    %1661 = vmatpush2.bf16.msra.mxu0 0
    %1662 = vmatprep.subr.bf16.mxu0 0
    %1663 = vmatpush2.bf16.msra.mxu0 0
    %1664 = vmatprep.mubr.bf16.mxu0 0
    %1665 = vmatmul.mubr.bf16.gmra.mxu0 %v1627
    %v1666 = vpop.f32.mrf.mxu0
    %v1667 = vadd.f32 0.0, %v1666
    %v1668 = vpop.f32.mrf.mxu0
    %v1669 = vpop.f32.mrf.mxu0
    %v1670 = vadd.f32 0.0, %v1669
    %v1671 = vpop.f32.mrf.mxu0
    %1672 = vmatprep.mubr.bf16.mxu0 0
    %1673 = vmatmul.mubr.bf16.gmra.mxu0 %v1630
    %v1674 = vpop.f32.mrf.mxu0
    %v1675 = vadd.f32 0.0, %v1674
    %v1676 = vpop.f32.mrf.mxu0
    %v1677 = vpop.f32.mrf.mxu0
    %v1678 = vadd.f32 0.0, %v1677
    %v1679 = vpop.f32.mrf.mxu0
    %1680 = vdwg.mxu0
    %v1685 = vunpack.c.l.b16 %v1469
    %v1686 = vunpack.c.l.b16 %v1470
    %v1687 = vunpack.c.l.b16 %v1471
    %v1688 = vunpack.c.l.b16 %v1472
    %v1689 = vpack.c.b16 %v1686, %v1685
    %v1690 = vpack.c.b16 %v1688, %v1687
    %v1692 = vsel %vm369, %v1689, 0
    %v1695 = vsel %vm369, %v1690, 0
    %1697 = vmatprep.subr.bf16.mxu0 0
    %1698 = vmatpush1.bf16.msra.mxu0 0
    %1699 = vmatprep.subr.bf16.mxu0 0
    %1700 = vmatpush1.bf16.msra.mxu0 0
    %1701 = vmatprep.subr.bf16.mxu0 0
    %1702 = vmatpush1.bf16.msra.mxu0 0
    %1703 = vmatprep.subr.bf16.mxu0 0
    %1704 = vmatpush1.bf16.msra.mxu0 0
    %1705 = vmatprep.subr.bf16.mxu0 0
    %1706 = vmatpush1.bf16.msra.mxu0 %v1476
    %1707 = vmatprep.subr.bf16.mxu0 0
    %1708 = vmatpush1.bf16.msra.mxu0 %v1475
    %1709 = vmatprep.subr.bf16.mxu0 0
    %1710 = vmatpush1.bf16.msra.mxu0 %v1474
    %1711 = vmatprep.subr.bf16.mxu0 0
    %1712 = vmatpush1.bf16.msra.mxu0 %v1473
    %1713 = vmatprep.subr.bf16.mxu0 0
    %1714 = vmatpush2.bf16.msra.mxu0 0
    %1715 = vmatprep.subr.bf16.mxu0 0
    %1716 = vmatpush2.bf16.msra.mxu0 0
    %1717 = vmatprep.subr.bf16.mxu0 0
    %1718 = vmatpush2.bf16.msra.mxu0 0
    %1719 = vmatprep.subr.bf16.mxu0 0
    %1720 = vmatpush2.bf16.msra.mxu0 0
    %1721 = vmatprep.subr.bf16.mxu0 0
    %1722 = vmatpush2.bf16.msra.mxu0 0
    %1723 = vmatprep.subr.bf16.mxu0 0
    %1724 = vmatpush2.bf16.msra.mxu0 0
    %1725 = vmatprep.subr.bf16.mxu0 0
    %1726 = vmatpush2.bf16.msra.mxu0 0
    %1727 = vmatprep.subr.bf16.mxu0 0
    %1728 = vmatpush2.bf16.msra.mxu0 0
    %1729 = vmatprep.mubr.bf16.mxu0 0
    %1730 = vmatmul.mubr.bf16.gmra.mxu0 %v1692
    %v1731 = vpop.f32.mrf.mxu0
    %v1732 = vadd.f32 %v1667, %v1731
    %v1733 = vpop.f32.mrf.mxu0
    %v1734 = vpop.f32.mrf.mxu0
    %v1735 = vadd.f32 %v1670, %v1734
    %v1736 = vpop.f32.mrf.mxu0
    %1737 = vmatprep.mubr.bf16.mxu0 0
    %1738 = vmatmul.mubr.bf16.gmra.mxu0 %v1695
    %v1739 = vpop.f32.mrf.mxu0
    %v1740 = vadd.f32 %v1675, %v1739
    %v1741 = vpop.f32.mrf.mxu0
    %v1742 = vpop.f32.mrf.mxu0
    %v1743 = vadd.f32 %v1678, %v1742
    %v1744 = vpop.f32.mrf.mxu0
    %1745 = vdwg.mxu0
    %s1746 = scalar_lea.vmem [#allocation8], 128
    %v1747 = vld [vmem:[%s1746] sm:$0xf]
    %v1748 = vld [vmem:[%s1746 + $0x4] sm:$0xf]
    %v1749 = vld [vmem:[%s1746 + $0x8] sm:$0xf]
    %v1750 = vld [vmem:[%s1746 + $0xc] sm:$0xf]
    %v1751 = vld [vmem:[%s1746 + $0x10] sm:$0xf]
    %v1752 = vld [vmem:[%s1746 + $0x14] sm:$0xf]
    %v1753 = vld [vmem:[%s1746 + $0x18] sm:$0xf]
    %v1754 = vld [vmem:[%s1746 + $0x1c] sm:$0xf]
    %v1755 = vld [vmem:[%s1746 + $0x20] sm:$0xf]
    %v1756 = vld [vmem:[%s1746 + $0x24] sm:$0xf]
    %v1757 = vld [vmem:[%s1746 + $0x28] sm:$0xf]
    %v1758 = vld [vmem:[%s1746 + $0x2c] sm:$0xf]
    %v1759 = vld [vmem:[%s1746 + $0x30] sm:$0xf]
    %v1760 = vld [vmem:[%s1746 + $0x34] sm:$0xf]
    %v1761 = vld [vmem:[%s1746 + $0x38] sm:$0xf]
    %v1762 = vld [vmem:[%s1746 + $0x3c] sm:$0xf]
    %v1779 = vunpack.c.l.b16 %v1747
    %v1780 = vunpack.c.l.b16 %v1748
    %v1781 = vunpack.c.l.b16 %v1749
    %v1782 = vunpack.c.l.b16 %v1750
    %v1783 = vunpack.c.l.b16 %v1751
    %v1784 = vunpack.c.l.b16 %v1752
    %v1785 = vunpack.c.l.b16 %v1753
    %v1786 = vunpack.c.l.b16 %v1754
    %v1787 = vunpack.c.l.b16 %v1755
    %v1788 = vunpack.c.l.b16 %v1756
    %v1789 = vunpack.c.l.b16 %v1757
    %v1790 = vunpack.c.l.b16 %v1758
    %v1791 = vunpack.c.l.b16 %v1759
    %v1792 = vunpack.c.l.b16 %v1760
    %v1793 = vunpack.c.l.b16 %v1761
    %v1794 = vunpack.c.l.b16 %v1762
    %v1795 = vpack.c.b16 %v1780, %v1779
    %v1796 = vpack.c.b16 %v1782, %v1781
    %v1797 = vpack.c.b16 %v1784, %v1783
    %v1798 = vpack.c.b16 %v1786, %v1785
    %v1799 = vpack.c.b16 %v1788, %v1787
    %v1800 = vpack.c.b16 %v1790, %v1789
    %v1801 = vpack.c.b16 %v1792, %v1791
    %v1802 = vpack.c.b16 %v1794, %v1793
    %1811 = vmatprep.subr.bf16.mxu0 0
    %1812 = vmatpush1.bf16.msra.mxu0 %v1802
    %1813 = vmatprep.subr.bf16.mxu0 0
    %1814 = vmatpush1.bf16.msra.mxu0 %v1801
    %1815 = vmatprep.subr.bf16.mxu0 0
    %1816 = vmatpush1.bf16.msra.mxu0 %v1800
    %1817 = vmatprep.subr.bf16.mxu0 0
    %1818 = vmatpush1.bf16.msra.mxu0 %v1799
    %1819 = vmatprep.subr.bf16.mxu0 0
    %1820 = vmatpush1.bf16.msra.mxu0 %v1798
    %1821 = vmatprep.subr.bf16.mxu0 0
    %1822 = vmatpush1.bf16.msra.mxu0 %v1797
    %1823 = vmatprep.subr.bf16.mxu0 0
    %1824 = vmatpush1.bf16.msra.mxu0 %v1796
    %1825 = vmatprep.subr.bf16.mxu0 0
    %1826 = vmatpush1.bf16.msra.mxu0 %v1795
    %1827 = vmatprep.subr.bf16.mxu0 0
    %1828 = vmatpush2.bf16.msra.mxu0 0
    %1829 = vmatprep.subr.bf16.mxu0 0
    %1830 = vmatpush2.bf16.msra.mxu0 0
    %1831 = vmatprep.subr.bf16.mxu0 0
    %1832 = vmatpush2.bf16.msra.mxu0 0
    %1833 = vmatprep.subr.bf16.mxu0 0
    %1834 = vmatpush2.bf16.msra.mxu0 0
    %1835 = vmatprep.subr.bf16.mxu0 0
    %1836 = vmatpush2.bf16.msra.mxu0 0
    %1837 = vmatprep.subr.bf16.mxu0 0
    %1838 = vmatpush2.bf16.msra.mxu0 0
    %1839 = vmatprep.subr.bf16.mxu0 0
    %1840 = vmatpush2.bf16.msra.mxu0 0
    %1841 = vmatprep.subr.bf16.mxu0 0
    %1842 = vmatpush2.bf16.msra.mxu0 0
    %1843 = vmatprep.mubr.bf16.mxu0 0
    %1844 = vmatmul.mubr.bf16.gmra.mxu0 %v1336
    %v1845 = vpop.f32.mrf.mxu0
    %v1846 = vadd.f32 0.0, %v1845
    %v1847 = vpop.f32.mrf.mxu0
    %v1848 = vpop.f32.mrf.mxu0
    %v1849 = vadd.f32 0.0, %v1848
    %v1850 = vpop.f32.mrf.mxu0
    %1851 = vmatprep.mubr.bf16.mxu0 0
    %1852 = vmatmul.mubr.bf16.gmra.mxu0 %v1337
    %v1853 = vpop.f32.mrf.mxu0
    %v1854 = vadd.f32 0.0, %v1853
    %v1855 = vpop.f32.mrf.mxu0
    %v1856 = vpop.f32.mrf.mxu0
    %v1857 = vadd.f32 0.0, %v1856
    %v1858 = vpop.f32.mrf.mxu0
    %1859 = vmatprep.mubr.bf16.mxu0 0
    %1860 = vmatmul.mubr.bf16.gmra.mxu0 %v1338
    %v1861 = vpop.f32.mrf.mxu0
    %v1862 = vadd.f32 0.0, %v1861
    %v1863 = vpop.f32.mrf.mxu0
    %v1864 = vpop.f32.mrf.mxu0
    %v1865 = vadd.f32 0.0, %v1864
    %v1866 = vpop.f32.mrf.mxu0
    %1867 = vmatprep.mubr.bf16.mxu0 0
    %1868 = vmatmul.mubr.bf16.gmra.mxu0 %v1339
    %v1869 = vpop.f32.mrf.mxu0
    %v1870 = vadd.f32 0.0, %v1869
    %v1871 = vpop.f32.mrf.mxu0
    %v1872 = vpop.f32.mrf.mxu0
    %v1873 = vadd.f32 0.0, %v1872
    %v1874 = vpop.f32.mrf.mxu0
    %1875 = vdwg.mxu0
    %s1876 = scalar_lea.vmem [#allocation10], 32
    %v1877 = vld [vmem:[%s1876] sm:$0xf]
    %v1878 = vld [vmem:[%s1876 + $0x4] sm:$0xf]
    %v1879 = vld [vmem:[%s1876 + $0x8] sm:$0xf]
    %v1880 = vld [vmem:[%s1876 + $0xc] sm:$0xf]
    %v1881 = vpack.c.bf16 %v1849, %v1846
    %v1882 = vpack.c.bf16 %v1857, %v1854
    %v1883 = vpack.c.bf16 %v1865, %v1862
    %v1884 = vpack.c.bf16 %v1873, %v1870
    %v1889 = vunpack.c.l.b16 %v1877
    %v1890 = vunpack.c.l.b16 %v1878
    %v1891 = vunpack.c.l.b16 %v1879
    %v1892 = vunpack.c.l.b16 %v1880
    %v1893 = vpack.c.b16 %v1890, %v1889
    %v1894 = vpack.c.b16 %v1892, %v1891
    %v1896 = vsel %vm369, %v1893, 0
    %v1899 = vsel %vm369, %v1894, 0
    %1901 = vmatprep.subr.bf16.mxu0 0
    %1902 = vmatpush1.bf16.msra.mxu0 0
    %1903 = vmatprep.subr.bf16.mxu0 0
    %1904 = vmatpush1.bf16.msra.mxu0 0
    %1905 = vmatprep.subr.bf16.mxu0 0
    %1906 = vmatpush1.bf16.msra.mxu0 0
    %1907 = vmatprep.subr.bf16.mxu0 0
    %1908 = vmatpush1.bf16.msra.mxu0 0
    %1909 = vmatprep.subr.bf16.mxu0 0
    %1910 = vmatpush1.bf16.msra.mxu0 %v1884
    %1911 = vmatprep.subr.bf16.mxu0 0
    %1912 = vmatpush1.bf16.msra.mxu0 %v1883
    %1913 = vmatprep.subr.bf16.mxu0 0
    %1914 = vmatpush1.bf16.msra.mxu0 %v1882
    %1915 = vmatprep.subr.bf16.mxu0 0
    %1916 = vmatpush1.bf16.msra.mxu0 %v1881
    %1917 = vmatprep.subr.bf16.mxu0 0
    %1918 = vmatpush2.bf16.msra.mxu0 0
    %1919 = vmatprep.subr.bf16.mxu0 0
    %1920 = vmatpush2.bf16.msra.mxu0 0
    %1921 = vmatprep.subr.bf16.mxu0 0
    %1922 = vmatpush2.bf16.msra.mxu0 0
    %1923 = vmatprep.subr.bf16.mxu0 0
    %1924 = vmatpush2.bf16.msra.mxu0 0
    %1925 = vmatprep.subr.bf16.mxu0 0
    %1926 = vmatpush2.bf16.msra.mxu0 0
    %1927 = vmatprep.subr.bf16.mxu0 0
    %1928 = vmatpush2.bf16.msra.mxu0 0
    %1929 = vmatprep.subr.bf16.mxu0 0
    %1930 = vmatpush2.bf16.msra.mxu0 0
    %1931 = vmatprep.subr.bf16.mxu0 0
    %1932 = vmatpush2.bf16.msra.mxu0 0
    %1933 = vmatprep.mubr.bf16.mxu0 0
    %1934 = vmatmul.mubr.bf16.gmra.mxu0 %v1896
    %v1935 = vpop.f32.mrf.mxu0
    %v1936 = vadd.f32 0.0, %v1935
    %v1937 = vpop.f32.mrf.mxu0
    %v1938 = vpop.f32.mrf.mxu0
    %v1939 = vadd.f32 0.0, %v1938
    %v1940 = vpop.f32.mrf.mxu0
    %1941 = vmatprep.mubr.bf16.mxu0 0
    %1942 = vmatmul.mubr.bf16.gmra.mxu0 %v1899
    %v1943 = vpop.f32.mrf.mxu0
    %v1944 = vadd.f32 0.0, %v1943
    %v1945 = vpop.f32.mrf.mxu0
    %v1946 = vpop.f32.mrf.mxu0
    %v1947 = vadd.f32 0.0, %v1946
    %v1948 = vpop.f32.mrf.mxu0
    %1949 = vdwg.mxu0
    %v1950 = vadd.f32 %v1732, %v1936
    %v1951 = vadd.f32 %v1735, %v1939
    %v1952 = vadd.f32 %v1740, %v1944
    %v1953 = vadd.f32 %v1743, %v1947
    %s1954 = scalar_lea.vmem [#allocation8], 192
    %v1955 = vld [vmem:[%s1954] sm:$0xf]
    %v1956 = vld [vmem:[%s1954 + $0x4] sm:$0xf]
    %v1957 = vld [vmem:[%s1954 + $0x8] sm:$0xf]
    %v1958 = vld [vmem:[%s1954 + $0xc] sm:$0xf]
    %v1959 = vld [vmem:[%s1954 + $0x10] sm:$0xf]
    %v1960 = vld [vmem:[%s1954 + $0x14] sm:$0xf]
    %v1961 = vld [vmem:[%s1954 + $0x18] sm:$0xf]
    %v1962 = vld [vmem:[%s1954 + $0x1c] sm:$0xf]
    %v1963 = vld [vmem:[%s1954 + $0x20] sm:$0xf]
    %v1964 = vld [vmem:[%s1954 + $0x24] sm:$0xf]
    %v1965 = vld [vmem:[%s1954 + $0x28] sm:$0xf]
    %v1966 = vld [vmem:[%s1954 + $0x2c] sm:$0xf]
    %v1967 = vld [vmem:[%s1954 + $0x30] sm:$0xf]
    %v1968 = vld [vmem:[%s1954 + $0x34] sm:$0xf]
    %v1969 = vld [vmem:[%s1954 + $0x38] sm:$0xf]
    %v1970 = vld [vmem:[%s1954 + $0x3c] sm:$0xf]
    %v1987 = vunpack.c.l.b16 %v1955
    %v1988 = vunpack.c.l.b16 %v1956
    %v1989 = vunpack.c.l.b16 %v1957
    %v1990 = vunpack.c.l.b16 %v1958
    %v1991 = vunpack.c.l.b16 %v1959
    %v1992 = vunpack.c.l.b16 %v1960
    %v1993 = vunpack.c.l.b16 %v1961
    %v1994 = vunpack.c.l.b16 %v1962
    %v1995 = vunpack.c.l.b16 %v1963
    %v1996 = vunpack.c.l.b16 %v1964
    %v1997 = vunpack.c.l.b16 %v1965
    %v1998 = vunpack.c.l.b16 %v1966
    %v1999 = vunpack.c.l.b16 %v1967
    %v2000 = vunpack.c.l.b16 %v1968
    %v2001 = vunpack.c.l.b16 %v1969
    %v2002 = vunpack.c.l.b16 %v1970
    %v2003 = vpack.c.b16 %v1988, %v1987
    %v2004 = vpack.c.b16 %v1990, %v1989
    %v2005 = vpack.c.b16 %v1992, %v1991
    %v2006 = vpack.c.b16 %v1994, %v1993
    %v2007 = vpack.c.b16 %v1996, %v1995
    %v2008 = vpack.c.b16 %v1998, %v1997
    %v2009 = vpack.c.b16 %v2000, %v1999
    %v2010 = vpack.c.b16 %v2002, %v2001
    %2019 = vmatprep.subr.bf16.mxu0 0
    %2020 = vmatpush1.bf16.msra.mxu0 %v2010
    %2021 = vmatprep.subr.bf16.mxu0 0
    %2022 = vmatpush1.bf16.msra.mxu0 %v2009
    %2023 = vmatprep.subr.bf16.mxu0 0
    %2024 = vmatpush1.bf16.msra.mxu0 %v2008
    %2025 = vmatprep.subr.bf16.mxu0 0
    %2026 = vmatpush1.bf16.msra.mxu0 %v2007
    %2027 = vmatprep.subr.bf16.mxu0 0
    %2028 = vmatpush1.bf16.msra.mxu0 %v2006
    %2029 = vmatprep.subr.bf16.mxu0 0
    %2030 = vmatpush1.bf16.msra.mxu0 %v2005
    %2031 = vmatprep.subr.bf16.mxu0 0
    %2032 = vmatpush1.bf16.msra.mxu0 %v2004
    %2033 = vmatprep.subr.bf16.mxu0 0
    %2034 = vmatpush1.bf16.msra.mxu0 %v2003
    %2035 = vmatprep.subr.bf16.mxu0 0
    %2036 = vmatpush2.bf16.msra.mxu0 0
    %2037 = vmatprep.subr.bf16.mxu0 0
    %2038 = vmatpush2.bf16.msra.mxu0 0
    %2039 = vmatprep.subr.bf16.mxu0 0
    %2040 = vmatpush2.bf16.msra.mxu0 0
    %2041 = vmatprep.subr.bf16.mxu0 0
    %2042 = vmatpush2.bf16.msra.mxu0 0
    %2043 = vmatprep.subr.bf16.mxu0 0
    %2044 = vmatpush2.bf16.msra.mxu0 0
    %2045 = vmatprep.subr.bf16.mxu0 0
    %2046 = vmatpush2.bf16.msra.mxu0 0
    %2047 = vmatprep.subr.bf16.mxu0 0
    %2048 = vmatpush2.bf16.msra.mxu0 0
    %2049 = vmatprep.subr.bf16.mxu0 0
    %2050 = vmatpush2.bf16.msra.mxu0 0
    %2051 = vmatprep.mubr.bf16.mxu0 0
    %2052 = vmatmul.mubr.bf16.gmra.mxu0 %v1336
    %v2053 = vpop.f32.mrf.mxu0
    %v2054 = vadd.f32 0.0, %v2053
    %v2055 = vpop.f32.mrf.mxu0
    %v2056 = vpop.f32.mrf.mxu0
    %v2057 = vadd.f32 0.0, %v2056
    %v2058 = vpop.f32.mrf.mxu0
    %2059 = vmatprep.mubr.bf16.mxu0 0
    %2060 = vmatmul.mubr.bf16.gmra.mxu0 %v1337
    %v2061 = vpop.f32.mrf.mxu0
    %v2062 = vadd.f32 0.0, %v2061
    %v2063 = vpop.f32.mrf.mxu0
    %v2064 = vpop.f32.mrf.mxu0
    %v2065 = vadd.f32 0.0, %v2064
    %v2066 = vpop.f32.mrf.mxu0
    %2067 = vmatprep.mubr.bf16.mxu0 0
    %2068 = vmatmul.mubr.bf16.gmra.mxu0 %v1338
    %v2069 = vpop.f32.mrf.mxu0
    %v2070 = vadd.f32 0.0, %v2069
    %v2071 = vpop.f32.mrf.mxu0
    %v2072 = vpop.f32.mrf.mxu0
    %v2073 = vadd.f32 0.0, %v2072
    %v2074 = vpop.f32.mrf.mxu0
    %2075 = vmatprep.mubr.bf16.mxu0 0
    %2076 = vmatmul.mubr.bf16.gmra.mxu0 %v1339
    %v2077 = vpop.f32.mrf.mxu0
    %v2078 = vadd.f32 0.0, %v2077
    %v2079 = vpop.f32.mrf.mxu0
    %v2080 = vpop.f32.mrf.mxu0
    %v2081 = vadd.f32 0.0, %v2080
    %v2082 = vpop.f32.mrf.mxu0
    %2083 = vdwg.mxu0
    %s2084 = scalar_lea.vmem [#allocation10], 48
    %v2085 = vld [vmem:[%s2084] sm:$0xf]
    %v2086 = vld [vmem:[%s2084 + $0x4] sm:$0xf]
    %v2087 = vld [vmem:[%s2084 + $0x8] sm:$0xf]
    %v2088 = vld [vmem:[%s2084 + $0xc] sm:$0xf]
    %v2089 = vpack.c.bf16 %v2057, %v2054
    %v2090 = vpack.c.bf16 %v2065, %v2062
    %v2091 = vpack.c.bf16 %v2073, %v2070
    %v2092 = vpack.c.bf16 %v2081, %v2078
    %v2097 = vunpack.c.l.b16 %v2085
    %v2098 = vunpack.c.l.b16 %v2086
    %v2099 = vunpack.c.l.b16 %v2087
    %v2100 = vunpack.c.l.b16 %v2088
    %v2101 = vpack.c.b16 %v2098, %v2097
    %v2102 = vpack.c.b16 %v2100, %v2099
    %v2104 = vsel %vm369, %v2101, 0
    %v2107 = vsel %vm369, %v2102, 0
    %2109 = vmatprep.subr.bf16.mxu0 0
    %2110 = vmatpush1.bf16.msra.mxu0 0
    %2111 = vmatprep.subr.bf16.mxu0 0
    %2112 = vmatpush1.bf16.msra.mxu0 0
    %2113 = vmatprep.subr.bf16.mxu0 0
    %2114 = vmatpush1.bf16.msra.mxu0 0
    %2115 = vmatprep.subr.bf16.mxu0 0
    %2116 = vmatpush1.bf16.msra.mxu0 0
    %2117 = vmatprep.subr.bf16.mxu0 0
    %2118 = vmatpush1.bf16.msra.mxu0 %v2092
    %2119 = vmatprep.subr.bf16.mxu0 0
    %2120 = vmatpush1.bf16.msra.mxu0 %v2091
    %2121 = vmatprep.subr.bf16.mxu0 0
    %2122 = vmatpush1.bf16.msra.mxu0 %v2090
    %2123 = vmatprep.subr.bf16.mxu0 0
    %2124 = vmatpush1.bf16.msra.mxu0 %v2089
    %2125 = vmatprep.subr.bf16.mxu0 0
    %2126 = vmatpush2.bf16.msra.mxu0 0
    %2127 = vmatprep.subr.bf16.mxu0 0
    %2128 = vmatpush2.bf16.msra.mxu0 0
    %2129 = vmatprep.subr.bf16.mxu0 0
    %2130 = vmatpush2.bf16.msra.mxu0 0
    %2131 = vmatprep.subr.bf16.mxu0 0
    %2132 = vmatpush2.bf16.msra.mxu0 0
    %2133 = vmatprep.subr.bf16.mxu0 0
    %2134 = vmatpush2.bf16.msra.mxu0 0
    %2135 = vmatprep.subr.bf16.mxu0 0
    %2136 = vmatpush2.bf16.msra.mxu0 0
    %2137 = vmatprep.subr.bf16.mxu0 0
    %2138 = vmatpush2.bf16.msra.mxu0 0
    %2139 = vmatprep.subr.bf16.mxu0 0
    %2140 = vmatpush2.bf16.msra.mxu0 0
    %2141 = vmatprep.mubr.bf16.mxu0 0
    %2142 = vmatmul.mubr.bf16.gmra.mxu0 %v2104
    %v2143 = vpop.f32.mrf.mxu0
    %v2144 = vadd.f32 0.0, %v2143
    %v2145 = vpop.f32.mrf.mxu0
    %v2146 = vpop.f32.mrf.mxu0
    %v2147 = vadd.f32 0.0, %v2146
    %v2148 = vpop.f32.mrf.mxu0
    %2149 = vmatprep.mubr.bf16.mxu0 0
    %2150 = vmatmul.mubr.bf16.gmra.mxu0 %v2107
    %v2151 = vpop.f32.mrf.mxu0
    %v2152 = vadd.f32 0.0, %v2151
    %v2153 = vpop.f32.mrf.mxu0
    %v2154 = vpop.f32.mrf.mxu0
    %v2155 = vadd.f32 0.0, %v2154
    %v2156 = vpop.f32.mrf.mxu0
    %2157 = vdwg.mxu0
    %v2158 = vadd.f32 %v1950, %v2144
    %v2159 = vadd.f32 %v1951, %v2147
    %v2160 = vadd.f32 %v1952, %v2152
    %v2161 = vadd.f32 %v1953, %v2155
    %v2163 = vlaneseq
    %v2164 = vshrl.u32 %v2163, 7
    %v2165 = vsub.s32 0, %v2164
    %v2166 = vrot.slane %v1335, %v2165
    %v2168 = vadd.f32 %v2158, %v2166
    %v2169 = vadd.f32 %v2159, %v2166
    %v2170 = vadd.f32 %v2160, %v2166
    %v2171 = vadd.f32 %v2161, %v2166
    %s2172 = scalar_lea.vmem %s14, 2
    %v2173 = vld [vmem:[%s2172] sm:$0x1]
    %v2174 = vpack.c.bf16 %v2169, %v2168
    %v2175 = vpack.c.bf16 %v2171, %v2170
    %v2176 = vld [vmem:[#allocation11] sm:$0xf]
    %v2177 = vld [vmem:[#allocation11 + $0x4] sm:$0xf]
    %v2178 = vld [vmem:[#allocation11 + $0x8] sm:$0xf]
    %v2179 = vld [vmem:[#allocation11 + $0xc] sm:$0xf]
    %v2180 = vld [vmem:[#allocation11 + $0x10] sm:$0xf]
    %v2181 = vld [vmem:[#allocation11 + $0x14] sm:$0xf]
    %v2182 = vld [vmem:[#allocation11 + $0x18] sm:$0xf]
    %v2183 = vld [vmem:[#allocation11 + $0x1c] sm:$0xf]
    %v2184 = vld [vmem:[#allocation11 + $0x20] sm:$0xf]
    %v2185 = vld [vmem:[#allocation11 + $0x24] sm:$0xf]
    %v2186 = vld [vmem:[#allocation11 + $0x28] sm:$0xf]
    %v2187 = vld [vmem:[#allocation11 + $0x2c] sm:$0xf]
    %v2188 = vld [vmem:[#allocation11 + $0x30] sm:$0xf]
    %v2189 = vld [vmem:[#allocation11 + $0x34] sm:$0xf]
    %v2190 = vld [vmem:[#allocation11 + $0x38] sm:$0xf]
    %v2191 = vld [vmem:[#allocation11 + $0x3c] sm:$0xf]
    %v2208 = vunpack.c.l.b16 %v2176
    %v2209 = vunpack.c.l.b16 %v2177
    %v2210 = vunpack.c.l.b16 %v2178
    %v2211 = vunpack.c.l.b16 %v2179
    %v2212 = vunpack.c.l.b16 %v2180
    %v2213 = vunpack.c.l.b16 %v2181
    %v2214 = vunpack.c.l.b16 %v2182
    %v2215 = vunpack.c.l.b16 %v2183
    %v2216 = vunpack.c.l.b16 %v2184
    %v2217 = vunpack.c.l.b16 %v2185
    %v2218 = vunpack.c.l.b16 %v2186
    %v2219 = vunpack.c.l.b16 %v2187
    %v2220 = vunpack.c.l.b16 %v2188
    %v2221 = vunpack.c.l.b16 %v2189
    %v2222 = vunpack.c.l.b16 %v2190
    %v2223 = vunpack.c.l.b16 %v2191
    %v2224 = vpack.c.b16 %v2209, %v2208
    %v2225 = vpack.c.b16 %v2211, %v2210
    %v2226 = vpack.c.b16 %v2213, %v2212
    %v2227 = vpack.c.b16 %v2215, %v2214
    %v2228 = vpack.c.b16 %v2217, %v2216
    %v2229 = vpack.c.b16 %v2219, %v2218
    %v2230 = vpack.c.b16 %v2221, %v2220
    %v2231 = vpack.c.b16 %v2223, %v2222
    %2240 = vmatprep.subr.bf16.mxu0 0
    %2241 = vmatpush1.bf16.msra.mxu0 %v2231
    %2242 = vmatprep.subr.bf16.mxu0 0
    %2243 = vmatpush1.bf16.msra.mxu0 %v2230
    %2244 = vmatprep.subr.bf16.mxu0 0
    %2245 = vmatpush1.bf16.msra.mxu0 %v2229
    %2246 = vmatprep.subr.bf16.mxu0 0
    %2247 = vmatpush1.bf16.msra.mxu0 %v2228
    %2248 = vmatprep.subr.bf16.mxu0 0
    %2249 = vmatpush1.bf16.msra.mxu0 %v2227
    %2250 = vmatprep.subr.bf16.mxu0 0
    %2251 = vmatpush1.bf16.msra.mxu0 %v2226
    %2252 = vmatprep.subr.bf16.mxu0 0
    %2253 = vmatpush1.bf16.msra.mxu0 %v2225
    %2254 = vmatprep.subr.bf16.mxu0 0
    %2255 = vmatpush1.bf16.msra.mxu0 %v2224
    %2256 = vmatprep.subr.bf16.mxu0 0
    %2257 = vmatpush2.bf16.msra.mxu0 0
    %2258 = vmatprep.subr.bf16.mxu0 0
    %2259 = vmatpush2.bf16.msra.mxu0 0
    %2260 = vmatprep.subr.bf16.mxu0 0
    %2261 = vmatpush2.bf16.msra.mxu0 0
    %2262 = vmatprep.subr.bf16.mxu0 0
    %2263 = vmatpush2.bf16.msra.mxu0 0
    %2264 = vmatprep.subr.bf16.mxu0 0
    %2265 = vmatpush2.bf16.msra.mxu0 0
    %2266 = vmatprep.subr.bf16.mxu0 0
    %2267 = vmatpush2.bf16.msra.mxu0 0
    %2268 = vmatprep.subr.bf16.mxu0 0
    %2269 = vmatpush2.bf16.msra.mxu0 0
    %2270 = vmatprep.subr.bf16.mxu0 0
    %2271 = vmatpush2.bf16.msra.mxu0 0
    %2272 = vmatprep.mubr.bf16.mxu0 0
    %2273 = vmatmul.mubr.bf16.gmra.mxu0 %v2174
    %v2274 = vpop.f32.mrf.mxu0
    %v2275 = vadd.f32 0.0, %v2274
    %v2276 = vpop.f32.mrf.mxu0
    %v2277 = vpop.f32.mrf.mxu0
    %v2278 = vadd.f32 0.0, %v2277
    %v2279 = vpop.f32.mrf.mxu0
    %2280 = vmatprep.mubr.bf16.mxu0 0
    %2281 = vmatmul.mubr.bf16.gmra.mxu0 %v2175
    %v2282 = vpop.f32.mrf.mxu0
    %v2283 = vadd.f32 0.0, %v2282
    %v2284 = vpop.f32.mrf.mxu0
    %v2285 = vpop.f32.mrf.mxu0
    %v2286 = vadd.f32 0.0, %v2285
    %v2287 = vpop.f32.mrf.mxu0
    %2288 = vdwg.mxu0
    %v2289 = vld [vmem:[#allocation13] sm:$0xf]
    %v2290 = vld [vmem:[#allocation13 + $0x4] sm:$0xf]
    %v2291 = vpack.c.bf16 %v2278, %v2275
    %v2292 = vpack.c.bf16 %v2286, %v2283
    %s2293 = scalar_lea.vmem [#allocation11], 64
    %v2294 = vld [vmem:[%s2293] sm:$0xf]
    %v2295 = vld [vmem:[%s2293 + $0x4] sm:$0xf]
    %v2296 = vld [vmem:[%s2293 + $0x8] sm:$0xf]
    %v2297 = vld [vmem:[%s2293 + $0xc] sm:$0xf]
    %v2298 = vld [vmem:[%s2293 + $0x10] sm:$0xf]
    %v2299 = vld [vmem:[%s2293 + $0x14] sm:$0xf]
    %v2300 = vld [vmem:[%s2293 + $0x18] sm:$0xf]
    %v2301 = vld [vmem:[%s2293 + $0x1c] sm:$0xf]
    %v2302 = vld [vmem:[%s2293 + $0x20] sm:$0xf]
    %v2303 = vld [vmem:[%s2293 + $0x24] sm:$0xf]
    %v2304 = vld [vmem:[%s2293 + $0x28] sm:$0xf]
    %v2305 = vld [vmem:[%s2293 + $0x2c] sm:$0xf]
    %v2306 = vld [vmem:[%s2293 + $0x30] sm:$0xf]
    %v2307 = vld [vmem:[%s2293 + $0x34] sm:$0xf]
    %v2308 = vld [vmem:[%s2293 + $0x38] sm:$0xf]
    %v2309 = vld [vmem:[%s2293 + $0x3c] sm:$0xf]
    %v2326 = vunpack.c.l.b16 %v2294
    %v2327 = vunpack.c.l.b16 %v2295
    %v2328 = vunpack.c.l.b16 %v2296
    %v2329 = vunpack.c.l.b16 %v2297
    %v2330 = vunpack.c.l.b16 %v2298
    %v2331 = vunpack.c.l.b16 %v2299
    %v2332 = vunpack.c.l.b16 %v2300
    %v2333 = vunpack.c.l.b16 %v2301
    %v2334 = vunpack.c.l.b16 %v2302
    %v2335 = vunpack.c.l.b16 %v2303
    %v2336 = vunpack.c.l.b16 %v2304
    %v2337 = vunpack.c.l.b16 %v2305
    %v2338 = vunpack.c.l.b16 %v2306
    %v2339 = vunpack.c.l.b16 %v2307
    %v2340 = vunpack.c.l.b16 %v2308
    %v2341 = vunpack.c.l.b16 %v2309
    %v2342 = vpack.c.b16 %v2327, %v2326
    %v2343 = vpack.c.b16 %v2329, %v2328
    %v2344 = vpack.c.b16 %v2331, %v2330
    %v2345 = vpack.c.b16 %v2333, %v2332
    %v2346 = vpack.c.b16 %v2335, %v2334
    %v2347 = vpack.c.b16 %v2337, %v2336
    %v2348 = vpack.c.b16 %v2339, %v2338
    %v2349 = vpack.c.b16 %v2341, %v2340
    %2358 = vmatprep.subr.bf16.mxu0 0
    %2359 = vmatpush1.bf16.msra.mxu0 %v2349
    %2360 = vmatprep.subr.bf16.mxu0 0
    %2361 = vmatpush1.bf16.msra.mxu0 %v2348
    %2362 = vmatprep.subr.bf16.mxu0 0
    %2363 = vmatpush1.bf16.msra.mxu0 %v2347
    %2364 = vmatprep.subr.bf16.mxu0 0
    %2365 = vmatpush1.bf16.msra.mxu0 %v2346
    %2366 = vmatprep.subr.bf16.mxu0 0
    %2367 = vmatpush1.bf16.msra.mxu0 %v2345
    %2368 = vmatprep.subr.bf16.mxu0 0
    %2369 = vmatpush1.bf16.msra.mxu0 %v2344
    %2370 = vmatprep.subr.bf16.mxu0 0
    %2371 = vmatpush1.bf16.msra.mxu0 %v2343
    %2372 = vmatprep.subr.bf16.mxu0 0
    %2373 = vmatpush1.bf16.msra.mxu0 %v2342
    %2374 = vmatprep.subr.bf16.mxu0 0
    %2375 = vmatpush2.bf16.msra.mxu0 0
    %2376 = vmatprep.subr.bf16.mxu0 0
    %2377 = vmatpush2.bf16.msra.mxu0 0
    %2378 = vmatprep.subr.bf16.mxu0 0
    %2379 = vmatpush2.bf16.msra.mxu0 0
    %2380 = vmatprep.subr.bf16.mxu0 0
    %2381 = vmatpush2.bf16.msra.mxu0 0
    %2382 = vmatprep.subr.bf16.mxu0 0
    %2383 = vmatpush2.bf16.msra.mxu0 0
    %2384 = vmatprep.subr.bf16.mxu0 0
    %2385 = vmatpush2.bf16.msra.mxu0 0
    %2386 = vmatprep.subr.bf16.mxu0 0
    %2387 = vmatpush2.bf16.msra.mxu0 0
    %2388 = vmatprep.subr.bf16.mxu0 0
    %2389 = vmatpush2.bf16.msra.mxu0 0
    %2390 = vmatprep.mubr.bf16.mxu0 0
    %2391 = vmatmul.mubr.bf16.gmra.mxu0 %v2174
    %v2392 = vpop.f32.mrf.mxu0
    %v2393 = vadd.f32 0.0, %v2392
    %v2394 = vpop.f32.mrf.mxu0
    %v2395 = vpop.f32.mrf.mxu0
    %v2396 = vadd.f32 0.0, %v2395
    %v2397 = vpop.f32.mrf.mxu0
    %2398 = vmatprep.mubr.bf16.mxu0 0
    %2399 = vmatmul.mubr.bf16.gmra.mxu0 %v2175
    %v2400 = vpop.f32.mrf.mxu0
    %v2401 = vadd.f32 0.0, %v2400
    %v2402 = vpop.f32.mrf.mxu0
    %v2403 = vpop.f32.mrf.mxu0
    %v2404 = vadd.f32 0.0, %v2403
    %v2405 = vpop.f32.mrf.mxu0
    %2406 = vdwg.mxu0
    %s2407 = scalar_lea.vmem [#allocation13], 8
    %v2408 = vld [vmem:[%s2407] sm:$0xf]
    %v2409 = vld [vmem:[%s2407 + $0x4] sm:$0xf]
    %v2410 = vpack.c.bf16 %v2396, %v2393
    %v2411 = vpack.c.bf16 %v2404, %v2401
    %v2414 = vunpack.c.l.b16 %v2408
    %v2415 = vunpack.c.l.b16 %v2409
    %v2416 = vpack.c.b16 %v2415, %v2414
    %vm2417 = vcmask 261120
    %v2419 = vsel %vm2417, %v2416, 0
    %2421 = vmatprep.subr.bf16.mxu0 0
    %2422 = vmatpush1.bf16.msra.mxu0 0
    %2423 = vmatprep.subr.bf16.mxu0 0
    %2424 = vmatpush1.bf16.msra.mxu0 0
    %2425 = vmatprep.subr.bf16.mxu0 0
    %2426 = vmatpush1.bf16.msra.mxu0 0
    %2427 = vmatprep.subr.bf16.mxu0 0
    %2428 = vmatpush1.bf16.msra.mxu0 0
    %2429 = vmatprep.subr.bf16.mxu0 0
    %2430 = vmatpush1.bf16.msra.mxu0 0
    %2431 = vmatprep.subr.bf16.mxu0 0
    %2432 = vmatpush1.bf16.msra.mxu0 0
    %2433 = vmatprep.subr.bf16.mxu0 0
    %2434 = vmatpush1.bf16.msra.mxu0 %v2411
    %2435 = vmatprep.subr.bf16.mxu0 0
    %2436 = vmatpush1.bf16.msra.mxu0 %v2410
    %2437 = vmatprep.subr.bf16.mxu0 0
    %2438 = vmatpush2.bf16.msra.mxu0 0
    %2439 = vmatprep.subr.bf16.mxu0 0
    %2440 = vmatpush2.bf16.msra.mxu0 0
    %2441 = vmatprep.subr.bf16.mxu0 0
    %2442 = vmatpush2.bf16.msra.mxu0 0
    %2443 = vmatprep.subr.bf16.mxu0 0
    %2444 = vmatpush2.bf16.msra.mxu0 0
    %2445 = vmatprep.subr.bf16.mxu0 0
    %2446 = vmatpush2.bf16.msra.mxu0 0
    %2447 = vmatprep.subr.bf16.mxu0 0
    %2448 = vmatpush2.bf16.msra.mxu0 0
    %2449 = vmatprep.subr.bf16.mxu0 0
    %2450 = vmatpush2.bf16.msra.mxu0 0
    %2451 = vmatprep.subr.bf16.mxu0 0
    %2452 = vmatpush2.bf16.msra.mxu0 0
    %2453 = vmatprep.mubr.bf16.mxu0 0
    %2454 = vmatmul.mubr.bf16.gmra.mxu0 %v2419
    %v2455 = vpop.f32.mrf.mxu0
    %v2456 = vadd.f32 0.0, %v2455
    %v2457 = vpop.f32.mrf.mxu0
    %v2458 = vpop.f32.mrf.mxu0
    %v2459 = vadd.f32 0.0, %v2458
    %v2460 = vpop.f32.mrf.mxu0
    %2461 = vdwg.mxu0
    %v2464 = vunpack.c.l.b16 %v2289
    %v2465 = vunpack.c.l.b16 %v2290
    %v2466 = vpack.c.b16 %v2465, %v2464
    %v2468 = vsel %vm2417, %v2466, 0
    %2470 = vmatprep.subr.bf16.mxu0 0
    %2471 = vmatpush1.bf16.msra.mxu0 0
    %2472 = vmatprep.subr.bf16.mxu0 0
    %2473 = vmatpush1.bf16.msra.mxu0 0
    %2474 = vmatprep.subr.bf16.mxu0 0
    %2475 = vmatpush1.bf16.msra.mxu0 0
    %2476 = vmatprep.subr.bf16.mxu0 0
    %2477 = vmatpush1.bf16.msra.mxu0 0
    %2478 = vmatprep.subr.bf16.mxu0 0
    %2479 = vmatpush1.bf16.msra.mxu0 0
    %2480 = vmatprep.subr.bf16.mxu0 0
    %2481 = vmatpush1.bf16.msra.mxu0 0
    %2482 = vmatprep.subr.bf16.mxu0 0
    %2483 = vmatpush1.bf16.msra.mxu0 %v2292
    %2484 = vmatprep.subr.bf16.mxu0 0
    %2485 = vmatpush1.bf16.msra.mxu0 %v2291
    %2486 = vmatprep.subr.bf16.mxu0 0
    %2487 = vmatpush2.bf16.msra.mxu0 0
    %2488 = vmatprep.subr.bf16.mxu0 0
    %2489 = vmatpush2.bf16.msra.mxu0 0
    %2490 = vmatprep.subr.bf16.mxu0 0
    %2491 = vmatpush2.bf16.msra.mxu0 0
    %2492 = vmatprep.subr.bf16.mxu0 0
    %2493 = vmatpush2.bf16.msra.mxu0 0
    %2494 = vmatprep.subr.bf16.mxu0 0
    %2495 = vmatpush2.bf16.msra.mxu0 0
    %2496 = vmatprep.subr.bf16.mxu0 0
    %2497 = vmatpush2.bf16.msra.mxu0 0
    %2498 = vmatprep.subr.bf16.mxu0 0
    %2499 = vmatpush2.bf16.msra.mxu0 0
    %2500 = vmatprep.subr.bf16.mxu0 0
    %2501 = vmatpush2.bf16.msra.mxu0 0
    %2502 = vmatprep.mubr.bf16.mxu0 0
    %2503 = vmatmul.mubr.bf16.gmra.mxu0 %v2468
    %v2504 = vpop.f32.mrf.mxu0
    %v2505 = vadd.f32 %v2456, %v2504
    %v2506 = vpop.f32.mrf.mxu0
    %v2507 = vpop.f32.mrf.mxu0
    %v2508 = vadd.f32 %v2459, %v2507
    %v2509 = vpop.f32.mrf.mxu0
    %2510 = vdwg.mxu0
    %s2511 = scalar_lea.vmem [#allocation11], 128
    %v2512 = vld [vmem:[%s2511] sm:$0xf]
    %v2513 = vld [vmem:[%s2511 + $0x4] sm:$0xf]
    %v2514 = vld [vmem:[%s2511 + $0x8] sm:$0xf]
    %v2515 = vld [vmem:[%s2511 + $0xc] sm:$0xf]
    %v2516 = vld [vmem:[%s2511 + $0x10] sm:$0xf]
    %v2517 = vld [vmem:[%s2511 + $0x14] sm:$0xf]
    %v2518 = vld [vmem:[%s2511 + $0x18] sm:$0xf]
    %v2519 = vld [vmem:[%s2511 + $0x1c] sm:$0xf]
    %v2520 = vld [vmem:[%s2511 + $0x20] sm:$0xf]
    %v2521 = vld [vmem:[%s2511 + $0x24] sm:$0xf]
    %v2522 = vld [vmem:[%s2511 + $0x28] sm:$0xf]
    %v2523 = vld [vmem:[%s2511 + $0x2c] sm:$0xf]
    %v2524 = vld [vmem:[%s2511 + $0x30] sm:$0xf]
    %v2525 = vld [vmem:[%s2511 + $0x34] sm:$0xf]
    %v2526 = vld [vmem:[%s2511 + $0x38] sm:$0xf]
    %v2527 = vld [vmem:[%s2511 + $0x3c] sm:$0xf]
    %v2544 = vunpack.c.l.b16 %v2512
    %v2545 = vunpack.c.l.b16 %v2513
    %v2546 = vunpack.c.l.b16 %v2514
    %v2547 = vunpack.c.l.b16 %v2515
    %v2548 = vunpack.c.l.b16 %v2516
    %v2549 = vunpack.c.l.b16 %v2517
    %v2550 = vunpack.c.l.b16 %v2518
    %v2551 = vunpack.c.l.b16 %v2519
    %v2552 = vunpack.c.l.b16 %v2520
    %v2553 = vunpack.c.l.b16 %v2521
    %v2554 = vunpack.c.l.b16 %v2522
    %v2555 = vunpack.c.l.b16 %v2523
    %v2556 = vunpack.c.l.b16 %v2524
    %v2557 = vunpack.c.l.b16 %v2525
    %v2558 = vunpack.c.l.b16 %v2526
    %v2559 = vunpack.c.l.b16 %v2527
    %v2560 = vpack.c.b16 %v2545, %v2544
    %v2561 = vpack.c.b16 %v2547, %v2546
    %v2562 = vpack.c.b16 %v2549, %v2548
    %v2563 = vpack.c.b16 %v2551, %v2550
    %v2564 = vpack.c.b16 %v2553, %v2552
    %v2565 = vpack.c.b16 %v2555, %v2554
    %v2566 = vpack.c.b16 %v2557, %v2556
    %v2567 = vpack.c.b16 %v2559, %v2558
    %2576 = vmatprep.subr.bf16.mxu0 0
    %2577 = vmatpush1.bf16.msra.mxu0 %v2567
    %2578 = vmatprep.subr.bf16.mxu0 0
    %2579 = vmatpush1.bf16.msra.mxu0 %v2566
    %2580 = vmatprep.subr.bf16.mxu0 0
    %2581 = vmatpush1.bf16.msra.mxu0 %v2565
    %2582 = vmatprep.subr.bf16.mxu0 0
    %2583 = vmatpush1.bf16.msra.mxu0 %v2564
    %2584 = vmatprep.subr.bf16.mxu0 0
    %2585 = vmatpush1.bf16.msra.mxu0 %v2563
    %2586 = vmatprep.subr.bf16.mxu0 0
    %2587 = vmatpush1.bf16.msra.mxu0 %v2562
    %2588 = vmatprep.subr.bf16.mxu0 0
    %2589 = vmatpush1.bf16.msra.mxu0 %v2561
    %2590 = vmatprep.subr.bf16.mxu0 0
    %2591 = vmatpush1.bf16.msra.mxu0 %v2560
    %2592 = vmatprep.subr.bf16.mxu0 0
    %2593 = vmatpush2.bf16.msra.mxu0 0
    %2594 = vmatprep.subr.bf16.mxu0 0
    %2595 = vmatpush2.bf16.msra.mxu0 0
    %2596 = vmatprep.subr.bf16.mxu0 0
    %2597 = vmatpush2.bf16.msra.mxu0 0
    %2598 = vmatprep.subr.bf16.mxu0 0
    %2599 = vmatpush2.bf16.msra.mxu0 0
    %2600 = vmatprep.subr.bf16.mxu0 0
    %2601 = vmatpush2.bf16.msra.mxu0 0
    %2602 = vmatprep.subr.bf16.mxu0 0
    %2603 = vmatpush2.bf16.msra.mxu0 0
    %2604 = vmatprep.subr.bf16.mxu0 0
    %2605 = vmatpush2.bf16.msra.mxu0 0
    %2606 = vmatprep.subr.bf16.mxu0 0
    %2607 = vmatpush2.bf16.msra.mxu0 0
    %2608 = vmatprep.mubr.bf16.mxu0 0
    %2609 = vmatmul.mubr.bf16.gmra.mxu0 %v2174
    %v2610 = vpop.f32.mrf.mxu0
    %v2611 = vadd.f32 0.0, %v2610
    %v2612 = vpop.f32.mrf.mxu0
    %v2613 = vpop.f32.mrf.mxu0
    %v2614 = vadd.f32 0.0, %v2613
    %v2615 = vpop.f32.mrf.mxu0
    %2616 = vmatprep.mubr.bf16.mxu0 0
    %2617 = vmatmul.mubr.bf16.gmra.mxu0 %v2175
    %v2618 = vpop.f32.mrf.mxu0
    %v2619 = vadd.f32 0.0, %v2618
    %v2620 = vpop.f32.mrf.mxu0
    %v2621 = vpop.f32.mrf.mxu0
    %v2622 = vadd.f32 0.0, %v2621
    %v2623 = vpop.f32.mrf.mxu0
    %2624 = vdwg.mxu0
    %s2625 = scalar_lea.vmem [#allocation13], 16
    %v2626 = vld [vmem:[%s2625] sm:$0xf]
    %v2627 = vld [vmem:[%s2625 + $0x4] sm:$0xf]
    %v2628 = vpack.c.bf16 %v2614, %v2611
    %v2629 = vpack.c.bf16 %v2622, %v2619
    %v2632 = vunpack.c.l.b16 %v2626
    %v2633 = vunpack.c.l.b16 %v2627
    %v2634 = vpack.c.b16 %v2633, %v2632
    %v2636 = vsel %vm2417, %v2634, 0
    %2638 = vmatprep.subr.bf16.mxu0 0
    %2639 = vmatpush1.bf16.msra.mxu0 0
    %2640 = vmatprep.subr.bf16.mxu0 0
    %2641 = vmatpush1.bf16.msra.mxu0 0
    %2642 = vmatprep.subr.bf16.mxu0 0
    %2643 = vmatpush1.bf16.msra.mxu0 0
    %2644 = vmatprep.subr.bf16.mxu0 0
    %2645 = vmatpush1.bf16.msra.mxu0 0
    %2646 = vmatprep.subr.bf16.mxu0 0
    %2647 = vmatpush1.bf16.msra.mxu0 0
    %2648 = vmatprep.subr.bf16.mxu0 0
    %2649 = vmatpush1.bf16.msra.mxu0 0
    %2650 = vmatprep.subr.bf16.mxu0 0
    %2651 = vmatpush1.bf16.msra.mxu0 %v2629
    %2652 = vmatprep.subr.bf16.mxu0 0
    %2653 = vmatpush1.bf16.msra.mxu0 %v2628
    %2654 = vmatprep.subr.bf16.mxu0 0
    %2655 = vmatpush2.bf16.msra.mxu0 0
    %2656 = vmatprep.subr.bf16.mxu0 0
    %2657 = vmatpush2.bf16.msra.mxu0 0
    %2658 = vmatprep.subr.bf16.mxu0 0
    %2659 = vmatpush2.bf16.msra.mxu0 0
    %2660 = vmatprep.subr.bf16.mxu0 0
    %2661 = vmatpush2.bf16.msra.mxu0 0
    %2662 = vmatprep.subr.bf16.mxu0 0
    %2663 = vmatpush2.bf16.msra.mxu0 0
    %2664 = vmatprep.subr.bf16.mxu0 0
    %2665 = vmatpush2.bf16.msra.mxu0 0
    %2666 = vmatprep.subr.bf16.mxu0 0
    %2667 = vmatpush2.bf16.msra.mxu0 0
    %2668 = vmatprep.subr.bf16.mxu0 0
    %2669 = vmatpush2.bf16.msra.mxu0 0
    %2670 = vmatprep.mubr.bf16.mxu0 0
    %2671 = vmatmul.mubr.bf16.gmra.mxu0 %v2636
    %v2672 = vpop.f32.mrf.mxu0
    %v2673 = vadd.f32 0.0, %v2672
    %v2674 = vpop.f32.mrf.mxu0
    %v2675 = vpop.f32.mrf.mxu0
    %v2676 = vadd.f32 0.0, %v2675
    %v2677 = vpop.f32.mrf.mxu0
    %2678 = vdwg.mxu0
    %v2679 = vadd.f32 %v2505, %v2673
    %v2680 = vadd.f32 %v2508, %v2676
    %s2681 = scalar_lea.vmem [#allocation11], 192
    %v2682 = vld [vmem:[%s2681] sm:$0xf]
    %v2683 = vld [vmem:[%s2681 + $0x4] sm:$0xf]
    %v2684 = vld [vmem:[%s2681 + $0x8] sm:$0xf]
    %v2685 = vld [vmem:[%s2681 + $0xc] sm:$0xf]
    %v2686 = vld [vmem:[%s2681 + $0x10] sm:$0xf]
    %v2687 = vld [vmem:[%s2681 + $0x14] sm:$0xf]
    %v2688 = vld [vmem:[%s2681 + $0x18] sm:$0xf]
    %v2689 = vld [vmem:[%s2681 + $0x1c] sm:$0xf]
    %v2690 = vld [vmem:[%s2681 + $0x20] sm:$0xf]
    %v2691 = vld [vmem:[%s2681 + $0x24] sm:$0xf]
    %v2692 = vld [vmem:[%s2681 + $0x28] sm:$0xf]
    %v2693 = vld [vmem:[%s2681 + $0x2c] sm:$0xf]
    %v2694 = vld [vmem:[%s2681 + $0x30] sm:$0xf]
    %v2695 = vld [vmem:[%s2681 + $0x34] sm:$0xf]
    %v2696 = vld [vmem:[%s2681 + $0x38] sm:$0xf]
    %v2697 = vld [vmem:[%s2681 + $0x3c] sm:$0xf]
    %v2714 = vunpack.c.l.b16 %v2682
    %v2715 = vunpack.c.l.b16 %v2683
    %v2716 = vunpack.c.l.b16 %v2684
    %v2717 = vunpack.c.l.b16 %v2685
    %v2718 = vunpack.c.l.b16 %v2686
    %v2719 = vunpack.c.l.b16 %v2687
    %v2720 = vunpack.c.l.b16 %v2688
    %v2721 = vunpack.c.l.b16 %v2689
    %v2722 = vunpack.c.l.b16 %v2690
    %v2723 = vunpack.c.l.b16 %v2691
    %v2724 = vunpack.c.l.b16 %v2692
    %v2725 = vunpack.c.l.b16 %v2693
    %v2726 = vunpack.c.l.b16 %v2694
    %v2727 = vunpack.c.l.b16 %v2695
    %v2728 = vunpack.c.l.b16 %v2696
    %v2729 = vunpack.c.l.b16 %v2697
    %v2730 = vpack.c.b16 %v2715, %v2714
    %v2731 = vpack.c.b16 %v2717, %v2716
    %v2732 = vpack.c.b16 %v2719, %v2718
    %v2733 = vpack.c.b16 %v2721, %v2720
    %v2734 = vpack.c.b16 %v2723, %v2722
    %v2735 = vpack.c.b16 %v2725, %v2724
    %v2736 = vpack.c.b16 %v2727, %v2726
    %v2737 = vpack.c.b16 %v2729, %v2728
    %2746 = vmatprep.subr.bf16.mxu0 0
    %2747 = vmatpush1.bf16.msra.mxu0 %v2737
    %2748 = vmatprep.subr.bf16.mxu0 0
    %2749 = vmatpush1.bf16.msra.mxu0 %v2736
    %2750 = vmatprep.subr.bf16.mxu0 0
    %2751 = vmatpush1.bf16.msra.mxu0 %v2735
    %2752 = vmatprep.subr.bf16.mxu0 0
    %2753 = vmatpush1.bf16.msra.mxu0 %v2734
    %2754 = vmatprep.subr.bf16.mxu0 0
    %2755 = vmatpush1.bf16.msra.mxu0 %v2733
    %2756 = vmatprep.subr.bf16.mxu0 0
    %2757 = vmatpush1.bf16.msra.mxu0 %v2732
    %2758 = vmatprep.subr.bf16.mxu0 0
    %2759 = vmatpush1.bf16.msra.mxu0 %v2731
    %2760 = vmatprep.subr.bf16.mxu0 0
    %2761 = vmatpush1.bf16.msra.mxu0 %v2730
    %2762 = vmatprep.subr.bf16.mxu0 0
    %2763 = vmatpush2.bf16.msra.mxu0 0
    %2764 = vmatprep.subr.bf16.mxu0 0
    %2765 = vmatpush2.bf16.msra.mxu0 0
    %2766 = vmatprep.subr.bf16.mxu0 0
    %2767 = vmatpush2.bf16.msra.mxu0 0
    %2768 = vmatprep.subr.bf16.mxu0 0
    %2769 = vmatpush2.bf16.msra.mxu0 0
    %2770 = vmatprep.subr.bf16.mxu0 0
    %2771 = vmatpush2.bf16.msra.mxu0 0
    %2772 = vmatprep.subr.bf16.mxu0 0
    %2773 = vmatpush2.bf16.msra.mxu0 0
    %2774 = vmatprep.subr.bf16.mxu0 0
    %2775 = vmatpush2.bf16.msra.mxu0 0
    %2776 = vmatprep.subr.bf16.mxu0 0
    %2777 = vmatpush2.bf16.msra.mxu0 0
    %2778 = vmatprep.mubr.bf16.mxu0 0
    %2779 = vmatmul.mubr.bf16.gmra.mxu0 %v2174
    %v2780 = vpop.f32.mrf.mxu0
    %v2781 = vadd.f32 0.0, %v2780
    %v2782 = vpop.f32.mrf.mxu0
    %v2783 = vpop.f32.mrf.mxu0
    %v2784 = vadd.f32 0.0, %v2783
    %v2785 = vpop.f32.mrf.mxu0
    %2786 = vmatprep.mubr.bf16.mxu0 0
    %2787 = vmatmul.mubr.bf16.gmra.mxu0 %v2175
    %v2788 = vpop.f32.mrf.mxu0
    %v2789 = vadd.f32 0.0, %v2788
    %v2790 = vpop.f32.mrf.mxu0
    %v2791 = vpop.f32.mrf.mxu0
    %v2792 = vadd.f32 0.0, %v2791
    %v2793 = vpop.f32.mrf.mxu0
    %2794 = vdwg.mxu0
    %s2795 = scalar_lea.vmem [#allocation13], 24
    %v2796 = vld [vmem:[%s2795] sm:$0xf]
    %v2797 = vld [vmem:[%s2795 + $0x4] sm:$0xf]
    %v2798 = vpack.c.bf16 %v2784, %v2781
    %v2799 = vpack.c.bf16 %v2792, %v2789
    %v2802 = vunpack.c.l.b16 %v2796
    %v2803 = vunpack.c.l.b16 %v2797
    %v2804 = vpack.c.b16 %v2803, %v2802
    %v2806 = vsel %vm2417, %v2804, 0
    %2808 = vmatprep.subr.bf16.mxu0 0
    %2809 = vmatpush1.bf16.msra.mxu0 0
    %2810 = vmatprep.subr.bf16.mxu0 0
    %2811 = vmatpush1.bf16.msra.mxu0 0
    %2812 = vmatprep.subr.bf16.mxu0 0
    %2813 = vmatpush1.bf16.msra.mxu0 0
    %2814 = vmatprep.subr.bf16.mxu0 0
    %2815 = vmatpush1.bf16.msra.mxu0 0
    %2816 = vmatprep.subr.bf16.mxu0 0
    %2817 = vmatpush1.bf16.msra.mxu0 0
    %2818 = vmatprep.subr.bf16.mxu0 0
    %2819 = vmatpush1.bf16.msra.mxu0 0
    %2820 = vmatprep.subr.bf16.mxu0 0
    %2821 = vmatpush1.bf16.msra.mxu0 %v2799
    %2822 = vmatprep.subr.bf16.mxu0 0
    %2823 = vmatpush1.bf16.msra.mxu0 %v2798
    %2824 = vmatprep.subr.bf16.mxu0 0
    %2825 = vmatpush2.bf16.msra.mxu0 0
    %2826 = vmatprep.subr.bf16.mxu0 0
    %2827 = vmatpush2.bf16.msra.mxu0 0
    %2828 = vmatprep.subr.bf16.mxu0 0
    %2829 = vmatpush2.bf16.msra.mxu0 0
    %2830 = vmatprep.subr.bf16.mxu0 0
    %2831 = vmatpush2.bf16.msra.mxu0 0
    %2832 = vmatprep.subr.bf16.mxu0 0
    %2833 = vmatpush2.bf16.msra.mxu0 0
    %2834 = vmatprep.subr.bf16.mxu0 0
    %2835 = vmatpush2.bf16.msra.mxu0 0
    %2836 = vmatprep.subr.bf16.mxu0 0
    %2837 = vmatpush2.bf16.msra.mxu0 0
    %2838 = vmatprep.subr.bf16.mxu0 0
    %2839 = vmatpush2.bf16.msra.mxu0 0
    %2840 = vmatprep.mubr.bf16.mxu0 0
    %2841 = vmatmul.mubr.bf16.gmra.mxu0 %v2806
    %v2842 = vpop.f32.mrf.mxu0
    %v2843 = vadd.f32 0.0, %v2842
    %v2844 = vpop.f32.mrf.mxu0
    %v2845 = vpop.f32.mrf.mxu0
    %v2846 = vadd.f32 0.0, %v2845
    %v2847 = vpop.f32.mrf.mxu0
    %2848 = vdwg.mxu0
    %v2849 = vadd.f32 %v2679, %v2843
    %v2850 = vadd.f32 %v2680, %v2846
    %v2852 = vlaneseq
    %v2853 = vshrl.u32 %v2852, 7
    %v2854 = vsub.s32 0, %v2853
    %v2855 = vrot.slane %v2173, %v2854
    %v2857 = vadd.f32 %v2849, %v2855
    %v2858 = vadd.f32 %v2850, %v2855
    %s2859 = scalar_lea.vmem %s14, 3
    %v2860 = vld [vmem:[%s2859] sm:$0x1]
    %v2861 = vpack.c.bf16 %v2858, %v2857
    %v2862 = vld [vmem:[#allocation14] sm:$0xf]
    %v2863 = vld [vmem:[#allocation14 + $0x4] sm:$0xf]
    %v2864 = vld [vmem:[#allocation14 + $0x8] sm:$0xf]
    %v2865 = vld [vmem:[#allocation14 + $0xc] sm:$0xf]
    %v2866 = vld [vmem:[#allocation14 + $0x10] sm:$0xf]
    %v2867 = vld [vmem:[#allocation14 + $0x14] sm:$0xf]
    %v2868 = vld [vmem:[#allocation14 + $0x18] sm:$0xf]
    %v2869 = vld [vmem:[#allocation14 + $0x1c] sm:$0xf]
    %v2870 = vld [vmem:[#allocation14 + $0x20] sm:$0xf]
    %v2871 = vld [vmem:[#allocation14 + $0x24] sm:$0xf]
    %v2872 = vld [vmem:[#allocation14 + $0x28] sm:$0xf]
    %v2873 = vld [vmem:[#allocation14 + $0x2c] sm:$0xf]
    %v2874 = vld [vmem:[#allocation14 + $0x30] sm:$0xf]
    %v2875 = vld [vmem:[#allocation14 + $0x34] sm:$0xf]
    %v2876 = vld [vmem:[#allocation14 + $0x38] sm:$0xf]
    %v2877 = vld [vmem:[#allocation14 + $0x3c] sm:$0xf]
    %v2894 = vunpack.c.l.b16 %v2862
    %v2895 = vunpack.c.l.b16 %v2863
    %v2896 = vunpack.c.l.b16 %v2864
    %v2897 = vunpack.c.l.b16 %v2865
    %v2898 = vunpack.c.l.b16 %v2866
    %v2899 = vunpack.c.l.b16 %v2867
    %v2900 = vunpack.c.l.b16 %v2868
    %v2901 = vunpack.c.l.b16 %v2869
    %v2902 = vunpack.c.l.b16 %v2870
    %v2903 = vunpack.c.l.b16 %v2871
    %v2904 = vunpack.c.l.b16 %v2872
    %v2905 = vunpack.c.l.b16 %v2873
    %v2906 = vunpack.c.l.b16 %v2874
    %v2907 = vunpack.c.l.b16 %v2875
    %v2908 = vunpack.c.l.b16 %v2876
    %v2909 = vunpack.c.l.b16 %v2877
    %v2910 = vpack.c.b16 %v2895, %v2894
    %v2911 = vpack.c.b16 %v2897, %v2896
    %v2912 = vpack.c.b16 %v2899, %v2898
    %v2913 = vpack.c.b16 %v2901, %v2900
    %v2914 = vpack.c.b16 %v2903, %v2902
    %v2915 = vpack.c.b16 %v2905, %v2904
    %v2916 = vpack.c.b16 %v2907, %v2906
    %v2917 = vpack.c.b16 %v2909, %v2908
    %2926 = vmatprep.subr.bf16.mxu0 0
    %2927 = vmatpush1.bf16.msra.mxu0 %v2917
    %2928 = vmatprep.subr.bf16.mxu0 0
    %2929 = vmatpush1.bf16.msra.mxu0 %v2916
    %2930 = vmatprep.subr.bf16.mxu0 0
    %2931 = vmatpush1.bf16.msra.mxu0 %v2915
    %2932 = vmatprep.subr.bf16.mxu0 0
    %2933 = vmatpush1.bf16.msra.mxu0 %v2914
    %2934 = vmatprep.subr.bf16.mxu0 0
    %2935 = vmatpush1.bf16.msra.mxu0 %v2913
    %2936 = vmatprep.subr.bf16.mxu0 0
    %2937 = vmatpush1.bf16.msra.mxu0 %v2912
    %2938 = vmatprep.subr.bf16.mxu0 0
    %2939 = vmatpush1.bf16.msra.mxu0 %v2911
    %2940 = vmatprep.subr.bf16.mxu0 0
    %2941 = vmatpush1.bf16.msra.mxu0 %v2910
    %2942 = vmatprep.subr.bf16.mxu0 0
    %2943 = vmatpush2.bf16.msra.mxu0 0
    %2944 = vmatprep.subr.bf16.mxu0 0
    %2945 = vmatpush2.bf16.msra.mxu0 0
    %2946 = vmatprep.subr.bf16.mxu0 0
    %2947 = vmatpush2.bf16.msra.mxu0 0
    %2948 = vmatprep.subr.bf16.mxu0 0
    %2949 = vmatpush2.bf16.msra.mxu0 0
    %2950 = vmatprep.subr.bf16.mxu0 0
    %2951 = vmatpush2.bf16.msra.mxu0 0
    %2952 = vmatprep.subr.bf16.mxu0 0
    %2953 = vmatpush2.bf16.msra.mxu0 0
    %2954 = vmatprep.subr.bf16.mxu0 0
    %2955 = vmatpush2.bf16.msra.mxu0 0
    %2956 = vmatprep.subr.bf16.mxu0 0
    %2957 = vmatpush2.bf16.msra.mxu0 0
    %2958 = vmatprep.mubr.bf16.mxu0 0
    %2959 = vmatmul.mubr.bf16.gmra.mxu0 %v2861
    %v2960 = vpop.f32.mrf.mxu0
    %v2961 = vadd.f32 0.0, %v2960
    %v2962 = vpop.f32.mrf.mxu0
    %v2963 = vpop.f32.mrf.mxu0
    %v2964 = vadd.f32 0.0, %v2963
    %v2965 = vpop.f32.mrf.mxu0
    %2966 = vdwg.mxu0
    %v2967 = vld [vmem:[#allocation16] sm:$0xf]
    %v2968 = vpack.c.bf16 %v2964, %v2961
    %s2969 = scalar_lea.vmem [#allocation14], 64
    %v2970 = vld [vmem:[%s2969] sm:$0xf]
    %v2971 = vld [vmem:[%s2969 + $0x4] sm:$0xf]
    %v2972 = vld [vmem:[%s2969 + $0x8] sm:$0xf]
    %v2973 = vld [vmem:[%s2969 + $0xc] sm:$0xf]
    %v2974 = vld [vmem:[%s2969 + $0x10] sm:$0xf]
    %v2975 = vld [vmem:[%s2969 + $0x14] sm:$0xf]
    %v2976 = vld [vmem:[%s2969 + $0x18] sm:$0xf]
    %v2977 = vld [vmem:[%s2969 + $0x1c] sm:$0xf]
    %v2978 = vld [vmem:[%s2969 + $0x20] sm:$0xf]
    %v2979 = vld [vmem:[%s2969 + $0x24] sm:$0xf]
    %v2980 = vld [vmem:[%s2969 + $0x28] sm:$0xf]
    %v2981 = vld [vmem:[%s2969 + $0x2c] sm:$0xf]
    %v2982 = vld [vmem:[%s2969 + $0x30] sm:$0xf]
    %v2983 = vld [vmem:[%s2969 + $0x34] sm:$0xf]
    %v2984 = vld [vmem:[%s2969 + $0x38] sm:$0xf]
    %v2985 = vld [vmem:[%s2969 + $0x3c] sm:$0xf]
    %v3002 = vunpack.c.l.b16 %v2970
    %v3003 = vunpack.c.l.b16 %v2971
    %v3004 = vunpack.c.l.b16 %v2972
    %v3005 = vunpack.c.l.b16 %v2973
    %v3006 = vunpack.c.l.b16 %v2974
    %v3007 = vunpack.c.l.b16 %v2975
    %v3008 = vunpack.c.l.b16 %v2976
    %v3009 = vunpack.c.l.b16 %v2977
    %v3010 = vunpack.c.l.b16 %v2978
    %v3011 = vunpack.c.l.b16 %v2979
    %v3012 = vunpack.c.l.b16 %v2980
    %v3013 = vunpack.c.l.b16 %v2981
    %v3014 = vunpack.c.l.b16 %v2982
    %v3015 = vunpack.c.l.b16 %v2983
    %v3016 = vunpack.c.l.b16 %v2984
    %v3017 = vunpack.c.l.b16 %v2985
    %v3018 = vpack.c.b16 %v3003, %v3002
    %v3019 = vpack.c.b16 %v3005, %v3004
    %v3020 = vpack.c.b16 %v3007, %v3006
    %v3021 = vpack.c.b16 %v3009, %v3008
    %v3022 = vpack.c.b16 %v3011, %v3010
    %v3023 = vpack.c.b16 %v3013, %v3012
    %v3024 = vpack.c.b16 %v3015, %v3014
    %v3025 = vpack.c.b16 %v3017, %v3016
    %3034 = vmatprep.subr.bf16.mxu0 0
    %3035 = vmatpush1.bf16.msra.mxu0 %v3025
    %3036 = vmatprep.subr.bf16.mxu0 0
    %3037 = vmatpush1.bf16.msra.mxu0 %v3024
    %3038 = vmatprep.subr.bf16.mxu0 0
    %3039 = vmatpush1.bf16.msra.mxu0 %v3023
    %3040 = vmatprep.subr.bf16.mxu0 0
    %3041 = vmatpush1.bf16.msra.mxu0 %v3022
    %3042 = vmatprep.subr.bf16.mxu0 0
    %3043 = vmatpush1.bf16.msra.mxu0 %v3021
    %3044 = vmatprep.subr.bf16.mxu0 0
    %3045 = vmatpush1.bf16.msra.mxu0 %v3020
    %3046 = vmatprep.subr.bf16.mxu0 0
    %3047 = vmatpush1.bf16.msra.mxu0 %v3019
    %3048 = vmatprep.subr.bf16.mxu0 0
    %3049 = vmatpush1.bf16.msra.mxu0 %v3018
    %3050 = vmatprep.subr.bf16.mxu0 0
    %3051 = vmatpush2.bf16.msra.mxu0 0
    %3052 = vmatprep.subr.bf16.mxu0 0
    %3053 = vmatpush2.bf16.msra.mxu0 0
    %3054 = vmatprep.subr.bf16.mxu0 0
    %3055 = vmatpush2.bf16.msra.mxu0 0
    %3056 = vmatprep.subr.bf16.mxu0 0
    %3057 = vmatpush2.bf16.msra.mxu0 0
    %3058 = vmatprep.subr.bf16.mxu0 0
    %3059 = vmatpush2.bf16.msra.mxu0 0
    %3060 = vmatprep.subr.bf16.mxu0 0
    %3061 = vmatpush2.bf16.msra.mxu0 0
    %3062 = vmatprep.subr.bf16.mxu0 0
    %3063 = vmatpush2.bf16.msra.mxu0 0
    %3064 = vmatprep.subr.bf16.mxu0 0
    %3065 = vmatpush2.bf16.msra.mxu0 0
    %3066 = vmatprep.mubr.bf16.mxu0 0
    %3067 = vmatmul.mubr.bf16.gmra.mxu0 %v2861
    %v3068 = vpop.f32.mrf.mxu0
    %v3069 = vadd.f32 0.0, %v3068
    %v3070 = vpop.f32.mrf.mxu0
    %v3071 = vpop.f32.mrf.mxu0
    %v3072 = vadd.f32 0.0, %v3071
    %v3073 = vpop.f32.mrf.mxu0
    %3074 = vdwg.mxu0
    %s3075 = scalar_lea.vmem [#allocation16], 4
    %v3076 = vld [vmem:[%s3075] sm:$0xf]
    %v3077 = vpack.c.bf16 %v3072, %v3069
    %vm3078 = vcmask 130048
    %v3080 = vsel %vm3078, %v3076, 0
    %3082 = vmatprep.subr.bf16.mxu0 0
    %3083 = vmatpush1.bf16.msra.mxu0 0
    %3084 = vmatprep.subr.bf16.mxu0 0
    %3085 = vmatpush1.bf16.msra.mxu0 0
    %3086 = vmatprep.subr.bf16.mxu0 0
    %3087 = vmatpush1.bf16.msra.mxu0 0
    %3088 = vmatprep.subr.bf16.mxu0 0
    %3089 = vmatpush1.bf16.msra.mxu0 0
    %3090 = vmatprep.subr.bf16.mxu0 0
    %3091 = vmatpush1.bf16.msra.mxu0 0
    %3092 = vmatprep.subr.bf16.mxu0 0
    %3093 = vmatpush1.bf16.msra.mxu0 0
    %3094 = vmatprep.subr.bf16.mxu0 0
    %3095 = vmatpush1.bf16.msra.mxu0 0
    %3096 = vmatprep.subr.bf16.mxu0 0
    %3097 = vmatpush1.bf16.msra.mxu0 %v3077
    %3098 = vmatprep.subr.bf16.mxu0 0
    %3099 = vmatpush2.bf16.msra.mxu0 0
    %3100 = vmatprep.subr.bf16.mxu0 0
    %3101 = vmatpush2.bf16.msra.mxu0 0
    %3102 = vmatprep.subr.bf16.mxu0 0
    %3103 = vmatpush2.bf16.msra.mxu0 0
    %3104 = vmatprep.subr.bf16.mxu0 0
    %3105 = vmatpush2.bf16.msra.mxu0 0
    %3106 = vmatprep.subr.bf16.mxu0 0
    %3107 = vmatpush2.bf16.msra.mxu0 0
    %3108 = vmatprep.subr.bf16.mxu0 0
    %3109 = vmatpush2.bf16.msra.mxu0 0
    %3110 = vmatprep.subr.bf16.mxu0 0
    %3111 = vmatpush2.bf16.msra.mxu0 0
    %3112 = vmatprep.subr.bf16.mxu0 0
    %3113 = vmatpush2.bf16.msra.mxu0 0
    %3114 = vmatprep.mubr.bf16.mxu0 0
    %3115 = vmatmul.mubr.bf16.gmra.mxu0 %v3080
    %v3116 = vpop.f32.mrf.mxu0
    %v3117 = vadd.f32 0.0, %v3116
    %v3118 = vpop.f32.mrf.mxu0
    %v3119 = vpop.f32.mrf.mxu0
    %v3120 = vpop.f32.mrf.mxu0
    %3121 = vdwg.mxu0
    %v3123 = vsel %vm3078, %v2967, 0
    %3125 = vmatprep.subr.bf16.mxu0 0
    %3126 = vmatpush1.bf16.msra.mxu0 0
    %3127 = vmatprep.subr.bf16.mxu0 0
    %3128 = vmatpush1.bf16.msra.mxu0 0
    %3129 = vmatprep.subr.bf16.mxu0 0
    %3130 = vmatpush1.bf16.msra.mxu0 0
    %3131 = vmatprep.subr.bf16.mxu0 0
    %3132 = vmatpush1.bf16.msra.mxu0 0
    %3133 = vmatprep.subr.bf16.mxu0 0
    %3134 = vmatpush1.bf16.msra.mxu0 0
    %3135 = vmatprep.subr.bf16.mxu0 0
    %3136 = vmatpush1.bf16.msra.mxu0 0
    %3137 = vmatprep.subr.bf16.mxu0 0
    %3138 = vmatpush1.bf16.msra.mxu0 0
    %3139 = vmatprep.subr.bf16.mxu0 0
    %3140 = vmatpush1.bf16.msra.mxu0 %v2968
    %3141 = vmatprep.subr.bf16.mxu0 0
    %3142 = vmatpush2.bf16.msra.mxu0 0
    %3143 = vmatprep.subr.bf16.mxu0 0
    %3144 = vmatpush2.bf16.msra.mxu0 0
    %3145 = vmatprep.subr.bf16.mxu0 0
    %3146 = vmatpush2.bf16.msra.mxu0 0
    %3147 = vmatprep.subr.bf16.mxu0 0
    %3148 = vmatpush2.bf16.msra.mxu0 0
    %3149 = vmatprep.subr.bf16.mxu0 0
    %3150 = vmatpush2.bf16.msra.mxu0 0
    %3151 = vmatprep.subr.bf16.mxu0 0
    %3152 = vmatpush2.bf16.msra.mxu0 0
    %3153 = vmatprep.subr.bf16.mxu0 0
    %3154 = vmatpush2.bf16.msra.mxu0 0
    %3155 = vmatprep.subr.bf16.mxu0 0
    %3156 = vmatpush2.bf16.msra.mxu0 0
    %3157 = vmatprep.mubr.bf16.mxu0 0
    %3158 = vmatmul.mubr.bf16.gmra.mxu0 %v3123
    %v3159 = vpop.f32.mrf.mxu0
    %v3160 = vadd.f32 %v3117, %v3159
    %v3161 = vpop.f32.mrf.mxu0
    %v3162 = vpop.f32.mrf.mxu0
    %v3163 = vpop.f32.mrf.mxu0
    %3164 = vdwg.mxu0
    %s3165 = scalar_lea.vmem [#allocation14], 128
    %v3166 = vld [vmem:[%s3165] sm:$0xf]
    %v3167 = vld [vmem:[%s3165 + $0x4] sm:$0xf]
    %v3168 = vld [vmem:[%s3165 + $0x8] sm:$0xf]
    %v3169 = vld [vmem:[%s3165 + $0xc] sm:$0xf]
    %v3170 = vld [vmem:[%s3165 + $0x10] sm:$0xf]
    %v3171 = vld [vmem:[%s3165 + $0x14] sm:$0xf]
    %v3172 = vld [vmem:[%s3165 + $0x18] sm:$0xf]
    %v3173 = vld [vmem:[%s3165 + $0x1c] sm:$0xf]
    %v3174 = vld [vmem:[%s3165 + $0x20] sm:$0xf]
    %v3175 = vld [vmem:[%s3165 + $0x24] sm:$0xf]
    %v3176 = vld [vmem:[%s3165 + $0x28] sm:$0xf]
    %v3177 = vld [vmem:[%s3165 + $0x2c] sm:$0xf]
    %v3178 = vld [vmem:[%s3165 + $0x30] sm:$0xf]
    %v3179 = vld [vmem:[%s3165 + $0x34] sm:$0xf]
    %v3180 = vld [vmem:[%s3165 + $0x38] sm:$0xf]
    %v3181 = vld [vmem:[%s3165 + $0x3c] sm:$0xf]
    %v3198 = vunpack.c.l.b16 %v3166
    %v3199 = vunpack.c.l.b16 %v3167
    %v3200 = vunpack.c.l.b16 %v3168
    %v3201 = vunpack.c.l.b16 %v3169
    %v3202 = vunpack.c.l.b16 %v3170
    %v3203 = vunpack.c.l.b16 %v3171
    %v3204 = vunpack.c.l.b16 %v3172
    %v3205 = vunpack.c.l.b16 %v3173
    %v3206 = vunpack.c.l.b16 %v3174
    %v3207 = vunpack.c.l.b16 %v3175
    %v3208 = vunpack.c.l.b16 %v3176
    %v3209 = vunpack.c.l.b16 %v3177
    %v3210 = vunpack.c.l.b16 %v3178
    %v3211 = vunpack.c.l.b16 %v3179
    %v3212 = vunpack.c.l.b16 %v3180
    %v3213 = vunpack.c.l.b16 %v3181
    %v3214 = vpack.c.b16 %v3199, %v3198
    %v3215 = vpack.c.b16 %v3201, %v3200
    %v3216 = vpack.c.b16 %v3203, %v3202
    %v3217 = vpack.c.b16 %v3205, %v3204
    %v3218 = vpack.c.b16 %v3207, %v3206
    %v3219 = vpack.c.b16 %v3209, %v3208
    %v3220 = vpack.c.b16 %v3211, %v3210
    %v3221 = vpack.c.b16 %v3213, %v3212
    %3230 = vmatprep.subr.bf16.mxu0 0
    %3231 = vmatpush1.bf16.msra.mxu0 %v3221
    %3232 = vmatprep.subr.bf16.mxu0 0
    %3233 = vmatpush1.bf16.msra.mxu0 %v3220
    %3234 = vmatprep.subr.bf16.mxu0 0
    %3235 = vmatpush1.bf16.msra.mxu0 %v3219
    %3236 = vmatprep.subr.bf16.mxu0 0
    %3237 = vmatpush1.bf16.msra.mxu0 %v3218
    %3238 = vmatprep.subr.bf16.mxu0 0
    %3239 = vmatpush1.bf16.msra.mxu0 %v3217
    %3240 = vmatprep.subr.bf16.mxu0 0
    %3241 = vmatpush1.bf16.msra.mxu0 %v3216
    %3242 = vmatprep.subr.bf16.mxu0 0
    %3243 = vmatpush1.bf16.msra.mxu0 %v3215
    %3244 = vmatprep.subr.bf16.mxu0 0
    %3245 = vmatpush1.bf16.msra.mxu0 %v3214
    %3246 = vmatprep.subr.bf16.mxu0 0
    %3247 = vmatpush2.bf16.msra.mxu0 0
    %3248 = vmatprep.subr.bf16.mxu0 0
    %3249 = vmatpush2.bf16.msra.mxu0 0
    %3250 = vmatprep.subr.bf16.mxu0 0
    %3251 = vmatpush2.bf16.msra.mxu0 0
    %3252 = vmatprep.subr.bf16.mxu0 0
    %3253 = vmatpush2.bf16.msra.mxu0 0
    %3254 = vmatprep.subr.bf16.mxu0 0
    %3255 = vmatpush2.bf16.msra.mxu0 0
    %3256 = vmatprep.subr.bf16.mxu0 0
    %3257 = vmatpush2.bf16.msra.mxu0 0
    %3258 = vmatprep.subr.bf16.mxu0 0
    %3259 = vmatpush2.bf16.msra.mxu0 0
    %3260 = vmatprep.subr.bf16.mxu0 0
    %3261 = vmatpush2.bf16.msra.mxu0 0
    %3262 = vmatprep.mubr.bf16.mxu0 0
    %3263 = vmatmul.mubr.bf16.gmra.mxu0 %v2861
    %v3264 = vpop.f32.mrf.mxu0
    %v3265 = vadd.f32 0.0, %v3264
    %v3266 = vpop.f32.mrf.mxu0
    %v3267 = vpop.f32.mrf.mxu0
    %v3268 = vadd.f32 0.0, %v3267
    %v3269 = vpop.f32.mrf.mxu0
    %3270 = vdwg.mxu0
    %s3271 = scalar_lea.vmem [#allocation16], 8
    %v3272 = vld [vmem:[%s3271] sm:$0xf]
    %v3273 = vpack.c.bf16 %v3268, %v3265
    %v3275 = vsel %vm3078, %v3272, 0
    %3277 = vmatprep.subr.bf16.mxu0 0
    %3278 = vmatpush1.bf16.msra.mxu0 0
    %3279 = vmatprep.subr.bf16.mxu0 0
    %3280 = vmatpush1.bf16.msra.mxu0 0
    %3281 = vmatprep.subr.bf16.mxu0 0
    %3282 = vmatpush1.bf16.msra.mxu0 0
    %3283 = vmatprep.subr.bf16.mxu0 0
    %3284 = vmatpush1.bf16.msra.mxu0 0
    %3285 = vmatprep.subr.bf16.mxu0 0
    %3286 = vmatpush1.bf16.msra.mxu0 0
    %3287 = vmatprep.subr.bf16.mxu0 0
    %3288 = vmatpush1.bf16.msra.mxu0 0
    %3289 = vmatprep.subr.bf16.mxu0 0
    %3290 = vmatpush1.bf16.msra.mxu0 0
    %3291 = vmatprep.subr.bf16.mxu0 0
    %3292 = vmatpush1.bf16.msra.mxu0 %v3273
    %3293 = vmatprep.subr.bf16.mxu0 0
    %3294 = vmatpush2.bf16.msra.mxu0 0
    %3295 = vmatprep.subr.bf16.mxu0 0
    %3296 = vmatpush2.bf16.msra.mxu0 0
    %3297 = vmatprep.subr.bf16.mxu0 0
    %3298 = vmatpush2.bf16.msra.mxu0 0
    %3299 = vmatprep.subr.bf16.mxu0 0
    %3300 = vmatpush2.bf16.msra.mxu0 0
    %3301 = vmatprep.subr.bf16.mxu0 0
    %3302 = vmatpush2.bf16.msra.mxu0 0
    %3303 = vmatprep.subr.bf16.mxu0 0
    %3304 = vmatpush2.bf16.msra.mxu0 0
    %3305 = vmatprep.subr.bf16.mxu0 0
    %3306 = vmatpush2.bf16.msra.mxu0 0
    %3307 = vmatprep.subr.bf16.mxu0 0
    %3308 = vmatpush2.bf16.msra.mxu0 0
    %3309 = vmatprep.mubr.bf16.mxu0 0
    %3310 = vmatmul.mubr.bf16.gmra.mxu0 %v3275
    %v3311 = vpop.f32.mrf.mxu0
    %v3312 = vadd.f32 0.0, %v3311
    %v3313 = vpop.f32.mrf.mxu0
    %v3314 = vpop.f32.mrf.mxu0
    %v3315 = vpop.f32.mrf.mxu0
    %3316 = vdwg.mxu0
    %v3317 = vadd.f32 %v3160, %v3312
    %s3318 = scalar_lea.vmem [#allocation14], 192
    %v3319 = vld [vmem:[%s3318] sm:$0xf]
    %v3320 = vld [vmem:[%s3318 + $0x4] sm:$0xf]
    %v3321 = vld [vmem:[%s3318 + $0x8] sm:$0xf]
    %v3322 = vld [vmem:[%s3318 + $0xc] sm:$0xf]
    %v3323 = vld [vmem:[%s3318 + $0x10] sm:$0xf]
    %v3324 = vld [vmem:[%s3318 + $0x14] sm:$0xf]
    %v3325 = vld [vmem:[%s3318 + $0x18] sm:$0xf]
    %v3326 = vld [vmem:[%s3318 + $0x1c] sm:$0xf]
    %v3327 = vld [vmem:[%s3318 + $0x20] sm:$0xf]
    %v3328 = vld [vmem:[%s3318 + $0x24] sm:$0xf]
    %v3329 = vld [vmem:[%s3318 + $0x28] sm:$0xf]
    %v3330 = vld [vmem:[%s3318 + $0x2c] sm:$0xf]
    %v3331 = vld [vmem:[%s3318 + $0x30] sm:$0xf]
    %v3332 = vld [vmem:[%s3318 + $0x34] sm:$0xf]
    %v3333 = vld [vmem:[%s3318 + $0x38] sm:$0xf]
    %v3334 = vld [vmem:[%s3318 + $0x3c] sm:$0xf]
    %v3351 = vunpack.c.l.b16 %v3319
    %v3352 = vunpack.c.l.b16 %v3320
    %v3353 = vunpack.c.l.b16 %v3321
    %v3354 = vunpack.c.l.b16 %v3322
    %v3355 = vunpack.c.l.b16 %v3323
    %v3356 = vunpack.c.l.b16 %v3324
    %v3357 = vunpack.c.l.b16 %v3325
    %v3358 = vunpack.c.l.b16 %v3326
    %v3359 = vunpack.c.l.b16 %v3327
    %v3360 = vunpack.c.l.b16 %v3328
    %v3361 = vunpack.c.l.b16 %v3329
    %v3362 = vunpack.c.l.b16 %v3330
    %v3363 = vunpack.c.l.b16 %v3331
    %v3364 = vunpack.c.l.b16 %v3332
    %v3365 = vunpack.c.l.b16 %v3333
    %v3366 = vunpack.c.l.b16 %v3334
    %v3367 = vpack.c.b16 %v3352, %v3351
    %v3368 = vpack.c.b16 %v3354, %v3353
    %v3369 = vpack.c.b16 %v3356, %v3355
    %v3370 = vpack.c.b16 %v3358, %v3357
    %v3371 = vpack.c.b16 %v3360, %v3359
    %v3372 = vpack.c.b16 %v3362, %v3361
    %v3373 = vpack.c.b16 %v3364, %v3363
    %v3374 = vpack.c.b16 %v3366, %v3365
    %3383 = vmatprep.subr.bf16.mxu0 0
    %3384 = vmatpush1.bf16.msra.mxu0 %v3374
    %3385 = vmatprep.subr.bf16.mxu0 0
    %3386 = vmatpush1.bf16.msra.mxu0 %v3373
    %3387 = vmatprep.subr.bf16.mxu0 0
    %3388 = vmatpush1.bf16.msra.mxu0 %v3372
    %3389 = vmatprep.subr.bf16.mxu0 0
    %3390 = vmatpush1.bf16.msra.mxu0 %v3371
    %3391 = vmatprep.subr.bf16.mxu0 0
    %3392 = vmatpush1.bf16.msra.mxu0 %v3370
    %3393 = vmatprep.subr.bf16.mxu0 0
    %3394 = vmatpush1.bf16.msra.mxu0 %v3369
    %3395 = vmatprep.subr.bf16.mxu0 0
    %3396 = vmatpush1.bf16.msra.mxu0 %v3368
    %3397 = vmatprep.subr.bf16.mxu0 0
    %3398 = vmatpush1.bf16.msra.mxu0 %v3367
    %3399 = vmatprep.subr.bf16.mxu0 0
    %3400 = vmatpush2.bf16.msra.mxu0 0
    %3401 = vmatprep.subr.bf16.mxu0 0
    %3402 = vmatpush2.bf16.msra.mxu0 0
    %3403 = vmatprep.subr.bf16.mxu0 0
    %3404 = vmatpush2.bf16.msra.mxu0 0
    %3405 = vmatprep.subr.bf16.mxu0 0
    %3406 = vmatpush2.bf16.msra.mxu0 0
    %3407 = vmatprep.subr.bf16.mxu0 0
    %3408 = vmatpush2.bf16.msra.mxu0 0
    %3409 = vmatprep.subr.bf16.mxu0 0
    %3410 = vmatpush2.bf16.msra.mxu0 0
    %3411 = vmatprep.subr.bf16.mxu0 0
    %3412 = vmatpush2.bf16.msra.mxu0 0
    %3413 = vmatprep.subr.bf16.mxu0 0
    %3414 = vmatpush2.bf16.msra.mxu0 0
    %3415 = vmatprep.mubr.bf16.mxu0 0
    %3416 = vmatmul.mubr.bf16.gmra.mxu0 %v2861
    %v3417 = vpop.f32.mrf.mxu0
    %v3418 = vadd.f32 0.0, %v3417
    %v3419 = vpop.f32.mrf.mxu0
    %v3420 = vpop.f32.mrf.mxu0
    %v3421 = vadd.f32 0.0, %v3420
    %v3422 = vpop.f32.mrf.mxu0
    %3423 = vdwg.mxu0
    %s3424 = scalar_lea.vmem [#allocation16], 12
    %v3425 = vld [vmem:[%s3424] sm:$0xf]
    %v3426 = vpack.c.bf16 %v3421, %v3418
    %v3428 = vsel %vm3078, %v3425, 0
    %3430 = vmatprep.subr.bf16.mxu0 0
    %3431 = vmatpush1.bf16.msra.mxu0 0
    %3432 = vmatprep.subr.bf16.mxu0 0
    %3433 = vmatpush1.bf16.msra.mxu0 0
    %3434 = vmatprep.subr.bf16.mxu0 0
    %3435 = vmatpush1.bf16.msra.mxu0 0
    %3436 = vmatprep.subr.bf16.mxu0 0
    %3437 = vmatpush1.bf16.msra.mxu0 0
    %3438 = vmatprep.subr.bf16.mxu0 0
    %3439 = vmatpush1.bf16.msra.mxu0 0
    %3440 = vmatprep.subr.bf16.mxu0 0
    %3441 = vmatpush1.bf16.msra.mxu0 0
    %3442 = vmatprep.subr.bf16.mxu0 0
    %3443 = vmatpush1.bf16.msra.mxu0 0
    %3444 = vmatprep.subr.bf16.mxu0 0
    %3445 = vmatpush1.bf16.msra.mxu0 %v3426
    %3446 = vmatprep.subr.bf16.mxu0 0
    %3447 = vmatpush2.bf16.msra.mxu0 0
    %3448 = vmatprep.subr.bf16.mxu0 0
    %3449 = vmatpush2.bf16.msra.mxu0 0
    %3450 = vmatprep.subr.bf16.mxu0 0
    %3451 = vmatpush2.bf16.msra.mxu0 0
    %3452 = vmatprep.subr.bf16.mxu0 0
    %3453 = vmatpush2.bf16.msra.mxu0 0
    %3454 = vmatprep.subr.bf16.mxu0 0
    %3455 = vmatpush2.bf16.msra.mxu0 0
    %3456 = vmatprep.subr.bf16.mxu0 0
    %3457 = vmatpush2.bf16.msra.mxu0 0
    %3458 = vmatprep.subr.bf16.mxu0 0
    %3459 = vmatpush2.bf16.msra.mxu0 0
    %3460 = vmatprep.subr.bf16.mxu0 0
    %3461 = vmatpush2.bf16.msra.mxu0 0
    %3462 = vmatprep.mubr.bf16.mxu0 0
    %3463 = vmatmul.mubr.bf16.gmra.mxu0 %v3428
    %v3464 = vpop.f32.mrf.mxu0
    %v3465 = vadd.f32 0.0, %v3464
    %v3466 = vpop.f32.mrf.mxu0
    %v3467 = vpop.f32.mrf.mxu0
    %v3468 = vpop.f32.mrf.mxu0
    %3469 = vdwg.mxu0
    %v3470 = vadd.f32 %v3317, %v3465
    %v3472 = vlaneseq
    %v3473 = vshrl.u32 %v3472, 7
    %v3474 = vsub.s32 0, %v3473
    %v3475 = vrot.slane %v2860, %v3474
    %v3477 = vadd.f32 %v3470, %v3475
    %s3478 = scalar_lea.vmem %s14, 4
    %v3479 = vld [vmem:[%s3478] sm:$0x1]
    %v3480 = vpack.c.bf16 %v3477, %v3477
    %v3481 = vld [vmem:[#allocation17] sm:$0xf]
    %v3482 = vld [vmem:[#allocation17 + $0x4] sm:$0xf]
    %v3483 = vld [vmem:[#allocation17 + $0x8] sm:$0xf]
    %v3484 = vld [vmem:[#allocation17 + $0xc] sm:$0xf]
    %v3485 = vld [vmem:[#allocation17 + $0x10] sm:$0xf]
    %v3486 = vld [vmem:[#allocation17 + $0x14] sm:$0xf]
    %v3487 = vld [vmem:[#allocation17 + $0x18] sm:$0xf]
    %v3488 = vld [vmem:[#allocation17 + $0x1c] sm:$0xf]
    %v3489 = vld [vmem:[#allocation17 + $0x20] sm:$0xf]
    %v3490 = vld [vmem:[#allocation17 + $0x24] sm:$0xf]
    %v3491 = vld [vmem:[#allocation17 + $0x28] sm:$0xf]
    %v3492 = vld [vmem:[#allocation17 + $0x2c] sm:$0xf]
    %v3493 = vld [vmem:[#allocation17 + $0x30] sm:$0xf]
    %v3494 = vld [vmem:[#allocation17 + $0x34] sm:$0xf]
    %v3495 = vld [vmem:[#allocation17 + $0x38] sm:$0xf]
    %v3496 = vld [vmem:[#allocation17 + $0x3c] sm:$0xf]
    %v3513 = vunpack.c.l.b16 %v3481
    %v3514 = vunpack.c.l.b16 %v3482
    %v3515 = vunpack.c.l.b16 %v3483
    %v3516 = vunpack.c.l.b16 %v3484
    %v3517 = vunpack.c.l.b16 %v3485
    %v3518 = vunpack.c.l.b16 %v3486
    %v3519 = vunpack.c.l.b16 %v3487
    %v3520 = vunpack.c.l.b16 %v3488
    %v3521 = vunpack.c.l.b16 %v3489
    %v3522 = vunpack.c.l.b16 %v3490
    %v3523 = vunpack.c.l.b16 %v3491
    %v3524 = vunpack.c.l.b16 %v3492
    %v3525 = vunpack.c.l.b16 %v3493
    %v3526 = vunpack.c.l.b16 %v3494
    %v3527 = vunpack.c.l.b16 %v3495
    %v3528 = vunpack.c.l.b16 %v3496
    %v3529 = vpack.c.b16 %v3514, %v3513
    %v3530 = vpack.c.b16 %v3516, %v3515
    %v3531 = vpack.c.b16 %v3518, %v3517
    %v3532 = vpack.c.b16 %v3520, %v3519
    %v3533 = vpack.c.b16 %v3522, %v3521
    %v3534 = vpack.c.b16 %v3524, %v3523
    %v3535 = vpack.c.b16 %v3526, %v3525
    %v3536 = vpack.c.b16 %v3528, %v3527
    %3545 = vmatprep.subr.bf16.mxu0 0
    %3546 = vmatpush1.bf16.msra.mxu0 %v3536
    %3547 = vmatprep.subr.bf16.mxu0 0
    %3548 = vmatpush1.bf16.msra.mxu0 %v3535
    %3549 = vmatprep.subr.bf16.mxu0 0
    %3550 = vmatpush1.bf16.msra.mxu0 %v3534
    %3551 = vmatprep.subr.bf16.mxu0 0
    %3552 = vmatpush1.bf16.msra.mxu0 %v3533
    %3553 = vmatprep.subr.bf16.mxu0 0
    %3554 = vmatpush1.bf16.msra.mxu0 %v3532
    %3555 = vmatprep.subr.bf16.mxu0 0
    %3556 = vmatpush1.bf16.msra.mxu0 %v3531
    %3557 = vmatprep.subr.bf16.mxu0 0
    %3558 = vmatpush1.bf16.msra.mxu0 %v3530
    %3559 = vmatprep.subr.bf16.mxu0 0
    %3560 = vmatpush1.bf16.msra.mxu0 %v3529
    %3561 = vmatprep.subr.bf16.mxu0 0
    %3562 = vmatpush2.bf16.msra.mxu0 0
    %3563 = vmatprep.subr.bf16.mxu0 0
    %3564 = vmatpush2.bf16.msra.mxu0 0
    %3565 = vmatprep.subr.bf16.mxu0 0
    %3566 = vmatpush2.bf16.msra.mxu0 0
    %3567 = vmatprep.subr.bf16.mxu0 0
    %3568 = vmatpush2.bf16.msra.mxu0 0
    %3569 = vmatprep.subr.bf16.mxu0 0
    %3570 = vmatpush2.bf16.msra.mxu0 0
    %3571 = vmatprep.subr.bf16.mxu0 0
    %3572 = vmatpush2.bf16.msra.mxu0 0
    %3573 = vmatprep.subr.bf16.mxu0 0
    %3574 = vmatpush2.bf16.msra.mxu0 0
    %3575 = vmatprep.subr.bf16.mxu0 0
    %3576 = vmatpush2.bf16.msra.mxu0 0
    %3577 = vmatprep.mubr.bf16.mxu0 0
    %3578 = vmatmul.mubr.bf16.gmra.mxu0 %v3480
    %v3579 = vpop.f32.mrf.mxu0
    %v3580 = vadd.f32 0.0, %v3579
    %v3581 = vpop.f32.mrf.mxu0
    %v3582 = vpop.f32.mrf.mxu0
    %v3583 = vpop.f32.mrf.mxu0
    %3584 = vdwg.mxu0
    %v3585 = vld [vmem:[#allocation19] sm:$0xf]
    %v3586 = vpack.c.bf16 %v3580, %v3580
    %s3587 = scalar_lea.vmem [#allocation17], 64
    %v3588 = vld [vmem:[%s3587] sm:$0xf]
    %v3589 = vld [vmem:[%s3587 + $0x4] sm:$0xf]
    %v3590 = vld [vmem:[%s3587 + $0x8] sm:$0xf]
    %v3591 = vld [vmem:[%s3587 + $0xc] sm:$0xf]
    %v3592 = vld [vmem:[%s3587 + $0x10] sm:$0xf]
    %v3593 = vld [vmem:[%s3587 + $0x14] sm:$0xf]
    %v3594 = vld [vmem:[%s3587 + $0x18] sm:$0xf]
    %v3595 = vld [vmem:[%s3587 + $0x1c] sm:$0xf]
    %v3596 = vld [vmem:[%s3587 + $0x20] sm:$0xf]
    %v3597 = vld [vmem:[%s3587 + $0x24] sm:$0xf]
    %v3598 = vld [vmem:[%s3587 + $0x28] sm:$0xf]
    %v3599 = vld [vmem:[%s3587 + $0x2c] sm:$0xf]
    %v3600 = vld [vmem:[%s3587 + $0x30] sm:$0xf]
    %v3601 = vld [vmem:[%s3587 + $0x34] sm:$0xf]
    %v3602 = vld [vmem:[%s3587 + $0x38] sm:$0xf]
    %v3603 = vld [vmem:[%s3587 + $0x3c] sm:$0xf]
    %v3620 = vunpack.c.l.b16 %v3588
    %v3621 = vunpack.c.l.b16 %v3589
    %v3622 = vunpack.c.l.b16 %v3590
    %v3623 = vunpack.c.l.b16 %v3591
    %v3624 = vunpack.c.l.b16 %v3592
    %v3625 = vunpack.c.l.b16 %v3593
    %v3626 = vunpack.c.l.b16 %v3594
    %v3627 = vunpack.c.l.b16 %v3595
    %v3628 = vunpack.c.l.b16 %v3596
    %v3629 = vunpack.c.l.b16 %v3597
    %v3630 = vunpack.c.l.b16 %v3598
    %v3631 = vunpack.c.l.b16 %v3599
    %v3632 = vunpack.c.l.b16 %v3600
    %v3633 = vunpack.c.l.b16 %v3601
    %v3634 = vunpack.c.l.b16 %v3602
    %v3635 = vunpack.c.l.b16 %v3603
    %v3636 = vpack.c.b16 %v3621, %v3620
    %v3637 = vpack.c.b16 %v3623, %v3622
    %v3638 = vpack.c.b16 %v3625, %v3624
    %v3639 = vpack.c.b16 %v3627, %v3626
    %v3640 = vpack.c.b16 %v3629, %v3628
    %v3641 = vpack.c.b16 %v3631, %v3630
    %v3642 = vpack.c.b16 %v3633, %v3632
    %v3643 = vpack.c.b16 %v3635, %v3634
    %3652 = vmatprep.subr.bf16.mxu0 0
    %3653 = vmatpush1.bf16.msra.mxu0 %v3643
    %3654 = vmatprep.subr.bf16.mxu0 0
    %3655 = vmatpush1.bf16.msra.mxu0 %v3642
    %3656 = vmatprep.subr.bf16.mxu0 0
    %3657 = vmatpush1.bf16.msra.mxu0 %v3641
    %3658 = vmatprep.subr.bf16.mxu0 0
    %3659 = vmatpush1.bf16.msra.mxu0 %v3640
    %3660 = vmatprep.subr.bf16.mxu0 0
    %3661 = vmatpush1.bf16.msra.mxu0 %v3639
    %3662 = vmatprep.subr.bf16.mxu0 0
    %3663 = vmatpush1.bf16.msra.mxu0 %v3638
    %3664 = vmatprep.subr.bf16.mxu0 0
    %3665 = vmatpush1.bf16.msra.mxu0 %v3637
    %3666 = vmatprep.subr.bf16.mxu0 0
    %3667 = vmatpush1.bf16.msra.mxu0 %v3636
    %3668 = vmatprep.subr.bf16.mxu0 0
    %3669 = vmatpush2.bf16.msra.mxu0 0
    %3670 = vmatprep.subr.bf16.mxu0 0
    %3671 = vmatpush2.bf16.msra.mxu0 0
    %3672 = vmatprep.subr.bf16.mxu0 0
    %3673 = vmatpush2.bf16.msra.mxu0 0
    %3674 = vmatprep.subr.bf16.mxu0 0
    %3675 = vmatpush2.bf16.msra.mxu0 0
    %3676 = vmatprep.subr.bf16.mxu0 0
    %3677 = vmatpush2.bf16.msra.mxu0 0
    %3678 = vmatprep.subr.bf16.mxu0 0
    %3679 = vmatpush2.bf16.msra.mxu0 0
    %3680 = vmatprep.subr.bf16.mxu0 0
    %3681 = vmatpush2.bf16.msra.mxu0 0
    %3682 = vmatprep.subr.bf16.mxu0 0
    %3683 = vmatpush2.bf16.msra.mxu0 0
    %3684 = vmatprep.mubr.bf16.mxu0 0
    %3685 = vmatmul.mubr.bf16.gmra.mxu0 %v3480
    %v3686 = vpop.f32.mrf.mxu0
    %v3687 = vadd.f32 0.0, %v3686
    %v3688 = vpop.f32.mrf.mxu0
    %v3689 = vpop.f32.mrf.mxu0
    %v3690 = vpop.f32.mrf.mxu0
    %3691 = vdwg.mxu0
    %s3692 = scalar_lea.vmem [#allocation19], 4
    %v3693 = vld [vmem:[%s3692] sm:$0xf]
    %v3694 = vpack.c.bf16 %v3687, %v3687
    %vm3695 = vcmask 64512
    %v3697 = vsel %vm3695, %v3693, 0
    %vm3699 = vcmask 1043456
    %v3701 = vsel %vm3699, %v3694, 0
    %3703 = vmatprep.subr.bf16.mxu0 0
    %3704 = vmatpush1.bf16.msra.mxu0 0
    %3705 = vmatprep.subr.bf16.mxu0 0
    %3706 = vmatpush1.bf16.msra.mxu0 0
    %3707 = vmatprep.subr.bf16.mxu0 0
    %3708 = vmatpush1.bf16.msra.mxu0 0
    %3709 = vmatprep.subr.bf16.mxu0 0
    %3710 = vmatpush1.bf16.msra.mxu0 0
    %3711 = vmatprep.subr.bf16.mxu0 0
    %3712 = vmatpush1.bf16.msra.mxu0 0
    %3713 = vmatprep.subr.bf16.mxu0 0
    %3714 = vmatpush1.bf16.msra.mxu0 0
    %3715 = vmatprep.subr.bf16.mxu0 0
    %3716 = vmatpush1.bf16.msra.mxu0 0
    %3717 = vmatprep.subr.bf16.mxu0 0
    %3718 = vmatpush1.bf16.msra.mxu0 %v3701
    %3719 = vmatprep.subr.bf16.mxu0 0
    %3720 = vmatpush2.bf16.msra.mxu0 0
    %3721 = vmatprep.subr.bf16.mxu0 0
    %3722 = vmatpush2.bf16.msra.mxu0 0
    %3723 = vmatprep.subr.bf16.mxu0 0
    %3724 = vmatpush2.bf16.msra.mxu0 0
    %3725 = vmatprep.subr.bf16.mxu0 0
    %3726 = vmatpush2.bf16.msra.mxu0 0
    %3727 = vmatprep.subr.bf16.mxu0 0
    %3728 = vmatpush2.bf16.msra.mxu0 0
    %3729 = vmatprep.subr.bf16.mxu0 0
    %3730 = vmatpush2.bf16.msra.mxu0 0
    %3731 = vmatprep.subr.bf16.mxu0 0
    %3732 = vmatpush2.bf16.msra.mxu0 0
    %3733 = vmatprep.subr.bf16.mxu0 0
    %3734 = vmatpush2.bf16.msra.mxu0 0
    %3735 = vmatprep.mubr.bf16.mxu0 0
    %3736 = vmatmul.mubr.bf16.gmra.mxu0 %v3697
    %v3737 = vpop.f32.mrf.mxu0
    %v3738 = vadd.f32 0.0, %v3737
    %v3739 = vpop.f32.mrf.mxu0
    %v3740 = vpop.f32.mrf.mxu0
    %v3741 = vpop.f32.mrf.mxu0
    %3742 = vdwg.mxu0
    %v3744 = vsel %vm3695, %v3585, 0
    %v3747 = vsel %vm3699, %v3586, 0
    %3749 = vmatprep.subr.bf16.mxu0 0
    %3750 = vmatpush1.bf16.msra.mxu0 0
    %3751 = vmatprep.subr.bf16.mxu0 0
    %3752 = vmatpush1.bf16.msra.mxu0 0
    %3753 = vmatprep.subr.bf16.mxu0 0
    %3754 = vmatpush1.bf16.msra.mxu0 0
    %3755 = vmatprep.subr.bf16.mxu0 0
    %3756 = vmatpush1.bf16.msra.mxu0 0
    %3757 = vmatprep.subr.bf16.mxu0 0
    %3758 = vmatpush1.bf16.msra.mxu0 0
    %3759 = vmatprep.subr.bf16.mxu0 0
    %3760 = vmatpush1.bf16.msra.mxu0 0
    %3761 = vmatprep.subr.bf16.mxu0 0
    %3762 = vmatpush1.bf16.msra.mxu0 0
    %3763 = vmatprep.subr.bf16.mxu0 0
    %3764 = vmatpush1.bf16.msra.mxu0 %v3747
    %3765 = vmatprep.subr.bf16.mxu0 0
    %3766 = vmatpush2.bf16.msra.mxu0 0
    %3767 = vmatprep.subr.bf16.mxu0 0
    %3768 = vmatpush2.bf16.msra.mxu0 0
    %3769 = vmatprep.subr.bf16.mxu0 0
    %3770 = vmatpush2.bf16.msra.mxu0 0
    %3771 = vmatprep.subr.bf16.mxu0 0
    %3772 = vmatpush2.bf16.msra.mxu0 0
    %3773 = vmatprep.subr.bf16.mxu0 0
    %3774 = vmatpush2.bf16.msra.mxu0 0
    %3775 = vmatprep.subr.bf16.mxu0 0
    %3776 = vmatpush2.bf16.msra.mxu0 0
    %3777 = vmatprep.subr.bf16.mxu0 0
    %3778 = vmatpush2.bf16.msra.mxu0 0
    %3779 = vmatprep.subr.bf16.mxu0 0
    %3780 = vmatpush2.bf16.msra.mxu0 0
    %3781 = vmatprep.mubr.bf16.mxu0 0
    %3782 = vmatmul.mubr.bf16.gmra.mxu0 %v3744
    %v3783 = vpop.f32.mrf.mxu0
    %v3784 = vadd.f32 %v3738, %v3783
    %v3785 = vpop.f32.mrf.mxu0
    %v3786 = vpop.f32.mrf.mxu0
    %v3787 = vpop.f32.mrf.mxu0
    %3788 = vdwg.mxu0
    %s3789 = scalar_lea.vmem [#allocation17], 128
    %v3790 = vld [vmem:[%s3789] sm:$0xf]
    %v3791 = vld [vmem:[%s3789 + $0x4] sm:$0xf]
    %v3792 = vld [vmem:[%s3789 + $0x8] sm:$0xf]
    %v3793 = vld [vmem:[%s3789 + $0xc] sm:$0xf]
    %v3794 = vld [vmem:[%s3789 + $0x10] sm:$0xf]
    %v3795 = vld [vmem:[%s3789 + $0x14] sm:$0xf]
    %v3796 = vld [vmem:[%s3789 + $0x18] sm:$0xf]
    %v3797 = vld [vmem:[%s3789 + $0x1c] sm:$0xf]
    %v3798 = vld [vmem:[%s3789 + $0x20] sm:$0xf]
    %v3799 = vld [vmem:[%s3789 + $0x24] sm:$0xf]
    %v3800 = vld [vmem:[%s3789 + $0x28] sm:$0xf]
    %v3801 = vld [vmem:[%s3789 + $0x2c] sm:$0xf]
    %v3802 = vld [vmem:[%s3789 + $0x30] sm:$0xf]
    %v3803 = vld [vmem:[%s3789 + $0x34] sm:$0xf]
    %v3804 = vld [vmem:[%s3789 + $0x38] sm:$0xf]
    %v3805 = vld [vmem:[%s3789 + $0x3c] sm:$0xf]
    %v3822 = vunpack.c.l.b16 %v3790
    %v3823 = vunpack.c.l.b16 %v3791
    %v3824 = vunpack.c.l.b16 %v3792
    %v3825 = vunpack.c.l.b16 %v3793
    %v3826 = vunpack.c.l.b16 %v3794
    %v3827 = vunpack.c.l.b16 %v3795
    %v3828 = vunpack.c.l.b16 %v3796
    %v3829 = vunpack.c.l.b16 %v3797
    %v3830 = vunpack.c.l.b16 %v3798
    %v3831 = vunpack.c.l.b16 %v3799
    %v3832 = vunpack.c.l.b16 %v3800
    %v3833 = vunpack.c.l.b16 %v3801
    %v3834 = vunpack.c.l.b16 %v3802
    %v3835 = vunpack.c.l.b16 %v3803
    %v3836 = vunpack.c.l.b16 %v3804
    %v3837 = vunpack.c.l.b16 %v3805
    %v3838 = vpack.c.b16 %v3823, %v3822
    %v3839 = vpack.c.b16 %v3825, %v3824
    %v3840 = vpack.c.b16 %v3827, %v3826
    %v3841 = vpack.c.b16 %v3829, %v3828
    %v3842 = vpack.c.b16 %v3831, %v3830
    %v3843 = vpack.c.b16 %v3833, %v3832
    %v3844 = vpack.c.b16 %v3835, %v3834
    %v3845 = vpack.c.b16 %v3837, %v3836
    %3854 = vmatprep.subr.bf16.mxu0 0
    %3855 = vmatpush1.bf16.msra.mxu0 %v3845
    %3856 = vmatprep.subr.bf16.mxu0 0
    %3857 = vmatpush1.bf16.msra.mxu0 %v3844
    %3858 = vmatprep.subr.bf16.mxu0 0
    %3859 = vmatpush1.bf16.msra.mxu0 %v3843
    %3860 = vmatprep.subr.bf16.mxu0 0
    %3861 = vmatpush1.bf16.msra.mxu0 %v3842
    %3862 = vmatprep.subr.bf16.mxu0 0
    %3863 = vmatpush1.bf16.msra.mxu0 %v3841
    %3864 = vmatprep.subr.bf16.mxu0 0
    %3865 = vmatpush1.bf16.msra.mxu0 %v3840
    %3866 = vmatprep.subr.bf16.mxu0 0
    %3867 = vmatpush1.bf16.msra.mxu0 %v3839
    %3868 = vmatprep.subr.bf16.mxu0 0
    %3869 = vmatpush1.bf16.msra.mxu0 %v3838
    %3870 = vmatprep.subr.bf16.mxu0 0
    %3871 = vmatpush2.bf16.msra.mxu0 0
    %3872 = vmatprep.subr.bf16.mxu0 0
    %3873 = vmatpush2.bf16.msra.mxu0 0
    %3874 = vmatprep.subr.bf16.mxu0 0
    %3875 = vmatpush2.bf16.msra.mxu0 0
    %3876 = vmatprep.subr.bf16.mxu0 0
    %3877 = vmatpush2.bf16.msra.mxu0 0
    %3878 = vmatprep.subr.bf16.mxu0 0
    %3879 = vmatpush2.bf16.msra.mxu0 0
    %3880 = vmatprep.subr.bf16.mxu0 0
    %3881 = vmatpush2.bf16.msra.mxu0 0
    %3882 = vmatprep.subr.bf16.mxu0 0
    %3883 = vmatpush2.bf16.msra.mxu0 0
    %3884 = vmatprep.subr.bf16.mxu0 0
    %3885 = vmatpush2.bf16.msra.mxu0 0
    %3886 = vmatprep.mubr.bf16.mxu0 0
    %3887 = vmatmul.mubr.bf16.gmra.mxu0 %v3480
    %v3888 = vpop.f32.mrf.mxu0
    %v3889 = vadd.f32 0.0, %v3888
    %v3890 = vpop.f32.mrf.mxu0
    %v3891 = vpop.f32.mrf.mxu0
    %v3892 = vpop.f32.mrf.mxu0
    %3893 = vdwg.mxu0
    %s3894 = scalar_lea.vmem [#allocation19], 8
    %v3895 = vld [vmem:[%s3894] sm:$0xf]
    %v3896 = vpack.c.bf16 %v3889, %v3889
    %v3898 = vsel %vm3695, %v3895, 0
    %v3901 = vsel %vm3699, %v3896, 0
    %3903 = vmatprep.subr.bf16.mxu0 0
    %3904 = vmatpush1.bf16.msra.mxu0 0
    %3905 = vmatprep.subr.bf16.mxu0 0
    %3906 = vmatpush1.bf16.msra.mxu0 0
    %3907 = vmatprep.subr.bf16.mxu0 0
    %3908 = vmatpush1.bf16.msra.mxu0 0
    %3909 = vmatprep.subr.bf16.mxu0 0
    %3910 = vmatpush1.bf16.msra.mxu0 0
    %3911 = vmatprep.subr.bf16.mxu0 0
    %3912 = vmatpush1.bf16.msra.mxu0 0
    %3913 = vmatprep.subr.bf16.mxu0 0
    %3914 = vmatpush1.bf16.msra.mxu0 0
    %3915 = vmatprep.subr.bf16.mxu0 0
    %3916 = vmatpush1.bf16.msra.mxu0 0
    %3917 = vmatprep.subr.bf16.mxu0 0
    %3918 = vmatpush1.bf16.msra.mxu0 %v3901
    %3919 = vmatprep.subr.bf16.mxu0 0
    %3920 = vmatpush2.bf16.msra.mxu0 0
    %3921 = vmatprep.subr.bf16.mxu0 0
    %3922 = vmatpush2.bf16.msra.mxu0 0
    %3923 = vmatprep.subr.bf16.mxu0 0
    %3924 = vmatpush2.bf16.msra.mxu0 0
    %3925 = vmatprep.subr.bf16.mxu0 0
    %3926 = vmatpush2.bf16.msra.mxu0 0
    %3927 = vmatprep.subr.bf16.mxu0 0
    %3928 = vmatpush2.bf16.msra.mxu0 0
    %3929 = vmatprep.subr.bf16.mxu0 0
    %3930 = vmatpush2.bf16.msra.mxu0 0
    %3931 = vmatprep.subr.bf16.mxu0 0
    %3932 = vmatpush2.bf16.msra.mxu0 0
    %3933 = vmatprep.subr.bf16.mxu0 0
    %3934 = vmatpush2.bf16.msra.mxu0 0
    %3935 = vmatprep.mubr.bf16.mxu0 0
    %3936 = vmatmul.mubr.bf16.gmra.mxu0 %v3898
    %v3937 = vpop.f32.mrf.mxu0
    %v3938 = vadd.f32 0.0, %v3937
    %v3939 = vpop.f32.mrf.mxu0
    %v3940 = vpop.f32.mrf.mxu0
    %v3941 = vpop.f32.mrf.mxu0
    %3942 = vdwg.mxu0
    %v3943 = vadd.f32 %v3784, %v3938
    %s3944 = scalar_lea.vmem [#allocation17], 192
    %v3945 = vld [vmem:[%s3944] sm:$0xf]
    %v3946 = vld [vmem:[%s3944 + $0x4] sm:$0xf]
    %v3947 = vld [vmem:[%s3944 + $0x8] sm:$0xf]
    %v3948 = vld [vmem:[%s3944 + $0xc] sm:$0xf]
    %v3949 = vld [vmem:[%s3944 + $0x10] sm:$0xf]
    %v3950 = vld [vmem:[%s3944 + $0x14] sm:$0xf]
    %v3951 = vld [vmem:[%s3944 + $0x18] sm:$0xf]
    %v3952 = vld [vmem:[%s3944 + $0x1c] sm:$0xf]
    %v3953 = vld [vmem:[%s3944 + $0x20] sm:$0xf]
    %v3954 = vld [vmem:[%s3944 + $0x24] sm:$0xf]
    %v3955 = vld [vmem:[%s3944 + $0x28] sm:$0xf]
    %v3956 = vld [vmem:[%s3944 + $0x2c] sm:$0xf]
    %v3957 = vld [vmem:[%s3944 + $0x30] sm:$0xf]
    %v3958 = vld [vmem:[%s3944 + $0x34] sm:$0xf]
    %v3959 = vld [vmem:[%s3944 + $0x38] sm:$0xf]
    %v3960 = vld [vmem:[%s3944 + $0x3c] sm:$0xf]
    %v3977 = vunpack.c.l.b16 %v3945
    %v3978 = vunpack.c.l.b16 %v3946
    %v3979 = vunpack.c.l.b16 %v3947
    %v3980 = vunpack.c.l.b16 %v3948
    %v3981 = vunpack.c.l.b16 %v3949
    %v3982 = vunpack.c.l.b16 %v3950
    %v3983 = vunpack.c.l.b16 %v3951
    %v3984 = vunpack.c.l.b16 %v3952
    %v3985 = vunpack.c.l.b16 %v3953
    %v3986 = vunpack.c.l.b16 %v3954
    %v3987 = vunpack.c.l.b16 %v3955
    %v3988 = vunpack.c.l.b16 %v3956
    %v3989 = vunpack.c.l.b16 %v3957
    %v3990 = vunpack.c.l.b16 %v3958
    %v3991 = vunpack.c.l.b16 %v3959
    %v3992 = vunpack.c.l.b16 %v3960
    %v3993 = vpack.c.b16 %v3978, %v3977
    %v3994 = vpack.c.b16 %v3980, %v3979
    %v3995 = vpack.c.b16 %v3982, %v3981
    %v3996 = vpack.c.b16 %v3984, %v3983
    %v3997 = vpack.c.b16 %v3986, %v3985
    %v3998 = vpack.c.b16 %v3988, %v3987
    %v3999 = vpack.c.b16 %v3990, %v3989
    %v4000 = vpack.c.b16 %v3992, %v3991
    %4009 = vmatprep.subr.bf16.mxu0 0
    %4010 = vmatpush1.bf16.msra.mxu0 %v4000
    %4011 = vmatprep.subr.bf16.mxu0 0
    %4012 = vmatpush1.bf16.msra.mxu0 %v3999
    %4013 = vmatprep.subr.bf16.mxu0 0
    %4014 = vmatpush1.bf16.msra.mxu0 %v3998
    %4015 = vmatprep.subr.bf16.mxu0 0
    %4016 = vmatpush1.bf16.msra.mxu0 %v3997
    %4017 = vmatprep.subr.bf16.mxu0 0
    %4018 = vmatpush1.bf16.msra.mxu0 %v3996
    %4019 = vmatprep.subr.bf16.mxu0 0
    %4020 = vmatpush1.bf16.msra.mxu0 %v3995
    %4021 = vmatprep.subr.bf16.mxu0 0
    %4022 = vmatpush1.bf16.msra.mxu0 %v3994
    %4023 = vmatprep.subr.bf16.mxu0 0
    %4024 = vmatpush1.bf16.msra.mxu0 %v3993
    %4025 = vmatprep.subr.bf16.mxu0 0
    %4026 = vmatpush2.bf16.msra.mxu0 0
    %4027 = vmatprep.subr.bf16.mxu0 0
    %4028 = vmatpush2.bf16.msra.mxu0 0
    %4029 = vmatprep.subr.bf16.mxu0 0
    %4030 = vmatpush2.bf16.msra.mxu0 0
    %4031 = vmatprep.subr.bf16.mxu0 0
    %4032 = vmatpush2.bf16.msra.mxu0 0
    %4033 = vmatprep.subr.bf16.mxu0 0
    %4034 = vmatpush2.bf16.msra.mxu0 0
    %4035 = vmatprep.subr.bf16.mxu0 0
    %4036 = vmatpush2.bf16.msra.mxu0 0
    %4037 = vmatprep.subr.bf16.mxu0 0
    %4038 = vmatpush2.bf16.msra.mxu0 0
    %4039 = vmatprep.subr.bf16.mxu0 0
    %4040 = vmatpush2.bf16.msra.mxu0 0
    %4041 = vmatprep.mubr.bf16.mxu0 0
    %4042 = vmatmul.mubr.bf16.gmra.mxu0 %v3480
    %v4043 = vpop.f32.mrf.mxu0
    %v4044 = vadd.f32 0.0, %v4043
    %v4045 = vpop.f32.mrf.mxu0
    %v4046 = vpop.f32.mrf.mxu0
    %v4047 = vpop.f32.mrf.mxu0
    %4048 = vdwg.mxu0
    %s4049 = scalar_lea.vmem [#allocation19], 12
    %v4050 = vld [vmem:[%s4049] sm:$0xf]
    %v4051 = vpack.c.bf16 %v4044, %v4044
    %v4053 = vsel %vm3695, %v4050, 0
    %v4056 = vsel %vm3699, %v4051, 0
    %4058 = vmatprep.subr.bf16.mxu0 0
    %4059 = vmatpush1.bf16.msra.mxu0 0
    %4060 = vmatprep.subr.bf16.mxu0 0
    %4061 = vmatpush1.bf16.msra.mxu0 0
    %4062 = vmatprep.subr.bf16.mxu0 0
    %4063 = vmatpush1.bf16.msra.mxu0 0
    %4064 = vmatprep.subr.bf16.mxu0 0
    %4065 = vmatpush1.bf16.msra.mxu0 0
    %4066 = vmatprep.subr.bf16.mxu0 0
    %4067 = vmatpush1.bf16.msra.mxu0 0
    %4068 = vmatprep.subr.bf16.mxu0 0
    %4069 = vmatpush1.bf16.msra.mxu0 0
    %4070 = vmatprep.subr.bf16.mxu0 0
    %4071 = vmatpush1.bf16.msra.mxu0 0
    %4072 = vmatprep.subr.bf16.mxu0 0
    %4073 = vmatpush1.bf16.msra.mxu0 %v4056
    %4074 = vmatprep.subr.bf16.mxu0 0
    %4075 = vmatpush2.bf16.msra.mxu0 0
    %4076 = vmatprep.subr.bf16.mxu0 0
    %4077 = vmatpush2.bf16.msra.mxu0 0
    %4078 = vmatprep.subr.bf16.mxu0 0
    %4079 = vmatpush2.bf16.msra.mxu0 0
    %4080 = vmatprep.subr.bf16.mxu0 0
    %4081 = vmatpush2.bf16.msra.mxu0 0
    %4082 = vmatprep.subr.bf16.mxu0 0
    %4083 = vmatpush2.bf16.msra.mxu0 0
    %4084 = vmatprep.subr.bf16.mxu0 0
    %4085 = vmatpush2.bf16.msra.mxu0 0
    %4086 = vmatprep.subr.bf16.mxu0 0
    %4087 = vmatpush2.bf16.msra.mxu0 0
    %4088 = vmatprep.subr.bf16.mxu0 0
    %4089 = vmatpush2.bf16.msra.mxu0 0
    %4090 = vmatprep.mubr.bf16.mxu0 0
    %4091 = vmatmul.mubr.bf16.gmra.mxu0 %v4053
    %v4092 = vpop.f32.mrf.mxu0
    %v4093 = vadd.f32 0.0, %v4092
    %v4094 = vpop.f32.mrf.mxu0
    %v4095 = vpop.f32.mrf.mxu0
    %v4096 = vpop.f32.mrf.mxu0
    %4097 = vdwg.mxu0
    %v4098 = vadd.f32 %v3943, %v4093
    %v4100 = vlaneseq
    %v4101 = vshrl.u32 %v4100, 7
    %v4102 = vsub.s32 0, %v4101
    %v4103 = vrot.slane %v3479, %v4102
    %v4105 = vadd.f32 %v4098, %v4103
    %s4106 = scalar_lea.vmem %s14, 5
    %v4107 = vld [vmem:[%s4106] sm:$0x1]
    %v4108 = vpack.c.bf16 %v4105, %v4105
    %v4109 = vld [vmem:[#allocation20] sm:$0xf]
    %v4110 = vld [vmem:[#allocation20 + $0x4] sm:$0xf]
    %v4111 = vld [vmem:[#allocation20 + $0x8] sm:$0xf]
    %v4112 = vld [vmem:[#allocation20 + $0xc] sm:$0xf]
    %v4113 = vld [vmem:[#allocation20 + $0x10] sm:$0xf]
    %v4114 = vld [vmem:[#allocation20 + $0x14] sm:$0xf]
    %v4115 = vld [vmem:[#allocation20 + $0x18] sm:$0xf]
    %v4116 = vld [vmem:[#allocation20 + $0x1c] sm:$0xf]
    %v4117 = vld [vmem:[#allocation20 + $0x20] sm:$0xf]
    %v4118 = vld [vmem:[#allocation20 + $0x24] sm:$0xf]
    %v4119 = vld [vmem:[#allocation20 + $0x28] sm:$0xf]
    %v4120 = vld [vmem:[#allocation20 + $0x2c] sm:$0xf]
    %v4121 = vld [vmem:[#allocation20 + $0x30] sm:$0xf]
    %v4122 = vld [vmem:[#allocation20 + $0x34] sm:$0xf]
    %v4123 = vld [vmem:[#allocation20 + $0x38] sm:$0xf]
    %v4124 = vld [vmem:[#allocation20 + $0x3c] sm:$0xf]
    %v4141 = vunpack.c.l.b16 %v4109
    %v4142 = vunpack.c.l.b16 %v4110
    %v4143 = vunpack.c.l.b16 %v4111
    %v4144 = vunpack.c.l.b16 %v4112
    %v4145 = vunpack.c.l.b16 %v4113
    %v4146 = vunpack.c.l.b16 %v4114
    %v4147 = vunpack.c.l.b16 %v4115
    %v4148 = vunpack.c.l.b16 %v4116
    %v4149 = vunpack.c.l.b16 %v4117
    %v4150 = vunpack.c.l.b16 %v4118
    %v4151 = vunpack.c.l.b16 %v4119
    %v4152 = vunpack.c.l.b16 %v4120
    %v4153 = vunpack.c.l.b16 %v4121
    %v4154 = vunpack.c.l.b16 %v4122
    %v4155 = vunpack.c.l.b16 %v4123
    %v4156 = vunpack.c.l.b16 %v4124
    %v4157 = vpack.c.b16 %v4142, %v4141
    %v4158 = vpack.c.b16 %v4144, %v4143
    %v4159 = vpack.c.b16 %v4146, %v4145
    %v4160 = vpack.c.b16 %v4148, %v4147
    %v4161 = vpack.c.b16 %v4150, %v4149
    %v4162 = vpack.c.b16 %v4152, %v4151
    %v4163 = vpack.c.b16 %v4154, %v4153
    %v4164 = vpack.c.b16 %v4156, %v4155
    %4173 = vmatprep.subr.bf16.mxu0 0
    %4174 = vmatpush1.bf16.msra.mxu0 %v4164
    %4175 = vmatprep.subr.bf16.mxu0 0
    %4176 = vmatpush1.bf16.msra.mxu0 %v4163
    %4177 = vmatprep.subr.bf16.mxu0 0
    %4178 = vmatpush1.bf16.msra.mxu0 %v4162
    %4179 = vmatprep.subr.bf16.mxu0 0
    %4180 = vmatpush1.bf16.msra.mxu0 %v4161
    %4181 = vmatprep.subr.bf16.mxu0 0
    %4182 = vmatpush1.bf16.msra.mxu0 %v4160
    %4183 = vmatprep.subr.bf16.mxu0 0
    %4184 = vmatpush1.bf16.msra.mxu0 %v4159
    %4185 = vmatprep.subr.bf16.mxu0 0
    %4186 = vmatpush1.bf16.msra.mxu0 %v4158
    %4187 = vmatprep.subr.bf16.mxu0 0
    %4188 = vmatpush1.bf16.msra.mxu0 %v4157
    %4189 = vmatprep.subr.bf16.mxu0 0
    %4190 = vmatpush2.bf16.msra.mxu0 0
    %4191 = vmatprep.subr.bf16.mxu0 0
    %4192 = vmatpush2.bf16.msra.mxu0 0
    %4193 = vmatprep.subr.bf16.mxu0 0
    %4194 = vmatpush2.bf16.msra.mxu0 0
    %4195 = vmatprep.subr.bf16.mxu0 0
    %4196 = vmatpush2.bf16.msra.mxu0 0
    %4197 = vmatprep.subr.bf16.mxu0 0
    %4198 = vmatpush2.bf16.msra.mxu0 0
    %4199 = vmatprep.subr.bf16.mxu0 0
    %4200 = vmatpush2.bf16.msra.mxu0 0
    %4201 = vmatprep.subr.bf16.mxu0 0
    %4202 = vmatpush2.bf16.msra.mxu0 0
    %4203 = vmatprep.subr.bf16.mxu0 0
    %4204 = vmatpush2.bf16.msra.mxu0 0
    %4205 = vmatprep.mubr.bf16.mxu0 0
    %4206 = vmatmul.mubr.bf16.gmra.mxu0 %v4108
    %v4207 = vpop.f32.mrf.mxu0
    %v4208 = vadd.f32 0.0, %v4207
    %v4209 = vpop.f32.mrf.mxu0
    %v4210 = vpop.f32.mrf.mxu0
    %v4211 = vpop.f32.mrf.mxu0
    %4212 = vdwg.mxu0
    %v4213 = vld [vmem:[#allocation22] sm:$0xf]
    %v4214 = vpack.c.bf16 %v4208, %v4208
    %s4215 = scalar_lea.vmem [#allocation20], 64
    %v4216 = vld [vmem:[%s4215] sm:$0xf]
    %v4217 = vld [vmem:[%s4215 + $0x4] sm:$0xf]
    %v4218 = vld [vmem:[%s4215 + $0x8] sm:$0xf]
    %v4219 = vld [vmem:[%s4215 + $0xc] sm:$0xf]
    %v4220 = vld [vmem:[%s4215 + $0x10] sm:$0xf]
    %v4221 = vld [vmem:[%s4215 + $0x14] sm:$0xf]
    %v4222 = vld [vmem:[%s4215 + $0x18] sm:$0xf]
    %v4223 = vld [vmem:[%s4215 + $0x1c] sm:$0xf]
    %v4224 = vld [vmem:[%s4215 + $0x20] sm:$0xf]
    %v4225 = vld [vmem:[%s4215 + $0x24] sm:$0xf]
    %v4226 = vld [vmem:[%s4215 + $0x28] sm:$0xf]
    %v4227 = vld [vmem:[%s4215 + $0x2c] sm:$0xf]
    %v4228 = vld [vmem:[%s4215 + $0x30] sm:$0xf]
    %v4229 = vld [vmem:[%s4215 + $0x34] sm:$0xf]
    %v4230 = vld [vmem:[%s4215 + $0x38] sm:$0xf]
    %v4231 = vld [vmem:[%s4215 + $0x3c] sm:$0xf]
    %v4248 = vunpack.c.l.b16 %v4216
    %v4249 = vunpack.c.l.b16 %v4217
    %v4250 = vunpack.c.l.b16 %v4218
    %v4251 = vunpack.c.l.b16 %v4219
    %v4252 = vunpack.c.l.b16 %v4220
    %v4253 = vunpack.c.l.b16 %v4221
    %v4254 = vunpack.c.l.b16 %v4222
    %v4255 = vunpack.c.l.b16 %v4223
    %v4256 = vunpack.c.l.b16 %v4224
    %v4257 = vunpack.c.l.b16 %v4225
    %v4258 = vunpack.c.l.b16 %v4226
    %v4259 = vunpack.c.l.b16 %v4227
    %v4260 = vunpack.c.l.b16 %v4228
    %v4261 = vunpack.c.l.b16 %v4229
    %v4262 = vunpack.c.l.b16 %v4230
    %v4263 = vunpack.c.l.b16 %v4231
    %v4264 = vpack.c.b16 %v4249, %v4248
    %v4265 = vpack.c.b16 %v4251, %v4250
    %v4266 = vpack.c.b16 %v4253, %v4252
    %v4267 = vpack.c.b16 %v4255, %v4254
    %v4268 = vpack.c.b16 %v4257, %v4256
    %v4269 = vpack.c.b16 %v4259, %v4258
    %v4270 = vpack.c.b16 %v4261, %v4260
    %v4271 = vpack.c.b16 %v4263, %v4262
    %4280 = vmatprep.subr.bf16.mxu0 0
    %4281 = vmatpush1.bf16.msra.mxu0 %v4271
    %4282 = vmatprep.subr.bf16.mxu0 0
    %4283 = vmatpush1.bf16.msra.mxu0 %v4270
    %4284 = vmatprep.subr.bf16.mxu0 0
    %4285 = vmatpush1.bf16.msra.mxu0 %v4269
    %4286 = vmatprep.subr.bf16.mxu0 0
    %4287 = vmatpush1.bf16.msra.mxu0 %v4268
    %4288 = vmatprep.subr.bf16.mxu0 0
    %4289 = vmatpush1.bf16.msra.mxu0 %v4267
    %4290 = vmatprep.subr.bf16.mxu0 0
    %4291 = vmatpush1.bf16.msra.mxu0 %v4266
    %4292 = vmatprep.subr.bf16.mxu0 0
    %4293 = vmatpush1.bf16.msra.mxu0 %v4265
    %4294 = vmatprep.subr.bf16.mxu0 0
    %4295 = vmatpush1.bf16.msra.mxu0 %v4264
    %4296 = vmatprep.subr.bf16.mxu0 0
    %4297 = vmatpush2.bf16.msra.mxu0 0
    %4298 = vmatprep.subr.bf16.mxu0 0
    %4299 = vmatpush2.bf16.msra.mxu0 0
    %4300 = vmatprep.subr.bf16.mxu0 0
    %4301 = vmatpush2.bf16.msra.mxu0 0
    %4302 = vmatprep.subr.bf16.mxu0 0
    %4303 = vmatpush2.bf16.msra.mxu0 0
    %4304 = vmatprep.subr.bf16.mxu0 0
    %4305 = vmatpush2.bf16.msra.mxu0 0
    %4306 = vmatprep.subr.bf16.mxu0 0
    %4307 = vmatpush2.bf16.msra.mxu0 0
    %4308 = vmatprep.subr.bf16.mxu0 0
    %4309 = vmatpush2.bf16.msra.mxu0 0
    %4310 = vmatprep.subr.bf16.mxu0 0
    %4311 = vmatpush2.bf16.msra.mxu0 0
    %4312 = vmatprep.mubr.bf16.mxu0 0
    %4313 = vmatmul.mubr.bf16.gmra.mxu0 %v4108
    %v4314 = vpop.f32.mrf.mxu0
    %v4315 = vadd.f32 0.0, %v4314
    %v4316 = vpop.f32.mrf.mxu0
    %v4317 = vpop.f32.mrf.mxu0
    %v4318 = vpop.f32.mrf.mxu0
    %4319 = vdwg.mxu0
    %s4320 = scalar_lea.vmem [#allocation22], 4
    %v4321 = vld [vmem:[%s4320] sm:$0xf]
    %v4322 = vpack.c.bf16 %v4315, %v4315
    %v4324 = vsel %vm3695, %v4321, 0
    %v4327 = vsel %vm3699, %v4322, 0
    %4329 = vmatprep.subr.bf16.mxu0 0
    %4330 = vmatpush1.bf16.msra.mxu0 0
    %4331 = vmatprep.subr.bf16.mxu0 0
    %4332 = vmatpush1.bf16.msra.mxu0 0
    %4333 = vmatprep.subr.bf16.mxu0 0
    %4334 = vmatpush1.bf16.msra.mxu0 0
    %4335 = vmatprep.subr.bf16.mxu0 0
    %4336 = vmatpush1.bf16.msra.mxu0 0
    %4337 = vmatprep.subr.bf16.mxu0 0
    %4338 = vmatpush1.bf16.msra.mxu0 0
    %4339 = vmatprep.subr.bf16.mxu0 0
    %4340 = vmatpush1.bf16.msra.mxu0 0
    %4341 = vmatprep.subr.bf16.mxu0 0
    %4342 = vmatpush1.bf16.msra.mxu0 0
    %4343 = vmatprep.subr.bf16.mxu0 0
    %4344 = vmatpush1.bf16.msra.mxu0 %v4327
    %4345 = vmatprep.subr.bf16.mxu0 0
    %4346 = vmatpush2.bf16.msra.mxu0 0
    %4347 = vmatprep.subr.bf16.mxu0 0
    %4348 = vmatpush2.bf16.msra.mxu0 0
    %4349 = vmatprep.subr.bf16.mxu0 0
    %4350 = vmatpush2.bf16.msra.mxu0 0
    %4351 = vmatprep.subr.bf16.mxu0 0
    %4352 = vmatpush2.bf16.msra.mxu0 0
    %4353 = vmatprep.subr.bf16.mxu0 0
    %4354 = vmatpush2.bf16.msra.mxu0 0
    %4355 = vmatprep.subr.bf16.mxu0 0
    %4356 = vmatpush2.bf16.msra.mxu0 0
    %4357 = vmatprep.subr.bf16.mxu0 0
    %4358 = vmatpush2.bf16.msra.mxu0 0
    %4359 = vmatprep.subr.bf16.mxu0 0
    %4360 = vmatpush2.bf16.msra.mxu0 0
    %4361 = vmatprep.mubr.bf16.mxu0 0
    %4362 = vmatmul.mubr.bf16.gmra.mxu0 %v4324
    %v4363 = vpop.f32.mrf.mxu0
    %v4364 = vadd.f32 0.0, %v4363
    %v4365 = vpop.f32.mrf.mxu0
    %v4366 = vpop.f32.mrf.mxu0
    %v4367 = vpop.f32.mrf.mxu0
    %4368 = vdwg.mxu0
    %v4370 = vsel %vm3695, %v4213, 0
    %v4373 = vsel %vm3699, %v4214, 0
    %4375 = vmatprep.subr.bf16.mxu0 0
    %4376 = vmatpush1.bf16.msra.mxu0 0
    %4377 = vmatprep.subr.bf16.mxu0 0
    %4378 = vmatpush1.bf16.msra.mxu0 0
    %4379 = vmatprep.subr.bf16.mxu0 0
    %4380 = vmatpush1.bf16.msra.mxu0 0
    %4381 = vmatprep.subr.bf16.mxu0 0
    %4382 = vmatpush1.bf16.msra.mxu0 0
    %4383 = vmatprep.subr.bf16.mxu0 0
    %4384 = vmatpush1.bf16.msra.mxu0 0
    %4385 = vmatprep.subr.bf16.mxu0 0
    %4386 = vmatpush1.bf16.msra.mxu0 0
    %4387 = vmatprep.subr.bf16.mxu0 0
    %4388 = vmatpush1.bf16.msra.mxu0 0
    %4389 = vmatprep.subr.bf16.mxu0 0
    %4390 = vmatpush1.bf16.msra.mxu0 %v4373
    %4391 = vmatprep.subr.bf16.mxu0 0
    %4392 = vmatpush2.bf16.msra.mxu0 0
    %4393 = vmatprep.subr.bf16.mxu0 0
    %4394 = vmatpush2.bf16.msra.mxu0 0
    %4395 = vmatprep.subr.bf16.mxu0 0
    %4396 = vmatpush2.bf16.msra.mxu0 0
    %4397 = vmatprep.subr.bf16.mxu0 0
    %4398 = vmatpush2.bf16.msra.mxu0 0
    %4399 = vmatprep.subr.bf16.mxu0 0
    %4400 = vmatpush2.bf16.msra.mxu0 0
    %4401 = vmatprep.subr.bf16.mxu0 0
    %4402 = vmatpush2.bf16.msra.mxu0 0
    %4403 = vmatprep.subr.bf16.mxu0 0
    %4404 = vmatpush2.bf16.msra.mxu0 0
    %4405 = vmatprep.subr.bf16.mxu0 0
    %4406 = vmatpush2.bf16.msra.mxu0 0
    %4407 = vmatprep.mubr.bf16.mxu0 0
    %4408 = vmatmul.mubr.bf16.gmra.mxu0 %v4370
    %v4409 = vpop.f32.mrf.mxu0
    %v4410 = vadd.f32 %v4364, %v4409
    %v4411 = vpop.f32.mrf.mxu0
    %v4412 = vpop.f32.mrf.mxu0
    %v4413 = vpop.f32.mrf.mxu0
    %4414 = vdwg.mxu0
    %s4415 = scalar_lea.vmem [#allocation20], 128
    %v4416 = vld [vmem:[%s4415] sm:$0xf]
    %v4417 = vld [vmem:[%s4415 + $0x4] sm:$0xf]
    %v4418 = vld [vmem:[%s4415 + $0x8] sm:$0xf]
    %v4419 = vld [vmem:[%s4415 + $0xc] sm:$0xf]
    %v4420 = vld [vmem:[%s4415 + $0x10] sm:$0xf]
    %v4421 = vld [vmem:[%s4415 + $0x14] sm:$0xf]
    %v4422 = vld [vmem:[%s4415 + $0x18] sm:$0xf]
    %v4423 = vld [vmem:[%s4415 + $0x1c] sm:$0xf]
    %v4424 = vld [vmem:[%s4415 + $0x20] sm:$0xf]
    %v4425 = vld [vmem:[%s4415 + $0x24] sm:$0xf]
    %v4426 = vld [vmem:[%s4415 + $0x28] sm:$0xf]
    %v4427 = vld [vmem:[%s4415 + $0x2c] sm:$0xf]
    %v4428 = vld [vmem:[%s4415 + $0x30] sm:$0xf]
    %v4429 = vld [vmem:[%s4415 + $0x34] sm:$0xf]
    %v4430 = vld [vmem:[%s4415 + $0x38] sm:$0xf]
    %v4431 = vld [vmem:[%s4415 + $0x3c] sm:$0xf]
    %v4448 = vunpack.c.l.b16 %v4416
    %v4449 = vunpack.c.l.b16 %v4417
    %v4450 = vunpack.c.l.b16 %v4418
    %v4451 = vunpack.c.l.b16 %v4419
    %v4452 = vunpack.c.l.b16 %v4420
    %v4453 = vunpack.c.l.b16 %v4421
    %v4454 = vunpack.c.l.b16 %v4422
    %v4455 = vunpack.c.l.b16 %v4423
    %v4456 = vunpack.c.l.b16 %v4424
    %v4457 = vunpack.c.l.b16 %v4425
    %v4458 = vunpack.c.l.b16 %v4426
    %v4459 = vunpack.c.l.b16 %v4427
    %v4460 = vunpack.c.l.b16 %v4428
    %v4461 = vunpack.c.l.b16 %v4429
    %v4462 = vunpack.c.l.b16 %v4430
    %v4463 = vunpack.c.l.b16 %v4431
    %v4464 = vpack.c.b16 %v4449, %v4448
    %v4465 = vpack.c.b16 %v4451, %v4450
    %v4466 = vpack.c.b16 %v4453, %v4452
    %v4467 = vpack.c.b16 %v4455, %v4454
    %v4468 = vpack.c.b16 %v4457, %v4456
    %v4469 = vpack.c.b16 %v4459, %v4458
    %v4470 = vpack.c.b16 %v4461, %v4460
    %v4471 = vpack.c.b16 %v4463, %v4462
    %4480 = vmatprep.subr.bf16.mxu0 0
    %4481 = vmatpush1.bf16.msra.mxu0 %v4471
    %4482 = vmatprep.subr.bf16.mxu0 0
    %4483 = vmatpush1.bf16.msra.mxu0 %v4470
    %4484 = vmatprep.subr.bf16.mxu0 0
    %4485 = vmatpush1.bf16.msra.mxu0 %v4469
    %4486 = vmatprep.subr.bf16.mxu0 0
    %4487 = vmatpush1.bf16.msra.mxu0 %v4468
    %4488 = vmatprep.subr.bf16.mxu0 0
    %4489 = vmatpush1.bf16.msra.mxu0 %v4467
    %4490 = vmatprep.subr.bf16.mxu0 0
    %4491 = vmatpush1.bf16.msra.mxu0 %v4466
    %4492 = vmatprep.subr.bf16.mxu0 0
    %4493 = vmatpush1.bf16.msra.mxu0 %v4465
    %4494 = vmatprep.subr.bf16.mxu0 0
    %4495 = vmatpush1.bf16.msra.mxu0 %v4464
    %4496 = vmatprep.subr.bf16.mxu0 0
    %4497 = vmatpush2.bf16.msra.mxu0 0
    %4498 = vmatprep.subr.bf16.mxu0 0
    %4499 = vmatpush2.bf16.msra.mxu0 0
    %4500 = vmatprep.subr.bf16.mxu0 0
    %4501 = vmatpush2.bf16.msra.mxu0 0
    %4502 = vmatprep.subr.bf16.mxu0 0
    %4503 = vmatpush2.bf16.msra.mxu0 0
    %4504 = vmatprep.subr.bf16.mxu0 0
    %4505 = vmatpush2.bf16.msra.mxu0 0
    %4506 = vmatprep.subr.bf16.mxu0 0
    %4507 = vmatpush2.bf16.msra.mxu0 0
    %4508 = vmatprep.subr.bf16.mxu0 0
    %4509 = vmatpush2.bf16.msra.mxu0 0
    %4510 = vmatprep.subr.bf16.mxu0 0
    %4511 = vmatpush2.bf16.msra.mxu0 0
    %4512 = vmatprep.mubr.bf16.mxu0 0
    %4513 = vmatmul.mubr.bf16.gmra.mxu0 %v4108
    %v4514 = vpop.f32.mrf.mxu0
    %v4515 = vadd.f32 0.0, %v4514
    %v4516 = vpop.f32.mrf.mxu0
    %v4517 = vpop.f32.mrf.mxu0
    %v4518 = vpop.f32.mrf.mxu0
    %4519 = vdwg.mxu0
    %s4520 = scalar_lea.vmem [#allocation22], 8
    %v4521 = vld [vmem:[%s4520] sm:$0xf]
    %v4522 = vpack.c.bf16 %v4515, %v4515
    %v4524 = vsel %vm3695, %v4521, 0
    %v4527 = vsel %vm3699, %v4522, 0
    %4529 = vmatprep.subr.bf16.mxu0 0
    %4530 = vmatpush1.bf16.msra.mxu0 0
    %4531 = vmatprep.subr.bf16.mxu0 0
    %4532 = vmatpush1.bf16.msra.mxu0 0
    %4533 = vmatprep.subr.bf16.mxu0 0
    %4534 = vmatpush1.bf16.msra.mxu0 0
    %4535 = vmatprep.subr.bf16.mxu0 0
    %4536 = vmatpush1.bf16.msra.mxu0 0
    %4537 = vmatprep.subr.bf16.mxu0 0
    %4538 = vmatpush1.bf16.msra.mxu0 0
    %4539 = vmatprep.subr.bf16.mxu0 0
    %4540 = vmatpush1.bf16.msra.mxu0 0
    %4541 = vmatprep.subr.bf16.mxu0 0
    %4542 = vmatpush1.bf16.msra.mxu0 0
    %4543 = vmatprep.subr.bf16.mxu0 0
    %4544 = vmatpush1.bf16.msra.mxu0 %v4527
    %4545 = vmatprep.subr.bf16.mxu0 0
    %4546 = vmatpush2.bf16.msra.mxu0 0
    %4547 = vmatprep.subr.bf16.mxu0 0
    %4548 = vmatpush2.bf16.msra.mxu0 0
    %4549 = vmatprep.subr.bf16.mxu0 0
    %4550 = vmatpush2.bf16.msra.mxu0 0
    %4551 = vmatprep.subr.bf16.mxu0 0
    %4552 = vmatpush2.bf16.msra.mxu0 0
    %4553 = vmatprep.subr.bf16.mxu0 0
    %4554 = vmatpush2.bf16.msra.mxu0 0
    %4555 = vmatprep.subr.bf16.mxu0 0
    %4556 = vmatpush2.bf16.msra.mxu0 0
    %4557 = vmatprep.subr.bf16.mxu0 0
    %4558 = vmatpush2.bf16.msra.mxu0 0
    %4559 = vmatprep.subr.bf16.mxu0 0
    %4560 = vmatpush2.bf16.msra.mxu0 0
    %4561 = vmatprep.mubr.bf16.mxu0 0
    %4562 = vmatmul.mubr.bf16.gmra.mxu0 %v4524
    %v4563 = vpop.f32.mrf.mxu0
    %v4564 = vadd.f32 0.0, %v4563
    %v4565 = vpop.f32.mrf.mxu0
    %v4566 = vpop.f32.mrf.mxu0
    %v4567 = vpop.f32.mrf.mxu0
    %4568 = vdwg.mxu0
    %v4569 = vadd.f32 %v4410, %v4564
    %s4570 = scalar_lea.vmem [#allocation20], 192
    %v4571 = vld [vmem:[%s4570] sm:$0xf]
    %v4572 = vld [vmem:[%s4570 + $0x4] sm:$0xf]
    %v4573 = vld [vmem:[%s4570 + $0x8] sm:$0xf]
    %v4574 = vld [vmem:[%s4570 + $0xc] sm:$0xf]
    %v4575 = vld [vmem:[%s4570 + $0x10] sm:$0xf]
    %v4576 = vld [vmem:[%s4570 + $0x14] sm:$0xf]
    %v4577 = vld [vmem:[%s4570 + $0x18] sm:$0xf]
    %v4578 = vld [vmem:[%s4570 + $0x1c] sm:$0xf]
    %v4579 = vld [vmem:[%s4570 + $0x20] sm:$0xf]
    %v4580 = vld [vmem:[%s4570 + $0x24] sm:$0xf]
    %v4581 = vld [vmem:[%s4570 + $0x28] sm:$0xf]
    %v4582 = vld [vmem:[%s4570 + $0x2c] sm:$0xf]
    %v4583 = vld [vmem:[%s4570 + $0x30] sm:$0xf]
    %v4584 = vld [vmem:[%s4570 + $0x34] sm:$0xf]
    %v4585 = vld [vmem:[%s4570 + $0x38] sm:$0xf]
    %v4586 = vld [vmem:[%s4570 + $0x3c] sm:$0xf]
    %v4603 = vunpack.c.l.b16 %v4571
    %v4604 = vunpack.c.l.b16 %v4572
    %v4605 = vunpack.c.l.b16 %v4573
    %v4606 = vunpack.c.l.b16 %v4574
    %v4607 = vunpack.c.l.b16 %v4575
    %v4608 = vunpack.c.l.b16 %v4576
    %v4609 = vunpack.c.l.b16 %v4577
    %v4610 = vunpack.c.l.b16 %v4578
    %v4611 = vunpack.c.l.b16 %v4579
    %v4612 = vunpack.c.l.b16 %v4580
    %v4613 = vunpack.c.l.b16 %v4581
    %v4614 = vunpack.c.l.b16 %v4582
    %v4615 = vunpack.c.l.b16 %v4583
    %v4616 = vunpack.c.l.b16 %v4584
    %v4617 = vunpack.c.l.b16 %v4585
    %v4618 = vunpack.c.l.b16 %v4586
    %v4619 = vpack.c.b16 %v4604, %v4603
    %v4620 = vpack.c.b16 %v4606, %v4605
    %v4621 = vpack.c.b16 %v4608, %v4607
    %v4622 = vpack.c.b16 %v4610, %v4609
    %v4623 = vpack.c.b16 %v4612, %v4611
    %v4624 = vpack.c.b16 %v4614, %v4613
    %v4625 = vpack.c.b16 %v4616, %v4615
    %v4626 = vpack.c.b16 %v4618, %v4617
    %4635 = vmatprep.subr.bf16.mxu0 0
    %4636 = vmatpush1.bf16.msra.mxu0 %v4626
    %4637 = vmatprep.subr.bf16.mxu0 0
    %4638 = vmatpush1.bf16.msra.mxu0 %v4625
    %4639 = vmatprep.subr.bf16.mxu0 0
    %4640 = vmatpush1.bf16.msra.mxu0 %v4624
    %4641 = vmatprep.subr.bf16.mxu0 0
    %4642 = vmatpush1.bf16.msra.mxu0 %v4623
    %4643 = vmatprep.subr.bf16.mxu0 0
    %4644 = vmatpush1.bf16.msra.mxu0 %v4622
    %4645 = vmatprep.subr.bf16.mxu0 0
    %4646 = vmatpush1.bf16.msra.mxu0 %v4621
    %4647 = vmatprep.subr.bf16.mxu0 0
    %4648 = vmatpush1.bf16.msra.mxu0 %v4620
    %4649 = vmatprep.subr.bf16.mxu0 0
    %4650 = vmatpush1.bf16.msra.mxu0 %v4619
    %4651 = vmatprep.subr.bf16.mxu0 0
    %4652 = vmatpush2.bf16.msra.mxu0 0
    %4653 = vmatprep.subr.bf16.mxu0 0
    %4654 = vmatpush2.bf16.msra.mxu0 0
    %4655 = vmatprep.subr.bf16.mxu0 0
    %4656 = vmatpush2.bf16.msra.mxu0 0
    %4657 = vmatprep.subr.bf16.mxu0 0
    %4658 = vmatpush2.bf16.msra.mxu0 0
    %4659 = vmatprep.subr.bf16.mxu0 0
    %4660 = vmatpush2.bf16.msra.mxu0 0
    %4661 = vmatprep.subr.bf16.mxu0 0
    %4662 = vmatpush2.bf16.msra.mxu0 0
    %4663 = vmatprep.subr.bf16.mxu0 0
    %4664 = vmatpush2.bf16.msra.mxu0 0
    %4665 = vmatprep.subr.bf16.mxu0 0
    %4666 = vmatpush2.bf16.msra.mxu0 0
    %4667 = vmatprep.mubr.bf16.mxu0 0
    %4668 = vmatmul.mubr.bf16.gmra.mxu0 %v4108
    %v4669 = vpop.f32.mrf.mxu0
    %v4670 = vadd.f32 0.0, %v4669
    %v4671 = vpop.f32.mrf.mxu0
    %v4672 = vpop.f32.mrf.mxu0
    %v4673 = vpop.f32.mrf.mxu0
    %4674 = vdwg.mxu0
    %s4675 = scalar_lea.vmem [#allocation22], 12
    %v4676 = vld [vmem:[%s4675] sm:$0xf]
    %v4677 = vpack.c.bf16 %v4670, %v4670
    %v4679 = vsel %vm3695, %v4676, 0
    %v4682 = vsel %vm3699, %v4677, 0
    %4684 = vmatprep.subr.bf16.mxu0 0
    %4685 = vmatpush1.bf16.msra.mxu0 0
    %4686 = vmatprep.subr.bf16.mxu0 0
    %4687 = vmatpush1.bf16.msra.mxu0 0
    %4688 = vmatprep.subr.bf16.mxu0 0
    %4689 = vmatpush1.bf16.msra.mxu0 0
    %4690 = vmatprep.subr.bf16.mxu0 0
    %4691 = vmatpush1.bf16.msra.mxu0 0
    %4692 = vmatprep.subr.bf16.mxu0 0
    %4693 = vmatpush1.bf16.msra.mxu0 0
    %4694 = vmatprep.subr.bf16.mxu0 0
    %4695 = vmatpush1.bf16.msra.mxu0 0
    %4696 = vmatprep.subr.bf16.mxu0 0
    %4697 = vmatpush1.bf16.msra.mxu0 0
    %4698 = vmatprep.subr.bf16.mxu0 0
    %4699 = vmatpush1.bf16.msra.mxu0 %v4682
    %4700 = vmatprep.subr.bf16.mxu0 0
    %4701 = vmatpush2.bf16.msra.mxu0 0
    %4702 = vmatprep.subr.bf16.mxu0 0
    %4703 = vmatpush2.bf16.msra.mxu0 0
    %4704 = vmatprep.subr.bf16.mxu0 0
    %4705 = vmatpush2.bf16.msra.mxu0 0
    %4706 = vmatprep.subr.bf16.mxu0 0
    %4707 = vmatpush2.bf16.msra.mxu0 0
    %4708 = vmatprep.subr.bf16.mxu0 0
    %4709 = vmatpush2.bf16.msra.mxu0 0
    %4710 = vmatprep.subr.bf16.mxu0 0
    %4711 = vmatpush2.bf16.msra.mxu0 0
    %4712 = vmatprep.subr.bf16.mxu0 0
    %4713 = vmatpush2.bf16.msra.mxu0 0
    %4714 = vmatprep.subr.bf16.mxu0 0
    %4715 = vmatpush2.bf16.msra.mxu0 0
    %4716 = vmatprep.mubr.bf16.mxu0 0
    %4717 = vmatmul.mubr.bf16.gmra.mxu0 %v4679
    %v4718 = vpop.f32.mrf.mxu0
    %v4719 = vadd.f32 0.0, %v4718
    %v4720 = vpop.f32.mrf.mxu0
    %v4721 = vpop.f32.mrf.mxu0
    %v4722 = vpop.f32.mrf.mxu0
    %4723 = vdwg.mxu0
    %v4724 = vadd.f32 %v4569, %v4719
    %v4726 = vlaneseq
    %v4727 = vshrl.u32 %v4726, 7
    %v4728 = vsub.s32 0, %v4727
    %v4729 = vrot.slane %v4107, %v4728
    %v4731 = vadd.f32 %v4724, %v4729
    %v4732 = vld [vmem:[%s1] sm:$0x3]
    %v4733 = vld [vmem:[#allocation23] sm:$0xff]
    %v4734 = vld [vmem:[#allocation23 + $0x8] sm:$0xff]
    %v4735 = vld [vmem:[#allocation23 + $0x10] sm:$0xff]
    %v4736 = vld [vmem:[#allocation23 + $0x18] sm:$0xff]
    %v4737 = vld [vmem:[#allocation23 + $0x20] sm:$0xff]
    %v4738 = vld [vmem:[#allocation23 + $0x28] sm:$0xff]
    %v4739 = vld [vmem:[#allocation23 + $0x30] sm:$0xff]
    %v4740 = vld [vmem:[#allocation23 + $0x38] sm:$0xff]
    %v4741 = vld [vmem:[#allocation23 + $0x40] sm:$0xff]
    %v4742 = vld [vmem:[#allocation23 + $0x48] sm:$0xff]
    %v4743 = vld [vmem:[#allocation23 + $0x50] sm:$0xff]
    %v4744 = vld [vmem:[#allocation23 + $0x58] sm:$0xff]
    %v4745 = vld [vmem:[#allocation23 + $0x60] sm:$0xff]
    %v4746 = vld [vmem:[#allocation23 + $0x68] sm:$0xff]
    %v4747 = vld [vmem:[#allocation23 + $0x70] sm:$0xff]
    %v4748 = vld [vmem:[#allocation23 + $0x78] sm:$0xff]
    %v4749 = vld [vmem:[#allocation23 + $0x80] sm:$0xff]
    %v4750 = vld [vmem:[#allocation23 + $0x88] sm:$0xff]
    %v4751 = vld [vmem:[#allocation23 + $0x90] sm:$0xff]
    %v4752 = vld [vmem:[#allocation23 + $0x98] sm:$0xff]
    %v4753 = vld [vmem:[#allocation23 + $0xa0] sm:$0xff]
    %v4754 = vld [vmem:[#allocation23 + $0xa8] sm:$0xff]
    %v4755 = vld [vmem:[#allocation23 + $0xb0] sm:$0xff]
    %v4756 = vld [vmem:[#allocation23 + $0xb8] sm:$0xff]
    %v4757 = vld [vmem:[#allocation23 + $0xc0] sm:$0xff]
    %v4758 = vld [vmem:[#allocation23 + $0xc8] sm:$0xff]
    %v4759 = vld [vmem:[#allocation23 + $0xd0] sm:$0xff]
    %v4760 = vld [vmem:[#allocation23 + $0xd8] sm:$0xff]
    %v4761 = vld [vmem:[#allocation23 + $0xe0] sm:$0xff]
    %v4762 = vld [vmem:[#allocation23 + $0xe8] sm:$0xff]
    %v4763 = vld [vmem:[#allocation23 + $0xf0] sm:$0xff]
    %v4764 = vld [vmem:[#allocation23 + $0xf8] sm:$0xff]
    %v4765 = vld [vmem:[#allocation23 + $0x100] sm:$0xff]
    %v4766 = vld [vmem:[#allocation23 + $0x108] sm:$0xff]
    %v4767 = vld [vmem:[#allocation23 + $0x110] sm:$0xff]
    %v4768 = vld [vmem:[#allocation23 + $0x118] sm:$0xff]
    %v4769 = vld [vmem:[#allocation23 + $0x120] sm:$0xff]
    %v4770 = vld [vmem:[#allocation23 + $0x128] sm:$0xff]
    %v4771 = vld [vmem:[#allocation23 + $0x130] sm:$0xff]
    %v4772 = vld [vmem:[#allocation23 + $0x138] sm:$0xff]
    %v4773 = vld [vmem:[#allocation23 + $0x140] sm:$0xff]
    %v4774 = vld [vmem:[#allocation23 + $0x148] sm:$0xff]
    %v4775 = vld [vmem:[#allocation23 + $0x150] sm:$0xff]
    %v4776 = vld [vmem:[#allocation23 + $0x158] sm:$0xff]
    %v4777 = vld [vmem:[#allocation23 + $0x160] sm:$0xff]
    %v4778 = vld [vmem:[#allocation23 + $0x168] sm:$0xff]
    %v4779 = vld [vmem:[#allocation23 + $0x170] sm:$0xff]
    %v4780 = vld [vmem:[#allocation23 + $0x178] sm:$0xff]
    %v4781 = vld [vmem:[#allocation26] sm:$0x7]
    %v4783 = vlaneseq
    %v4784 = vshrl.u32 %v4783, 7
    %v4785 = vsub.s32 0, %v4784
    %v4786 = vrot.slane %v4781, %v4785
    %v4787 = vlaneseq
    %v4788 = vshrl.u32 %v4787, 7
    %v4789 = vsub.s32 1, %v4788
    %v4790 = vrot.slane %v4781, %v4789
    %v4791 = vlaneseq
    %v4792 = vshrl.u32 %v4791, 7
    %v4793 = vsub.s32 2, %v4792
    %v4794 = vrot.slane %v4781, %v4793
    %4798 = vmatprep.subr.mxu0 %v4779
    %4799 = vmatpush1.msra.mxu0 %v4778
    %4800 = vmatprep.subr.mxu0 %v4776
    %4801 = vmatpush1.msra.mxu0 %v4775
    %4802 = vmatprep.subr.mxu0 %v4773
    %4803 = vmatpush1.msra.mxu0 %v4772
    %4804 = vmatprep.subr.mxu0 %v4770
    %4805 = vmatpush1.msra.mxu0 %v4769
    %4806 = vmatprep.subr.mxu0 %v4767
    %4807 = vmatpush1.msra.mxu0 %v4766
    %4808 = vmatprep.subr.mxu0 %v4764
    %4809 = vmatpush1.msra.mxu0 %v4763
    %4810 = vmatprep.subr.mxu0 %v4761
    %4811 = vmatpush1.msra.mxu0 %v4760
    %4812 = vmatprep.subr.mxu0 %v4758
    %4813 = vmatpush1.msra.mxu0 %v4757
    %4814 = vmatprep.subr.mxu0 %v4755
    %4815 = vmatpush1.msra.mxu0 %v4754
    %4816 = vmatprep.subr.mxu0 %v4752
    %4817 = vmatpush1.msra.mxu0 %v4751
    %4818 = vmatprep.subr.mxu0 %v4749
    %4819 = vmatpush1.msra.mxu0 %v4748
    %4820 = vmatprep.subr.mxu0 %v4746
    %4821 = vmatpush1.msra.mxu0 %v4745
    %4822 = vmatprep.subr.mxu0 %v4743
    %4823 = vmatpush1.msra.mxu0 %v4742
    %4824 = vmatprep.subr.mxu0 %v4740
    %4825 = vmatpush1.msra.mxu0 %v4739
    %4826 = vmatprep.subr.mxu0 %v4737
    %4827 = vmatpush1.msra.mxu0 %v4736
    %4828 = vmatprep.subr.mxu0 %v4734
    %4829 = vmatpush1.msra.mxu0 %v4733
    %4830 = vmatprep.subr.mxu0 0.0
    %4831 = vmatpush2.msra.mxu0 0.0
    %4832 = vmatprep.subr.mxu0 0.0
    %4833 = vmatpush2.msra.mxu0 0.0
    %4834 = vmatprep.subr.mxu0 0.0
    %4835 = vmatpush2.msra.mxu0 0.0
    %4836 = vmatprep.subr.mxu0 0.0
    %4837 = vmatpush2.msra.mxu0 0.0
    %4838 = vmatprep.subr.mxu0 0.0
    %4839 = vmatpush2.msra.mxu0 0.0
    %4840 = vmatprep.subr.mxu0 0.0
    %4841 = vmatpush2.msra.mxu0 0.0
    %4842 = vmatprep.subr.mxu0 0.0
    %4843 = vmatpush2.msra.mxu0 0.0
    %4844 = vmatprep.subr.mxu0 0.0
    %4845 = vmatpush2.msra.mxu0 0.0
    %4846 = vmatprep.subr.mxu0 0.0
    %4847 = vmatpush2.msra.mxu0 0.0
    %4848 = vmatprep.subr.mxu0 0.0
    %4849 = vmatpush2.msra.mxu0 0.0
    %4850 = vmatprep.subr.mxu0 0.0
    %4851 = vmatpush2.msra.mxu0 0.0
    %4852 = vmatprep.subr.mxu0 0.0
    %4853 = vmatpush2.msra.mxu0 0.0
    %4854 = vmatprep.subr.mxu0 0.0
    %4855 = vmatpush2.msra.mxu0 0.0
    %4856 = vmatprep.subr.mxu0 0.0
    %4857 = vmatpush2.msra.mxu0 0.0
    %4858 = vmatprep.subr.mxu0 0.0
    %4859 = vmatpush2.msra.mxu0 0.0
    %4860 = vmatprep.subr.mxu0 0.0
    %4861 = vmatpush2.msra.mxu0 0.0
    %4862 = vmatprep.mubr.f32.mxu0 0.0
    %4863 = vmatmul.mubr.f32.gmra.mxu0 %v4731
    %v4864 = vpop.f32.mrf.mxu0
    %v4865 = vadd.f32 %v4786, %v4864
    %v4866 = vpop.f32.mrf.mxu0
    %v4867 = vadd.f32 %v4790, %v4866
    %4868 = vdwg.mxu0
    %4869 = vmatprep.subr.mxu0 0.0
    %4870 = vmatpush1.msra.mxu0 %v4780
    %4871 = vmatprep.subr.mxu0 0.0
    %4872 = vmatpush1.msra.mxu0 %v4777
    %4873 = vmatprep.subr.mxu0 0.0
    %4874 = vmatpush1.msra.mxu0 %v4774
    %4875 = vmatprep.subr.mxu0 0.0
    %4876 = vmatpush1.msra.mxu0 %v4771
    %4877 = vmatprep.subr.mxu0 0.0
    %4878 = vmatpush1.msra.mxu0 %v4768
    %4879 = vmatprep.subr.mxu0 0.0
    %4880 = vmatpush1.msra.mxu0 %v4765
    %4881 = vmatprep.subr.mxu0 0.0
    %4882 = vmatpush1.msra.mxu0 %v4762
    %4883 = vmatprep.subr.mxu0 0.0
    %4884 = vmatpush1.msra.mxu0 %v4759
    %4885 = vmatprep.subr.mxu0 0.0
    %4886 = vmatpush1.msra.mxu0 %v4756
    %4887 = vmatprep.subr.mxu0 0.0
    %4888 = vmatpush1.msra.mxu0 %v4753
    %4889 = vmatprep.subr.mxu0 0.0
    %4890 = vmatpush1.msra.mxu0 %v4750
    %4891 = vmatprep.subr.mxu0 0.0
    %4892 = vmatpush1.msra.mxu0 %v4747
    %4893 = vmatprep.subr.mxu0 0.0
    %4894 = vmatpush1.msra.mxu0 %v4744
    %4895 = vmatprep.subr.mxu0 0.0
    %4896 = vmatpush1.msra.mxu0 %v4741
    %4897 = vmatprep.subr.mxu0 0.0
    %4898 = vmatpush1.msra.mxu0 %v4738
    %4899 = vmatprep.subr.mxu0 0.0
    %4900 = vmatpush1.msra.mxu0 %v4735
    %4901 = vmatprep.subr.mxu0 0.0
    %4902 = vmatpush2.msra.mxu0 0.0
    %4903 = vmatprep.subr.mxu0 0.0
    %4904 = vmatpush2.msra.mxu0 0.0
    %4905 = vmatprep.subr.mxu0 0.0
    %4906 = vmatpush2.msra.mxu0 0.0
    %4907 = vmatprep.subr.mxu0 0.0
    %4908 = vmatpush2.msra.mxu0 0.0
    %4909 = vmatprep.subr.mxu0 0.0
    %4910 = vmatpush2.msra.mxu0 0.0
    %4911 = vmatprep.subr.mxu0 0.0
    %4912 = vmatpush2.msra.mxu0 0.0
    %4913 = vmatprep.subr.mxu0 0.0
    %4914 = vmatpush2.msra.mxu0 0.0
    %4915 = vmatprep.subr.mxu0 0.0
    %4916 = vmatpush2.msra.mxu0 0.0
    %4917 = vmatprep.subr.mxu0 0.0
    %4918 = vmatpush2.msra.mxu0 0.0
    %4919 = vmatprep.subr.mxu0 0.0
    %4920 = vmatpush2.msra.mxu0 0.0
    %4921 = vmatprep.subr.mxu0 0.0
    %4922 = vmatpush2.msra.mxu0 0.0
    %4923 = vmatprep.subr.mxu0 0.0
    %4924 = vmatpush2.msra.mxu0 0.0
    %4925 = vmatprep.subr.mxu0 0.0
    %4926 = vmatpush2.msra.mxu0 0.0
    %4927 = vmatprep.subr.mxu0 0.0
    %4928 = vmatpush2.msra.mxu0 0.0
    %4929 = vmatprep.subr.mxu0 0.0
    %4930 = vmatpush2.msra.mxu0 0.0
    %4931 = vmatprep.subr.mxu0 0.0
    %4932 = vmatpush2.msra.mxu0 0.0
    %4933 = vmatprep.mubr.f32.mxu0 0.0
    %4934 = vmatmul.mubr.f32.gmra.mxu0 %v4731
    %v4935 = vpop.f32.mrf.mxu0
    %v4936 = vadd.f32 %v4794, %v4935
    %v4937 = vpop.f32.mrf.mxu0
    %4938 = vdwg.mxu0
    %v4939 = vld [vmem:[#allocation25] sm:$0xff]
    %v4940 = vld [vmem:[#allocation25 + $0x8] sm:$0xff]
    %v4941 = vld [vmem:[#allocation25 + $0x10] sm:$0xff]
    %v4942 = vld [vmem:[#allocation25 + $0x18] sm:$0xff]
    %v4943 = vld [vmem:[#allocation25 + $0x20] sm:$0xff]
    %v4944 = vld [vmem:[#allocation25 + $0x28] sm:$0xff]
    %v4945 = vld [vmem:[#allocation25 + $0x30] sm:$0xff]
    %v4946 = vld [vmem:[#allocation25 + $0x38] sm:$0xff]
    %v4947 = vld [vmem:[#allocation25 + $0x40] sm:$0xff]
    %v4948 = vld [vmem:[#allocation25 + $0x48] sm:$0xff]
    %v4949 = vld [vmem:[#allocation25 + $0x50] sm:$0xff]
    %v4950 = vld [vmem:[#allocation25 + $0x58] sm:$0xff]
    %v4951 = vld [vmem:[#allocation28] sm:$0x7]
    %v4953 = vlaneseq
    %v4954 = vshrl.u32 %v4953, 7
    %v4955 = vsub.s32 0, %v4954
    %v4956 = vrot.slane %v4951, %v4955
    %v4957 = vlaneseq
    %v4958 = vshrl.u32 %v4957, 7
    %v4959 = vsub.s32 1, %v4958
    %v4960 = vrot.slane %v4951, %v4959
    %v4961 = vlaneseq
    %v4962 = vshrl.u32 %v4961, 7
    %v4963 = vsub.s32 2, %v4962
    %v4964 = vrot.slane %v4951, %v4963
    %v4969 = vsel %vm2417, %v4732, 0
    %4971 = vmatprep.subr.mxu0 0.0
    %4972 = vmatpush1.msra.mxu0 0.0
    %4973 = vmatprep.subr.mxu0 0.0
    %4974 = vmatpush1.msra.mxu0 0.0
    %4975 = vmatprep.subr.mxu0 0.0
    %4976 = vmatpush1.msra.mxu0 0.0
    %4977 = vmatprep.subr.mxu0 0.0
    %4978 = vmatpush1.msra.mxu0 0.0
    %4979 = vmatprep.subr.mxu0 0.0
    %4980 = vmatpush1.msra.mxu0 0.0
    %4981 = vmatprep.subr.mxu0 0.0
    %4982 = vmatpush1.msra.mxu0 0.0
    %4983 = vmatprep.subr.mxu0 0.0
    %4984 = vmatpush1.msra.mxu0 0.0
    %4985 = vmatprep.subr.mxu0 0.0
    %4986 = vmatpush1.msra.mxu0 0.0
    %4987 = vmatprep.subr.mxu0 0.0
    %4988 = vmatpush1.msra.mxu0 0.0
    %4989 = vmatprep.subr.mxu0 0.0
    %4990 = vmatpush1.msra.mxu0 0.0
    %4991 = vmatprep.subr.mxu0 0.0
    %4992 = vmatpush1.msra.mxu0 0.0
    %4993 = vmatprep.subr.mxu0 0.0
    %4994 = vmatpush1.msra.mxu0 0.0
    %4995 = vmatprep.subr.mxu0 %v4949
    %4996 = vmatpush1.msra.mxu0 %v4948
    %4997 = vmatprep.subr.mxu0 %v4946
    %4998 = vmatpush1.msra.mxu0 %v4945
    %4999 = vmatprep.subr.mxu0 %v4943
    %5000 = vmatpush1.msra.mxu0 %v4942
    %5001 = vmatprep.subr.mxu0 %v4940
    %5002 = vmatpush1.msra.mxu0 %v4939
    %5003 = vmatprep.subr.mxu0 0.0
    %5004 = vmatpush2.msra.mxu0 0.0
    %5005 = vmatprep.subr.mxu0 0.0
    %5006 = vmatpush2.msra.mxu0 0.0
    %5007 = vmatprep.subr.mxu0 0.0
    %5008 = vmatpush2.msra.mxu0 0.0
    %5009 = vmatprep.subr.mxu0 0.0
    %5010 = vmatpush2.msra.mxu0 0.0
    %5011 = vmatprep.subr.mxu0 0.0
    %5012 = vmatpush2.msra.mxu0 0.0
    %5013 = vmatprep.subr.mxu0 0.0
    %5014 = vmatpush2.msra.mxu0 0.0
    %5015 = vmatprep.subr.mxu0 0.0
    %5016 = vmatpush2.msra.mxu0 0.0
    %5017 = vmatprep.subr.mxu0 0.0
    %5018 = vmatpush2.msra.mxu0 0.0
    %5019 = vmatprep.subr.mxu0 0.0
    %5020 = vmatpush2.msra.mxu0 0.0
    %5021 = vmatprep.subr.mxu0 0.0
    %5022 = vmatpush2.msra.mxu0 0.0
    %5023 = vmatprep.subr.mxu0 0.0
    %5024 = vmatpush2.msra.mxu0 0.0
    %5025 = vmatprep.subr.mxu0 0.0
    %5026 = vmatpush2.msra.mxu0 0.0
    %5027 = vmatprep.subr.mxu0 0.0
    %5028 = vmatpush2.msra.mxu0 0.0
    %5029 = vmatprep.subr.mxu0 0.0
    %5030 = vmatpush2.msra.mxu0 0.0
    %5031 = vmatprep.subr.mxu0 0.0
    %5032 = vmatpush2.msra.mxu0 0.0
    %5033 = vmatprep.subr.mxu0 0.0
    %5034 = vmatpush2.msra.mxu0 0.0
    %5035 = vmatprep.mubr.f32.mxu0 0.0
    %5036 = vmatmul.mubr.f32.gmra.mxu0 %v4969
    %v5037 = vpop.f32.mrf.mxu0
    %v5038 = vadd.f32 %v4956, %v5037
    %v5039 = vpop.f32.mrf.mxu0
    %v5040 = vadd.f32 %v4960, %v5039
    %5041 = vdwg.mxu0
    %5042 = vmatprep.subr.mxu0 0.0
    %5043 = vmatpush1.msra.mxu0 0.0
    %5044 = vmatprep.subr.mxu0 0.0
    %5045 = vmatpush1.msra.mxu0 0.0
    %5046 = vmatprep.subr.mxu0 0.0
    %5047 = vmatpush1.msra.mxu0 0.0
    %5048 = vmatprep.subr.mxu0 0.0
    %5049 = vmatpush1.msra.mxu0 0.0
    %5050 = vmatprep.subr.mxu0 0.0
    %5051 = vmatpush1.msra.mxu0 0.0
    %5052 = vmatprep.subr.mxu0 0.0
    %5053 = vmatpush1.msra.mxu0 0.0
    %5054 = vmatprep.subr.mxu0 0.0
    %5055 = vmatpush1.msra.mxu0 0.0
    %5056 = vmatprep.subr.mxu0 0.0
    %5057 = vmatpush1.msra.mxu0 0.0
    %5058 = vmatprep.subr.mxu0 0.0
    %5059 = vmatpush1.msra.mxu0 0.0
    %5060 = vmatprep.subr.mxu0 0.0
    %5061 = vmatpush1.msra.mxu0 0.0
    %5062 = vmatprep.subr.mxu0 0.0
    %5063 = vmatpush1.msra.mxu0 0.0
    %5064 = vmatprep.subr.mxu0 0.0
    %5065 = vmatpush1.msra.mxu0 0.0
    %5066 = vmatprep.subr.mxu0 0.0
    %5067 = vmatpush1.msra.mxu0 %v4950
    %5068 = vmatprep.subr.mxu0 0.0
    %5069 = vmatpush1.msra.mxu0 %v4947
    %5070 = vmatprep.subr.mxu0 0.0
    %5071 = vmatpush1.msra.mxu0 %v4944
    %5072 = vmatprep.subr.mxu0 0.0
    %5073 = vmatpush1.msra.mxu0 %v4941
    %5074 = vmatprep.subr.mxu0 0.0
    %5075 = vmatpush2.msra.mxu0 0.0
    %5076 = vmatprep.subr.mxu0 0.0
    %5077 = vmatpush2.msra.mxu0 0.0
    %5078 = vmatprep.subr.mxu0 0.0
    %5079 = vmatpush2.msra.mxu0 0.0
    %5080 = vmatprep.subr.mxu0 0.0
    %5081 = vmatpush2.msra.mxu0 0.0
    %5082 = vmatprep.subr.mxu0 0.0
    %5083 = vmatpush2.msra.mxu0 0.0
    %5084 = vmatprep.subr.mxu0 0.0
    %5085 = vmatpush2.msra.mxu0 0.0
    %5086 = vmatprep.subr.mxu0 0.0
    %5087 = vmatpush2.msra.mxu0 0.0
    %5088 = vmatprep.subr.mxu0 0.0
    %5089 = vmatpush2.msra.mxu0 0.0
    %5090 = vmatprep.subr.mxu0 0.0
    %5091 = vmatpush2.msra.mxu0 0.0
    %5092 = vmatprep.subr.mxu0 0.0
    %5093 = vmatpush2.msra.mxu0 0.0
    %5094 = vmatprep.subr.mxu0 0.0
    %5095 = vmatpush2.msra.mxu0 0.0
    %5096 = vmatprep.subr.mxu0 0.0
    %5097 = vmatpush2.msra.mxu0 0.0
    %5098 = vmatprep.subr.mxu0 0.0
    %5099 = vmatpush2.msra.mxu0 0.0
    %5100 = vmatprep.subr.mxu0 0.0
    %5101 = vmatpush2.msra.mxu0 0.0
    %5102 = vmatprep.subr.mxu0 0.0
    %5103 = vmatpush2.msra.mxu0 0.0
    %5104 = vmatprep.subr.mxu0 0.0
    %5105 = vmatpush2.msra.mxu0 0.0
    %5106 = vmatprep.mubr.f32.mxu0 0.0
    %5107 = vmatmul.mubr.f32.gmra.mxu0 %v4969
    %v5108 = vpop.f32.mrf.mxu0
    %v5109 = vadd.f32 %v4964, %v5108
    %v5110 = vpop.f32.mrf.mxu0
    %5111 = vdwg.mxu0
    %v5112 = vadd.f32 %v4865, %v5038
    %v5113 = vxor.u32 %v5112, 2147483648
    %v5114 = vmul.f32 %v5113, 1.442695
    %v5115 = vpow.pop %v5114
    %v5116 = vadd.f32 %v5115, 1.0
    %v5117 = vrcp.pop %v5116
    %v5118 = vmul.f32 1.0, %v5117
    %v5119 = vadd.f32 %v4867, %v5040
    %v5120 = vxor.u32 %v5119, 2147483648
    %v5121 = vmul.f32 %v5120, 1.442695
    %v5122 = vpow.pop %v5121
    %v5123 = vadd.f32 %v5122, 1.0
    %v5124 = vrcp.pop %v5123
    %v5125 = vmul.f32 1.0, %v5124
    %v5126 = vmul.f32 %v5118, %v5109
    %v5127 = vadd.f32 %v4936, %v5126
    %v5128 = vtanh.pop %v5127
    %v5129 = vsub.f32 1.0, %v5125
    %v5130 = vmul.f32 %v5129, %v5128
    %v5131 = vmul.f32 %v5125, %v4732
    %v5132 = vadd.f32 %v5130, %v5131
    %vm5133 = vcmask 254976
    %5134 = vst.msk [vmem:[#allocation31] sm:$0x3] %vm5133, %v5132
    %v5135 = vpack.c.bf16 %v5132, %v5132
    %v5136 = vld [vmem:[#allocation29] sm:$0xff]
    %v5137 = vld [vmem:[#allocation29 + $0x8] sm:$0xff]
    %v5138 = vld [vmem:[#allocation29 + $0x10] sm:$0xff]
    %v5139 = vld [vmem:[#allocation29 + $0x18] sm:$0xff]
    %v5140 = vld [vmem:[#allocation29 + $0x20] sm:$0xff]
    %v5141 = vld [vmem:[#allocation29 + $0x28] sm:$0xff]
    %v5142 = vld [vmem:[#allocation29 + $0x30] sm:$0xff]
    %v5143 = vld [vmem:[#allocation29 + $0x38] sm:$0xff]
    %v5144 = vld [vmem:[#allocation29 + $0x40] sm:$0xff]
    %v5145 = vld [vmem:[#allocation29 + $0x48] sm:$0xff]
    %v5146 = vld [vmem:[#allocation29 + $0x50] sm:$0xff]
    %v5147 = vld [vmem:[#allocation29 + $0x58] sm:$0xff]
    %v5148 = vld [vmem:[#allocation29 + $0x60] sm:$0xff]
    %v5149 = vld [vmem:[#allocation29 + $0x68] sm:$0xff]
    %v5150 = vld [vmem:[#allocation29 + $0x70] sm:$0xff]
    %v5151 = vld [vmem:[#allocation29 + $0x78] sm:$0xff]
    %v5152 = vld [vmem:[#allocation29 + $0x80] sm:$0xff]
    %v5153 = vld [vmem:[#allocation29 + $0x88] sm:$0xff]
    %v5154 = vld [vmem:[#allocation29 + $0x90] sm:$0xff]
    %v5155 = vld [vmem:[#allocation29 + $0x98] sm:$0xff]
    %v5156 = vld [vmem:[#allocation29 + $0xa0] sm:$0xff]
    %v5157 = vld [vmem:[#allocation29 + $0xa8] sm:$0xff]
    %v5158 = vld [vmem:[#allocation29 + $0xb0] sm:$0xff]
    %v5159 = vld [vmem:[#allocation29 + $0xb8] sm:$0xff]
    %v5160 = vld [vmem:[#allocation29 + $0xc0] sm:$0xff]
    %v5161 = vld [vmem:[#allocation29 + $0xc8] sm:$0xff]
    %v5162 = vld [vmem:[#allocation29 + $0xd0] sm:$0xff]
    %v5163 = vld [vmem:[#allocation29 + $0xd8] sm:$0xff]
    %v5164 = vld [vmem:[#allocation29 + $0xe0] sm:$0xff]
    %v5165 = vld [vmem:[#allocation29 + $0xe8] sm:$0xff]
    %v5166 = vld [vmem:[#allocation29 + $0xf0] sm:$0xff]
    %v5167 = vld [vmem:[#allocation29 + $0xf8] sm:$0xff]
    %v5168 = vld [vmem:[#allocation29 + $0x100] sm:$0xff]
    %v5169 = vld [vmem:[#allocation29 + $0x108] sm:$0xff]
    %v5170 = vld [vmem:[#allocation29 + $0x110] sm:$0xff]
    %v5171 = vld [vmem:[#allocation29 + $0x118] sm:$0xff]
    %v5172 = vld [vmem:[#allocation29 + $0x120] sm:$0xff]
    %v5173 = vld [vmem:[#allocation29 + $0x128] sm:$0xff]
    %v5174 = vld [vmem:[#allocation29 + $0x130] sm:$0xff]
    %v5175 = vld [vmem:[#allocation29 + $0x138] sm:$0xff]
    %v5176 = vld [vmem:[#allocation29 + $0x140] sm:$0xff]
    %v5177 = vld [vmem:[#allocation29 + $0x148] sm:$0xff]
    %v5178 = vld [vmem:[#allocation29 + $0x150] sm:$0xff]
    %v5179 = vld [vmem:[#allocation29 + $0x158] sm:$0xff]
    %v5180 = vld [vmem:[#allocation29 + $0x160] sm:$0xff]
    %v5181 = vld [vmem:[#allocation29 + $0x168] sm:$0xff]
    %v5182 = vld [vmem:[#allocation29 + $0x170] sm:$0xff]
    %v5183 = vld [vmem:[#allocation29 + $0x178] sm:$0xff]
    %v5184 = vld [vmem:[#allocation29 + $0x180] sm:$0xff]
    %v5185 = vld [vmem:[#allocation29 + $0x188] sm:$0xff]
    %v5186 = vld [vmem:[#allocation29 + $0x190] sm:$0xff]
    %v5187 = vld [vmem:[#allocation29 + $0x198] sm:$0xff]
    %v5188 = vld [vmem:[#allocation29 + $0x1a0] sm:$0xff]
    %v5189 = vld [vmem:[#allocation29 + $0x1a8] sm:$0xff]
    %v5190 = vld [vmem:[#allocation29 + $0x1b0] sm:$0xff]
    %v5191 = vld [vmem:[#allocation29 + $0x1b8] sm:$0xff]
    %v5192 = vld [vmem:[#allocation29 + $0x1c0] sm:$0xff]
    %v5193 = vld [vmem:[#allocation29 + $0x1c8] sm:$0xff]
    %v5194 = vld [vmem:[#allocation29 + $0x1d0] sm:$0xff]
    %v5195 = vld [vmem:[#allocation29 + $0x1d8] sm:$0xff]
    %v5196 = vld [vmem:[#allocation29 + $0x1e0] sm:$0xff]
    %v5197 = vld [vmem:[#allocation29 + $0x1e8] sm:$0xff]
    %v5198 = vld [vmem:[#allocation29 + $0x1f0] sm:$0xff]
    %v5199 = vld [vmem:[#allocation29 + $0x1f8] sm:$0xff]
    %v5200 = vld [vmem:[%s20] sm:$0xff]
    %v5201 = vld [vmem:[%s20 + $0x8] sm:$0xff]
    %v5202 = vld [vmem:[%s20 + $0x10] sm:$0xff]
    %v5203 = vld [vmem:[%s20 + $0x18] sm:$0xff]
    %v5208 = vlaneseq
    %v5209 = vshrl.u32 %v5208, 7
    %v5210 = vsub.s32 0, %v5209
    %v5211 = vrot.slane %v5200, %v5210
    %v5212 = vlaneseq
    %v5213 = vshrl.u32 %v5212, 7
    %v5214 = vsub.s32 1, %v5213
    %v5215 = vrot.slane %v5200, %v5214
    %v5216 = vlaneseq
    %v5217 = vshrl.u32 %v5216, 7
    %v5218 = vsub.s32 2, %v5217
    %v5219 = vrot.slane %v5200, %v5218
    %v5220 = vlaneseq
    %v5221 = vshrl.u32 %v5220, 7
    %v5222 = vsub.s32 3, %v5221
    %v5223 = vrot.slane %v5200, %v5222
    %v5224 = vlaneseq
    %v5225 = vshrl.u32 %v5224, 7
    %v5226 = vsub.s32 4, %v5225
    %v5227 = vrot.slane %v5200, %v5226
    %v5228 = vlaneseq
    %v5229 = vshrl.u32 %v5228, 7
    %v5230 = vsub.s32 5, %v5229
    %v5231 = vrot.slane %v5200, %v5230
    %v5232 = vlaneseq
    %v5233 = vshrl.u32 %v5232, 7
    %v5234 = vsub.s32 6, %v5233
    %v5235 = vrot.slane %v5200, %v5234
    %v5236 = vlaneseq
    %v5237 = vshrl.u32 %v5236, 7
    %v5238 = vsub.s32 7, %v5237
    %v5239 = vrot.slane %v5200, %v5238
    %v5240 = vlaneseq
    %v5241 = vshrl.u32 %v5240, 7
    %v5242 = vsub.s32 0, %v5241
    %v5243 = vrot.slane %v5201, %v5242
    %v5244 = vlaneseq
    %v5245 = vshrl.u32 %v5244, 7
    %v5246 = vsub.s32 1, %v5245
    %v5247 = vrot.slane %v5201, %v5246
    %v5248 = vlaneseq
    %v5249 = vshrl.u32 %v5248, 7
    %v5250 = vsub.s32 2, %v5249
    %v5251 = vrot.slane %v5201, %v5250
    %v5252 = vlaneseq
    %v5253 = vshrl.u32 %v5252, 7
    %v5254 = vsub.s32 3, %v5253
    %v5255 = vrot.slane %v5201, %v5254
    %v5256 = vlaneseq
    %v5257 = vshrl.u32 %v5256, 7
    %v5258 = vsub.s32 4, %v5257
    %v5259 = vrot.slane %v5201, %v5258
    %v5260 = vlaneseq
    %v5261 = vshrl.u32 %v5260, 7
    %v5262 = vsub.s32 5, %v5261
    %v5263 = vrot.slane %v5201, %v5262
    %v5264 = vlaneseq
    %v5265 = vshrl.u32 %v5264, 7
    %v5266 = vsub.s32 6, %v5265
    %v5267 = vrot.slane %v5201, %v5266
    %v5268 = vlaneseq
    %v5269 = vshrl.u32 %v5268, 7
    %v5270 = vsub.s32 7, %v5269
    %v5271 = vrot.slane %v5201, %v5270
    %v5272 = vlaneseq
    %v5273 = vshrl.u32 %v5272, 7
    %v5274 = vsub.s32 0, %v5273
    %v5275 = vrot.slane %v5202, %v5274
    %v5276 = vlaneseq
    %v5277 = vshrl.u32 %v5276, 7
    %v5278 = vsub.s32 1, %v5277
    %v5279 = vrot.slane %v5202, %v5278
    %v5280 = vlaneseq
    %v5281 = vshrl.u32 %v5280, 7
    %v5282 = vsub.s32 2, %v5281
    %v5283 = vrot.slane %v5202, %v5282
    %v5284 = vlaneseq
    %v5285 = vshrl.u32 %v5284, 7
    %v5286 = vsub.s32 3, %v5285
    %v5287 = vrot.slane %v5202, %v5286
    %v5288 = vlaneseq
    %v5289 = vshrl.u32 %v5288, 7
    %v5290 = vsub.s32 4, %v5289
    %v5291 = vrot.slane %v5202, %v5290
    %v5292 = vlaneseq
    %v5293 = vshrl.u32 %v5292, 7
    %v5294 = vsub.s32 5, %v5293
    %v5295 = vrot.slane %v5202, %v5294
    %v5296 = vlaneseq
    %v5297 = vshrl.u32 %v5296, 7
    %v5298 = vsub.s32 6, %v5297
    %v5299 = vrot.slane %v5202, %v5298
    %v5300 = vlaneseq
    %v5301 = vshrl.u32 %v5300, 7
    %v5302 = vsub.s32 7, %v5301
    %v5303 = vrot.slane %v5202, %v5302
    %v5304 = vlaneseq
    %v5305 = vshrl.u32 %v5304, 7
    %v5306 = vsub.s32 0, %v5305
    %v5307 = vrot.slane %v5203, %v5306
    %v5308 = vlaneseq
    %v5309 = vshrl.u32 %v5308, 7
    %v5310 = vsub.s32 1, %v5309
    %v5311 = vrot.slane %v5203, %v5310
    %v5312 = vlaneseq
    %v5313 = vshrl.u32 %v5312, 7
    %v5314 = vsub.s32 2, %v5313
    %v5315 = vrot.slane %v5203, %v5314
    %v5316 = vlaneseq
    %v5317 = vshrl.u32 %v5316, 7
    %v5318 = vsub.s32 3, %v5317
    %v5319 = vrot.slane %v5203, %v5318
    %v5320 = vlaneseq
    %v5321 = vshrl.u32 %v5320, 7
    %v5322 = vsub.s32 4, %v5321
    %v5323 = vrot.slane %v5203, %v5322
    %v5324 = vlaneseq
    %v5325 = vshrl.u32 %v5324, 7
    %v5326 = vsub.s32 5, %v5325
    %v5327 = vrot.slane %v5203, %v5326
    %v5328 = vlaneseq
    %v5329 = vshrl.u32 %v5328, 7
    %v5330 = vsub.s32 6, %v5329
    %v5331 = vrot.slane %v5203, %v5330
    %v5332 = vlaneseq
    %v5333 = vshrl.u32 %v5332, 7
    %v5334 = vsub.s32 7, %v5333
    %v5335 = vrot.slane %v5203, %v5334
    %v5432 = vunpack.c.l.b16 %v5136
    %v5433 = vunpack.c.h.b16 %v5136
    %v5434 = vunpack.c.l.b16 %v5137
    %v5435 = vunpack.c.h.b16 %v5137
    %v5436 = vunpack.c.l.b16 %v5138
    %v5437 = vunpack.c.h.b16 %v5138
    %v5438 = vunpack.c.l.b16 %v5139
    %v5439 = vunpack.c.h.b16 %v5139
    %v5440 = vunpack.c.l.b16 %v5140
    %v5441 = vunpack.c.h.b16 %v5140
    %v5442 = vunpack.c.l.b16 %v5141
    %v5443 = vunpack.c.h.b16 %v5141
    %v5444 = vunpack.c.l.b16 %v5142
    %v5445 = vunpack.c.h.b16 %v5142
    %v5446 = vunpack.c.l.b16 %v5143
    %v5447 = vunpack.c.h.b16 %v5143
    %v5448 = vunpack.c.l.b16 %v5144
    %v5449 = vunpack.c.h.b16 %v5144
    %v5450 = vunpack.c.l.b16 %v5145
    %v5451 = vunpack.c.h.b16 %v5145
    %v5452 = vunpack.c.l.b16 %v5146
    %v5453 = vunpack.c.h.b16 %v5146
    %v5454 = vunpack.c.l.b16 %v5147
    %v5455 = vunpack.c.h.b16 %v5147
    %v5456 = vunpack.c.l.b16 %v5148
    %v5457 = vunpack.c.h.b16 %v5148
    %v5458 = vunpack.c.l.b16 %v5149
    %v5459 = vunpack.c.h.b16 %v5149
    %v5460 = vunpack.c.l.b16 %v5150
    %v5461 = vunpack.c.h.b16 %v5150
    %v5462 = vunpack.c.l.b16 %v5151
    %v5463 = vunpack.c.h.b16 %v5151
    %v5464 = vunpack.c.l.b16 %v5152
    %v5465 = vunpack.c.h.b16 %v5152
    %v5466 = vunpack.c.l.b16 %v5153
    %v5467 = vunpack.c.h.b16 %v5153
    %v5468 = vunpack.c.l.b16 %v5154
    %v5469 = vunpack.c.h.b16 %v5154
    %v5470 = vunpack.c.l.b16 %v5155
    %v5471 = vunpack.c.h.b16 %v5155
    %v5472 = vunpack.c.l.b16 %v5156
    %v5473 = vunpack.c.h.b16 %v5156
    %v5474 = vunpack.c.l.b16 %v5157
    %v5475 = vunpack.c.h.b16 %v5157
    %v5476 = vunpack.c.l.b16 %v5158
    %v5477 = vunpack.c.h.b16 %v5158
    %v5478 = vunpack.c.l.b16 %v5159
    %v5479 = vunpack.c.h.b16 %v5159
    %v5480 = vunpack.c.l.b16 %v5160
    %v5481 = vunpack.c.h.b16 %v5160
    %v5482 = vunpack.c.l.b16 %v5161
    %v5483 = vunpack.c.h.b16 %v5161
    %v5484 = vunpack.c.l.b16 %v5162
    %v5485 = vunpack.c.h.b16 %v5162
    %v5486 = vunpack.c.l.b16 %v5163
    %v5487 = vunpack.c.h.b16 %v5163
    %v5488 = vunpack.c.l.b16 %v5164
    %v5489 = vunpack.c.h.b16 %v5164
    %v5490 = vunpack.c.l.b16 %v5165
    %v5491 = vunpack.c.h.b16 %v5165
    %v5492 = vunpack.c.l.b16 %v5166
    %v5493 = vunpack.c.h.b16 %v5166
    %v5494 = vunpack.c.l.b16 %v5167
    %v5495 = vunpack.c.h.b16 %v5167
    %v5496 = vunpack.c.l.b16 %v5168
    %v5497 = vunpack.c.h.b16 %v5168
    %v5498 = vunpack.c.l.b16 %v5169
    %v5499 = vunpack.c.h.b16 %v5169
    %v5500 = vunpack.c.l.b16 %v5170
    %v5501 = vunpack.c.h.b16 %v5170
    %v5502 = vunpack.c.l.b16 %v5171
    %v5503 = vunpack.c.h.b16 %v5171
    %v5504 = vunpack.c.l.b16 %v5172
    %v5505 = vunpack.c.h.b16 %v5172
    %v5506 = vunpack.c.l.b16 %v5173
    %v5507 = vunpack.c.h.b16 %v5173
    %v5508 = vunpack.c.l.b16 %v5174
    %v5509 = vunpack.c.h.b16 %v5174
    %v5510 = vunpack.c.l.b16 %v5175
    %v5511 = vunpack.c.h.b16 %v5175
    %v5512 = vunpack.c.l.b16 %v5176
    %v5513 = vunpack.c.h.b16 %v5176
    %v5514 = vunpack.c.l.b16 %v5177
    %v5515 = vunpack.c.h.b16 %v5177
    %v5516 = vunpack.c.l.b16 %v5178
    %v5517 = vunpack.c.h.b16 %v5178
    %v5518 = vunpack.c.l.b16 %v5179
    %v5519 = vunpack.c.h.b16 %v5179
    %v5520 = vunpack.c.l.b16 %v5180
    %v5521 = vunpack.c.h.b16 %v5180
    %v5522 = vunpack.c.l.b16 %v5181
    %v5523 = vunpack.c.h.b16 %v5181
    %v5524 = vunpack.c.l.b16 %v5182
    %v5525 = vunpack.c.h.b16 %v5182
    %v5526 = vunpack.c.l.b16 %v5183
    %v5527 = vunpack.c.h.b16 %v5183
    %v5528 = vunpack.c.l.b16 %v5184
    %v5529 = vunpack.c.h.b16 %v5184
    %v5530 = vunpack.c.l.b16 %v5185
    %v5531 = vunpack.c.h.b16 %v5185
    %v5532 = vunpack.c.l.b16 %v5186
    %v5533 = vunpack.c.h.b16 %v5186
    %v5534 = vunpack.c.l.b16 %v5187
    %v5535 = vunpack.c.h.b16 %v5187
    %v5536 = vunpack.c.l.b16 %v5188
    %v5537 = vunpack.c.h.b16 %v5188
    %v5538 = vunpack.c.l.b16 %v5189
    %v5539 = vunpack.c.h.b16 %v5189
    %v5540 = vunpack.c.l.b16 %v5190
    %v5541 = vunpack.c.h.b16 %v5190
    %v5542 = vunpack.c.l.b16 %v5191
    %v5543 = vunpack.c.h.b16 %v5191
    %v5544 = vunpack.c.l.b16 %v5192
    %v5545 = vunpack.c.h.b16 %v5192
    %v5546 = vunpack.c.l.b16 %v5193
    %v5547 = vunpack.c.h.b16 %v5193
    %v5548 = vunpack.c.l.b16 %v5194
    %v5549 = vunpack.c.h.b16 %v5194
    %v5550 = vunpack.c.l.b16 %v5195
    %v5551 = vunpack.c.h.b16 %v5195
    %v5552 = vunpack.c.l.b16 %v5196
    %v5553 = vunpack.c.h.b16 %v5196
    %v5554 = vunpack.c.l.b16 %v5197
    %v5555 = vunpack.c.h.b16 %v5197
    %v5556 = vunpack.c.l.b16 %v5198
    %v5557 = vunpack.c.h.b16 %v5198
    %v5558 = vunpack.c.l.b16 %v5199
    %v5559 = vunpack.c.h.b16 %v5199
    %v5560 = vpack.c.b16 %v5464, %v5432
    %v5561 = vpack.c.b16 %v5465, %v5433
    %v5562 = vpack.c.b16 %v5466, %v5434
    %v5563 = vpack.c.b16 %v5467, %v5435
    %v5564 = vpack.c.b16 %v5468, %v5436
    %v5565 = vpack.c.b16 %v5469, %v5437
    %v5566 = vpack.c.b16 %v5470, %v5438
    %v5567 = vpack.c.b16 %v5471, %v5439
    %v5568 = vpack.c.b16 %v5472, %v5440
    %v5569 = vpack.c.b16 %v5473, %v5441
    %v5570 = vpack.c.b16 %v5474, %v5442
    %v5571 = vpack.c.b16 %v5475, %v5443
    %v5572 = vpack.c.b16 %v5476, %v5444
    %v5573 = vpack.c.b16 %v5477, %v5445
    %v5574 = vpack.c.b16 %v5478, %v5446
    %v5575 = vpack.c.b16 %v5479, %v5447
    %v5576 = vpack.c.b16 %v5480, %v5448
    %v5577 = vpack.c.b16 %v5481, %v5449
    %v5578 = vpack.c.b16 %v5482, %v5450
    %v5579 = vpack.c.b16 %v5483, %v5451
    %v5580 = vpack.c.b16 %v5484, %v5452
    %v5581 = vpack.c.b16 %v5485, %v5453
    %v5582 = vpack.c.b16 %v5486, %v5454
    %v5583 = vpack.c.b16 %v5487, %v5455
    %v5584 = vpack.c.b16 %v5488, %v5456
    %v5585 = vpack.c.b16 %v5489, %v5457
    %v5586 = vpack.c.b16 %v5490, %v5458
    %v5587 = vpack.c.b16 %v5491, %v5459
    %v5588 = vpack.c.b16 %v5492, %v5460
    %v5589 = vpack.c.b16 %v5493, %v5461
    %v5590 = vpack.c.b16 %v5494, %v5462
    %v5591 = vpack.c.b16 %v5495, %v5463
    %v5592 = vpack.c.b16 %v5528, %v5496
    %v5593 = vpack.c.b16 %v5529, %v5497
    %v5594 = vpack.c.b16 %v5530, %v5498
    %v5595 = vpack.c.b16 %v5531, %v5499
    %v5596 = vpack.c.b16 %v5532, %v5500
    %v5597 = vpack.c.b16 %v5533, %v5501
    %v5598 = vpack.c.b16 %v5534, %v5502
    %v5599 = vpack.c.b16 %v5535, %v5503
    %v5600 = vpack.c.b16 %v5536, %v5504
    %v5601 = vpack.c.b16 %v5537, %v5505
    %v5602 = vpack.c.b16 %v5538, %v5506
    %v5603 = vpack.c.b16 %v5539, %v5507
    %v5604 = vpack.c.b16 %v5540, %v5508
    %v5605 = vpack.c.b16 %v5541, %v5509
    %v5606 = vpack.c.b16 %v5542, %v5510
    %v5607 = vpack.c.b16 %v5543, %v5511
    %v5608 = vpack.c.b16 %v5544, %v5512
    %v5609 = vpack.c.b16 %v5545, %v5513
    %v5610 = vpack.c.b16 %v5546, %v5514
    %v5611 = vpack.c.b16 %v5547, %v5515
    %v5612 = vpack.c.b16 %v5548, %v5516
    %v5613 = vpack.c.b16 %v5549, %v5517
    %v5614 = vpack.c.b16 %v5550, %v5518
    %v5615 = vpack.c.b16 %v5551, %v5519
    %v5616 = vpack.c.b16 %v5552, %v5520
    %v5617 = vpack.c.b16 %v5553, %v5521
    %v5618 = vpack.c.b16 %v5554, %v5522
    %v5619 = vpack.c.b16 %v5555, %v5523
    %v5620 = vpack.c.b16 %v5556, %v5524
    %v5621 = vpack.c.b16 %v5557, %v5525
    %v5622 = vpack.c.b16 %v5558, %v5526
    %v5623 = vpack.c.b16 %v5559, %v5527
    %v5689 = vsel %vm2417, %v5135, 0
    %5691 = vmatprep.subr.bf16.mxu0 0
    %5692 = vmatpush1.bf16.msra.mxu0 0
    %5693 = vmatprep.subr.bf16.mxu0 0
    %5694 = vmatpush1.bf16.msra.mxu0 0
    %5695 = vmatprep.subr.bf16.mxu0 0
    %5696 = vmatpush1.bf16.msra.mxu0 0
    %5697 = vmatprep.subr.bf16.mxu0 0
    %5698 = vmatpush1.bf16.msra.mxu0 0
    %5699 = vmatprep.subr.bf16.mxu0 0
    %5700 = vmatpush1.bf16.msra.mxu0 0
    %5701 = vmatprep.subr.bf16.mxu0 0
    %5702 = vmatpush1.bf16.msra.mxu0 0
    %5703 = vmatprep.subr.bf16.mxu0 %v5593
    %5704 = vmatpush1.bf16.msra.mxu0 %v5592
    %5705 = vmatprep.subr.bf16.mxu0 %v5561
    %5706 = vmatpush1.bf16.msra.mxu0 %v5560
    %5707 = vmatprep.subr.bf16.mxu0 0
    %5708 = vmatpush2.bf16.msra.mxu0 0
    %5709 = vmatprep.subr.bf16.mxu0 0
    %5710 = vmatpush2.bf16.msra.mxu0 0
    %5711 = vmatprep.subr.bf16.mxu0 0
    %5712 = vmatpush2.bf16.msra.mxu0 0
    %5713 = vmatprep.subr.bf16.mxu0 0
    %5714 = vmatpush2.bf16.msra.mxu0 0
    %5715 = vmatprep.subr.bf16.mxu0 0
    %5716 = vmatpush2.bf16.msra.mxu0 0
    %5717 = vmatprep.subr.bf16.mxu0 0
    %5718 = vmatpush2.bf16.msra.mxu0 0
    %5719 = vmatprep.subr.bf16.mxu0 0
    %5720 = vmatpush2.bf16.msra.mxu0 0
    %5721 = vmatprep.subr.bf16.mxu0 0
    %5722 = vmatpush2.bf16.msra.mxu0 0
    %5723 = vmatprep.mubr.bf16.mxu0 0
    %5724 = vmatmul.mubr.bf16.gmra.mxu0 %v5689
    %v5725 = vpop.f32.mrf.mxu0
    %v5726 = vadd.f32 %v5211, %v5725
    %v5727 = vpop.f32.mrf.mxu0
    %v5728 = vadd.f32 %v5215, %v5727
    %v5729 = vpop.f32.mrf.mxu0
    %v5730 = vpop.f32.mrf.mxu0
    %5731 = vdwg.mxu0
    %5732 = vmatprep.subr.bf16.mxu0 0
    %5733 = vmatpush1.bf16.msra.mxu0 0
    %5734 = vmatprep.subr.bf16.mxu0 0
    %5735 = vmatpush1.bf16.msra.mxu0 0
    %5736 = vmatprep.subr.bf16.mxu0 0
    %5737 = vmatpush1.bf16.msra.mxu0 0
    %5738 = vmatprep.subr.bf16.mxu0 0
    %5739 = vmatpush1.bf16.msra.mxu0 0
    %5740 = vmatprep.subr.bf16.mxu0 0
    %5741 = vmatpush1.bf16.msra.mxu0 0
    %5742 = vmatprep.subr.bf16.mxu0 0
    %5743 = vmatpush1.bf16.msra.mxu0 0
    %5744 = vmatprep.subr.bf16.mxu0 %v5595
    %5745 = vmatpush1.bf16.msra.mxu0 %v5594
    %5746 = vmatprep.subr.bf16.mxu0 %v5563
    %5747 = vmatpush1.bf16.msra.mxu0 %v5562
    %5748 = vmatprep.subr.bf16.mxu0 0
    %5749 = vmatpush2.bf16.msra.mxu0 0
    %5750 = vmatprep.subr.bf16.mxu0 0
    %5751 = vmatpush2.bf16.msra.mxu0 0
    %5752 = vmatprep.subr.bf16.mxu0 0
    %5753 = vmatpush2.bf16.msra.mxu0 0
    %5754 = vmatprep.subr.bf16.mxu0 0
    %5755 = vmatpush2.bf16.msra.mxu0 0
    %5756 = vmatprep.subr.bf16.mxu0 0
    %5757 = vmatpush2.bf16.msra.mxu0 0
    %5758 = vmatprep.subr.bf16.mxu0 0
    %5759 = vmatpush2.bf16.msra.mxu0 0
    %5760 = vmatprep.subr.bf16.mxu0 0
    %5761 = vmatpush2.bf16.msra.mxu0 0
    %5762 = vmatprep.subr.bf16.mxu0 0
    %5763 = vmatpush2.bf16.msra.mxu0 0
    %5764 = vmatprep.mubr.bf16.mxu0 0
    %5765 = vmatmul.mubr.bf16.gmra.mxu0 %v5689
    %v5766 = vpop.f32.mrf.mxu0
    %v5767 = vadd.f32 %v5219, %v5766
    %v5768 = vpop.f32.mrf.mxu0
    %v5769 = vadd.f32 %v5223, %v5768
    %v5770 = vpop.f32.mrf.mxu0
    %v5771 = vpop.f32.mrf.mxu0
    %5772 = vdwg.mxu0
    %5773 = vmatprep.subr.bf16.mxu0 0
    %5774 = vmatpush1.bf16.msra.mxu0 0
    %5775 = vmatprep.subr.bf16.mxu0 0
    %5776 = vmatpush1.bf16.msra.mxu0 0
    %5777 = vmatprep.subr.bf16.mxu0 0
    %5778 = vmatpush1.bf16.msra.mxu0 0
    %5779 = vmatprep.subr.bf16.mxu0 0
    %5780 = vmatpush1.bf16.msra.mxu0 0
    %5781 = vmatprep.subr.bf16.mxu0 0
    %5782 = vmatpush1.bf16.msra.mxu0 0
    %5783 = vmatprep.subr.bf16.mxu0 0
    %5784 = vmatpush1.bf16.msra.mxu0 0
    %5785 = vmatprep.subr.bf16.mxu0 %v5597
    %5786 = vmatpush1.bf16.msra.mxu0 %v5596
    %5787 = vmatprep.subr.bf16.mxu0 %v5565
    %5788 = vmatpush1.bf16.msra.mxu0 %v5564
    %5789 = vmatprep.subr.bf16.mxu0 0
    %5790 = vmatpush2.bf16.msra.mxu0 0
    %5791 = vmatprep.subr.bf16.mxu0 0
    %5792 = vmatpush2.bf16.msra.mxu0 0
    %5793 = vmatprep.subr.bf16.mxu0 0
    %5794 = vmatpush2.bf16.msra.mxu0 0
    %5795 = vmatprep.subr.bf16.mxu0 0
    %5796 = vmatpush2.bf16.msra.mxu0 0
    %5797 = vmatprep.subr.bf16.mxu0 0
    %5798 = vmatpush2.bf16.msra.mxu0 0
    %5799 = vmatprep.subr.bf16.mxu0 0
    %5800 = vmatpush2.bf16.msra.mxu0 0
    %5801 = vmatprep.subr.bf16.mxu0 0
    %5802 = vmatpush2.bf16.msra.mxu0 0
    %5803 = vmatprep.subr.bf16.mxu0 0
    %5804 = vmatpush2.bf16.msra.mxu0 0
    %5805 = vmatprep.mubr.bf16.mxu0 0
    %5806 = vmatmul.mubr.bf16.gmra.mxu0 %v5689
    %v5807 = vpop.f32.mrf.mxu0
    %v5808 = vadd.f32 %v5227, %v5807
    %v5809 = vpop.f32.mrf.mxu0
    %v5810 = vadd.f32 %v5231, %v5809
    %v5811 = vpop.f32.mrf.mxu0
    %v5812 = vpop.f32.mrf.mxu0
    %5813 = vdwg.mxu0
    %5814 = vmatprep.subr.bf16.mxu0 0
    %5815 = vmatpush1.bf16.msra.mxu0 0
    %5816 = vmatprep.subr.bf16.mxu0 0
    %5817 = vmatpush1.bf16.msra.mxu0 0
    %5818 = vmatprep.subr.bf16.mxu0 0
    %5819 = vmatpush1.bf16.msra.mxu0 0
    %5820 = vmatprep.subr.bf16.mxu0 0
    %5821 = vmatpush1.bf16.msra.mxu0 0
    %5822 = vmatprep.subr.bf16.mxu0 0
    %5823 = vmatpush1.bf16.msra.mxu0 0
    %5824 = vmatprep.subr.bf16.mxu0 0
    %5825 = vmatpush1.bf16.msra.mxu0 0
    %5826 = vmatprep.subr.bf16.mxu0 %v5599
    %5827 = vmatpush1.bf16.msra.mxu0 %v5598
    %5828 = vmatprep.subr.bf16.mxu0 %v5567
    %5829 = vmatpush1.bf16.msra.mxu0 %v5566
    %5830 = vmatprep.subr.bf16.mxu0 0
    %5831 = vmatpush2.bf16.msra.mxu0 0
    %5832 = vmatprep.subr.bf16.mxu0 0
    %5833 = vmatpush2.bf16.msra.mxu0 0
    %5834 = vmatprep.subr.bf16.mxu0 0
    %5835 = vmatpush2.bf16.msra.mxu0 0
    %5836 = vmatprep.subr.bf16.mxu0 0
    %5837 = vmatpush2.bf16.msra.mxu0 0
    %5838 = vmatprep.subr.bf16.mxu0 0
    %5839 = vmatpush2.bf16.msra.mxu0 0
    %5840 = vmatprep.subr.bf16.mxu0 0
    %5841 = vmatpush2.bf16.msra.mxu0 0
    %5842 = vmatprep.subr.bf16.mxu0 0
    %5843 = vmatpush2.bf16.msra.mxu0 0
    %5844 = vmatprep.subr.bf16.mxu0 0
    %5845 = vmatpush2.bf16.msra.mxu0 0
    %5846 = vmatprep.mubr.bf16.mxu0 0
    %5847 = vmatmul.mubr.bf16.gmra.mxu0 %v5689
    %v5848 = vpop.f32.mrf.mxu0
    %v5849 = vadd.f32 %v5235, %v5848
    %v5850 = vpop.f32.mrf.mxu0
    %v5851 = vadd.f32 %v5239, %v5850
    %v5852 = vpop.f32.mrf.mxu0
    %v5853 = vpop.f32.mrf.mxu0
    %5854 = vdwg.mxu0
    %5855 = vmatprep.subr.bf16.mxu0 0
    %5856 = vmatpush1.bf16.msra.mxu0 0
    %5857 = vmatprep.subr.bf16.mxu0 0
    %5858 = vmatpush1.bf16.msra.mxu0 0
    %5859 = vmatprep.subr.bf16.mxu0 0
    %5860 = vmatpush1.bf16.msra.mxu0 0
    %5861 = vmatprep.subr.bf16.mxu0 0
    %5862 = vmatpush1.bf16.msra.mxu0 0
    %5863 = vmatprep.subr.bf16.mxu0 0
    %5864 = vmatpush1.bf16.msra.mxu0 0
    %5865 = vmatprep.subr.bf16.mxu0 0
    %5866 = vmatpush1.bf16.msra.mxu0 0
    %5867 = vmatprep.subr.bf16.mxu0 %v5601
    %5868 = vmatpush1.bf16.msra.mxu0 %v5600
    %5869 = vmatprep.subr.bf16.mxu0 %v5569
    %5870 = vmatpush1.bf16.msra.mxu0 %v5568
    %5871 = vmatprep.subr.bf16.mxu0 0
    %5872 = vmatpush2.bf16.msra.mxu0 0
    %5873 = vmatprep.subr.bf16.mxu0 0
    %5874 = vmatpush2.bf16.msra.mxu0 0
    %5875 = vmatprep.subr.bf16.mxu0 0
    %5876 = vmatpush2.bf16.msra.mxu0 0
    %5877 = vmatprep.subr.bf16.mxu0 0
    %5878 = vmatpush2.bf16.msra.mxu0 0
    %5879 = vmatprep.subr.bf16.mxu0 0
    %5880 = vmatpush2.bf16.msra.mxu0 0
    %5881 = vmatprep.subr.bf16.mxu0 0
    %5882 = vmatpush2.bf16.msra.mxu0 0
    %5883 = vmatprep.subr.bf16.mxu0 0
    %5884 = vmatpush2.bf16.msra.mxu0 0
    %5885 = vmatprep.subr.bf16.mxu0 0
    %5886 = vmatpush2.bf16.msra.mxu0 0
    %5887 = vmatprep.mubr.bf16.mxu0 0
    %5888 = vmatmul.mubr.bf16.gmra.mxu0 %v5689
    %v5889 = vpop.f32.mrf.mxu0
    %v5890 = vadd.f32 %v5243, %v5889
    %v5891 = vpop.f32.mrf.mxu0
    %v5892 = vadd.f32 %v5247, %v5891
    %v5893 = vpop.f32.mrf.mxu0
    %v5894 = vpop.f32.mrf.mxu0
    %5895 = vdwg.mxu0
    %5896 = vmatprep.subr.bf16.mxu0 0
    %5897 = vmatpush1.bf16.msra.mxu0 0
    %5898 = vmatprep.subr.bf16.mxu0 0
    %5899 = vmatpush1.bf16.msra.mxu0 0
    %5900 = vmatprep.subr.bf16.mxu0 0
    %5901 = vmatpush1.bf16.msra.mxu0 0
    %5902 = vmatprep.subr.bf16.mxu0 0
    %5903 = vmatpush1.bf16.msra.mxu0 0
    %5904 = vmatprep.subr.bf16.mxu0 0
    %5905 = vmatpush1.bf16.msra.mxu0 0
    %5906 = vmatprep.subr.bf16.mxu0 0
    %5907 = vmatpush1.bf16.msra.mxu0 0
    %5908 = vmatprep.subr.bf16.mxu0 %v5603
    %5909 = vmatpush1.bf16.msra.mxu0 %v5602
    %5910 = vmatprep.subr.bf16.mxu0 %v5571
    %5911 = vmatpush1.bf16.msra.mxu0 %v5570
    %5912 = vmatprep.subr.bf16.mxu0 0
    %5913 = vmatpush2.bf16.msra.mxu0 0
    %5914 = vmatprep.subr.bf16.mxu0 0
    %5915 = vmatpush2.bf16.msra.mxu0 0
    %5916 = vmatprep.subr.bf16.mxu0 0
    %5917 = vmatpush2.bf16.msra.mxu0 0
    %5918 = vmatprep.subr.bf16.mxu0 0
    %5919 = vmatpush2.bf16.msra.mxu0 0
    %5920 = vmatprep.subr.bf16.mxu0 0
    %5921 = vmatpush2.bf16.msra.mxu0 0
    %5922 = vmatprep.subr.bf16.mxu0 0
    %5923 = vmatpush2.bf16.msra.mxu0 0
    %5924 = vmatprep.subr.bf16.mxu0 0
    %5925 = vmatpush2.bf16.msra.mxu0 0
    %5926 = vmatprep.subr.bf16.mxu0 0
    %5927 = vmatpush2.bf16.msra.mxu0 0
    %5928 = vmatprep.mubr.bf16.mxu0 0
    %5929 = vmatmul.mubr.bf16.gmra.mxu0 %v5689
    %v5930 = vpop.f32.mrf.mxu0
    %v5931 = vadd.f32 %v5251, %v5930
    %v5932 = vpop.f32.mrf.mxu0
    %v5933 = vadd.f32 %v5255, %v5932
    %v5934 = vpop.f32.mrf.mxu0
    %v5935 = vpop.f32.mrf.mxu0
    %5936 = vdwg.mxu0
    %5937 = vmatprep.subr.bf16.mxu0 0
    %5938 = vmatpush1.bf16.msra.mxu0 0
    %5939 = vmatprep.subr.bf16.mxu0 0
    %5940 = vmatpush1.bf16.msra.mxu0 0
    %5941 = vmatprep.subr.bf16.mxu0 0
    %5942 = vmatpush1.bf16.msra.mxu0 0
    %5943 = vmatprep.subr.bf16.mxu0 0
    %5944 = vmatpush1.bf16.msra.mxu0 0
    %5945 = vmatprep.subr.bf16.mxu0 0
    %5946 = vmatpush1.bf16.msra.mxu0 0
    %5947 = vmatprep.subr.bf16.mxu0 0
    %5948 = vmatpush1.bf16.msra.mxu0 0
    %5949 = vmatprep.subr.bf16.mxu0 %v5605
    %5950 = vmatpush1.bf16.msra.mxu0 %v5604
    %5951 = vmatprep.subr.bf16.mxu0 %v5573
    %5952 = vmatpush1.bf16.msra.mxu0 %v5572
    %5953 = vmatprep.subr.bf16.mxu0 0
    %5954 = vmatpush2.bf16.msra.mxu0 0
    %5955 = vmatprep.subr.bf16.mxu0 0
    %5956 = vmatpush2.bf16.msra.mxu0 0
    %5957 = vmatprep.subr.bf16.mxu0 0
    %5958 = vmatpush2.bf16.msra.mxu0 0
    %5959 = vmatprep.subr.bf16.mxu0 0
    %5960 = vmatpush2.bf16.msra.mxu0 0
    %5961 = vmatprep.subr.bf16.mxu0 0
    %5962 = vmatpush2.bf16.msra.mxu0 0
    %5963 = vmatprep.subr.bf16.mxu0 0
    %5964 = vmatpush2.bf16.msra.mxu0 0
    %5965 = vmatprep.subr.bf16.mxu0 0
    %5966 = vmatpush2.bf16.msra.mxu0 0
    %5967 = vmatprep.subr.bf16.mxu0 0
    %5968 = vmatpush2.bf16.msra.mxu0 0
    %5969 = vmatprep.mubr.bf16.mxu0 0
    %5970 = vmatmul.mubr.bf16.gmra.mxu0 %v5689
    %v5971 = vpop.f32.mrf.mxu0
    %v5972 = vadd.f32 %v5259, %v5971
    %v5973 = vpop.f32.mrf.mxu0
    %v5974 = vadd.f32 %v5263, %v5973
    %v5975 = vpop.f32.mrf.mxu0
    %v5976 = vpop.f32.mrf.mxu0
    %5977 = vdwg.mxu0
    %5978 = vmatprep.subr.bf16.mxu0 0
    %5979 = vmatpush1.bf16.msra.mxu0 0
    %5980 = vmatprep.subr.bf16.mxu0 0
    %5981 = vmatpush1.bf16.msra.mxu0 0
    %5982 = vmatprep.subr.bf16.mxu0 0
    %5983 = vmatpush1.bf16.msra.mxu0 0
    %5984 = vmatprep.subr.bf16.mxu0 0
    %5985 = vmatpush1.bf16.msra.mxu0 0
    %5986 = vmatprep.subr.bf16.mxu0 0
    %5987 = vmatpush1.bf16.msra.mxu0 0
    %5988 = vmatprep.subr.bf16.mxu0 0
    %5989 = vmatpush1.bf16.msra.mxu0 0
    %5990 = vmatprep.subr.bf16.mxu0 %v5607
    %5991 = vmatpush1.bf16.msra.mxu0 %v5606
    %5992 = vmatprep.subr.bf16.mxu0 %v5575
    %5993 = vmatpush1.bf16.msra.mxu0 %v5574
    %5994 = vmatprep.subr.bf16.mxu0 0
    %5995 = vmatpush2.bf16.msra.mxu0 0
    %5996 = vmatprep.subr.bf16.mxu0 0
    %5997 = vmatpush2.bf16.msra.mxu0 0
    %5998 = vmatprep.subr.bf16.mxu0 0
    %5999 = vmatpush2.bf16.msra.mxu0 0
    %6000 = vmatprep.subr.bf16.mxu0 0
    %6001 = vmatpush2.bf16.msra.mxu0 0
    %6002 = vmatprep.subr.bf16.mxu0 0
    %6003 = vmatpush2.bf16.msra.mxu0 0
    %6004 = vmatprep.subr.bf16.mxu0 0
    %6005 = vmatpush2.bf16.msra.mxu0 0
    %6006 = vmatprep.subr.bf16.mxu0 0
    %6007 = vmatpush2.bf16.msra.mxu0 0
    %6008 = vmatprep.subr.bf16.mxu0 0
    %6009 = vmatpush2.bf16.msra.mxu0 0
    %6010 = vmatprep.mubr.bf16.mxu0 0
    %6011 = vmatmul.mubr.bf16.gmra.mxu0 %v5689
    %v6012 = vpop.f32.mrf.mxu0
    %v6013 = vadd.f32 %v5267, %v6012
    %v6014 = vpop.f32.mrf.mxu0
    %v6015 = vadd.f32 %v5271, %v6014
    %v6016 = vpop.f32.mrf.mxu0
    %v6017 = vpop.f32.mrf.mxu0
    %6018 = vdwg.mxu0
    %6019 = vmatprep.subr.bf16.mxu0 0
    %6020 = vmatpush1.bf16.msra.mxu0 0
    %6021 = vmatprep.subr.bf16.mxu0 0
    %6022 = vmatpush1.bf16.msra.mxu0 0
    %6023 = vmatprep.subr.bf16.mxu0 0
    %6024 = vmatpush1.bf16.msra.mxu0 0
    %6025 = vmatprep.subr.bf16.mxu0 0
    %6026 = vmatpush1.bf16.msra.mxu0 0
    %6027 = vmatprep.subr.bf16.mxu0 0
    %6028 = vmatpush1.bf16.msra.mxu0 0
    %6029 = vmatprep.subr.bf16.mxu0 0
    %6030 = vmatpush1.bf16.msra.mxu0 0
    %6031 = vmatprep.subr.bf16.mxu0 %v5609
    %6032 = vmatpush1.bf16.msra.mxu0 %v5608
    %6033 = vmatprep.subr.bf16.mxu0 %v5577
    %6034 = vmatpush1.bf16.msra.mxu0 %v5576
    %6035 = vmatprep.subr.bf16.mxu0 0
    %6036 = vmatpush2.bf16.msra.mxu0 0
    %6037 = vmatprep.subr.bf16.mxu0 0
    %6038 = vmatpush2.bf16.msra.mxu0 0
    %6039 = vmatprep.subr.bf16.mxu0 0
    %6040 = vmatpush2.bf16.msra.mxu0 0
    %6041 = vmatprep.subr.bf16.mxu0 0
    %6042 = vmatpush2.bf16.msra.mxu0 0
    %6043 = vmatprep.subr.bf16.mxu0 0
    %6044 = vmatpush2.bf16.msra.mxu0 0
    %6045 = vmatprep.subr.bf16.mxu0 0
    %6046 = vmatpush2.bf16.msra.mxu0 0
    %6047 = vmatprep.subr.bf16.mxu0 0
    %6048 = vmatpush2.bf16.msra.mxu0 0
    %6049 = vmatprep.subr.bf16.mxu0 0
    %6050 = vmatpush2.bf16.msra.mxu0 0
    %6051 = vmatprep.mubr.bf16.mxu0 0
    %6052 = vmatmul.mubr.bf16.gmra.mxu0 %v5689
    %v6053 = vpop.f32.mrf.mxu0
    %v6054 = vadd.f32 %v5275, %v6053
    %v6055 = vpop.f32.mrf.mxu0
    %v6056 = vadd.f32 %v5279, %v6055
    %v6057 = vpop.f32.mrf.mxu0
    %v6058 = vpop.f32.mrf.mxu0
    %6059 = vdwg.mxu0
    %6060 = vmatprep.subr.bf16.mxu0 0
    %6061 = vmatpush1.bf16.msra.mxu0 0
    %6062 = vmatprep.subr.bf16.mxu0 0
    %6063 = vmatpush1.bf16.msra.mxu0 0
    %6064 = vmatprep.subr.bf16.mxu0 0
    %6065 = vmatpush1.bf16.msra.mxu0 0
    %6066 = vmatprep.subr.bf16.mxu0 0
    %6067 = vmatpush1.bf16.msra.mxu0 0
    %6068 = vmatprep.subr.bf16.mxu0 0
    %6069 = vmatpush1.bf16.msra.mxu0 0
    %6070 = vmatprep.subr.bf16.mxu0 0
    %6071 = vmatpush1.bf16.msra.mxu0 0
    %6072 = vmatprep.subr.bf16.mxu0 %v5611
    %6073 = vmatpush1.bf16.msra.mxu0 %v5610
    %6074 = vmatprep.subr.bf16.mxu0 %v5579
    %6075 = vmatpush1.bf16.msra.mxu0 %v5578
    %6076 = vmatprep.subr.bf16.mxu0 0
    %6077 = vmatpush2.bf16.msra.mxu0 0
    %6078 = vmatprep.subr.bf16.mxu0 0
    %6079 = vmatpush2.bf16.msra.mxu0 0
    %6080 = vmatprep.subr.bf16.mxu0 0
    %6081 = vmatpush2.bf16.msra.mxu0 0
    %6082 = vmatprep.subr.bf16.mxu0 0
    %6083 = vmatpush2.bf16.msra.mxu0 0
    %6084 = vmatprep.subr.bf16.mxu0 0
    %6085 = vmatpush2.bf16.msra.mxu0 0
    %6086 = vmatprep.subr.bf16.mxu0 0
    %6087 = vmatpush2.bf16.msra.mxu0 0
    %6088 = vmatprep.subr.bf16.mxu0 0
    %6089 = vmatpush2.bf16.msra.mxu0 0
    %6090 = vmatprep.subr.bf16.mxu0 0
    %6091 = vmatpush2.bf16.msra.mxu0 0
    %6092 = vmatprep.mubr.bf16.mxu0 0
    %6093 = vmatmul.mubr.bf16.gmra.mxu0 %v5689
    %v6094 = vpop.f32.mrf.mxu0
    %v6095 = vadd.f32 %v5283, %v6094
    %v6096 = vpop.f32.mrf.mxu0
    %v6097 = vadd.f32 %v5287, %v6096
    %v6098 = vpop.f32.mrf.mxu0
    %v6099 = vpop.f32.mrf.mxu0
    %6100 = vdwg.mxu0
    %6101 = vmatprep.subr.bf16.mxu0 0
    %6102 = vmatpush1.bf16.msra.mxu0 0
    %6103 = vmatprep.subr.bf16.mxu0 0
    %6104 = vmatpush1.bf16.msra.mxu0 0
    %6105 = vmatprep.subr.bf16.mxu0 0
    %6106 = vmatpush1.bf16.msra.mxu0 0
    %6107 = vmatprep.subr.bf16.mxu0 0
    %6108 = vmatpush1.bf16.msra.mxu0 0
    %6109 = vmatprep.subr.bf16.mxu0 0
    %6110 = vmatpush1.bf16.msra.mxu0 0
    %6111 = vmatprep.subr.bf16.mxu0 0
    %6112 = vmatpush1.bf16.msra.mxu0 0
    %6113 = vmatprep.subr.bf16.mxu0 %v5613
    %6114 = vmatpush1.bf16.msra.mxu0 %v5612
    %6115 = vmatprep.subr.bf16.mxu0 %v5581
    %6116 = vmatpush1.bf16.msra.mxu0 %v5580
    %6117 = vmatprep.subr.bf16.mxu0 0
    %6118 = vmatpush2.bf16.msra.mxu0 0
    %6119 = vmatprep.subr.bf16.mxu0 0
    %6120 = vmatpush2.bf16.msra.mxu0 0
    %6121 = vmatprep.subr.bf16.mxu0 0
    %6122 = vmatpush2.bf16.msra.mxu0 0
    %6123 = vmatprep.subr.bf16.mxu0 0
    %6124 = vmatpush2.bf16.msra.mxu0 0
    %6125 = vmatprep.subr.bf16.mxu0 0
    %6126 = vmatpush2.bf16.msra.mxu0 0
    %6127 = vmatprep.subr.bf16.mxu0 0
    %6128 = vmatpush2.bf16.msra.mxu0 0
    %6129 = vmatprep.subr.bf16.mxu0 0
    %6130 = vmatpush2.bf16.msra.mxu0 0
    %6131 = vmatprep.subr.bf16.mxu0 0
    %6132 = vmatpush2.bf16.msra.mxu0 0
    %6133 = vmatprep.mubr.bf16.mxu0 0
    %6134 = vmatmul.mubr.bf16.gmra.mxu0 %v5689
    %v6135 = vpop.f32.mrf.mxu0
    %v6136 = vadd.f32 %v5291, %v6135
    %v6137 = vpop.f32.mrf.mxu0
    %v6138 = vadd.f32 %v5295, %v6137
    %v6139 = vpop.f32.mrf.mxu0
    %v6140 = vpop.f32.mrf.mxu0
    %6141 = vdwg.mxu0
    %6142 = vmatprep.subr.bf16.mxu0 0
    %6143 = vmatpush1.bf16.msra.mxu0 0
    %6144 = vmatprep.subr.bf16.mxu0 0
    %6145 = vmatpush1.bf16.msra.mxu0 0
    %6146 = vmatprep.subr.bf16.mxu0 0
    %6147 = vmatpush1.bf16.msra.mxu0 0
    %6148 = vmatprep.subr.bf16.mxu0 0
    %6149 = vmatpush1.bf16.msra.mxu0 0
    %6150 = vmatprep.subr.bf16.mxu0 0
    %6151 = vmatpush1.bf16.msra.mxu0 0
    %6152 = vmatprep.subr.bf16.mxu0 0
    %6153 = vmatpush1.bf16.msra.mxu0 0
    %6154 = vmatprep.subr.bf16.mxu0 %v5615
    %6155 = vmatpush1.bf16.msra.mxu0 %v5614
    %6156 = vmatprep.subr.bf16.mxu0 %v5583
    %6157 = vmatpush1.bf16.msra.mxu0 %v5582
    %6158 = vmatprep.subr.bf16.mxu0 0
    %6159 = vmatpush2.bf16.msra.mxu0 0
    %6160 = vmatprep.subr.bf16.mxu0 0
    %6161 = vmatpush2.bf16.msra.mxu0 0
    %6162 = vmatprep.subr.bf16.mxu0 0
    %6163 = vmatpush2.bf16.msra.mxu0 0
    %6164 = vmatprep.subr.bf16.mxu0 0
    %6165 = vmatpush2.bf16.msra.mxu0 0
    %6166 = vmatprep.subr.bf16.mxu0 0
    %6167 = vmatpush2.bf16.msra.mxu0 0
    %6168 = vmatprep.subr.bf16.mxu0 0
    %6169 = vmatpush2.bf16.msra.mxu0 0
    %6170 = vmatprep.subr.bf16.mxu0 0
    %6171 = vmatpush2.bf16.msra.mxu0 0
    %6172 = vmatprep.subr.bf16.mxu0 0
    %6173 = vmatpush2.bf16.msra.mxu0 0
    %6174 = vmatprep.mubr.bf16.mxu0 0
    %6175 = vmatmul.mubr.bf16.gmra.mxu0 %v5689
    %v6176 = vpop.f32.mrf.mxu0
    %v6177 = vadd.f32 %v5299, %v6176
    %v6178 = vpop.f32.mrf.mxu0
    %v6179 = vadd.f32 %v5303, %v6178
    %v6180 = vpop.f32.mrf.mxu0
    %v6181 = vpop.f32.mrf.mxu0
    %6182 = vdwg.mxu0
    %6183 = vmatprep.subr.bf16.mxu0 0
    %6184 = vmatpush1.bf16.msra.mxu0 0
    %6185 = vmatprep.subr.bf16.mxu0 0
    %6186 = vmatpush1.bf16.msra.mxu0 0
    %6187 = vmatprep.subr.bf16.mxu0 0
    %6188 = vmatpush1.bf16.msra.mxu0 0
    %6189 = vmatprep.subr.bf16.mxu0 0
    %6190 = vmatpush1.bf16.msra.mxu0 0
    %6191 = vmatprep.subr.bf16.mxu0 0
    %6192 = vmatpush1.bf16.msra.mxu0 0
    %6193 = vmatprep.subr.bf16.mxu0 0
    %6194 = vmatpush1.bf16.msra.mxu0 0
    %6195 = vmatprep.subr.bf16.mxu0 %v5617
    %6196 = vmatpush1.bf16.msra.mxu0 %v5616
    %6197 = vmatprep.subr.bf16.mxu0 %v5585
    %6198 = vmatpush1.bf16.msra.mxu0 %v5584
    %6199 = vmatprep.subr.bf16.mxu0 0
    %6200 = vmatpush2.bf16.msra.mxu0 0
    %6201 = vmatprep.subr.bf16.mxu0 0
    %6202 = vmatpush2.bf16.msra.mxu0 0
    %6203 = vmatprep.subr.bf16.mxu0 0
    %6204 = vmatpush2.bf16.msra.mxu0 0
    %6205 = vmatprep.subr.bf16.mxu0 0
    %6206 = vmatpush2.bf16.msra.mxu0 0
    %6207 = vmatprep.subr.bf16.mxu0 0
    %6208 = vmatpush2.bf16.msra.mxu0 0
    %6209 = vmatprep.subr.bf16.mxu0 0
    %6210 = vmatpush2.bf16.msra.mxu0 0
    %6211 = vmatprep.subr.bf16.mxu0 0
    %6212 = vmatpush2.bf16.msra.mxu0 0
    %6213 = vmatprep.subr.bf16.mxu0 0
    %6214 = vmatpush2.bf16.msra.mxu0 0
    %6215 = vmatprep.mubr.bf16.mxu0 0
    %6216 = vmatmul.mubr.bf16.gmra.mxu0 %v5689
    %v6217 = vpop.f32.mrf.mxu0
    %v6218 = vadd.f32 %v5307, %v6217
    %v6219 = vpop.f32.mrf.mxu0
    %v6220 = vadd.f32 %v5311, %v6219
    %v6221 = vpop.f32.mrf.mxu0
    %v6222 = vpop.f32.mrf.mxu0
    %6223 = vdwg.mxu0
    %6224 = vmatprep.subr.bf16.mxu0 0
    %6225 = vmatpush1.bf16.msra.mxu0 0
    %6226 = vmatprep.subr.bf16.mxu0 0
    %6227 = vmatpush1.bf16.msra.mxu0 0
    %6228 = vmatprep.subr.bf16.mxu0 0
    %6229 = vmatpush1.bf16.msra.mxu0 0
    %6230 = vmatprep.subr.bf16.mxu0 0
    %6231 = vmatpush1.bf16.msra.mxu0 0
    %6232 = vmatprep.subr.bf16.mxu0 0
    %6233 = vmatpush1.bf16.msra.mxu0 0
    %6234 = vmatprep.subr.bf16.mxu0 0
    %6235 = vmatpush1.bf16.msra.mxu0 0
    %6236 = vmatprep.subr.bf16.mxu0 %v5619
    %6237 = vmatpush1.bf16.msra.mxu0 %v5618
    %6238 = vmatprep.subr.bf16.mxu0 %v5587
    %6239 = vmatpush1.bf16.msra.mxu0 %v5586
    %6240 = vmatprep.subr.bf16.mxu0 0
    %6241 = vmatpush2.bf16.msra.mxu0 0
    %6242 = vmatprep.subr.bf16.mxu0 0
    %6243 = vmatpush2.bf16.msra.mxu0 0
    %6244 = vmatprep.subr.bf16.mxu0 0
    %6245 = vmatpush2.bf16.msra.mxu0 0
    %6246 = vmatprep.subr.bf16.mxu0 0
    %6247 = vmatpush2.bf16.msra.mxu0 0
    %6248 = vmatprep.subr.bf16.mxu0 0
    %6249 = vmatpush2.bf16.msra.mxu0 0
    %6250 = vmatprep.subr.bf16.mxu0 0
    %6251 = vmatpush2.bf16.msra.mxu0 0
    %6252 = vmatprep.subr.bf16.mxu0 0
    %6253 = vmatpush2.bf16.msra.mxu0 0
    %6254 = vmatprep.subr.bf16.mxu0 0
    %6255 = vmatpush2.bf16.msra.mxu0 0
    %6256 = vmatprep.mubr.bf16.mxu0 0
    %6257 = vmatmul.mubr.bf16.gmra.mxu0 %v5689
    %v6258 = vpop.f32.mrf.mxu0
    %v6259 = vadd.f32 %v5315, %v6258
    %v6260 = vpop.f32.mrf.mxu0
    %v6261 = vadd.f32 %v5319, %v6260
    %v6262 = vpop.f32.mrf.mxu0
    %v6263 = vpop.f32.mrf.mxu0
    %6264 = vdwg.mxu0
    %6265 = vmatprep.subr.bf16.mxu0 0
    %6266 = vmatpush1.bf16.msra.mxu0 0
    %6267 = vmatprep.subr.bf16.mxu0 0
    %6268 = vmatpush1.bf16.msra.mxu0 0
    %6269 = vmatprep.subr.bf16.mxu0 0
    %6270 = vmatpush1.bf16.msra.mxu0 0
    %6271 = vmatprep.subr.bf16.mxu0 0
    %6272 = vmatpush1.bf16.msra.mxu0 0
    %6273 = vmatprep.subr.bf16.mxu0 0
    %6274 = vmatpush1.bf16.msra.mxu0 0
    %6275 = vmatprep.subr.bf16.mxu0 0
    %6276 = vmatpush1.bf16.msra.mxu0 0
    %6277 = vmatprep.subr.bf16.mxu0 %v5621
    %6278 = vmatpush1.bf16.msra.mxu0 %v5620
    %6279 = vmatprep.subr.bf16.mxu0 %v5589
    %6280 = vmatpush1.bf16.msra.mxu0 %v5588
    %6281 = vmatprep.subr.bf16.mxu0 0
    %6282 = vmatpush2.bf16.msra.mxu0 0
    %6283 = vmatprep.subr.bf16.mxu0 0
    %6284 = vmatpush2.bf16.msra.mxu0 0
    %6285 = vmatprep.subr.bf16.mxu0 0
    %6286 = vmatpush2.bf16.msra.mxu0 0
    %6287 = vmatprep.subr.bf16.mxu0 0
    %6288 = vmatpush2.bf16.msra.mxu0 0
    %6289 = vmatprep.subr.bf16.mxu0 0
    %6290 = vmatpush2.bf16.msra.mxu0 0
    %6291 = vmatprep.subr.bf16.mxu0 0
    %6292 = vmatpush2.bf16.msra.mxu0 0
    %6293 = vmatprep.subr.bf16.mxu0 0
    %6294 = vmatpush2.bf16.msra.mxu0 0
    %6295 = vmatprep.subr.bf16.mxu0 0
    %6296 = vmatpush2.bf16.msra.mxu0 0
    %6297 = vmatprep.mubr.bf16.mxu0 0
    %6298 = vmatmul.mubr.bf16.gmra.mxu0 %v5689
    %v6299 = vpop.f32.mrf.mxu0
    %v6300 = vadd.f32 %v5323, %v6299
    %v6301 = vpop.f32.mrf.mxu0
    %v6302 = vadd.f32 %v5327, %v6301
    %v6303 = vpop.f32.mrf.mxu0
    %v6304 = vpop.f32.mrf.mxu0
    %6305 = vdwg.mxu0
    %6306 = vmatprep.subr.bf16.mxu0 0
    %6307 = vmatpush1.bf16.msra.mxu0 0
    %6308 = vmatprep.subr.bf16.mxu0 0
    %6309 = vmatpush1.bf16.msra.mxu0 0
    %6310 = vmatprep.subr.bf16.mxu0 0
    %6311 = vmatpush1.bf16.msra.mxu0 0
    %6312 = vmatprep.subr.bf16.mxu0 0
    %6313 = vmatpush1.bf16.msra.mxu0 0
    %6314 = vmatprep.subr.bf16.mxu0 0
    %6315 = vmatpush1.bf16.msra.mxu0 0
    %6316 = vmatprep.subr.bf16.mxu0 0
    %6317 = vmatpush1.bf16.msra.mxu0 0
    %6318 = vmatprep.subr.bf16.mxu0 %v5623
    %6319 = vmatpush1.bf16.msra.mxu0 %v5622
    %6320 = vmatprep.subr.bf16.mxu0 %v5591
    %6321 = vmatpush1.bf16.msra.mxu0 %v5590
    %6322 = vmatprep.subr.bf16.mxu0 0
    %6323 = vmatpush2.bf16.msra.mxu0 0
    %6324 = vmatprep.subr.bf16.mxu0 0
    %6325 = vmatpush2.bf16.msra.mxu0 0
    %6326 = vmatprep.subr.bf16.mxu0 0
    %6327 = vmatpush2.bf16.msra.mxu0 0
    %6328 = vmatprep.subr.bf16.mxu0 0
    %6329 = vmatpush2.bf16.msra.mxu0 0
    %6330 = vmatprep.subr.bf16.mxu0 0
    %6331 = vmatpush2.bf16.msra.mxu0 0
    %6332 = vmatprep.subr.bf16.mxu0 0
    %6333 = vmatpush2.bf16.msra.mxu0 0
    %6334 = vmatprep.subr.bf16.mxu0 0
    %6335 = vmatpush2.bf16.msra.mxu0 0
    %6336 = vmatprep.subr.bf16.mxu0 0
    %6337 = vmatpush2.bf16.msra.mxu0 0
    %6338 = vmatprep.mubr.bf16.mxu0 0
    %6339 = vmatmul.mubr.bf16.gmra.mxu0 %v5689
    %v6340 = vpop.f32.mrf.mxu0
    %v6341 = vadd.f32 %v5331, %v6340
    %v6342 = vpop.f32.mrf.mxu0
    %v6343 = vadd.f32 %v5335, %v6342
    %v6344 = vpop.f32.mrf.mxu0
    %v6345 = vpop.f32.mrf.mxu0
    %6346 = vdwg.mxu0
    %v6379 = vcombine.low %v5726, %v5728
    %v6380 = vcombine.low %v5767, %v5769
    %v6382 = vunpack.c.l.s4 1983009808
    %v6383 = vunpack.c.0.s8 %v6382
    %v6384 = vlaneseq
    %v6385 = vshrl.u32 %v6384, 7
    %v6386 = vsub.s32 %v6383, %v6385
    %v6387 = vrot.slane %v6379, %v6386
    %v6389 = vunpack.c.l.s4 1983009808
    %v6390 = vunpack.c.0.s8 %v6389
    %v6391 = vlaneseq
    %v6392 = vshrl.u32 %v6391, 7
    %v6393 = vsub.s32 %v6390, %v6392
    %v6394 = vrot.slane %v6380, %v6393
    %v6395 = vcombine.low %v6387, %v6394
    %v6396 = vcombine.low %v5808, %v5810
    %v6397 = vcombine.low %v5849, %v5851
    %v6399 = vunpack.c.l.s4 1983009808
    %v6400 = vunpack.c.0.s8 %v6399
    %v6401 = vlaneseq
    %v6402 = vshrl.u32 %v6401, 7
    %v6403 = vsub.s32 %v6400, %v6402
    %v6404 = vrot.slane %v6396, %v6403
    %v6406 = vunpack.c.l.s4 1983009808
    %v6407 = vunpack.c.0.s8 %v6406
    %v6408 = vlaneseq
    %v6409 = vshrl.u32 %v6408, 7
    %v6410 = vsub.s32 %v6407, %v6409
    %v6411 = vrot.slane %v6397, %v6410
    %v6412 = vcombine.low %v6404, %v6411
    %v6413 = vcombine.low %v5890, %v5892
    %v6414 = vcombine.low %v5931, %v5933
    %v6416 = vunpack.c.l.s4 1983009808
    %v6417 = vunpack.c.0.s8 %v6416
    %v6418 = vlaneseq
    %v6419 = vshrl.u32 %v6418, 7
    %v6420 = vsub.s32 %v6417, %v6419
    %v6421 = vrot.slane %v6413, %v6420
    %v6423 = vunpack.c.l.s4 1983009808
    %v6424 = vunpack.c.0.s8 %v6423
    %v6425 = vlaneseq
    %v6426 = vshrl.u32 %v6425, 7
    %v6427 = vsub.s32 %v6424, %v6426
    %v6428 = vrot.slane %v6414, %v6427
    %v6429 = vcombine.low %v6421, %v6428
    %v6430 = vcombine.low %v5972, %v5974
    %v6431 = vcombine.low %v6013, %v6015
    %v6433 = vunpack.c.l.s4 1983009808
    %v6434 = vunpack.c.0.s8 %v6433
    %v6435 = vlaneseq
    %v6436 = vshrl.u32 %v6435, 7
    %v6437 = vsub.s32 %v6434, %v6436
    %v6438 = vrot.slane %v6430, %v6437
    %v6440 = vunpack.c.l.s4 1983009808
    %v6441 = vunpack.c.0.s8 %v6440
    %v6442 = vlaneseq
    %v6443 = vshrl.u32 %v6442, 7
    %v6444 = vsub.s32 %v6441, %v6443
    %v6445 = vrot.slane %v6431, %v6444
    %v6446 = vcombine.low %v6438, %v6445
    %v6447 = vcombine.low %v6054, %v6056
    %v6448 = vcombine.low %v6095, %v6097
    %v6450 = vunpack.c.l.s4 1983009808
    %v6451 = vunpack.c.0.s8 %v6450
    %v6452 = vlaneseq
    %v6453 = vshrl.u32 %v6452, 7
    %v6454 = vsub.s32 %v6451, %v6453
    %v6455 = vrot.slane %v6447, %v6454
    %v6457 = vunpack.c.l.s4 1983009808
    %v6458 = vunpack.c.0.s8 %v6457
    %v6459 = vlaneseq
    %v6460 = vshrl.u32 %v6459, 7
    %v6461 = vsub.s32 %v6458, %v6460
    %v6462 = vrot.slane %v6448, %v6461
    %v6463 = vcombine.low %v6455, %v6462
    %v6464 = vcombine.low %v6136, %v6138
    %v6465 = vcombine.low %v6177, %v6179
    %v6467 = vunpack.c.l.s4 1983009808
    %v6468 = vunpack.c.0.s8 %v6467
    %v6469 = vlaneseq
    %v6470 = vshrl.u32 %v6469, 7
    %v6471 = vsub.s32 %v6468, %v6470
    %v6472 = vrot.slane %v6464, %v6471
    %v6474 = vunpack.c.l.s4 1983009808
    %v6475 = vunpack.c.0.s8 %v6474
    %v6476 = vlaneseq
    %v6477 = vshrl.u32 %v6476, 7
    %v6478 = vsub.s32 %v6475, %v6477
    %v6479 = vrot.slane %v6465, %v6478
    %v6480 = vcombine.low %v6472, %v6479
    %v6481 = vcombine.low %v6218, %v6220
    %v6482 = vcombine.low %v6259, %v6261
    %v6484 = vunpack.c.l.s4 1983009808
    %v6485 = vunpack.c.0.s8 %v6484
    %v6486 = vlaneseq
    %v6487 = vshrl.u32 %v6486, 7
    %v6488 = vsub.s32 %v6485, %v6487
    %v6489 = vrot.slane %v6481, %v6488
    %v6491 = vunpack.c.l.s4 1983009808
    %v6492 = vunpack.c.0.s8 %v6491
    %v6493 = vlaneseq
    %v6494 = vshrl.u32 %v6493, 7
    %v6495 = vsub.s32 %v6492, %v6494
    %v6496 = vrot.slane %v6482, %v6495
    %v6497 = vcombine.low %v6489, %v6496
    %v6498 = vcombine.low %v6300, %v6302
    %v6499 = vcombine.low %v6341, %v6343
    %v6501 = vunpack.c.l.s4 1983009808
    %v6502 = vunpack.c.0.s8 %v6501
    %v6503 = vlaneseq
    %v6504 = vshrl.u32 %v6503, 7
    %v6505 = vsub.s32 %v6502, %v6504
    %v6506 = vrot.slane %v6498, %v6505
    %v6508 = vunpack.c.l.s4 1983009808
    %v6509 = vunpack.c.0.s8 %v6508
    %v6510 = vlaneseq
    %v6511 = vshrl.u32 %v6510, 7
    %v6512 = vsub.s32 %v6509, %v6511
    %v6513 = vrot.slane %v6499, %v6512
    %v6514 = vcombine.low %v6506, %v6513
    %6523 = vst [vmem:[%s21] sm:$0xff] %v6395
    %6524 = vst [vmem:[%s21 + $0x8] sm:$0xff] %v6412
    %6525 = vst [vmem:[%s21 + $0x10] sm:$0xff] %v6429
    %6526 = vst [vmem:[%s21 + $0x18] sm:$0xff] %v6446
    %6527 = vst [vmem:[%s21 + $0x20] sm:$0xff] %v6463
    %6528 = vst [vmem:[%s21 + $0x28] sm:$0xff] %v6480
    %6529 = vst [vmem:[%s21 + $0x30] sm:$0xff] %v6497
    %6530 = vst [vmem:[%s21 + $0x38] sm:$0xff] %v6514
    // Predicated region
    $region158: #{encoder_crnn_forward.1} parent=1 // pred_check
      _
    $region159: #{encoder_crnn_forward.1} parent=1 // pred_check_branch
      %6532 = sbr.rel (0) target = $region161
    $region160: #{encoder_crnn_forward.1} parent=1 // pred_region
      _
    $region161: #{encoder_crnn_forward.1} parent=1 // pred_fallthru
      _
    // Predicated region
    $region162: #{encoder_crnn_forward.1} parent=1 // pred_check
      _
    $region163: #{encoder_crnn_forward.1} parent=1 // pred_check_branch
      %6534 = sbr.rel (0) target = $region165
    $region164: #{encoder_crnn_forward.1} parent=1 // pred_region
      %s6536 = ssub.s32 32, 32
      %6537 = vsyncadd [#allocation4], %s6536
      %s6539 = sshll.u32 [#allocation31], 4
      %s6540 = int_to_ptr.vmem [resolvable:$true] %s6539
      %6542 = dma.vmem_to_hbm [thread:$0]  %s6540, 32, %s22, [#allocation4]
    $region165: #{encoder_crnn_forward.1} parent=1 // pred_fallthru
      _
    // Predicated region
    $region166: #{encoder_crnn_forward.1} parent=1 // pred_check
      _
    $region167: #{encoder_crnn_forward.1} parent=1 // pred_check_branch
      %6544 = sbr.rel (0) target = $region169
    $region168: #{encoder_crnn_forward.1} parent=1 // pred_region
      _
    $region169: #{encoder_crnn_forward.1} parent=1 // pred_fallthru
      _
    // Predicated region
    $region170: #{encoder_crnn_forward.1} parent=1 // pred_check
      _
    $region171: #{encoder_crnn_forward.1} parent=1 // pred_check_branch
      %6546 = sbr.rel (0) target = $region173
    $region172: #{encoder_crnn_forward.1} parent=1 // pred_region
      %6547 = dma.done [#allocation4], 32
    $region173: #{encoder_crnn_forward.1} parent=1 // pred_fallthru
      _
    %6548 = vsyncpa [#allocation3], 1
    %6549 = vsyncpa [#allocation6], 1
    %6550 = vsyncpa [#allocation9], 1
    %6551 = vsyncpa [#allocation12], 1
    %6552 = vsyncpa [#allocation15], 1
    %6553 = vsyncpa [#allocation18], 1
    %6554 = vsyncpa [#allocation21], 1
    %6555 = vsyncpa [#allocation24], 1
    %6556 = vsyncpa [#allocation27], 1
    %6557 = vsyncpa [#allocation30], 1
    %6558 = vsyncpa [#allocation4], 1

</llo_original>
